<compile_context>
chip_gen: v7x
topology: tpu7x:2x2x1
jax: 0.10.0
libtpu: 0.0.40
codegen_flags: <defaults>
</compile_context>

<pallas_src>
import jax
import jax.numpy as jnp
from jax.experimental import pallas as pl
from jax.experimental.pallas import tpu as pltpu

DIN = 1552           # Linear in_features  (src + dest + edge_attr concat width)
DOUT = 614           # Linear out_features
DIN_PAD = 1664       # 13 * 128  (lane-aligned K)
DOUT_PAD = 640       # 5  * 128  (lane-aligned N)
TM = 256             # row tile, aligned to v6e/v7x MXU dimension


def _edge_mlp_kernel(feat_ref, wt_ref, bias_ref, out_ref):
    # feat_ref: [TM, DIN_PAD] bf16   wt_ref: [DIN_PAD, DOUT_PAD] bf16
    # bias_ref: [1, DOUT_PAD] f32    out_ref: [TM, DOUT_PAD] f32
    h = jnp.dot(feat_ref[...], wt_ref[...], preferred_element_type=jnp.float32)  # MXU
    out_ref[...] = jnp.maximum(h + bias_ref[...], 0.0)                            # VPU


def edge_mlp_pallas(feat_pad, wt_pad, bias_pad, *, tm=TM):
    e_pad = feat_pad.shape[0]
    grid = (e_pad // tm,)
    return pl.pallas_call(
        _edge_mlp_kernel,
        out_shape=jax.ShapeDtypeStruct((e_pad, DOUT_PAD), jnp.float32),
        grid=grid,
        in_specs=[
            pl.BlockSpec((tm, DIN_PAD), lambda i: (i, 0)),         # streamed row tile
            pl.BlockSpec((DIN_PAD, DOUT_PAD), lambda i: (0, 0)),   # W^T resident
            pl.BlockSpec((1, DOUT_PAD), lambda i: (0, 0)),         # bias resident
        ],
        out_specs=pl.BlockSpec((tm, DOUT_PAD), lambda i: (i, 0)),
        compiler_params=pltpu.CompilerParams(
            dimension_semantics=("parallel",),
            vmem_limit_bytes=32 * 1024 * 1024,
        ),
    )(feat_pad, wt_pad, bias_pad)


def edge_model_4_forward(src, dest, edge_attr, w, bias, *, tm=TM):
    """out = relu(cat([src, dest, edge_attr], 1) @ w.T + bias)."""
    feat = jnp.concatenate([src, dest, edge_attr], axis=1)          # [E, 1552]
    e = feat.shape[0]
    e_pad = ((e + tm - 1) // tm) * tm

    # Zero-pad to lane/MXU-friendly shapes and cast matmul operands to bf16.
    feat_p = jnp.zeros((e_pad, DIN_PAD), jnp.bfloat16)
    feat_p = feat_p.at[:e, :DIN].set(feat.astype(jnp.bfloat16))
    wt_p = jnp.zeros((DIN_PAD, DOUT_PAD), jnp.bfloat16)
    wt_p = wt_p.at[:DIN, :DOUT].set(w.T.astype(jnp.bfloat16))
    bias_p = jnp.zeros((1, DOUT_PAD), jnp.float32)
    bias_p = bias_p.at[0, :DOUT].set(bias.astype(jnp.float32))

    out_p = edge_mlp_pallas(feat_p, wt_p, bias_p, tm=tm)
    return out_p[:e, :DOUT]


if __name__ == "__main__":
    key = jax.random.PRNGKey(0)
    ks, kd, ke, kw, kb = jax.random.split(key, 5)

    E = 512              # number of edges (2 row tiles of 256 -> exercises the grid)
    FX = 660             # src / dest feature dim
    FE = 232             # edge feature dim  (660 + 660 + 232 = 1552)

    src = jax.random.normal(ks, (E, FX), dtype=jnp.float32)
    dest = jax.random.normal(kd, (E, FX), dtype=jnp.float32)
    edge_attr = jax.random.normal(ke, (E, FE), dtype=jnp.float32)

    # Deterministic parameter init (glorot-ish scale for W, small bias).
    w = jax.random.normal(kw, (DOUT, DIN), dtype=jnp.float32) * (1.0 / jnp.sqrt(DIN))
    bias = jax.random.normal(kb, (DOUT,), dtype=jnp.float32) * 0.01

    out = edge_model_4_forward(src, dest, edge_attr, w, bias)
    out = jax.block_until_ready(out)
    assert out.shape == (E, DOUT) and out.dtype == jnp.float32

    # Reference: same bf16 rounding of the matmul operands, f32 accumulation.
    feat = jnp.concatenate([src, dest, edge_attr], axis=1)
    feat_bf = feat.astype(jnp.bfloat16).astype(jnp.float32)
    w_bf = w.astype(jnp.bfloat16).astype(jnp.float32)
    ref = jnp.maximum(
        jnp.dot(feat_bf, w_bf.T, precision=jax.lax.Precision.HIGHEST) + bias, 0.0
    )
    assert jnp.allclose(out, ref, rtol=1e-2, atol=1e-2), "mismatch vs JAX reference"

    print("KERNEL_OK")
</pallas_src>

<mosaic_0001>
module attributes {stable_mosaic.version = 11 : i64} {
  func.func @_edge_mlp_kernel(%arg0: i32, %arg1: memref<256x1664xbf16, #tpu.memory_space<vmem>>, %arg2: memref<1664x640xbf16, #tpu.memory_space<vmem>>, %arg3: memref<1x640xf32, #tpu.memory_space<vmem>>, %arg4: memref<256x640xf32, #tpu.memory_space<vmem>>) attributes {dimension_semantics = [#tpu.dimension_semantics<parallel>], iteration_bounds = array<i64: 2>, scalar_prefetch = 0 : i64, scratch_operands = 0 : i64, tpu.core_type = #tpu.core_type<tc>, window_params = [{transform_indices = @transform_0, window_bounds = array<i64: 256, 1664>}, {pipeline_mode = #tpu.pipeline_mode<synchronous>, transform_indices = @transform_1, window_bounds = array<i64: 1664, 640>}, {pipeline_mode = #tpu.pipeline_mode<synchronous>, transform_indices = @transform_2, window_bounds = array<i64: 1, 640>}, {transform_indices = @transform_3, window_bounds = array<i64: 256, 640>}]} {
    %c0 = arith.constant 0 : index
    %c0_0 = arith.constant 0 : index
    %0 = vector.load %arg1[%c0, %c0_0] : memref<256x1664xbf16, #tpu.memory_space<vmem>>, vector<256x1664xbf16>
    %c0_1 = arith.constant 0 : index
    %c0_2 = arith.constant 0 : index
    %1 = vector.load %arg2[%c0_1, %c0_2] : memref<1664x640xbf16, #tpu.memory_space<vmem>>, vector<1664x640xbf16>
    %cst = arith.constant dense<0.000000e+00> : vector<256x640xf32>
    %2 = tpu.matmul %0, %1, %cst {dimension_numbers = #tpu.dot_dimension_numbers<[1], [0], [0], [1], [0, 0, 1, 1], [], []>} : vector<256x1664xbf16>, vector<1664x640xbf16>, vector<256x640xf32> -> vector<256x640xf32>
    %c0_3 = arith.constant 0 : index
    %c0_4 = arith.constant 0 : index
    %3 = vector.load %arg3[%c0_3, %c0_4] : memref<1x640xf32, #tpu.memory_space<vmem>>, vector<1x640xf32>
    %4 = vector.broadcast %3 : vector<1x640xf32> to vector<256x640xf32>
    %5 = arith.addf %2, %4 : vector<256x640xf32>
    %cst_5 = arith.constant 0.000000e+00 : f32
    %6 = vector.broadcast %cst_5 : f32 to vector<256x640xf32>
    %7 = arith.maximumf %5, %6 : vector<256x640xf32>
    %c0_6 = arith.constant 0 : index
    %c0_7 = arith.constant 0 : index
    %8 = vector.load %arg4[%c0_6, %c0_7] : memref<256x640xf32, #tpu.memory_space<vmem>>, vector<256x640xf32>
    tpu.vector_store %arg4[%c0_6, %c0_7], %7 {strides = array<i32>} : memref<256x640xf32, #tpu.memory_space<vmem>>, vector<256x640xf32>,
    return
  }
  func.func @transform_0(%arg0: i32) -> (i32, i32) {
    %c0_i32 = arith.constant 0 : i32
    %c0_i32_0 = arith.constant 0 : i32
    return %arg0, %c0_i32 : i32, i32
  }
  func.func @transform_1(%arg0: i32) -> (i32, i32) {
    %c0_i32 = arith.constant 0 : i32
    %c0_i32_0 = arith.constant 0 : i32
    %c0_i32_1 = arith.constant 0 : i32
    return %c0_i32, %c0_i32_0 : i32, i32
  }
  func.func @transform_2(%arg0: i32) -> (i32, i32) {
    %c0_i32 = arith.constant 0 : i32
    %c0_i32_0 = arith.constant 0 : i32
    %c0_i32_1 = arith.constant 0 : i32
    return %c0_i32, %c0_i32_0 : i32, i32
  }
  func.func @transform_3(%arg0: i32) -> (i32, i32) {
    %c0_i32 = arith.constant 0 : i32
    %c0_i32_0 = arith.constant 0 : i32
    return %arg0, %c0_i32 : i32, i32
  }
}

</mosaic_0001>

<llo_original>
// kernel: tpu_custom_call.1
$region0: #{tpu_custom_call.1}
  #allocation0 [shape = 'u32[]', space=smem, size = 0x4, offset = 0x4, fixed_abs, tag = 'smem constant byte address 0x4 - core index']
  #allocation1 [shape = 'u32[144,128]{1,0:T(1,128)}', space=vmem, size = 0x12000, scoped, tag = 'internal scratch']
  %s0 = inlined_call_operand.hbm [shape: bf16[512,1664], index: 0, kind: input, shape index: {}]
  %s1 = inlined_call_operand.hbm [shape: bf16[1664,640], index: 1, kind: input, shape index: {}]
  %s2 = inlined_call_operand.hbm [shape: f32[1,640], index: 2, kind: input, shape index: {}]
  %s3 = inlined_call_operand.hbm [shape: f32[512,640], index: 3, kind: output, shape index: {}]
  %s4 = sld [smem:[#allocation0]]
  $region57: #{tpu_custom_call.1} parent=0
    _
  %s6 = ssub.s32 1, %s4
  %s7 = scalar_select 0, %s6, %s4
  $region1: #{tpu_custom_call.1} parent=0
    #allocation2 [shape = 'u8[1703936]{0}', space=vmem, size = 0x1a0000, scoped, tag = 'input window, operand 0']
    #allocation3 [shape = 's32[2]{0}', space=sflag, size = 0x8, scoped, tag = 'scoped memory for tpu_custom_call.1']
    #allocation4 [shape = 's32[2]{0}', space=sflag, size = 0x8, scoped, tag = 'scoped memory for tpu_custom_call.1']
    #allocation5 [shape = 'u8[2129920]{0}', space=vmem, size = 0x208000, scoped, tag = 'input window, operand 1, single buffered']
    #allocation6 [shape = 's32[1]{0}', space=sflag, size = 0x4, scoped, tag = 'scoped memory for tpu_custom_call.1']
    #allocation7 [shape = 'u8[2560]{0}', space=vmem, size = 0xc00, scoped, tag = 'input window, operand 2, single buffered']
    #allocation8 [shape = 'u8[1310720]{0}', space=vmem, size = 0x140000, scoped, tag = 'output window, operand 0']
    %8 = vsyncpa [#allocation3], 0
    %s9 = scalar_lea.sflag [#allocation3], 1
    %10 = vsyncpa %s9, 0
    %11 = vsyncpa [#allocation6], 0
    %12 = vsyncpa [#allocation4], 0
    %s13 = scalar_lea.sflag [#allocation4], 1
    %14 = vsyncpa %s13, 0
    loop: start=0, step=1, limit=4
    $region2: #{tpu_custom_call.1} parent=1 // loop_pre_header
      _
    $region3: #{tpu_custom_call.1} parent=1 // loop_header
      %s16 = sphi 0, %s20
      %p17 = scmp.ge.s32.totalorder %s16, 4
      %s26 = sphi 0, %s28
      %s29 = sphi 0, %s26
      %s30 = sphi 0, %s29
      %s46 = sphi 0, %s30
      %s50 = sphi 0, %s50
      %s52 = sphi 0, %s50
      %s53 = sphi 0, %s52
      %s67 = sphi 0, %s53
      %s71 = sphi 0, %s71
      %s73 = sphi 0, %s71
      %s74 = sphi 0, %s73
      %s88 = sphi 0, %s74
      %s94 = sphi 0, %s96
      %s97 = sphi 0, %s94
      %s98 = sphi 0, %s97
      %s114 = sphi 0, %s98
    $region4: #{tpu_custom_call.1} parent=1 // loop_header_branch
      %19 = sbr.rel (%p17) target = $region8
    $region5: #{tpu_custom_call.1} parent=1 // loop_body
      %s21 = ssub.s32 %s16, 1
      %s22 = ssub.s32 %s16, 2
      %s23 = sadd.s32 %s16, 1
      %s24 = ssub.s32 %s16, %s23
      %p25 = scmp.eq.s32.totalorder %s24, 0
      %s27 = sadd.s32 %s26, 1
      %s28 = scalar_select %p25, %s26, %s27
      %p31 = pneg %p25
      %p32 = scmp.eq.s32.totalorder %s16, 1
      %p33 = por %p31, %p32
      %p34 = scmp.ne.s32.totalorder %s26, %s29
      %p35 = scmp.eq.s32.totalorder %s16, 0
      %p36 = por %p34, %p35
      %p37 = scmp.ne.s32.totalorder %s26, %s29
      %p38 = scmp.eq.s32.totalorder %s21, 1
      %p39 = por %p37, %p38
      %p40 = scmp.ne.s32.totalorder %s29, %s30
      %p41 = scmp.eq.s32.totalorder %s21, 0
      %p42 = por %p40, %p41
      %p43 = scmp.ne.s32.totalorder %s29, %s30
      %p44 = scmp.eq.s32.totalorder %s22, 1
      %p45 = por %p43, %p44
      %p47 = scmp.ne.s32.totalorder %s30, %s46
      %p48 = scmp.eq.s32.totalorder %s22, 0
      %p49 = por %p47, %p48
      %s51 = sadd.s32 %s50, 1
      %p54 = scmp.eq.s32.totalorder %s16, 1
      %p55 = scmp.ne.s32.totalorder %s50, %s52
      %p56 = scmp.eq.s32.totalorder %s16, 0
      %p57 = por %p55, %p56
      %p58 = scmp.ne.s32.totalorder %s50, %s52
      %p59 = scmp.eq.s32.totalorder %s21, 1
      %p60 = por %p58, %p59
      %p61 = scmp.ne.s32.totalorder %s52, %s53
      %p62 = scmp.eq.s32.totalorder %s21, 0
      %p63 = por %p61, %p62
      %p64 = scmp.ne.s32.totalorder %s52, %s53
      %p65 = scmp.eq.s32.totalorder %s22, 1
      %p66 = por %p64, %p65
      %p68 = scmp.ne.s32.totalorder %s53, %s67
      %p69 = scmp.eq.s32.totalorder %s22, 0
      %p70 = por %p68, %p69
      %s72 = sadd.s32 %s71, 1
      %p75 = scmp.eq.s32.totalorder %s16, 1
      %p76 = scmp.ne.s32.totalorder %s71, %s73
      %p77 = scmp.eq.s32.totalorder %s16, 0
      %p78 = por %p76, %p77
      %p79 = scmp.ne.s32.totalorder %s71, %s73
      %p80 = scmp.eq.s32.totalorder %s21, 1
      %p81 = por %p79, %p80
      %p82 = scmp.ne.s32.totalorder %s73, %s74
      %p83 = scmp.eq.s32.totalorder %s21, 0
      %p84 = por %p82, %p83
      %p85 = scmp.ne.s32.totalorder %s73, %s74
      %p86 = scmp.eq.s32.totalorder %s22, 1
      %p87 = por %p85, %p86
      %p89 = scmp.ne.s32.totalorder %s74, %s88
      %p90 = scmp.eq.s32.totalorder %s22, 0
      %p91 = por %p89, %p90
      %s92 = ssub.s32 %s16, %s23
      %p93 = scmp.eq.s32.totalorder %s92, 0
      %s95 = sadd.s32 %s94, 1
      %s96 = scalar_select %p93, %s94, %s95
      %p99 = pneg %p93
      %p100 = scmp.eq.s32.totalorder %s16, 1
      %p101 = por %p99, %p100
      %p102 = scmp.ne.s32.totalorder %s94, %s97
      %p103 = scmp.eq.s32.totalorder %s16, 0
      %p104 = por %p102, %p103
      %p105 = scmp.ne.s32.totalorder %s94, %s97
      %p106 = scmp.eq.s32.totalorder %s21, 1
      %p107 = por %p105, %p106
      %p108 = scmp.ne.s32.totalorder %s97, %s98
      %p109 = scmp.eq.s32.totalorder %s21, 0
      %p110 = por %p108, %p109
      %p111 = scmp.ne.s32.totalorder %s97, %s98
      %p112 = scmp.eq.s32.totalorder %s22, 1
      %p113 = por %p111, %p112
      %p115 = scmp.ne.s32.totalorder %s98, %s114
      %p116 = scmp.eq.s32.totalorder %s22, 0
      %p117 = por %p115, %p116
      %p118 = scmp.le.s32.totalorder 1, %s16
      %p119 = scmp.lt.s32.totalorder %s16, 3
      %p120 = pnand %p118, %p119
      %p121 = pneg %p120
      // Predicated region
      $region9: #{tpu_custom_call.1} parent=5 // pred_check
        _
      $region10: #{tpu_custom_call.1} parent=5 // pred_check_branch
        %123 = sbr.rel (%p120) target = $region12
      $region11: #{tpu_custom_call.1} parent=5 // pred_region
        %s124 = ssub.s32 %s16, 1
        // Predicated region
        $region13: #{tpu_custom_call.1} parent=11 // pred_check
          %p125 = pneg %p63
        $region14: #{tpu_custom_call.1} parent=11 // pred_check_branch
          %127 = sbr.rel (%p125) target = $region16
        $region15: #{tpu_custom_call.1} parent=11 // pred_region
          %s129 = ssub.s32 66560, 66560
          %130 = vsyncadd [#allocation6], %s129
          %s131 = sshll.u32 [#allocation5], 4
          %s132 = int_to_ptr.vmem [resolvable:$true] %s131
          %137 = dma.hbm_to_vmem [thread:$0]  %s1, 66560, %s132, [#allocation6], 320, 320, 20
        $region16: #{tpu_custom_call.1} parent=11 // pred_fallthru
          _
        // Predicated region
        $region17: #{tpu_custom_call.1} parent=11 // pred_check
          %p138 = pneg %p84
        $region18: #{tpu_custom_call.1} parent=11 // pred_check_branch
          %140 = sbr.rel (%p138) target = $region20
        $region19: #{tpu_custom_call.1} parent=11 // pred_region
          %s142 = ssub.s32 80, 80
          %143 = vsyncadd [#allocation6], %s142
          %s145 = sshll.u32 [#allocation7], 4
          %s146 = int_to_ptr.vmem [resolvable:$true] %s145
          %148 = dma.hbm_to_vmem [thread:$0]  %s2, 80, %s146, [#allocation6]
        $region20: #{tpu_custom_call.1} parent=11 // pred_fallthru
          _
      $region12: #{tpu_custom_call.1} parent=5 // pred_fallthru
        _
      %p149 = scmp.lt.s32.totalorder %s16, 2
      // Predicated region
      $region21: #{tpu_custom_call.1} parent=5 // pred_check
        %p150 = pneg %p149
      $region22: #{tpu_custom_call.1} parent=5 // pred_check_branch
        %152 = sbr.rel (%p150) target = $region24
      $region23: #{tpu_custom_call.1} parent=5 // pred_region
        // Predicated region
        $region25: #{tpu_custom_call.1} parent=23 // pred_check
          %p153 = pneg %p36
        $region26: #{tpu_custom_call.1} parent=23 // pred_check_branch
          %155 = sbr.rel (%p153) target = $region28
        $region27: #{tpu_custom_call.1} parent=23 // pred_region
          %s156 = sand.u32 %s26, 1
          %s157 = scalar_lea.sflag [#allocation3], %s156
          %s158 = sand.u32 %s26, 1
          %s159 = smul.addr %s158, 1664
          %s160 = scalar_lea.vmem [#allocation2], %s159
          %s161 = smul.u32 32, %s16
          %s163 = ssub.s32 26624, 26624
          %164 = vsyncadd %s157, %s163
          %s165 = smul.addr %s161, 13
          %s166 = smul.addr %s165, 64
          %s167 = scalar_lea.hbm %s0, %s166
          %s168 = sshll.u32 %s160, 4
          %s169 = int_to_ptr.vmem [resolvable:$true] %s168
          %174 = dma.hbm_to_vmem [thread:$0]  %s167, 26624, %s169, %s157, 832, 832, 52
        $region28: #{tpu_custom_call.1} parent=23 // pred_fallthru
          _
      $region24: #{tpu_custom_call.1} parent=5 // pred_fallthru
        _
      %p175 = scmp.le.s32.totalorder 1, %s16
      %p176 = scmp.lt.s32.totalorder %s16, 3
      %p177 = pnand %p175, %p176
      %p178 = pneg %p177
      // Predicated region
      $region29: #{tpu_custom_call.1} parent=5 // pred_check
        _
      $region30: #{tpu_custom_call.1} parent=5 // pred_check_branch
        %180 = sbr.rel (%p177) target = $region32
      $region31: #{tpu_custom_call.1} parent=5 // pred_region
        %s181 = ssub.s32 %s16, 1
        %s182 = sand.u32 %s29, 1
        %s183 = scalar_lea.sflag [#allocation3], %s182
        %s184 = sand.u32 %s29, 1
        %s185 = smul.addr %s184, 1664
        %s186 = scalar_lea.vmem [#allocation2], %s185
        // Predicated region
        $region33: #{tpu_custom_call.1} parent=31 // pred_check
          %p187 = pneg %p42
        $region34: #{tpu_custom_call.1} parent=31 // pred_check_branch
          %189 = sbr.rel (%p187) target = $region36
        $region35: #{tpu_custom_call.1} parent=31 // pred_region
          %190 = dma.done %s183, 26624
        $region36: #{tpu_custom_call.1} parent=31 // pred_fallthru
          _
        // Predicated region
        $region37: #{tpu_custom_call.1} parent=31 // pred_check
          %p191 = pneg %p63
        $region38: #{tpu_custom_call.1} parent=31 // pred_check_branch
          %193 = sbr.rel (%p191) target = $region40
        $region39: #{tpu_custom_call.1} parent=31 // pred_region
          %194 = dma.done [#allocation6], 66560
        $region40: #{tpu_custom_call.1} parent=31 // pred_fallthru
          _
        // Predicated region
        $region41: #{tpu_custom_call.1} parent=31 // pred_check
          %p195 = pneg %p84
        $region42: #{tpu_custom_call.1} parent=31 // pred_check_branch
          %197 = sbr.rel (%p195) target = $region44
        $region43: #{tpu_custom_call.1} parent=31 // pred_region
          %198 = dma.done [#allocation6], 80
        $region44: #{tpu_custom_call.1} parent=31 // pred_fallthru
          _
        %s199 = sand.u32 %s29, 1
        %s200 = scalar_lea.sflag [#allocation3], %s199
        %s201 = sand.u32 %s29, 1
        %s202 = smul.addr %s201, 1664
        %s203 = scalar_lea.vmem [#allocation2], %s202
        %p204 = pneg %p42
        %p205 = pneg %p39
        %p206 = pneg %p63
        %p207 = pneg %p60
        %p208 = pneg %p84
        %p209 = pneg %p81
        %p210 = pneg %p110
        %p211 = pneg %p107
        %s212 = sand.u32 %s97, 1
        %s213 = scalar_lea.sflag [#allocation4], %s212
        %s214 = sand.u32 %s97, 1
        %s215 = smul.addr %s214, 1280
        %s216 = scalar_lea.vmem [#allocation8], %s215
        %s217 = smul.u32 32, %s21
        %s218 = smul.u32 32, %s21
        %v220 = vld [vmem:[%s186] sm:$0xff]
        %v221 = vld [vmem:[%s186 + $0x8] sm:$0xff]
        %v222 = vld [vmem:[%s186 + $0x10] sm:$0xff]
        %v223 = vld [vmem:[%s186 + $0x18] sm:$0xff]
        %v224 = vld [vmem:[%s186 + $0x20] sm:$0xff]
        %v225 = vld [vmem:[%s186 + $0x28] sm:$0xff]
        %v226 = vld [vmem:[%s186 + $0x30] sm:$0xf]
        %v227 = vld [vmem:[%s186 + $0x34] sm:$0xff]
        %v228 = vld [vmem:[%s186 + $0x3c] sm:$0xff]
        %v229 = vld [vmem:[%s186 + $0x44] sm:$0xff]
        %v230 = vld [vmem:[%s186 + $0x4c] sm:$0xff]
        %v231 = vld [vmem:[%s186 + $0x54] sm:$0xff]
        %v232 = vld [vmem:[%s186 + $0x5c] sm:$0xff]
        %v233 = vld [vmem:[%s186 + $0x64] sm:$0xf]
        %v234 = vld [vmem:[%s186 + $0x68] sm:$0xff]
        %v235 = vld [vmem:[%s186 + $0x70] sm:$0xff]
        %v236 = vld [vmem:[%s186 + $0x78] sm:$0xff]
        %v237 = vld [vmem:[%s186 + $0x80] sm:$0xff]
        %v238 = vld [vmem:[%s186 + $0x88] sm:$0xff]
        %v239 = vld [vmem:[%s186 + $0x90] sm:$0xff]
        %v240 = vld [vmem:[%s186 + $0x98] sm:$0xf]
        %v241 = vld [vmem:[%s186 + $0x9c] sm:$0xff]
        %v242 = vld [vmem:[%s186 + $0xa4] sm:$0xff]
        %v243 = vld [vmem:[%s186 + $0xac] sm:$0xff]
        %v244 = vld [vmem:[%s186 + $0xb4] sm:$0xff]
        %v245 = vld [vmem:[%s186 + $0xbc] sm:$0xff]
        %v246 = vld [vmem:[%s186 + $0xc4] sm:$0xff]
        %v247 = vld [vmem:[%s186 + $0xcc] sm:$0xf]
        %v248 = vld [vmem:[%s186 + $0xd0] sm:$0xff]
        %v249 = vld [vmem:[%s186 + $0xd8] sm:$0xff]
        %v250 = vld [vmem:[%s186 + $0xe0] sm:$0xff]
        %v251 = vld [vmem:[%s186 + $0xe8] sm:$0xff]
        %v252 = vld [vmem:[%s186 + $0xf0] sm:$0xff]
        %v253 = vld [vmem:[%s186 + $0xf8] sm:$0xff]
        %v254 = vld [vmem:[%s186 + $0x100] sm:$0xf]
        %v255 = vld [vmem:[%s186 + $0x104] sm:$0xff]
        %v256 = vld [vmem:[%s186 + $0x10c] sm:$0xff]
        %v257 = vld [vmem:[%s186 + $0x114] sm:$0xff]
        %v258 = vld [vmem:[%s186 + $0x11c] sm:$0xff]
        %v259 = vld [vmem:[%s186 + $0x124] sm:$0xff]
        %v260 = vld [vmem:[%s186 + $0x12c] sm:$0xff]
        %v261 = vld [vmem:[%s186 + $0x134] sm:$0xf]
        %v262 = vld [vmem:[%s186 + $0x138] sm:$0xff]
        %v263 = vld [vmem:[%s186 + $0x140] sm:$0xff]
        %v264 = vld [vmem:[%s186 + $0x148] sm:$0xff]
        %v265 = vld [vmem:[%s186 + $0x150] sm:$0xff]
        %v266 = vld [vmem:[%s186 + $0x158] sm:$0xff]
        %v267 = vld [vmem:[%s186 + $0x160] sm:$0xff]
        %v268 = vld [vmem:[%s186 + $0x168] sm:$0xf]
        %v269 = vld [vmem:[%s186 + $0x16c] sm:$0xff]
        %v270 = vld [vmem:[%s186 + $0x174] sm:$0xff]
        %v271 = vld [vmem:[%s186 + $0x17c] sm:$0xff]
        %v272 = vld [vmem:[%s186 + $0x184] sm:$0xff]
        %v273 = vld [vmem:[%s186 + $0x18c] sm:$0xff]
        %v274 = vld [vmem:[%s186 + $0x194] sm:$0xff]
        %v275 = vld [vmem:[%s186 + $0x19c] sm:$0xf]
        %v276 = vld [vmem:[%s186 + $0x1a0] sm:$0xff]
        %v277 = vld [vmem:[%s186 + $0x1a8] sm:$0xff]
        %v278 = vld [vmem:[%s186 + $0x1b0] sm:$0xff]
        %v279 = vld [vmem:[%s186 + $0x1b8] sm:$0xff]
        %v280 = vld [vmem:[%s186 + $0x1c0] sm:$0xff]
        %v281 = vld [vmem:[%s186 + $0x1c8] sm:$0xff]
        %v282 = vld [vmem:[%s186 + $0x1d0] sm:$0xf]
        %v283 = vld [vmem:[%s186 + $0x1d4] sm:$0xff]
        %v284 = vld [vmem:[%s186 + $0x1dc] sm:$0xff]
        %v285 = vld [vmem:[%s186 + $0x1e4] sm:$0xff]
        %v286 = vld [vmem:[%s186 + $0x1ec] sm:$0xff]
        %v287 = vld [vmem:[%s186 + $0x1f4] sm:$0xff]
        %v288 = vld [vmem:[%s186 + $0x1fc] sm:$0xff]
        %v289 = vld [vmem:[%s186 + $0x204] sm:$0xf]
        %v290 = vld [vmem:[%s186 + $0x208] sm:$0xff]
        %v291 = vld [vmem:[%s186 + $0x210] sm:$0xff]
        %v292 = vld [vmem:[%s186 + $0x218] sm:$0xff]
        %v293 = vld [vmem:[%s186 + $0x220] sm:$0xff]
        %v294 = vld [vmem:[%s186 + $0x228] sm:$0xff]
        %v295 = vld [vmem:[%s186 + $0x230] sm:$0xff]
        %v296 = vld [vmem:[%s186 + $0x238] sm:$0xf]
        %v297 = vld [vmem:[%s186 + $0x23c] sm:$0xff]
        %v298 = vld [vmem:[%s186 + $0x244] sm:$0xff]
        %v299 = vld [vmem:[%s186 + $0x24c] sm:$0xff]
        %v300 = vld [vmem:[%s186 + $0x254] sm:$0xff]
        %v301 = vld [vmem:[%s186 + $0x25c] sm:$0xff]
        %v302 = vld [vmem:[%s186 + $0x264] sm:$0xff]
        %v303 = vld [vmem:[%s186 + $0x26c] sm:$0xf]
        %v304 = vld [vmem:[%s186 + $0x270] sm:$0xff]
        %v305 = vld [vmem:[%s186 + $0x278] sm:$0xff]
        %v306 = vld [vmem:[%s186 + $0x280] sm:$0xff]
        %v307 = vld [vmem:[%s186 + $0x288] sm:$0xff]
        %v308 = vld [vmem:[%s186 + $0x290] sm:$0xff]
        %v309 = vld [vmem:[%s186 + $0x298] sm:$0xff]
        %v310 = vld [vmem:[%s186 + $0x2a0] sm:$0xf]
        %v311 = vld [vmem:[%s186 + $0x2a4] sm:$0xff]
        %v312 = vld [vmem:[%s186 + $0x2ac] sm:$0xff]
        %v313 = vld [vmem:[%s186 + $0x2b4] sm:$0xff]
        %v314 = vld [vmem:[%s186 + $0x2bc] sm:$0xff]
        %v315 = vld [vmem:[%s186 + $0x2c4] sm:$0xff]
        %v316 = vld [vmem:[%s186 + $0x2cc] sm:$0xff]
        %v317 = vld [vmem:[%s186 + $0x2d4] sm:$0xf]
        %v318 = vld [vmem:[%s186 + $0x2d8] sm:$0xff]
        %v319 = vld [vmem:[%s186 + $0x2e0] sm:$0xff]
        %v320 = vld [vmem:[%s186 + $0x2e8] sm:$0xff]
        %v321 = vld [vmem:[%s186 + $0x2f0] sm:$0xff]
        %v322 = vld [vmem:[%s186 + $0x2f8] sm:$0xff]
        %v323 = vld [vmem:[%s186 + $0x300] sm:$0xff]
        %v324 = vld [vmem:[%s186 + $0x308] sm:$0xf]
        %v325 = vld [vmem:[%s186 + $0x30c] sm:$0xff]
        %v326 = vld [vmem:[%s186 + $0x314] sm:$0xff]
        %v327 = vld [vmem:[%s186 + $0x31c] sm:$0xff]
        %v328 = vld [vmem:[%s186 + $0x324] sm:$0xff]
        %v329 = vld [vmem:[%s186 + $0x32c] sm:$0xff]
        %v330 = vld [vmem:[%s186 + $0x334] sm:$0xff]
        %v331 = vld [vmem:[%s186 + $0x33c] sm:$0xf]
        %v332 = vld [vmem:[%s186 + $0x340] sm:$0xff]
        %v333 = vld [vmem:[%s186 + $0x348] sm:$0xff]
        %v334 = vld [vmem:[%s186 + $0x350] sm:$0xff]
        %v335 = vld [vmem:[%s186 + $0x358] sm:$0xff]
        %v336 = vld [vmem:[%s186 + $0x360] sm:$0xff]
        %v337 = vld [vmem:[%s186 + $0x368] sm:$0xff]
        %v338 = vld [vmem:[%s186 + $0x370] sm:$0xf]
        %v339 = vld [vmem:[%s186 + $0x374] sm:$0xff]
        %v340 = vld [vmem:[%s186 + $0x37c] sm:$0xff]
        %v341 = vld [vmem:[%s186 + $0x384] sm:$0xff]
        %v342 = vld [vmem:[%s186 + $0x38c] sm:$0xff]
        %v343 = vld [vmem:[%s186 + $0x394] sm:$0xff]
        %v344 = vld [vmem:[%s186 + $0x39c] sm:$0xff]
        %v345 = vld [vmem:[%s186 + $0x3a4] sm:$0xf]
        %v346 = vld [vmem:[%s186 + $0x3a8] sm:$0xff]
        %v347 = vld [vmem:[%s186 + $0x3b0] sm:$0xff]
        %v348 = vld [vmem:[%s186 + $0x3b8] sm:$0xff]
        %v349 = vld [vmem:[%s186 + $0x3c0] sm:$0xff]
        %v350 = vld [vmem:[%s186 + $0x3c8] sm:$0xff]
        %v351 = vld [vmem:[%s186 + $0x3d0] sm:$0xff]
        %v352 = vld [vmem:[%s186 + $0x3d8] sm:$0xf]
        %v353 = vld [vmem:[%s186 + $0x3dc] sm:$0xff]
        %v354 = vld [vmem:[%s186 + $0x3e4] sm:$0xff]
        %v355 = vld [vmem:[%s186 + $0x3ec] sm:$0xff]
        %v356 = vld [vmem:[%s186 + $0x3f4] sm:$0xff]
        %v357 = vld [vmem:[%s186 + $0x3fc] sm:$0xff]
        %v358 = vld [vmem:[%s186 + $0x404] sm:$0xff]
        %v359 = vld [vmem:[%s186 + $0x40c] sm:$0xf]
        %v360 = vld [vmem:[%s186 + $0x410] sm:$0xff]
        %v361 = vld [vmem:[%s186 + $0x418] sm:$0xff]
        %v362 = vld [vmem:[%s186 + $0x420] sm:$0xff]
        %v363 = vld [vmem:[%s186 + $0x428] sm:$0xff]
        %v364 = vld [vmem:[%s186 + $0x430] sm:$0xff]
        %v365 = vld [vmem:[%s186 + $0x438] sm:$0xff]
        %v366 = vld [vmem:[%s186 + $0x440] sm:$0xf]
        %v367 = vld [vmem:[%s186 + $0x444] sm:$0xff]
        %v368 = vld [vmem:[%s186 + $0x44c] sm:$0xff]
        %v369 = vld [vmem:[%s186 + $0x454] sm:$0xff]
        %v370 = vld [vmem:[%s186 + $0x45c] sm:$0xff]
        %v371 = vld [vmem:[%s186 + $0x464] sm:$0xff]
        %v372 = vld [vmem:[%s186 + $0x46c] sm:$0xff]
        %v373 = vld [vmem:[%s186 + $0x474] sm:$0xf]
        %v374 = vld [vmem:[%s186 + $0x478] sm:$0xff]
        %v375 = vld [vmem:[%s186 + $0x480] sm:$0xff]
        %v376 = vld [vmem:[%s186 + $0x488] sm:$0xff]
        %v377 = vld [vmem:[%s186 + $0x490] sm:$0xff]
        %v378 = vld [vmem:[%s186 + $0x498] sm:$0xff]
        %v379 = vld [vmem:[%s186 + $0x4a0] sm:$0xff]
        %v380 = vld [vmem:[%s186 + $0x4a8] sm:$0xf]
        %v381 = vld [vmem:[%s186 + $0x4ac] sm:$0xff]
        %v382 = vld [vmem:[%s186 + $0x4b4] sm:$0xff]
        %v383 = vld [vmem:[%s186 + $0x4bc] sm:$0xff]
        %v384 = vld [vmem:[%s186 + $0x4c4] sm:$0xff]
        %v385 = vld [vmem:[%s186 + $0x4cc] sm:$0xff]
        %v386 = vld [vmem:[%s186 + $0x4d4] sm:$0xff]
        %v387 = vld [vmem:[%s186 + $0x4dc] sm:$0xf]
        %v388 = vld [vmem:[%s186 + $0x4e0] sm:$0xff]
        %v389 = vld [vmem:[%s186 + $0x4e8] sm:$0xff]
        %v390 = vld [vmem:[%s186 + $0x4f0] sm:$0xff]
        %v391 = vld [vmem:[%s186 + $0x4f8] sm:$0xff]
        %v392 = vld [vmem:[%s186 + $0x500] sm:$0xff]
        %v393 = vld [vmem:[%s186 + $0x508] sm:$0xff]
        %v394 = vld [vmem:[%s186 + $0x510] sm:$0xf]
        %v395 = vld [vmem:[%s186 + $0x514] sm:$0xff]
        %v396 = vld [vmem:[%s186 + $0x51c] sm:$0xff]
        %v397 = vld [vmem:[%s186 + $0x524] sm:$0xff]
        %v398 = vld [vmem:[%s186 + $0x52c] sm:$0xff]
        %v399 = vld [vmem:[%s186 + $0x534] sm:$0xff]
        %v400 = vld [vmem:[%s186 + $0x53c] sm:$0xff]
        %v401 = vld [vmem:[%s186 + $0x544] sm:$0xf]
        %v402 = vld [vmem:[%s186 + $0x548] sm:$0xff]
        %v403 = vld [vmem:[%s186 + $0x550] sm:$0xff]
        %v404 = vld [vmem:[%s186 + $0x558] sm:$0xff]
        %v405 = vld [vmem:[%s186 + $0x560] sm:$0xff]
        %v406 = vld [vmem:[%s186 + $0x568] sm:$0xff]
        %v407 = vld [vmem:[%s186 + $0x570] sm:$0xff]
        %v408 = vld [vmem:[%s186 + $0x578] sm:$0xf]
        %v409 = vld [vmem:[%s186 + $0x57c] sm:$0xff]
        %v410 = vld [vmem:[%s186 + $0x584] sm:$0xff]
        %v411 = vld [vmem:[%s186 + $0x58c] sm:$0xff]
        %v412 = vld [vmem:[%s186 + $0x594] sm:$0xff]
        %v413 = vld [vmem:[%s186 + $0x59c] sm:$0xff]
        %v414 = vld [vmem:[%s186 + $0x5a4] sm:$0xff]
        %v415 = vld [vmem:[%s186 + $0x5ac] sm:$0xf]
        %v416 = vld [vmem:[%s186 + $0x5b0] sm:$0xff]
        %v417 = vld [vmem:[%s186 + $0x5b8] sm:$0xff]
        %v418 = vld [vmem:[%s186 + $0x5c0] sm:$0xff]
        %v419 = vld [vmem:[%s186 + $0x5c8] sm:$0xff]
        %v420 = vld [vmem:[%s186 + $0x5d0] sm:$0xff]
        %v421 = vld [vmem:[%s186 + $0x5d8] sm:$0xff]
        %v422 = vld [vmem:[%s186 + $0x5e0] sm:$0xf]
        %v423 = vld [vmem:[%s186 + $0x5e4] sm:$0xff]
        %v424 = vld [vmem:[%s186 + $0x5ec] sm:$0xff]
        %v425 = vld [vmem:[%s186 + $0x5f4] sm:$0xff]
        %v426 = vld [vmem:[%s186 + $0x5fc] sm:$0xff]
        %v427 = vld [vmem:[%s186 + $0x604] sm:$0xff]
        %v428 = vld [vmem:[%s186 + $0x60c] sm:$0xff]
        %v429 = vld [vmem:[%s186 + $0x614] sm:$0xf]
        %v430 = vld [vmem:[%s186 + $0x618] sm:$0xff]
        %v431 = vld [vmem:[%s186 + $0x620] sm:$0xff]
        %v432 = vld [vmem:[%s186 + $0x628] sm:$0xff]
        %v433 = vld [vmem:[%s186 + $0x630] sm:$0xff]
        %v434 = vld [vmem:[%s186 + $0x638] sm:$0xff]
        %v435 = vld [vmem:[%s186 + $0x640] sm:$0xff]
        %v436 = vld [vmem:[%s186 + $0x648] sm:$0xf]
        %v437 = vld [vmem:[%s186 + $0x64c] sm:$0xff]
        %v438 = vld [vmem:[%s186 + $0x654] sm:$0xff]
        %v439 = vld [vmem:[%s186 + $0x65c] sm:$0xff]
        %v440 = vld [vmem:[%s186 + $0x664] sm:$0xff]
        %v441 = vld [vmem:[%s186 + $0x66c] sm:$0xff]
        %v442 = vld [vmem:[%s186 + $0x674] sm:$0xff]
        %v443 = vld [vmem:[%s186 + $0x67c] sm:$0xf]
        %v444 = vld [vmem:[#allocation5] sm:$0xff]
        %v445 = vld [vmem:[#allocation5 + $0x8] sm:$0xff]
        %v446 = vld [vmem:[#allocation5 + $0x10] sm:$0xf]
        %v447 = vld [vmem:[#allocation5 + $0x14] sm:$0xff]
        %v448 = vld [vmem:[#allocation5 + $0x1c] sm:$0xff]
        %v449 = vld [vmem:[#allocation5 + $0x24] sm:$0xf]
        %v450 = vld [vmem:[#allocation5 + $0x28] sm:$0xff]
        %v451 = vld [vmem:[#allocation5 + $0x30] sm:$0xff]
        %v452 = vld [vmem:[#allocation5 + $0x38] sm:$0xf]
        %v453 = vld [vmem:[#allocation5 + $0x3c] sm:$0xff]
        %v454 = vld [vmem:[#allocation5 + $0x44] sm:$0xff]
        %v455 = vld [vmem:[#allocation5 + $0x4c] sm:$0xf]
        %v456 = vld [vmem:[#allocation5 + $0x50] sm:$0xff]
        %v457 = vld [vmem:[#allocation5 + $0x58] sm:$0xff]
        %v458 = vld [vmem:[#allocation5 + $0x60] sm:$0xf]
        %v459 = vld [vmem:[#allocation5 + $0x64] sm:$0xff]
        %v460 = vld [vmem:[#allocation5 + $0x6c] sm:$0xff]
        %v461 = vld [vmem:[#allocation5 + $0x74] sm:$0xf]
        %v462 = vld [vmem:[#allocation5 + $0x78] sm:$0xff]
        %v463 = vld [vmem:[#allocation5 + $0x80] sm:$0xff]
        %v464 = vld [vmem:[#allocation5 + $0x88] sm:$0xf]
        %v465 = vld [vmem:[#allocation5 + $0x8c] sm:$0xff]
        %v466 = vld [vmem:[#allocation5 + $0x94] sm:$0xff]
        %v467 = vld [vmem:[#allocation5 + $0x9c] sm:$0xf]
        %v468 = vld [vmem:[#allocation5 + $0xa0] sm:$0xff]
        %v469 = vld [vmem:[#allocation5 + $0xa8] sm:$0xff]
        %v470 = vld [vmem:[#allocation5 + $0xb0] sm:$0xf]
        %v471 = vld [vmem:[#allocation5 + $0xb4] sm:$0xff]
        %v472 = vld [vmem:[#allocation5 + $0xbc] sm:$0xff]
        %v473 = vld [vmem:[#allocation5 + $0xc4] sm:$0xf]
        %v474 = vld [vmem:[#allocation5 + $0xc8] sm:$0xff]
        %v475 = vld [vmem:[#allocation5 + $0xd0] sm:$0xff]
        %v476 = vld [vmem:[#allocation5 + $0xd8] sm:$0xf]
        %v477 = vld [vmem:[#allocation5 + $0xdc] sm:$0xff]
        %v478 = vld [vmem:[#allocation5 + $0xe4] sm:$0xff]
        %v479 = vld [vmem:[#allocation5 + $0xec] sm:$0xf]
        %v480 = vld [vmem:[#allocation5 + $0xf0] sm:$0xff]
        %v481 = vld [vmem:[#allocation5 + $0xf8] sm:$0xff]
        %v482 = vld [vmem:[#allocation5 + $0x100] sm:$0xf]
        %v483 = vld [vmem:[#allocation5 + $0x104] sm:$0xff]
        %v484 = vld [vmem:[#allocation5 + $0x10c] sm:$0xff]
        %v485 = vld [vmem:[#allocation5 + $0x114] sm:$0xf]
        %v486 = vld [vmem:[#allocation5 + $0x118] sm:$0xff]
        %v487 = vld [vmem:[#allocation5 + $0x120] sm:$0xff]
        %v488 = vld [vmem:[#allocation5 + $0x128] sm:$0xf]
        %v489 = vld [vmem:[#allocation5 + $0x12c] sm:$0xff]
        %v490 = vld [vmem:[#allocation5 + $0x134] sm:$0xff]
        %v491 = vld [vmem:[#allocation5 + $0x13c] sm:$0xf]
        %v492 = vld [vmem:[#allocation5 + $0x140] sm:$0xff]
        %v493 = vld [vmem:[#allocation5 + $0x148] sm:$0xff]
        %v494 = vld [vmem:[#allocation5 + $0x150] sm:$0xf]
        %v495 = vld [vmem:[#allocation5 + $0x154] sm:$0xff]
        %v496 = vld [vmem:[#allocation5 + $0x15c] sm:$0xff]
        %v497 = vld [vmem:[#allocation5 + $0x164] sm:$0xf]
        %v498 = vld [vmem:[#allocation5 + $0x168] sm:$0xff]
        %v499 = vld [vmem:[#allocation5 + $0x170] sm:$0xff]
        %v500 = vld [vmem:[#allocation5 + $0x178] sm:$0xf]
        %v501 = vld [vmem:[#allocation5 + $0x17c] sm:$0xff]
        %v502 = vld [vmem:[#allocation5 + $0x184] sm:$0xff]
        %v503 = vld [vmem:[#allocation5 + $0x18c] sm:$0xf]
        %v504 = vld [vmem:[#allocation5 + $0x190] sm:$0xff]
        %v505 = vld [vmem:[#allocation5 + $0x198] sm:$0xff]
        %v506 = vld [vmem:[#allocation5 + $0x1a0] sm:$0xf]
        %v507 = vld [vmem:[#allocation5 + $0x1a4] sm:$0xff]
        %v508 = vld [vmem:[#allocation5 + $0x1ac] sm:$0xff]
        %v509 = vld [vmem:[#allocation5 + $0x1b4] sm:$0xf]
        %v510 = vld [vmem:[#allocation5 + $0x1b8] sm:$0xff]
        %v511 = vld [vmem:[#allocation5 + $0x1c0] sm:$0xff]
        %v512 = vld [vmem:[#allocation5 + $0x1c8] sm:$0xf]
        %v513 = vld [vmem:[#allocation5 + $0x1cc] sm:$0xff]
        %v514 = vld [vmem:[#allocation5 + $0x1d4] sm:$0xff]
        %v515 = vld [vmem:[#allocation5 + $0x1dc] sm:$0xf]
        %v516 = vld [vmem:[#allocation5 + $0x1e0] sm:$0xff]
        %v517 = vld [vmem:[#allocation5 + $0x1e8] sm:$0xff]
        %v518 = vld [vmem:[#allocation5 + $0x1f0] sm:$0xf]
        %v519 = vld [vmem:[#allocation5 + $0x1f4] sm:$0xff]
        %v520 = vld [vmem:[#allocation5 + $0x1fc] sm:$0xff]
        %v521 = vld [vmem:[#allocation5 + $0x204] sm:$0xf]
        %v522 = vld [vmem:[#allocation5 + $0x208] sm:$0xff]
        %v523 = vld [vmem:[#allocation5 + $0x210] sm:$0xff]
        %v524 = vld [vmem:[#allocation5 + $0x218] sm:$0xf]
        %v525 = vld [vmem:[#allocation5 + $0x21c] sm:$0xff]
        %v526 = vld [vmem:[#allocation5 + $0x224] sm:$0xff]
        %v527 = vld [vmem:[#allocation5 + $0x22c] sm:$0xf]
        %v528 = vld [vmem:[#allocation5 + $0x230] sm:$0xff]
        %v529 = vld [vmem:[#allocation5 + $0x238] sm:$0xff]
        %v530 = vld [vmem:[#allocation5 + $0x240] sm:$0xf]
        %v531 = vld [vmem:[#allocation5 + $0x244] sm:$0xff]
        %v532 = vld [vmem:[#allocation5 + $0x24c] sm:$0xff]
        %v533 = vld [vmem:[#allocation5 + $0x254] sm:$0xf]
        %v534 = vld [vmem:[#allocation5 + $0x258] sm:$0xff]
        %v535 = vld [vmem:[#allocation5 + $0x260] sm:$0xff]
        %v536 = vld [vmem:[#allocation5 + $0x268] sm:$0xf]
        %v537 = vld [vmem:[#allocation5 + $0x26c] sm:$0xff]
        %v538 = vld [vmem:[#allocation5 + $0x274] sm:$0xff]
        %v539 = vld [vmem:[#allocation5 + $0x27c] sm:$0xf]
        %v540 = vld [vmem:[#allocation5 + $0x280] sm:$0xff]
        %v541 = vld [vmem:[#allocation5 + $0x288] sm:$0xff]
        %v542 = vld [vmem:[#allocation5 + $0x290] sm:$0xf]
        %v543 = vld [vmem:[#allocation5 + $0x294] sm:$0xff]
        %v544 = vld [vmem:[#allocation5 + $0x29c] sm:$0xff]
        %v545 = vld [vmem:[#allocation5 + $0x2a4] sm:$0xf]
        %v546 = vld [vmem:[#allocation5 + $0x2a8] sm:$0xff]
        %v547 = vld [vmem:[#allocation5 + $0x2b0] sm:$0xff]
        %v548 = vld [vmem:[#allocation5 + $0x2b8] sm:$0xf]
        %v549 = vld [vmem:[#allocation5 + $0x2bc] sm:$0xff]
        %v550 = vld [vmem:[#allocation5 + $0x2c4] sm:$0xff]
        %v551 = vld [vmem:[#allocation5 + $0x2cc] sm:$0xf]
        %v552 = vld [vmem:[#allocation5 + $0x2d0] sm:$0xff]
        %v553 = vld [vmem:[#allocation5 + $0x2d8] sm:$0xff]
        %v554 = vld [vmem:[#allocation5 + $0x2e0] sm:$0xf]
        %v555 = vld [vmem:[#allocation5 + $0x2e4] sm:$0xff]
        %v556 = vld [vmem:[#allocation5 + $0x2ec] sm:$0xff]
        %v557 = vld [vmem:[#allocation5 + $0x2f4] sm:$0xf]
        %v558 = vld [vmem:[#allocation5 + $0x2f8] sm:$0xff]
        %v559 = vld [vmem:[#allocation5 + $0x300] sm:$0xff]
        %v560 = vld [vmem:[#allocation5 + $0x308] sm:$0xf]
        %v561 = vld [vmem:[#allocation5 + $0x30c] sm:$0xff]
        %v562 = vld [vmem:[#allocation5 + $0x314] sm:$0xff]
        %v563 = vld [vmem:[#allocation5 + $0x31c] sm:$0xf]
        %v564 = vld [vmem:[#allocation5 + $0x320] sm:$0xff]
        %v565 = vld [vmem:[#allocation5 + $0x328] sm:$0xff]
        %v566 = vld [vmem:[#allocation5 + $0x330] sm:$0xf]
        %v567 = vld [vmem:[#allocation5 + $0x334] sm:$0xff]
        %v568 = vld [vmem:[#allocation5 + $0x33c] sm:$0xff]
        %v569 = vld [vmem:[#allocation5 + $0x344] sm:$0xf]
        %v570 = vld [vmem:[#allocation5 + $0x348] sm:$0xff]
        %v571 = vld [vmem:[#allocation5 + $0x350] sm:$0xff]
        %v572 = vld [vmem:[#allocation5 + $0x358] sm:$0xf]
        %v573 = vld [vmem:[#allocation5 + $0x35c] sm:$0xff]
        %v574 = vld [vmem:[#allocation5 + $0x364] sm:$0xff]
        %v575 = vld [vmem:[#allocation5 + $0x36c] sm:$0xf]
        %v576 = vld [vmem:[#allocation5 + $0x370] sm:$0xff]
        %v577 = vld [vmem:[#allocation5 + $0x378] sm:$0xff]
        %v578 = vld [vmem:[#allocation5 + $0x380] sm:$0xf]
        %v579 = vld [vmem:[#allocation5 + $0x384] sm:$0xff]
        %v580 = vld [vmem:[#allocation5 + $0x38c] sm:$0xff]
        %v581 = vld [vmem:[#allocation5 + $0x394] sm:$0xf]
        %v582 = vld [vmem:[#allocation5 + $0x398] sm:$0xff]
        %v583 = vld [vmem:[#allocation5 + $0x3a0] sm:$0xff]
        %v584 = vld [vmem:[#allocation5 + $0x3a8] sm:$0xf]
        %v585 = vld [vmem:[#allocation5 + $0x3ac] sm:$0xff]
        %v586 = vld [vmem:[#allocation5 + $0x3b4] sm:$0xff]
        %v587 = vld [vmem:[#allocation5 + $0x3bc] sm:$0xf]
        %v588 = vld [vmem:[#allocation5 + $0x3c0] sm:$0xff]
        %v589 = vld [vmem:[#allocation5 + $0x3c8] sm:$0xff]
        %v590 = vld [vmem:[#allocation5 + $0x3d0] sm:$0xf]
        %v591 = vld [vmem:[#allocation5 + $0x3d4] sm:$0xff]
        %v592 = vld [vmem:[#allocation5 + $0x3dc] sm:$0xff]
        %v593 = vld [vmem:[#allocation5 + $0x3e4] sm:$0xf]
        %v594 = vld [vmem:[#allocation5 + $0x3e8] sm:$0xff]
        %v595 = vld [vmem:[#allocation5 + $0x3f0] sm:$0xff]
        %v596 = vld [vmem:[#allocation5 + $0x3f8] sm:$0xf]
        %v597 = vld [vmem:[#allocation5 + $0x3fc] sm:$0xff]
        %v598 = vld [vmem:[#allocation5 + $0x404] sm:$0xff]
        %v599 = vld [vmem:[#allocation5 + $0x40c] sm:$0xf]
        %v600 = vld [vmem:[#allocation5 + $0x410] sm:$0xff]
        %v601 = vld [vmem:[#allocation5 + $0x418] sm:$0xff]
        %v602 = vld [vmem:[#allocation5 + $0x420] sm:$0xf]
        %v603 = vld [vmem:[#allocation5 + $0x424] sm:$0xff]
        %v604 = vld [vmem:[#allocation5 + $0x42c] sm:$0xff]
        %v605 = vld [vmem:[#allocation5 + $0x434] sm:$0xf]
        %v606 = vld [vmem:[#allocation5 + $0x438] sm:$0xff]
        %v607 = vld [vmem:[#allocation5 + $0x440] sm:$0xff]
        %v608 = vld [vmem:[#allocation5 + $0x448] sm:$0xf]
        %v609 = vld [vmem:[#allocation5 + $0x44c] sm:$0xff]
        %v610 = vld [vmem:[#allocation5 + $0x454] sm:$0xff]
        %v611 = vld [vmem:[#allocation5 + $0x45c] sm:$0xf]
        %v612 = vld [vmem:[#allocation5 + $0x460] sm:$0xff]
        %v613 = vld [vmem:[#allocation5 + $0x468] sm:$0xff]
        %v614 = vld [vmem:[#allocation5 + $0x470] sm:$0xf]
        %v615 = vld [vmem:[#allocation5 + $0x474] sm:$0xff]
        %v616 = vld [vmem:[#allocation5 + $0x47c] sm:$0xff]
        %v617 = vld [vmem:[#allocation5 + $0x484] sm:$0xf]
        %v618 = vld [vmem:[#allocation5 + $0x488] sm:$0xff]
        %v619 = vld [vmem:[#allocation5 + $0x490] sm:$0xff]
        %v620 = vld [vmem:[#allocation5 + $0x498] sm:$0xf]
        %v621 = vld [vmem:[#allocation5 + $0x49c] sm:$0xff]
        %v622 = vld [vmem:[#allocation5 + $0x4a4] sm:$0xff]
        %v623 = vld [vmem:[#allocation5 + $0x4ac] sm:$0xf]
        %v624 = vld [vmem:[#allocation5 + $0x4b0] sm:$0xff]
        %v625 = vld [vmem:[#allocation5 + $0x4b8] sm:$0xff]
        %v626 = vld [vmem:[#allocation5 + $0x4c0] sm:$0xf]
        %v627 = vld [vmem:[#allocation5 + $0x4c4] sm:$0xff]
        %v628 = vld [vmem:[#allocation5 + $0x4cc] sm:$0xff]
        %v629 = vld [vmem:[#allocation5 + $0x4d4] sm:$0xf]
        %v630 = vld [vmem:[#allocation5 + $0x4d8] sm:$0xff]
        %v631 = vld [vmem:[#allocation5 + $0x4e0] sm:$0xff]
        %v632 = vld [vmem:[#allocation5 + $0x4e8] sm:$0xf]
        %v633 = vld [vmem:[#allocation5 + $0x4ec] sm:$0xff]
        %v634 = vld [vmem:[#allocation5 + $0x4f4] sm:$0xff]
        %v635 = vld [vmem:[#allocation5 + $0x4fc] sm:$0xf]
        %v636 = vld [vmem:[#allocation5 + $0x500] sm:$0xff]
        %v637 = vld [vmem:[#allocation5 + $0x508] sm:$0xff]
        %v638 = vld [vmem:[#allocation5 + $0x510] sm:$0xf]
        %v639 = vld [vmem:[#allocation5 + $0x514] sm:$0xff]
        %v640 = vld [vmem:[#allocation5 + $0x51c] sm:$0xff]
        %v641 = vld [vmem:[#allocation5 + $0x524] sm:$0xf]
        %v642 = vld [vmem:[#allocation5 + $0x528] sm:$0xff]
        %v643 = vld [vmem:[#allocation5 + $0x530] sm:$0xff]
        %v644 = vld [vmem:[#allocation5 + $0x538] sm:$0xf]
        %v645 = vld [vmem:[#allocation5 + $0x53c] sm:$0xff]
        %v646 = vld [vmem:[#allocation5 + $0x544] sm:$0xff]
        %v647 = vld [vmem:[#allocation5 + $0x54c] sm:$0xf]
        %v648 = vld [vmem:[#allocation5 + $0x550] sm:$0xff]
        %v649 = vld [vmem:[#allocation5 + $0x558] sm:$0xff]
        %v650 = vld [vmem:[#allocation5 + $0x560] sm:$0xf]
        %v651 = vld [vmem:[#allocation5 + $0x564] sm:$0xff]
        %v652 = vld [vmem:[#allocation5 + $0x56c] sm:$0xff]
        %v653 = vld [vmem:[#allocation5 + $0x574] sm:$0xf]
        %v654 = vld [vmem:[#allocation5 + $0x578] sm:$0xff]
        %v655 = vld [vmem:[#allocation5 + $0x580] sm:$0xff]
        %v656 = vld [vmem:[#allocation5 + $0x588] sm:$0xf]
        %v657 = vld [vmem:[#allocation5 + $0x58c] sm:$0xff]
        %v658 = vld [vmem:[#allocation5 + $0x594] sm:$0xff]
        %v659 = vld [vmem:[#allocation5 + $0x59c] sm:$0xf]
        %v660 = vld [vmem:[#allocation5 + $0x5a0] sm:$0xff]
        %v661 = vld [vmem:[#allocation5 + $0x5a8] sm:$0xff]
        %v662 = vld [vmem:[#allocation5 + $0x5b0] sm:$0xf]
        %v663 = vld [vmem:[#allocation5 + $0x5b4] sm:$0xff]
        %v664 = vld [vmem:[#allocation5 + $0x5bc] sm:$0xff]
        %v665 = vld [vmem:[#allocation5 + $0x5c4] sm:$0xf]
        %v666 = vld [vmem:[#allocation5 + $0x5c8] sm:$0xff]
        %v667 = vld [vmem:[#allocation5 + $0x5d0] sm:$0xff]
        %v668 = vld [vmem:[#allocation5 + $0x5d8] sm:$0xf]
        %v669 = vld [vmem:[#allocation5 + $0x5dc] sm:$0xff]
        %v670 = vld [vmem:[#allocation5 + $0x5e4] sm:$0xff]
        %v671 = vld [vmem:[#allocation5 + $0x5ec] sm:$0xf]
        %v672 = vld [vmem:[#allocation5 + $0x5f0] sm:$0xff]
        %v673 = vld [vmem:[#allocation5 + $0x5f8] sm:$0xff]
        %v674 = vld [vmem:[#allocation5 + $0x600] sm:$0xf]
        %v675 = vld [vmem:[#allocation5 + $0x604] sm:$0xff]
        %v676 = vld [vmem:[#allocation5 + $0x60c] sm:$0xff]
        %v677 = vld [vmem:[#allocation5 + $0x614] sm:$0xf]
        %v678 = vld [vmem:[#allocation5 + $0x618] sm:$0xff]
        %v679 = vld [vmem:[#allocation5 + $0x620] sm:$0xff]
        %v680 = vld [vmem:[#allocation5 + $0x628] sm:$0xf]
        %v681 = vld [vmem:[#allocation5 + $0x62c] sm:$0xff]
        %v682 = vld [vmem:[#allocation5 + $0x634] sm:$0xff]
        %v683 = vld [vmem:[#allocation5 + $0x63c] sm:$0xf]
        %v684 = vld [vmem:[#allocation5 + $0x640] sm:$0xff]
        %v685 = vld [vmem:[#allocation5 + $0x648] sm:$0xff]
        %v686 = vld [vmem:[#allocation5 + $0x650] sm:$0xf]
        %v687 = vld [vmem:[#allocation5 + $0x654] sm:$0xff]
        %v688 = vld [vmem:[#allocation5 + $0x65c] sm:$0xff]
        %v689 = vld [vmem:[#allocation5 + $0x664] sm:$0xf]
        %v690 = vld [vmem:[#allocation5 + $0x668] sm:$0xff]
        %v691 = vld [vmem:[#allocation5 + $0x670] sm:$0xff]
        %v692 = vld [vmem:[#allocation5 + $0x678] sm:$0xf]
        %v693 = vld [vmem:[#allocation5 + $0x67c] sm:$0xff]
        %v694 = vld [vmem:[#allocation5 + $0x684] sm:$0xff]
        %v695 = vld [vmem:[#allocation5 + $0x68c] sm:$0xf]
        %v696 = vld [vmem:[#allocation5 + $0x690] sm:$0xff]
        %v697 = vld [vmem:[#allocation5 + $0x698] sm:$0xff]
        %v698 = vld [vmem:[#allocation5 + $0x6a0] sm:$0xf]
        %v699 = vld [vmem:[#allocation5 + $0x6a4] sm:$0xff]
        %v700 = vld [vmem:[#allocation5 + $0x6ac] sm:$0xff]
        %v701 = vld [vmem:[#allocation5 + $0x6b4] sm:$0xf]
        %v702 = vld [vmem:[#allocation5 + $0x6b8] sm:$0xff]
        %v703 = vld [vmem:[#allocation5 + $0x6c0] sm:$0xff]
        %v704 = vld [vmem:[#allocation5 + $0x6c8] sm:$0xf]
        %v705 = vld [vmem:[#allocation5 + $0x6cc] sm:$0xff]
        %v706 = vld [vmem:[#allocation5 + $0x6d4] sm:$0xff]
        %v707 = vld [vmem:[#allocation5 + $0x6dc] sm:$0xf]
        %v708 = vld [vmem:[#allocation5 + $0x6e0] sm:$0xff]
        %v709 = vld [vmem:[#allocation5 + $0x6e8] sm:$0xff]
        %v710 = vld [vmem:[#allocation5 + $0x6f0] sm:$0xf]
        %v711 = vld [vmem:[#allocation5 + $0x6f4] sm:$0xff]
        %v712 = vld [vmem:[#allocation5 + $0x6fc] sm:$0xff]
        %v713 = vld [vmem:[#allocation5 + $0x704] sm:$0xf]
        %v714 = vld [vmem:[#allocation5 + $0x708] sm:$0xff]
        %v715 = vld [vmem:[#allocation5 + $0x710] sm:$0xff]
        %v716 = vld [vmem:[#allocation5 + $0x718] sm:$0xf]
        %v717 = vld [vmem:[#allocation5 + $0x71c] sm:$0xff]
        %v718 = vld [vmem:[#allocation5 + $0x724] sm:$0xff]
        %v719 = vld [vmem:[#allocation5 + $0x72c] sm:$0xf]
        %v720 = vld [vmem:[#allocation5 + $0x730] sm:$0xff]
        %v721 = vld [vmem:[#allocation5 + $0x738] sm:$0xff]
        %v722 = vld [vmem:[#allocation5 + $0x740] sm:$0xf]
        %v723 = vld [vmem:[#allocation5 + $0x744] sm:$0xff]
        %v724 = vld [vmem:[#allocation5 + $0x74c] sm:$0xff]
        %v725 = vld [vmem:[#allocation5 + $0x754] sm:$0xf]
        %v726 = vld [vmem:[#allocation5 + $0x758] sm:$0xff]
        %v727 = vld [vmem:[#allocation5 + $0x760] sm:$0xff]
        %v728 = vld [vmem:[#allocation5 + $0x768] sm:$0xf]
        %v729 = vld [vmem:[#allocation5 + $0x76c] sm:$0xff]
        %v730 = vld [vmem:[#allocation5 + $0x774] sm:$0xff]
        %v731 = vld [vmem:[#allocation5 + $0x77c] sm:$0xf]
        %v732 = vld [vmem:[#allocation5 + $0x780] sm:$0xff]
        %v733 = vld [vmem:[#allocation5 + $0x788] sm:$0xff]
        %v734 = vld [vmem:[#allocation5 + $0x790] sm:$0xf]
        %v735 = vld [vmem:[#allocation5 + $0x794] sm:$0xff]
        %v736 = vld [vmem:[#allocation5 + $0x79c] sm:$0xff]
        %v737 = vld [vmem:[#allocation5 + $0x7a4] sm:$0xf]
        %v738 = vld [vmem:[#allocation5 + $0x7a8] sm:$0xff]
        %v739 = vld [vmem:[#allocation5 + $0x7b0] sm:$0xff]
        %v740 = vld [vmem:[#allocation5 + $0x7b8] sm:$0xf]
        %v741 = vld [vmem:[#allocation5 + $0x7bc] sm:$0xff]
        %v742 = vld [vmem:[#allocation5 + $0x7c4] sm:$0xff]
        %v743 = vld [vmem:[#allocation5 + $0x7cc] sm:$0xf]
        %v744 = vld [vmem:[#allocation5 + $0x7d0] sm:$0xff]
        %v745 = vld [vmem:[#allocation5 + $0x7d8] sm:$0xff]
        %v746 = vld [vmem:[#allocation5 + $0x7e0] sm:$0xf]
        %v747 = vld [vmem:[#allocation5 + $0x7e4] sm:$0xff]
        %v748 = vld [vmem:[#allocation5 + $0x7ec] sm:$0xff]
        %v749 = vld [vmem:[#allocation5 + $0x7f4] sm:$0xf]
        %v750 = vld [vmem:[#allocation5 + $0x7f8] sm:$0xff]
        %v751 = vld [vmem:[#allocation5 + $0x800] sm:$0xff]
        %v752 = vld [vmem:[#allocation5 + $0x808] sm:$0xf]
        %v753 = vld [vmem:[#allocation5 + $0x80c] sm:$0xff]
        %v754 = vld [vmem:[#allocation5 + $0x814] sm:$0xff]
        %v755 = vld [vmem:[#allocation5 + $0x81c] sm:$0xf]
        %v756 = vld [vmem:[#allocation5 + $0x820] sm:$0xff]
        %v757 = vld [vmem:[#allocation5 + $0x828] sm:$0xff]
        %v758 = vld [vmem:[#allocation5 + $0x830] sm:$0xf]
        %v759 = vld [vmem:[#allocation5 + $0x834] sm:$0xff]
        %v760 = vld [vmem:[#allocation5 + $0x83c] sm:$0xff]
        %v761 = vld [vmem:[#allocation5 + $0x844] sm:$0xf]
        %v762 = vld [vmem:[#allocation5 + $0x848] sm:$0xff]
        %v763 = vld [vmem:[#allocation5 + $0x850] sm:$0xff]
        %v764 = vld [vmem:[#allocation5 + $0x858] sm:$0xf]
        %v765 = vld [vmem:[#allocation5 + $0x85c] sm:$0xff]
        %v766 = vld [vmem:[#allocation5 + $0x864] sm:$0xff]
        %v767 = vld [vmem:[#allocation5 + $0x86c] sm:$0xf]
        %v768 = vld [vmem:[#allocation5 + $0x870] sm:$0xff]
        %v769 = vld [vmem:[#allocation5 + $0x878] sm:$0xff]
        %v770 = vld [vmem:[#allocation5 + $0x880] sm:$0xf]
        %v771 = vld [vmem:[#allocation5 + $0x884] sm:$0xff]
        %v772 = vld [vmem:[#allocation5 + $0x88c] sm:$0xff]
        %v773 = vld [vmem:[#allocation5 + $0x894] sm:$0xf]
        %v774 = vld [vmem:[#allocation5 + $0x898] sm:$0xff]
        %v775 = vld [vmem:[#allocation5 + $0x8a0] sm:$0xff]
        %v776 = vld [vmem:[#allocation5 + $0x8a8] sm:$0xf]
        %v777 = vld [vmem:[#allocation5 + $0x8ac] sm:$0xff]
        %v778 = vld [vmem:[#allocation5 + $0x8b4] sm:$0xff]
        %v779 = vld [vmem:[#allocation5 + $0x8bc] sm:$0xf]
        %v780 = vld [vmem:[#allocation5 + $0x8c0] sm:$0xff]
        %v781 = vld [vmem:[#allocation5 + $0x8c8] sm:$0xff]
        %v782 = vld [vmem:[#allocation5 + $0x8d0] sm:$0xf]
        %v783 = vld [vmem:[#allocation5 + $0x8d4] sm:$0xff]
        %v784 = vld [vmem:[#allocation5 + $0x8dc] sm:$0xff]
        %v785 = vld [vmem:[#allocation5 + $0x8e4] sm:$0xf]
        %v786 = vld [vmem:[#allocation5 + $0x8e8] sm:$0xff]
        %v787 = vld [vmem:[#allocation5 + $0x8f0] sm:$0xff]
        %v788 = vld [vmem:[#allocation5 + $0x8f8] sm:$0xf]
        %v789 = vld [vmem:[#allocation5 + $0x8fc] sm:$0xff]
        %v790 = vld [vmem:[#allocation5 + $0x904] sm:$0xff]
        %v791 = vld [vmem:[#allocation5 + $0x90c] sm:$0xf]
        %v792 = vld [vmem:[#allocation5 + $0x910] sm:$0xff]
        %v793 = vld [vmem:[#allocation5 + $0x918] sm:$0xff]
        %v794 = vld [vmem:[#allocation5 + $0x920] sm:$0xf]
        %v795 = vld [vmem:[#allocation5 + $0x924] sm:$0xff]
        %v796 = vld [vmem:[#allocation5 + $0x92c] sm:$0xff]
        %v797 = vld [vmem:[#allocation5 + $0x934] sm:$0xf]
        %v798 = vld [vmem:[#allocation5 + $0x938] sm:$0xff]
        %v799 = vld [vmem:[#allocation5 + $0x940] sm:$0xff]
        %v800 = vld [vmem:[#allocation5 + $0x948] sm:$0xf]
        %v801 = vld [vmem:[#allocation5 + $0x94c] sm:$0xff]
        %v802 = vld [vmem:[#allocation5 + $0x954] sm:$0xff]
        %v803 = vld [vmem:[#allocation5 + $0x95c] sm:$0xf]
        %v804 = vld [vmem:[#allocation5 + $0x960] sm:$0xff]
        %v805 = vld [vmem:[#allocation5 + $0x968] sm:$0xff]
        %v806 = vld [vmem:[#allocation5 + $0x970] sm:$0xf]
        %v807 = vld [vmem:[#allocation5 + $0x974] sm:$0xff]
        %v808 = vld [vmem:[#allocation5 + $0x97c] sm:$0xff]
        %v809 = vld [vmem:[#allocation5 + $0x984] sm:$0xf]
        %v810 = vld [vmem:[#allocation5 + $0x988] sm:$0xff]
        %v811 = vld [vmem:[#allocation5 + $0x990] sm:$0xff]
        %v812 = vld [vmem:[#allocation5 + $0x998] sm:$0xf]
        %v813 = vld [vmem:[#allocation5 + $0x99c] sm:$0xff]
        %v814 = vld [vmem:[#allocation5 + $0x9a4] sm:$0xff]
        %v815 = vld [vmem:[#allocation5 + $0x9ac] sm:$0xf]
        %v816 = vld [vmem:[#allocation5 + $0x9b0] sm:$0xff]
        %v817 = vld [vmem:[#allocation5 + $0x9b8] sm:$0xff]
        %v818 = vld [vmem:[#allocation5 + $0x9c0] sm:$0xf]
        %v819 = vld [vmem:[#allocation5 + $0x9c4] sm:$0xff]
        %v820 = vld [vmem:[#allocation5 + $0x9cc] sm:$0xff]
        %v821 = vld [vmem:[#allocation5 + $0x9d4] sm:$0xf]
        %v822 = vld [vmem:[#allocation5 + $0x9d8] sm:$0xff]
        %v823 = vld [vmem:[#allocation5 + $0x9e0] sm:$0xff]
        %v824 = vld [vmem:[#allocation5 + $0x9e8] sm:$0xf]
        %v825 = vld [vmem:[#allocation5 + $0x9ec] sm:$0xff]
        %v826 = vld [vmem:[#allocation5 + $0x9f4] sm:$0xff]
        %v827 = vld [vmem:[#allocation5 + $0x9fc] sm:$0xf]
        %v828 = vld [vmem:[#allocation5 + $0xa00] sm:$0xff]
        %v829 = vld [vmem:[#allocation5 + $0xa08] sm:$0xff]
        %v830 = vld [vmem:[#allocation5 + $0xa10] sm:$0xf]
        %v831 = vld [vmem:[#allocation5 + $0xa14] sm:$0xff]
        %v832 = vld [vmem:[#allocation5 + $0xa1c] sm:$0xff]
        %v833 = vld [vmem:[#allocation5 + $0xa24] sm:$0xf]
        %v834 = vld [vmem:[#allocation5 + $0xa28] sm:$0xff]
        %v835 = vld [vmem:[#allocation5 + $0xa30] sm:$0xff]
        %v836 = vld [vmem:[#allocation5 + $0xa38] sm:$0xf]
        %v837 = vld [vmem:[#allocation5 + $0xa3c] sm:$0xff]
        %v838 = vld [vmem:[#allocation5 + $0xa44] sm:$0xff]
        %v839 = vld [vmem:[#allocation5 + $0xa4c] sm:$0xf]
        %v840 = vld [vmem:[#allocation5 + $0xa50] sm:$0xff]
        %v841 = vld [vmem:[#allocation5 + $0xa58] sm:$0xff]
        %v842 = vld [vmem:[#allocation5 + $0xa60] sm:$0xf]
        %v843 = vld [vmem:[#allocation5 + $0xa64] sm:$0xff]
        %v844 = vld [vmem:[#allocation5 + $0xa6c] sm:$0xff]
        %v845 = vld [vmem:[#allocation5 + $0xa74] sm:$0xf]
        %v846 = vld [vmem:[#allocation5 + $0xa78] sm:$0xff]
        %v847 = vld [vmem:[#allocation5 + $0xa80] sm:$0xff]
        %v848 = vld [vmem:[#allocation5 + $0xa88] sm:$0xf]
        %v849 = vld [vmem:[#allocation5 + $0xa8c] sm:$0xff]
        %v850 = vld [vmem:[#allocation5 + $0xa94] sm:$0xff]
        %v851 = vld [vmem:[#allocation5 + $0xa9c] sm:$0xf]
        %v852 = vld [vmem:[#allocation5 + $0xaa0] sm:$0xff]
        %v853 = vld [vmem:[#allocation5 + $0xaa8] sm:$0xff]
        %v854 = vld [vmem:[#allocation5 + $0xab0] sm:$0xf]
        %v855 = vld [vmem:[#allocation5 + $0xab4] sm:$0xff]
        %v856 = vld [vmem:[#allocation5 + $0xabc] sm:$0xff]
        %v857 = vld [vmem:[#allocation5 + $0xac4] sm:$0xf]
        %v858 = vld [vmem:[#allocation5 + $0xac8] sm:$0xff]
        %v859 = vld [vmem:[#allocation5 + $0xad0] sm:$0xff]
        %v860 = vld [vmem:[#allocation5 + $0xad8] sm:$0xf]
        %v861 = vld [vmem:[#allocation5 + $0xadc] sm:$0xff]
        %v862 = vld [vmem:[#allocation5 + $0xae4] sm:$0xff]
        %v863 = vld [vmem:[#allocation5 + $0xaec] sm:$0xf]
        %v864 = vld [vmem:[#allocation5 + $0xaf0] sm:$0xff]
        %v865 = vld [vmem:[#allocation5 + $0xaf8] sm:$0xff]
        %v866 = vld [vmem:[#allocation5 + $0xb00] sm:$0xf]
        %v867 = vld [vmem:[#allocation5 + $0xb04] sm:$0xff]
        %v868 = vld [vmem:[#allocation5 + $0xb0c] sm:$0xff]
        %v869 = vld [vmem:[#allocation5 + $0xb14] sm:$0xf]
        %v870 = vld [vmem:[#allocation5 + $0xb18] sm:$0xff]
        %v871 = vld [vmem:[#allocation5 + $0xb20] sm:$0xff]
        %v872 = vld [vmem:[#allocation5 + $0xb28] sm:$0xf]
        %v873 = vld [vmem:[#allocation5 + $0xb2c] sm:$0xff]
        %v874 = vld [vmem:[#allocation5 + $0xb34] sm:$0xff]
        %v875 = vld [vmem:[#allocation5 + $0xb3c] sm:$0xf]
        %v876 = vld [vmem:[#allocation5 + $0xb40] sm:$0xff]
        %v877 = vld [vmem:[#allocation5 + $0xb48] sm:$0xff]
        %v878 = vld [vmem:[#allocation5 + $0xb50] sm:$0xf]
        %v879 = vld [vmem:[#allocation5 + $0xb54] sm:$0xff]
        %v880 = vld [vmem:[#allocation5 + $0xb5c] sm:$0xff]
        %v881 = vld [vmem:[#allocation5 + $0xb64] sm:$0xf]
        %v882 = vld [vmem:[#allocation5 + $0xb68] sm:$0xff]
        %v883 = vld [vmem:[#allocation5 + $0xb70] sm:$0xff]
        %v884 = vld [vmem:[#allocation5 + $0xb78] sm:$0xf]
        %v885 = vld [vmem:[#allocation5 + $0xb7c] sm:$0xff]
        %v886 = vld [vmem:[#allocation5 + $0xb84] sm:$0xff]
        %v887 = vld [vmem:[#allocation5 + $0xb8c] sm:$0xf]
        %v888 = vld [vmem:[#allocation5 + $0xb90] sm:$0xff]
        %v889 = vld [vmem:[#allocation5 + $0xb98] sm:$0xff]
        %v890 = vld [vmem:[#allocation5 + $0xba0] sm:$0xf]
        %v891 = vld [vmem:[#allocation5 + $0xba4] sm:$0xff]
        %v892 = vld [vmem:[#allocation5 + $0xbac] sm:$0xff]
        %v893 = vld [vmem:[#allocation5 + $0xbb4] sm:$0xf]
        %v894 = vld [vmem:[#allocation5 + $0xbb8] sm:$0xff]
        %v895 = vld [vmem:[#allocation5 + $0xbc0] sm:$0xff]
        %v896 = vld [vmem:[#allocation5 + $0xbc8] sm:$0xf]
        %v897 = vld [vmem:[#allocation5 + $0xbcc] sm:$0xff]
        %v898 = vld [vmem:[#allocation5 + $0xbd4] sm:$0xff]
        %v899 = vld [vmem:[#allocation5 + $0xbdc] sm:$0xf]
        %v900 = vld [vmem:[#allocation5 + $0xbe0] sm:$0xff]
        %v901 = vld [vmem:[#allocation5 + $0xbe8] sm:$0xff]
        %v902 = vld [vmem:[#allocation5 + $0xbf0] sm:$0xf]
        %v903 = vld [vmem:[#allocation5 + $0xbf4] sm:$0xff]
        %v904 = vld [vmem:[#allocation5 + $0xbfc] sm:$0xff]
        %v905 = vld [vmem:[#allocation5 + $0xc04] sm:$0xf]
        %v906 = vld [vmem:[#allocation5 + $0xc08] sm:$0xff]
        %v907 = vld [vmem:[#allocation5 + $0xc10] sm:$0xff]
        %v908 = vld [vmem:[#allocation5 + $0xc18] sm:$0xf]
        %v909 = vld [vmem:[#allocation5 + $0xc1c] sm:$0xff]
        %v910 = vld [vmem:[#allocation5 + $0xc24] sm:$0xff]
        %v911 = vld [vmem:[#allocation5 + $0xc2c] sm:$0xf]
        %v912 = vld [vmem:[#allocation5 + $0xc30] sm:$0xff]
        %v913 = vld [vmem:[#allocation5 + $0xc38] sm:$0xff]
        %v914 = vld [vmem:[#allocation5 + $0xc40] sm:$0xf]
        %v915 = vld [vmem:[#allocation5 + $0xc44] sm:$0xff]
        %v916 = vld [vmem:[#allocation5 + $0xc4c] sm:$0xff]
        %v917 = vld [vmem:[#allocation5 + $0xc54] sm:$0xf]
        %v918 = vld [vmem:[#allocation5 + $0xc58] sm:$0xff]
        %v919 = vld [vmem:[#allocation5 + $0xc60] sm:$0xff]
        %v920 = vld [vmem:[#allocation5 + $0xc68] sm:$0xf]
        %v921 = vld [vmem:[#allocation5 + $0xc6c] sm:$0xff]
        %v922 = vld [vmem:[#allocation5 + $0xc74] sm:$0xff]
        %v923 = vld [vmem:[#allocation5 + $0xc7c] sm:$0xf]
        %v924 = vld [vmem:[#allocation5 + $0xc80] sm:$0xff]
        %v925 = vld [vmem:[#allocation5 + $0xc88] sm:$0xff]
        %v926 = vld [vmem:[#allocation5 + $0xc90] sm:$0xf]
        %v927 = vld [vmem:[#allocation5 + $0xc94] sm:$0xff]
        %v928 = vld [vmem:[#allocation5 + $0xc9c] sm:$0xff]
        %v929 = vld [vmem:[#allocation5 + $0xca4] sm:$0xf]
        %v930 = vld [vmem:[#allocation5 + $0xca8] sm:$0xff]
        %v931 = vld [vmem:[#allocation5 + $0xcb0] sm:$0xff]
        %v932 = vld [vmem:[#allocation5 + $0xcb8] sm:$0xf]
        %v933 = vld [vmem:[#allocation5 + $0xcbc] sm:$0xff]
        %v934 = vld [vmem:[#allocation5 + $0xcc4] sm:$0xff]
        %v935 = vld [vmem:[#allocation5 + $0xccc] sm:$0xf]
        %v936 = vld [vmem:[#allocation5 + $0xcd0] sm:$0xff]
        %v937 = vld [vmem:[#allocation5 + $0xcd8] sm:$0xff]
        %v938 = vld [vmem:[#allocation5 + $0xce0] sm:$0xf]
        %v939 = vld [vmem:[#allocation5 + $0xce4] sm:$0xff]
        %v940 = vld [vmem:[#allocation5 + $0xcec] sm:$0xff]
        %v941 = vld [vmem:[#allocation5 + $0xcf4] sm:$0xf]
        %v942 = vld [vmem:[#allocation5 + $0xcf8] sm:$0xff]
        %v943 = vld [vmem:[#allocation5 + $0xd00] sm:$0xff]
        %v944 = vld [vmem:[#allocation5 + $0xd08] sm:$0xf]
        %v945 = vld [vmem:[#allocation5 + $0xd0c] sm:$0xff]
        %v946 = vld [vmem:[#allocation5 + $0xd14] sm:$0xff]
        %v947 = vld [vmem:[#allocation5 + $0xd1c] sm:$0xf]
        %v948 = vld [vmem:[#allocation5 + $0xd20] sm:$0xff]
        %v949 = vld [vmem:[#allocation5 + $0xd28] sm:$0xff]
        %v950 = vld [vmem:[#allocation5 + $0xd30] sm:$0xf]
        %v951 = vld [vmem:[#allocation5 + $0xd34] sm:$0xff]
        %v952 = vld [vmem:[#allocation5 + $0xd3c] sm:$0xff]
        %v953 = vld [vmem:[#allocation5 + $0xd44] sm:$0xf]
        %v954 = vld [vmem:[#allocation5 + $0xd48] sm:$0xff]
        %v955 = vld [vmem:[#allocation5 + $0xd50] sm:$0xff]
        %v956 = vld [vmem:[#allocation5 + $0xd58] sm:$0xf]
        %v957 = vld [vmem:[#allocation5 + $0xd5c] sm:$0xff]
        %v958 = vld [vmem:[#allocation5 + $0xd64] sm:$0xff]
        %v959 = vld [vmem:[#allocation5 + $0xd6c] sm:$0xf]
        %v960 = vld [vmem:[#allocation5 + $0xd70] sm:$0xff]
        %v961 = vld [vmem:[#allocation5 + $0xd78] sm:$0xff]
        %v962 = vld [vmem:[#allocation5 + $0xd80] sm:$0xf]
        %v963 = vld [vmem:[#allocation5 + $0xd84] sm:$0xff]
        %v964 = vld [vmem:[#allocation5 + $0xd8c] sm:$0xff]
        %v965 = vld [vmem:[#allocation5 + $0xd94] sm:$0xf]
        %v966 = vld [vmem:[#allocation5 + $0xd98] sm:$0xff]
        %v967 = vld [vmem:[#allocation5 + $0xda0] sm:$0xff]
        %v968 = vld [vmem:[#allocation5 + $0xda8] sm:$0xf]
        %v969 = vld [vmem:[#allocation5 + $0xdac] sm:$0xff]
        %v970 = vld [vmem:[#allocation5 + $0xdb4] sm:$0xff]
        %v971 = vld [vmem:[#allocation5 + $0xdbc] sm:$0xf]
        %v972 = vld [vmem:[#allocation5 + $0xdc0] sm:$0xff]
        %v973 = vld [vmem:[#allocation5 + $0xdc8] sm:$0xff]
        %v974 = vld [vmem:[#allocation5 + $0xdd0] sm:$0xf]
        %v975 = vld [vmem:[#allocation5 + $0xdd4] sm:$0xff]
        %v976 = vld [vmem:[#allocation5 + $0xddc] sm:$0xff]
        %v977 = vld [vmem:[#allocation5 + $0xde4] sm:$0xf]
        %v978 = vld [vmem:[#allocation5 + $0xde8] sm:$0xff]
        %v979 = vld [vmem:[#allocation5 + $0xdf0] sm:$0xff]
        %v980 = vld [vmem:[#allocation5 + $0xdf8] sm:$0xf]
        %v981 = vld [vmem:[#allocation5 + $0xdfc] sm:$0xff]
        %v982 = vld [vmem:[#allocation5 + $0xe04] sm:$0xff]
        %v983 = vld [vmem:[#allocation5 + $0xe0c] sm:$0xf]
        %v984 = vld [vmem:[#allocation5 + $0xe10] sm:$0xff]
        %v985 = vld [vmem:[#allocation5 + $0xe18] sm:$0xff]
        %v986 = vld [vmem:[#allocation5 + $0xe20] sm:$0xf]
        %v987 = vld [vmem:[#allocation5 + $0xe24] sm:$0xff]
        %v988 = vld [vmem:[#allocation5 + $0xe2c] sm:$0xff]
        %v989 = vld [vmem:[#allocation5 + $0xe34] sm:$0xf]
        %v990 = vld [vmem:[#allocation5 + $0xe38] sm:$0xff]
        %v991 = vld [vmem:[#allocation5 + $0xe40] sm:$0xff]
        %v992 = vld [vmem:[#allocation5 + $0xe48] sm:$0xf]
        %v993 = vld [vmem:[#allocation5 + $0xe4c] sm:$0xff]
        %v994 = vld [vmem:[#allocation5 + $0xe54] sm:$0xff]
        %v995 = vld [vmem:[#allocation5 + $0xe5c] sm:$0xf]
        %v996 = vld [vmem:[#allocation5 + $0xe60] sm:$0xff]
        %v997 = vld [vmem:[#allocation5 + $0xe68] sm:$0xff]
        %v998 = vld [vmem:[#allocation5 + $0xe70] sm:$0xf]
        %v999 = vld [vmem:[#allocation5 + $0xe74] sm:$0xff]
        %v1000 = vld [vmem:[#allocation5 + $0xe7c] sm:$0xff]
        %v1001 = vld [vmem:[#allocation5 + $0xe84] sm:$0xf]
        %v1002 = vld [vmem:[#allocation5 + $0xe88] sm:$0xff]
        %v1003 = vld [vmem:[#allocation5 + $0xe90] sm:$0xff]
        %v1004 = vld [vmem:[#allocation5 + $0xe98] sm:$0xf]
        %v1005 = vld [vmem:[#allocation5 + $0xe9c] sm:$0xff]
        %v1006 = vld [vmem:[#allocation5 + $0xea4] sm:$0xff]
        %v1007 = vld [vmem:[#allocation5 + $0xeac] sm:$0xf]
        %v1008 = vld [vmem:[#allocation5 + $0xeb0] sm:$0xff]
        %v1009 = vld [vmem:[#allocation5 + $0xeb8] sm:$0xff]
        %v1010 = vld [vmem:[#allocation5 + $0xec0] sm:$0xf]
        %v1011 = vld [vmem:[#allocation5 + $0xec4] sm:$0xff]
        %v1012 = vld [vmem:[#allocation5 + $0xecc] sm:$0xff]
        %v1013 = vld [vmem:[#allocation5 + $0xed4] sm:$0xf]
        %v1014 = vld [vmem:[#allocation5 + $0xed8] sm:$0xff]
        %v1015 = vld [vmem:[#allocation5 + $0xee0] sm:$0xff]
        %v1016 = vld [vmem:[#allocation5 + $0xee8] sm:$0xf]
        %v1017 = vld [vmem:[#allocation5 + $0xeec] sm:$0xff]
        %v1018 = vld [vmem:[#allocation5 + $0xef4] sm:$0xff]
        %v1019 = vld [vmem:[#allocation5 + $0xefc] sm:$0xf]
        %v1020 = vld [vmem:[#allocation5 + $0xf00] sm:$0xff]
        %v1021 = vld [vmem:[#allocation5 + $0xf08] sm:$0xff]
        %v1022 = vld [vmem:[#allocation5 + $0xf10] sm:$0xf]
        %v1023 = vld [vmem:[#allocation5 + $0xf14] sm:$0xff]
        %v1024 = vld [vmem:[#allocation5 + $0xf1c] sm:$0xff]
        %v1025 = vld [vmem:[#allocation5 + $0xf24] sm:$0xf]
        %v1026 = vld [vmem:[#allocation5 + $0xf28] sm:$0xff]
        %v1027 = vld [vmem:[#allocation5 + $0xf30] sm:$0xff]
        %v1028 = vld [vmem:[#allocation5 + $0xf38] sm:$0xf]
        %v1029 = vld [vmem:[#allocation5 + $0xf3c] sm:$0xff]
        %v1030 = vld [vmem:[#allocation5 + $0xf44] sm:$0xff]
        %v1031 = vld [vmem:[#allocation5 + $0xf4c] sm:$0xf]
        %v1032 = vld [vmem:[#allocation5 + $0xf50] sm:$0xff]
        %v1033 = vld [vmem:[#allocation5 + $0xf58] sm:$0xff]
        %v1034 = vld [vmem:[#allocation5 + $0xf60] sm:$0xf]
        %v1035 = vld [vmem:[#allocation5 + $0xf64] sm:$0xff]
        %v1036 = vld [vmem:[#allocation5 + $0xf6c] sm:$0xff]
        %v1037 = vld [vmem:[#allocation5 + $0xf74] sm:$0xf]
        %v1038 = vld [vmem:[#allocation5 + $0xf78] sm:$0xff]
        %v1039 = vld [vmem:[#allocation5 + $0xf80] sm:$0xff]
        %v1040 = vld [vmem:[#allocation5 + $0xf88] sm:$0xf]
        %v1041 = vld [vmem:[#allocation5 + $0xf8c] sm:$0xff]
        %v1042 = vld [vmem:[#allocation5 + $0xf94] sm:$0xff]
        %v1043 = vld [vmem:[#allocation5 + $0xf9c] sm:$0xf]
        %v1044 = vld [vmem:[#allocation5 + $0xfa0] sm:$0xff]
        %v1045 = vld [vmem:[#allocation5 + $0xfa8] sm:$0xff]
        %v1046 = vld [vmem:[#allocation5 + $0xfb0] sm:$0xf]
        %v1047 = vld [vmem:[#allocation5 + $0xfb4] sm:$0xff]
        %v1048 = vld [vmem:[#allocation5 + $0xfbc] sm:$0xff]
        %v1049 = vld [vmem:[#allocation5 + $0xfc4] sm:$0xf]
        %v1050 = vld [vmem:[#allocation5 + $0xfc8] sm:$0xff]
        %v1051 = vld [vmem:[#allocation5 + $0xfd0] sm:$0xff]
        %v1052 = vld [vmem:[#allocation5 + $0xfd8] sm:$0xf]
        %v1053 = vld [vmem:[#allocation5 + $0xfdc] sm:$0xff]
        %v1054 = vld [vmem:[#allocation5 + $0xfe4] sm:$0xff]
        %v1055 = vld [vmem:[#allocation5 + $0xfec] sm:$0xf]
        %v1056 = vld [vmem:[#allocation5 + $0xff0] sm:$0xff]
        %v1057 = vld [vmem:[#allocation5 + $0xff8] sm:$0xff]
        %v1058 = vld [vmem:[#allocation5 + $0x1000] sm:$0xf]
        %v1059 = vld [vmem:[#allocation5 + $0x1004] sm:$0xff]
        %v1060 = vld [vmem:[#allocation5 + $0x100c] sm:$0xff]
        %v1061 = vld [vmem:[#allocation5 + $0x1014] sm:$0xf]
        %v1062 = vld [vmem:[#allocation5 + $0x1018] sm:$0xff]
        %v1063 = vld [vmem:[#allocation5 + $0x1020] sm:$0xff]
        %v1064 = vld [vmem:[#allocation5 + $0x1028] sm:$0xf]
        %v1065 = vld [vmem:[#allocation5 + $0x102c] sm:$0xff]
        %v1066 = vld [vmem:[#allocation5 + $0x1034] sm:$0xff]
        %v1067 = vld [vmem:[#allocation5 + $0x103c] sm:$0xf]
        %v1068 = vld [vmem:[#allocation7] sm:$0x1f]
        %v1070 = vlaneseq
        %v1071 = vshrl.u32 %v1070, 7
        %v1072 = vsub.s32 0, %v1071
        %v1073 = vrot.slane %v1068, %v1072
        %v1074 = vlaneseq
        %v1075 = vshrl.u32 %v1074, 7
        %v1076 = vsub.s32 1, %v1075
        %v1077 = vrot.slane %v1068, %v1076
        %v1078 = vlaneseq
        %v1079 = vshrl.u32 %v1078, 7
        %v1080 = vsub.s32 2, %v1079
        %v1081 = vrot.slane %v1068, %v1080
        %v1082 = vlaneseq
        %v1083 = vshrl.u32 %v1082, 7
        %v1084 = vsub.s32 3, %v1083
        %v1085 = vrot.slane %v1068, %v1084
        %v1086 = vlaneseq
        %v1087 = vshrl.u32 %v1086, 7
        %v1088 = vsub.s32 4, %v1087
        %v1089 = vrot.slane %v1068, %v1088
        %v1319 = vunpack.c.l.b16 %v220
        %v1320 = vunpack.c.h.b16 %v220
        %v1321 = vunpack.c.l.b16 %v221
        %v1322 = vunpack.c.h.b16 %v221
        %v1323 = vunpack.c.l.b16 %v222
        %v1324 = vunpack.c.h.b16 %v222
        %v1325 = vunpack.c.l.b16 %v223
        %v1326 = vunpack.c.h.b16 %v223
        %v1327 = vunpack.c.l.b16 %v224
        %v1328 = vunpack.c.h.b16 %v224
        %v1329 = vunpack.c.l.b16 %v225
        %v1330 = vunpack.c.h.b16 %v225
        %v1331 = vunpack.c.l.b16 %v226
        %v1332 = vunpack.c.l.b16 %v227
        %v1333 = vunpack.c.h.b16 %v227
        %v1334 = vunpack.c.l.b16 %v228
        %v1335 = vunpack.c.h.b16 %v228
        %v1336 = vunpack.c.l.b16 %v229
        %v1337 = vunpack.c.h.b16 %v229
        %v1338 = vunpack.c.l.b16 %v230
        %v1339 = vunpack.c.h.b16 %v230
        %v1340 = vunpack.c.l.b16 %v231
        %v1341 = vunpack.c.h.b16 %v231
        %v1342 = vunpack.c.l.b16 %v232
        %v1343 = vunpack.c.h.b16 %v232
        %v1344 = vunpack.c.l.b16 %v233
        %v1345 = vunpack.c.l.b16 %v234
        %v1346 = vunpack.c.h.b16 %v234
        %v1347 = vunpack.c.l.b16 %v235
        %v1348 = vunpack.c.h.b16 %v235
        %v1349 = vunpack.c.l.b16 %v236
        %v1350 = vunpack.c.h.b16 %v236
        %v1351 = vunpack.c.l.b16 %v237
        %v1352 = vunpack.c.h.b16 %v237
        %v1353 = vunpack.c.l.b16 %v238
        %v1354 = vunpack.c.h.b16 %v238
        %v1355 = vunpack.c.l.b16 %v239
        %v1356 = vunpack.c.h.b16 %v239
        %v1357 = vunpack.c.l.b16 %v240
        %v1358 = vunpack.c.l.b16 %v241
        %v1359 = vunpack.c.h.b16 %v241
        %v1360 = vunpack.c.l.b16 %v242
        %v1361 = vunpack.c.h.b16 %v242
        %v1362 = vunpack.c.l.b16 %v243
        %v1363 = vunpack.c.h.b16 %v243
        %v1364 = vunpack.c.l.b16 %v244
        %v1365 = vunpack.c.h.b16 %v244
        %v1366 = vunpack.c.l.b16 %v245
        %v1367 = vunpack.c.h.b16 %v245
        %v1368 = vunpack.c.l.b16 %v246
        %v1369 = vunpack.c.h.b16 %v246
        %v1370 = vunpack.c.l.b16 %v247
        %v1371 = vunpack.c.l.b16 %v248
        %v1372 = vunpack.c.h.b16 %v248
        %v1373 = vunpack.c.l.b16 %v249
        %v1374 = vunpack.c.h.b16 %v249
        %v1375 = vunpack.c.l.b16 %v250
        %v1376 = vunpack.c.h.b16 %v250
        %v1377 = vunpack.c.l.b16 %v251
        %v1378 = vunpack.c.h.b16 %v251
        %v1379 = vunpack.c.l.b16 %v252
        %v1380 = vunpack.c.h.b16 %v252
        %v1381 = vunpack.c.l.b16 %v253
        %v1382 = vunpack.c.h.b16 %v253
        %v1383 = vunpack.c.l.b16 %v254
        %v1384 = vunpack.c.l.b16 %v255
        %v1385 = vunpack.c.h.b16 %v255
        %v1386 = vunpack.c.l.b16 %v256
        %v1387 = vunpack.c.h.b16 %v256
        %v1388 = vunpack.c.l.b16 %v257
        %v1389 = vunpack.c.h.b16 %v257
        %v1390 = vunpack.c.l.b16 %v258
        %v1391 = vunpack.c.h.b16 %v258
        %v1392 = vunpack.c.l.b16 %v259
        %v1393 = vunpack.c.h.b16 %v259
        %v1394 = vunpack.c.l.b16 %v260
        %v1395 = vunpack.c.h.b16 %v260
        %v1396 = vunpack.c.l.b16 %v261
        %v1397 = vunpack.c.l.b16 %v262
        %v1398 = vunpack.c.h.b16 %v262
        %v1399 = vunpack.c.l.b16 %v263
        %v1400 = vunpack.c.h.b16 %v263
        %v1401 = vunpack.c.l.b16 %v264
        %v1402 = vunpack.c.h.b16 %v264
        %v1403 = vunpack.c.l.b16 %v265
        %v1404 = vunpack.c.h.b16 %v265
        %v1405 = vunpack.c.l.b16 %v266
        %v1406 = vunpack.c.h.b16 %v266
        %v1407 = vunpack.c.l.b16 %v267
        %v1408 = vunpack.c.h.b16 %v267
        %v1409 = vunpack.c.l.b16 %v268
        %v1410 = vunpack.c.l.b16 %v269
        %v1411 = vunpack.c.h.b16 %v269
        %v1412 = vunpack.c.l.b16 %v270
        %v1413 = vunpack.c.h.b16 %v270
        %v1414 = vunpack.c.l.b16 %v271
        %v1415 = vunpack.c.h.b16 %v271
        %v1416 = vunpack.c.l.b16 %v272
        %v1417 = vunpack.c.h.b16 %v272
        %v1418 = vunpack.c.l.b16 %v273
        %v1419 = vunpack.c.h.b16 %v273
        %v1420 = vunpack.c.l.b16 %v274
        %v1421 = vunpack.c.h.b16 %v274
        %v1422 = vunpack.c.l.b16 %v275
        %v1423 = vunpack.c.l.b16 %v276
        %v1424 = vunpack.c.h.b16 %v276
        %v1425 = vunpack.c.l.b16 %v277
        %v1426 = vunpack.c.h.b16 %v277
        %v1427 = vunpack.c.l.b16 %v278
        %v1428 = vunpack.c.h.b16 %v278
        %v1429 = vunpack.c.l.b16 %v279
        %v1430 = vunpack.c.h.b16 %v279
        %v1431 = vunpack.c.l.b16 %v280
        %v1432 = vunpack.c.h.b16 %v280
        %v1433 = vunpack.c.l.b16 %v281
        %v1434 = vunpack.c.h.b16 %v281
        %v1435 = vunpack.c.l.b16 %v282
        %v1436 = vunpack.c.l.b16 %v283
        %v1437 = vunpack.c.h.b16 %v283
        %v1438 = vunpack.c.l.b16 %v284
        %v1439 = vunpack.c.h.b16 %v284
        %v1440 = vunpack.c.l.b16 %v285
        %v1441 = vunpack.c.h.b16 %v285
        %v1442 = vunpack.c.l.b16 %v286
        %v1443 = vunpack.c.h.b16 %v286
        %v1444 = vunpack.c.l.b16 %v287
        %v1445 = vunpack.c.h.b16 %v287
        %v1446 = vunpack.c.l.b16 %v288
        %v1447 = vunpack.c.h.b16 %v288
        %v1448 = vunpack.c.l.b16 %v289
        %v1449 = vunpack.c.l.b16 %v290
        %v1450 = vunpack.c.h.b16 %v290
        %v1451 = vunpack.c.l.b16 %v291
        %v1452 = vunpack.c.h.b16 %v291
        %v1453 = vunpack.c.l.b16 %v292
        %v1454 = vunpack.c.h.b16 %v292
        %v1455 = vunpack.c.l.b16 %v293
        %v1456 = vunpack.c.h.b16 %v293
        %v1457 = vunpack.c.l.b16 %v294
        %v1458 = vunpack.c.h.b16 %v294
        %v1459 = vunpack.c.l.b16 %v295
        %v1460 = vunpack.c.h.b16 %v295
        %v1461 = vunpack.c.l.b16 %v296
        %v1462 = vunpack.c.l.b16 %v297
        %v1463 = vunpack.c.h.b16 %v297
        %v1464 = vunpack.c.l.b16 %v298
        %v1465 = vunpack.c.h.b16 %v298
        %v1466 = vunpack.c.l.b16 %v299
        %v1467 = vunpack.c.h.b16 %v299
        %v1468 = vunpack.c.l.b16 %v300
        %v1469 = vunpack.c.h.b16 %v300
        %v1470 = vunpack.c.l.b16 %v301
        %v1471 = vunpack.c.h.b16 %v301
        %v1472 = vunpack.c.l.b16 %v302
        %v1473 = vunpack.c.h.b16 %v302
        %v1474 = vunpack.c.l.b16 %v303
        %v1475 = vunpack.c.l.b16 %v304
        %v1476 = vunpack.c.h.b16 %v304
        %v1477 = vunpack.c.l.b16 %v305
        %v1478 = vunpack.c.h.b16 %v305
        %v1479 = vunpack.c.l.b16 %v306
        %v1480 = vunpack.c.h.b16 %v306
        %v1481 = vunpack.c.l.b16 %v307
        %v1482 = vunpack.c.h.b16 %v307
        %v1483 = vunpack.c.l.b16 %v308
        %v1484 = vunpack.c.h.b16 %v308
        %v1485 = vunpack.c.l.b16 %v309
        %v1486 = vunpack.c.h.b16 %v309
        %v1487 = vunpack.c.l.b16 %v310
        %v1488 = vunpack.c.l.b16 %v311
        %v1489 = vunpack.c.h.b16 %v311
        %v1490 = vunpack.c.l.b16 %v312
        %v1491 = vunpack.c.h.b16 %v312
        %v1492 = vunpack.c.l.b16 %v313
        %v1493 = vunpack.c.h.b16 %v313
        %v1494 = vunpack.c.l.b16 %v314
        %v1495 = vunpack.c.h.b16 %v314
        %v1496 = vunpack.c.l.b16 %v315
        %v1497 = vunpack.c.h.b16 %v315
        %v1498 = vunpack.c.l.b16 %v316
        %v1499 = vunpack.c.h.b16 %v316
        %v1500 = vunpack.c.l.b16 %v317
        %v1501 = vunpack.c.l.b16 %v318
        %v1502 = vunpack.c.h.b16 %v318
        %v1503 = vunpack.c.l.b16 %v319
        %v1504 = vunpack.c.h.b16 %v319
        %v1505 = vunpack.c.l.b16 %v320
        %v1506 = vunpack.c.h.b16 %v320
        %v1507 = vunpack.c.l.b16 %v321
        %v1508 = vunpack.c.h.b16 %v321
        %v1509 = vunpack.c.l.b16 %v322
        %v1510 = vunpack.c.h.b16 %v322
        %v1511 = vunpack.c.l.b16 %v323
        %v1512 = vunpack.c.h.b16 %v323
        %v1513 = vunpack.c.l.b16 %v324
        %v1514 = vunpack.c.l.b16 %v325
        %v1515 = vunpack.c.h.b16 %v325
        %v1516 = vunpack.c.l.b16 %v326
        %v1517 = vunpack.c.h.b16 %v326
        %v1518 = vunpack.c.l.b16 %v327
        %v1519 = vunpack.c.h.b16 %v327
        %v1520 = vunpack.c.l.b16 %v328
        %v1521 = vunpack.c.h.b16 %v328
        %v1522 = vunpack.c.l.b16 %v329
        %v1523 = vunpack.c.h.b16 %v329
        %v1524 = vunpack.c.l.b16 %v330
        %v1525 = vunpack.c.h.b16 %v330
        %v1526 = vunpack.c.l.b16 %v331
        %v1527 = vunpack.c.l.b16 %v332
        %v1528 = vunpack.c.h.b16 %v332
        %v1529 = vunpack.c.l.b16 %v333
        %v1530 = vunpack.c.h.b16 %v333
        %v1531 = vunpack.c.l.b16 %v334
        %v1532 = vunpack.c.h.b16 %v334
        %v1533 = vunpack.c.l.b16 %v335
        %v1534 = vunpack.c.h.b16 %v335
        %v1535 = vunpack.c.l.b16 %v336
        %v1536 = vunpack.c.h.b16 %v336
        %v1537 = vunpack.c.l.b16 %v337
        %v1538 = vunpack.c.h.b16 %v337
        %v1539 = vunpack.c.l.b16 %v338
        %v1540 = vunpack.c.l.b16 %v339
        %v1541 = vunpack.c.h.b16 %v339
        %v1542 = vunpack.c.l.b16 %v340
        %v1543 = vunpack.c.h.b16 %v340
        %v1544 = vunpack.c.l.b16 %v341
        %v1545 = vunpack.c.h.b16 %v341
        %v1546 = vunpack.c.l.b16 %v342
        %v1547 = vunpack.c.h.b16 %v342
        %v1548 = vunpack.c.l.b16 %v343
        %v1549 = vunpack.c.h.b16 %v343
        %v1550 = vunpack.c.l.b16 %v344
        %v1551 = vunpack.c.h.b16 %v344
        %v1552 = vunpack.c.l.b16 %v345
        %v1553 = vunpack.c.l.b16 %v346
        %v1554 = vunpack.c.h.b16 %v346
        %v1555 = vunpack.c.l.b16 %v347
        %v1556 = vunpack.c.h.b16 %v347
        %v1557 = vunpack.c.l.b16 %v348
        %v1558 = vunpack.c.h.b16 %v348
        %v1559 = vunpack.c.l.b16 %v349
        %v1560 = vunpack.c.h.b16 %v349
        %v1561 = vunpack.c.l.b16 %v350
        %v1562 = vunpack.c.h.b16 %v350
        %v1563 = vunpack.c.l.b16 %v351
        %v1564 = vunpack.c.h.b16 %v351
        %v1565 = vunpack.c.l.b16 %v352
        %v1566 = vunpack.c.l.b16 %v353
        %v1567 = vunpack.c.h.b16 %v353
        %v1568 = vunpack.c.l.b16 %v354
        %v1569 = vunpack.c.h.b16 %v354
        %v1570 = vunpack.c.l.b16 %v355
        %v1571 = vunpack.c.h.b16 %v355
        %v1572 = vunpack.c.l.b16 %v356
        %v1573 = vunpack.c.h.b16 %v356
        %v1574 = vunpack.c.l.b16 %v357
        %v1575 = vunpack.c.h.b16 %v357
        %v1576 = vunpack.c.l.b16 %v358
        %v1577 = vunpack.c.h.b16 %v358
        %v1578 = vunpack.c.l.b16 %v359
        %v1579 = vunpack.c.l.b16 %v360
        %v1580 = vunpack.c.h.b16 %v360
        %v1581 = vunpack.c.l.b16 %v361
        %v1582 = vunpack.c.h.b16 %v361
        %v1583 = vunpack.c.l.b16 %v362
        %v1584 = vunpack.c.h.b16 %v362
        %v1585 = vunpack.c.l.b16 %v363
        %v1586 = vunpack.c.h.b16 %v363
        %v1587 = vunpack.c.l.b16 %v364
        %v1588 = vunpack.c.h.b16 %v364
        %v1589 = vunpack.c.l.b16 %v365
        %v1590 = vunpack.c.h.b16 %v365
        %v1591 = vunpack.c.l.b16 %v366
        %v1592 = vunpack.c.l.b16 %v367
        %v1593 = vunpack.c.h.b16 %v367
        %v1594 = vunpack.c.l.b16 %v368
        %v1595 = vunpack.c.h.b16 %v368
        %v1596 = vunpack.c.l.b16 %v369
        %v1597 = vunpack.c.h.b16 %v369
        %v1598 = vunpack.c.l.b16 %v370
        %v1599 = vunpack.c.h.b16 %v370
        %v1600 = vunpack.c.l.b16 %v371
        %v1601 = vunpack.c.h.b16 %v371
        %v1602 = vunpack.c.l.b16 %v372
        %v1603 = vunpack.c.h.b16 %v372
        %v1604 = vunpack.c.l.b16 %v373
        %v1605 = vunpack.c.l.b16 %v374
        %v1606 = vunpack.c.h.b16 %v374
        %v1607 = vunpack.c.l.b16 %v375
        %v1608 = vunpack.c.h.b16 %v375
        %v1609 = vunpack.c.l.b16 %v376
        %v1610 = vunpack.c.h.b16 %v376
        %v1611 = vunpack.c.l.b16 %v377
        %v1612 = vunpack.c.h.b16 %v377
        %v1613 = vunpack.c.l.b16 %v378
        %v1614 = vunpack.c.h.b16 %v378
        %v1615 = vunpack.c.l.b16 %v379
        %v1616 = vunpack.c.h.b16 %v379
        %v1617 = vunpack.c.l.b16 %v380
        %v1618 = vunpack.c.l.b16 %v381
        %v1619 = vunpack.c.h.b16 %v381
        %v1620 = vunpack.c.l.b16 %v382
        %v1621 = vunpack.c.h.b16 %v382
        %v1622 = vunpack.c.l.b16 %v383
        %v1623 = vunpack.c.h.b16 %v383
        %v1624 = vunpack.c.l.b16 %v384
        %v1625 = vunpack.c.h.b16 %v384
        %v1626 = vunpack.c.l.b16 %v385
        %v1627 = vunpack.c.h.b16 %v385
        %v1628 = vunpack.c.l.b16 %v386
        %v1629 = vunpack.c.h.b16 %v386
        %v1630 = vunpack.c.l.b16 %v387
        %v1631 = vunpack.c.l.b16 %v388
        %v1632 = vunpack.c.h.b16 %v388
        %v1633 = vunpack.c.l.b16 %v389
        %v1634 = vunpack.c.h.b16 %v389
        %v1635 = vunpack.c.l.b16 %v390
        %v1636 = vunpack.c.h.b16 %v390
        %v1637 = vunpack.c.l.b16 %v391
        %v1638 = vunpack.c.h.b16 %v391
        %v1639 = vunpack.c.l.b16 %v392
        %v1640 = vunpack.c.h.b16 %v392
        %v1641 = vunpack.c.l.b16 %v393
        %v1642 = vunpack.c.h.b16 %v393
        %v1643 = vunpack.c.l.b16 %v394
        %v1644 = vunpack.c.l.b16 %v395
        %v1645 = vunpack.c.h.b16 %v395
        %v1646 = vunpack.c.l.b16 %v396
        %v1647 = vunpack.c.h.b16 %v396
        %v1648 = vunpack.c.l.b16 %v397
        %v1649 = vunpack.c.h.b16 %v397
        %v1650 = vunpack.c.l.b16 %v398
        %v1651 = vunpack.c.h.b16 %v398
        %v1652 = vunpack.c.l.b16 %v399
        %v1653 = vunpack.c.h.b16 %v399
        %v1654 = vunpack.c.l.b16 %v400
        %v1655 = vunpack.c.h.b16 %v400
        %v1656 = vunpack.c.l.b16 %v401
        %v1657 = vunpack.c.l.b16 %v402
        %v1658 = vunpack.c.h.b16 %v402
        %v1659 = vunpack.c.l.b16 %v403
        %v1660 = vunpack.c.h.b16 %v403
        %v1661 = vunpack.c.l.b16 %v404
        %v1662 = vunpack.c.h.b16 %v404
        %v1663 = vunpack.c.l.b16 %v405
        %v1664 = vunpack.c.h.b16 %v405
        %v1665 = vunpack.c.l.b16 %v406
        %v1666 = vunpack.c.h.b16 %v406
        %v1667 = vunpack.c.l.b16 %v407
        %v1668 = vunpack.c.h.b16 %v407
        %v1669 = vunpack.c.l.b16 %v408
        %v1670 = vunpack.c.l.b16 %v409
        %v1671 = vunpack.c.h.b16 %v409
        %v1672 = vunpack.c.l.b16 %v410
        %v1673 = vunpack.c.h.b16 %v410
        %v1674 = vunpack.c.l.b16 %v411
        %v1675 = vunpack.c.h.b16 %v411
        %v1676 = vunpack.c.l.b16 %v412
        %v1677 = vunpack.c.h.b16 %v412
        %v1678 = vunpack.c.l.b16 %v413
        %v1679 = vunpack.c.h.b16 %v413
        %v1680 = vunpack.c.l.b16 %v414
        %v1681 = vunpack.c.h.b16 %v414
        %v1682 = vunpack.c.l.b16 %v415
        %v1683 = vunpack.c.l.b16 %v416
        %v1684 = vunpack.c.h.b16 %v416
        %v1685 = vunpack.c.l.b16 %v417
        %v1686 = vunpack.c.h.b16 %v417
        %v1687 = vunpack.c.l.b16 %v418
        %v1688 = vunpack.c.h.b16 %v418
        %v1689 = vunpack.c.l.b16 %v419
        %v1690 = vunpack.c.h.b16 %v419
        %v1691 = vunpack.c.l.b16 %v420
        %v1692 = vunpack.c.h.b16 %v420
        %v1693 = vunpack.c.l.b16 %v421
        %v1694 = vunpack.c.h.b16 %v421
        %v1695 = vunpack.c.l.b16 %v422
        %v1696 = vunpack.c.l.b16 %v423
        %v1697 = vunpack.c.h.b16 %v423
        %v1698 = vunpack.c.l.b16 %v424
        %v1699 = vunpack.c.h.b16 %v424
        %v1700 = vunpack.c.l.b16 %v425
        %v1701 = vunpack.c.h.b16 %v425
        %v1702 = vunpack.c.l.b16 %v426
        %v1703 = vunpack.c.h.b16 %v426
        %v1704 = vunpack.c.l.b16 %v427
        %v1705 = vunpack.c.h.b16 %v427
        %v1706 = vunpack.c.l.b16 %v428
        %v1707 = vunpack.c.h.b16 %v428
        %v1708 = vunpack.c.l.b16 %v429
        %v1709 = vunpack.c.l.b16 %v430
        %v1710 = vunpack.c.h.b16 %v430
        %v1711 = vunpack.c.l.b16 %v431
        %v1712 = vunpack.c.h.b16 %v431
        %v1713 = vunpack.c.l.b16 %v432
        %v1714 = vunpack.c.h.b16 %v432
        %v1715 = vunpack.c.l.b16 %v433
        %v1716 = vunpack.c.h.b16 %v433
        %v1717 = vunpack.c.l.b16 %v434
        %v1718 = vunpack.c.h.b16 %v434
        %v1719 = vunpack.c.l.b16 %v435
        %v1720 = vunpack.c.h.b16 %v435
        %v1721 = vunpack.c.l.b16 %v436
        %v1722 = vunpack.c.l.b16 %v437
        %v1723 = vunpack.c.h.b16 %v437
        %v1724 = vunpack.c.l.b16 %v438
        %v1725 = vunpack.c.h.b16 %v438
        %v1726 = vunpack.c.l.b16 %v439
        %v1727 = vunpack.c.h.b16 %v439
        %v1728 = vunpack.c.l.b16 %v440
        %v1729 = vunpack.c.h.b16 %v440
        %v1730 = vunpack.c.l.b16 %v441
        %v1731 = vunpack.c.h.b16 %v441
        %v1732 = vunpack.c.l.b16 %v442
        %v1733 = vunpack.c.h.b16 %v442
        %v1734 = vunpack.c.l.b16 %v443
        %v1735 = vpack.c.b16 %v1332, %v1319
        %v1736 = vpack.c.b16 %v1333, %v1320
        %v1737 = vpack.c.b16 %v1334, %v1321
        %v1738 = vpack.c.b16 %v1335, %v1322
        %v1739 = vpack.c.b16 %v1336, %v1323
        %v1740 = vpack.c.b16 %v1337, %v1324
        %v1741 = vpack.c.b16 %v1338, %v1325
        %v1742 = vpack.c.b16 %v1339, %v1326
        %v1743 = vpack.c.b16 %v1340, %v1327
        %v1744 = vpack.c.b16 %v1341, %v1328
        %v1745 = vpack.c.b16 %v1342, %v1329
        %v1746 = vpack.c.b16 %v1343, %v1330
        %v1747 = vpack.c.b16 %v1344, %v1331
        %v1748 = vpack.c.b16 %v1358, %v1345
        %v1749 = vpack.c.b16 %v1359, %v1346
        %v1750 = vpack.c.b16 %v1360, %v1347
        %v1751 = vpack.c.b16 %v1361, %v1348
        %v1752 = vpack.c.b16 %v1362, %v1349
        %v1753 = vpack.c.b16 %v1363, %v1350
        %v1754 = vpack.c.b16 %v1364, %v1351
        %v1755 = vpack.c.b16 %v1365, %v1352
        %v1756 = vpack.c.b16 %v1366, %v1353
        %v1757 = vpack.c.b16 %v1367, %v1354
        %v1758 = vpack.c.b16 %v1368, %v1355
        %v1759 = vpack.c.b16 %v1369, %v1356
        %v1760 = vpack.c.b16 %v1370, %v1357
        %v1761 = vpack.c.b16 %v1384, %v1371
        %v1762 = vpack.c.b16 %v1385, %v1372
        %v1763 = vpack.c.b16 %v1386, %v1373
        %v1764 = vpack.c.b16 %v1387, %v1374
        %v1765 = vpack.c.b16 %v1388, %v1375
        %v1766 = vpack.c.b16 %v1389, %v1376
        %v1767 = vpack.c.b16 %v1390, %v1377
        %v1768 = vpack.c.b16 %v1391, %v1378
        %v1769 = vpack.c.b16 %v1392, %v1379
        %v1770 = vpack.c.b16 %v1393, %v1380
        %v1771 = vpack.c.b16 %v1394, %v1381
        %v1772 = vpack.c.b16 %v1395, %v1382
        %v1773 = vpack.c.b16 %v1396, %v1383
        %v1774 = vpack.c.b16 %v1410, %v1397
        %v1775 = vpack.c.b16 %v1411, %v1398
        %v1776 = vpack.c.b16 %v1412, %v1399
        %v1777 = vpack.c.b16 %v1413, %v1400
        %v1778 = vpack.c.b16 %v1414, %v1401
        %v1779 = vpack.c.b16 %v1415, %v1402
        %v1780 = vpack.c.b16 %v1416, %v1403
        %v1781 = vpack.c.b16 %v1417, %v1404
        %v1782 = vpack.c.b16 %v1418, %v1405
        %v1783 = vpack.c.b16 %v1419, %v1406
        %v1784 = vpack.c.b16 %v1420, %v1407
        %v1785 = vpack.c.b16 %v1421, %v1408
        %v1786 = vpack.c.b16 %v1422, %v1409
        %v1787 = vpack.c.b16 %v1436, %v1423
        %v1788 = vpack.c.b16 %v1437, %v1424
        %v1789 = vpack.c.b16 %v1438, %v1425
        %v1790 = vpack.c.b16 %v1439, %v1426
        %v1791 = vpack.c.b16 %v1440, %v1427
        %v1792 = vpack.c.b16 %v1441, %v1428
        %v1793 = vpack.c.b16 %v1442, %v1429
        %v1794 = vpack.c.b16 %v1443, %v1430
        %v1795 = vpack.c.b16 %v1444, %v1431
        %v1796 = vpack.c.b16 %v1445, %v1432
        %v1797 = vpack.c.b16 %v1446, %v1433
        %v1798 = vpack.c.b16 %v1447, %v1434
        %v1799 = vpack.c.b16 %v1448, %v1435
        %v1800 = vpack.c.b16 %v1462, %v1449
        %v1801 = vpack.c.b16 %v1463, %v1450
        %v1802 = vpack.c.b16 %v1464, %v1451
        %v1803 = vpack.c.b16 %v1465, %v1452
        %v1804 = vpack.c.b16 %v1466, %v1453
        %v1805 = vpack.c.b16 %v1467, %v1454
        %v1806 = vpack.c.b16 %v1468, %v1455
        %v1807 = vpack.c.b16 %v1469, %v1456
        %v1808 = vpack.c.b16 %v1470, %v1457
        %v1809 = vpack.c.b16 %v1471, %v1458
        %v1810 = vpack.c.b16 %v1472, %v1459
        %v1811 = vpack.c.b16 %v1473, %v1460
        %v1812 = vpack.c.b16 %v1474, %v1461
        %v1813 = vpack.c.b16 %v1488, %v1475
        %v1814 = vpack.c.b16 %v1489, %v1476
        %v1815 = vpack.c.b16 %v1490, %v1477
        %v1816 = vpack.c.b16 %v1491, %v1478
        %v1817 = vpack.c.b16 %v1492, %v1479
        %v1818 = vpack.c.b16 %v1493, %v1480
        %v1819 = vpack.c.b16 %v1494, %v1481
        %v1820 = vpack.c.b16 %v1495, %v1482
        %v1821 = vpack.c.b16 %v1496, %v1483
        %v1822 = vpack.c.b16 %v1497, %v1484
        %v1823 = vpack.c.b16 %v1498, %v1485
        %v1824 = vpack.c.b16 %v1499, %v1486
        %v1825 = vpack.c.b16 %v1500, %v1487
        %v1826 = vpack.c.b16 %v1514, %v1501
        %v1827 = vpack.c.b16 %v1515, %v1502
        %v1828 = vpack.c.b16 %v1516, %v1503
        %v1829 = vpack.c.b16 %v1517, %v1504
        %v1830 = vpack.c.b16 %v1518, %v1505
        %v1831 = vpack.c.b16 %v1519, %v1506
        %v1832 = vpack.c.b16 %v1520, %v1507
        %v1833 = vpack.c.b16 %v1521, %v1508
        %v1834 = vpack.c.b16 %v1522, %v1509
        %v1835 = vpack.c.b16 %v1523, %v1510
        %v1836 = vpack.c.b16 %v1524, %v1511
        %v1837 = vpack.c.b16 %v1525, %v1512
        %v1838 = vpack.c.b16 %v1526, %v1513
        %v1839 = vpack.c.b16 %v1540, %v1527
        %v1840 = vpack.c.b16 %v1541, %v1528
        %v1841 = vpack.c.b16 %v1542, %v1529
        %v1842 = vpack.c.b16 %v1543, %v1530
        %v1843 = vpack.c.b16 %v1544, %v1531
        %v1844 = vpack.c.b16 %v1545, %v1532
        %v1845 = vpack.c.b16 %v1546, %v1533
        %v1846 = vpack.c.b16 %v1547, %v1534
        %v1847 = vpack.c.b16 %v1548, %v1535
        %v1848 = vpack.c.b16 %v1549, %v1536
        %v1849 = vpack.c.b16 %v1550, %v1537
        %v1850 = vpack.c.b16 %v1551, %v1538
        %v1851 = vpack.c.b16 %v1552, %v1539
        %v1852 = vpack.c.b16 %v1566, %v1553
        %v1853 = vpack.c.b16 %v1567, %v1554
        %v1854 = vpack.c.b16 %v1568, %v1555
        %v1855 = vpack.c.b16 %v1569, %v1556
        %v1856 = vpack.c.b16 %v1570, %v1557
        %v1857 = vpack.c.b16 %v1571, %v1558
        %v1858 = vpack.c.b16 %v1572, %v1559
        %v1859 = vpack.c.b16 %v1573, %v1560
        %v1860 = vpack.c.b16 %v1574, %v1561
        %v1861 = vpack.c.b16 %v1575, %v1562
        %v1862 = vpack.c.b16 %v1576, %v1563
        %v1863 = vpack.c.b16 %v1577, %v1564
        %v1864 = vpack.c.b16 %v1578, %v1565
        %v1865 = vpack.c.b16 %v1592, %v1579
        %v1866 = vpack.c.b16 %v1593, %v1580
        %v1867 = vpack.c.b16 %v1594, %v1581
        %v1868 = vpack.c.b16 %v1595, %v1582
        %v1869 = vpack.c.b16 %v1596, %v1583
        %v1870 = vpack.c.b16 %v1597, %v1584
        %v1871 = vpack.c.b16 %v1598, %v1585
        %v1872 = vpack.c.b16 %v1599, %v1586
        %v1873 = vpack.c.b16 %v1600, %v1587
        %v1874 = vpack.c.b16 %v1601, %v1588
        %v1875 = vpack.c.b16 %v1602, %v1589
        %v1876 = vpack.c.b16 %v1603, %v1590
        %v1877 = vpack.c.b16 %v1604, %v1591
        %v1878 = vpack.c.b16 %v1618, %v1605
        %v1879 = vpack.c.b16 %v1619, %v1606
        %v1880 = vpack.c.b16 %v1620, %v1607
        %v1881 = vpack.c.b16 %v1621, %v1608
        %v1882 = vpack.c.b16 %v1622, %v1609
        %v1883 = vpack.c.b16 %v1623, %v1610
        %v1884 = vpack.c.b16 %v1624, %v1611
        %v1885 = vpack.c.b16 %v1625, %v1612
        %v1886 = vpack.c.b16 %v1626, %v1613
        %v1887 = vpack.c.b16 %v1627, %v1614
        %v1888 = vpack.c.b16 %v1628, %v1615
        %v1889 = vpack.c.b16 %v1629, %v1616
        %v1890 = vpack.c.b16 %v1630, %v1617
        %v1891 = vpack.c.b16 %v1644, %v1631
        %v1892 = vpack.c.b16 %v1645, %v1632
        %v1893 = vpack.c.b16 %v1646, %v1633
        %v1894 = vpack.c.b16 %v1647, %v1634
        %v1895 = vpack.c.b16 %v1648, %v1635
        %v1896 = vpack.c.b16 %v1649, %v1636
        %v1897 = vpack.c.b16 %v1650, %v1637
        %v1898 = vpack.c.b16 %v1651, %v1638
        %v1899 = vpack.c.b16 %v1652, %v1639
        %v1900 = vpack.c.b16 %v1653, %v1640
        %v1901 = vpack.c.b16 %v1654, %v1641
        %v1902 = vpack.c.b16 %v1655, %v1642
        %v1903 = vpack.c.b16 %v1656, %v1643
        %v1904 = vpack.c.b16 %v1670, %v1657
        %v1905 = vpack.c.b16 %v1671, %v1658
        %v1906 = vpack.c.b16 %v1672, %v1659
        %v1907 = vpack.c.b16 %v1673, %v1660
        %v1908 = vpack.c.b16 %v1674, %v1661
        %v1909 = vpack.c.b16 %v1675, %v1662
        %v1910 = vpack.c.b16 %v1676, %v1663
        %v1911 = vpack.c.b16 %v1677, %v1664
        %v1912 = vpack.c.b16 %v1678, %v1665
        %v1913 = vpack.c.b16 %v1679, %v1666
        %v1914 = vpack.c.b16 %v1680, %v1667
        %v1915 = vpack.c.b16 %v1681, %v1668
        %v1916 = vpack.c.b16 %v1682, %v1669
        %v1917 = vpack.c.b16 %v1696, %v1683
        %v1918 = vpack.c.b16 %v1697, %v1684
        %v1919 = vpack.c.b16 %v1698, %v1685
        %v1920 = vpack.c.b16 %v1699, %v1686
        %v1921 = vpack.c.b16 %v1700, %v1687
        %v1922 = vpack.c.b16 %v1701, %v1688
        %v1923 = vpack.c.b16 %v1702, %v1689
        %v1924 = vpack.c.b16 %v1703, %v1690
        %v1925 = vpack.c.b16 %v1704, %v1691
        %v1926 = vpack.c.b16 %v1705, %v1692
        %v1927 = vpack.c.b16 %v1706, %v1693
        %v1928 = vpack.c.b16 %v1707, %v1694
        %v1929 = vpack.c.b16 %v1708, %v1695
        %v1930 = vpack.c.b16 %v1722, %v1709
        %v1931 = vpack.c.b16 %v1723, %v1710
        %v1932 = vpack.c.b16 %v1724, %v1711
        %v1933 = vpack.c.b16 %v1725, %v1712
        %v1934 = vpack.c.b16 %v1726, %v1713
        %v1935 = vpack.c.b16 %v1727, %v1714
        %v1936 = vpack.c.b16 %v1728, %v1715
        %v1937 = vpack.c.b16 %v1729, %v1716
        %v1938 = vpack.c.b16 %v1730, %v1717
        %v1939 = vpack.c.b16 %v1731, %v1718
        %v1940 = vpack.c.b16 %v1732, %v1719
        %v1941 = vpack.c.b16 %v1733, %v1720
        %v1942 = vpack.c.b16 %v1734, %v1721
        %v2775 = vunpack.c.l.b16 %v444
        %v2776 = vunpack.c.h.b16 %v444
        %v2777 = vunpack.c.l.b16 %v445
        %v2778 = vunpack.c.h.b16 %v445
        %v2779 = vunpack.c.l.b16 %v446
        %v2780 = vunpack.c.l.b16 %v447
        %v2781 = vunpack.c.h.b16 %v447
        %v2782 = vunpack.c.l.b16 %v448
        %v2783 = vunpack.c.h.b16 %v448
        %v2784 = vunpack.c.l.b16 %v449
        %v2785 = vunpack.c.l.b16 %v450
        %v2786 = vunpack.c.h.b16 %v450
        %v2787 = vunpack.c.l.b16 %v451
        %v2788 = vunpack.c.h.b16 %v451
        %v2789 = vunpack.c.l.b16 %v452
        %v2790 = vunpack.c.l.b16 %v453
        %v2791 = vunpack.c.h.b16 %v453
        %v2792 = vunpack.c.l.b16 %v454
        %v2793 = vunpack.c.h.b16 %v454
        %v2794 = vunpack.c.l.b16 %v455
        %v2795 = vunpack.c.l.b16 %v456
        %v2796 = vunpack.c.h.b16 %v456
        %v2797 = vunpack.c.l.b16 %v457
        %v2798 = vunpack.c.h.b16 %v457
        %v2799 = vunpack.c.l.b16 %v458
        %v2800 = vunpack.c.l.b16 %v459
        %v2801 = vunpack.c.h.b16 %v459
        %v2802 = vunpack.c.l.b16 %v460
        %v2803 = vunpack.c.h.b16 %v460
        %v2804 = vunpack.c.l.b16 %v461
        %v2805 = vunpack.c.l.b16 %v462
        %v2806 = vunpack.c.h.b16 %v462
        %v2807 = vunpack.c.l.b16 %v463
        %v2808 = vunpack.c.h.b16 %v463
        %v2809 = vunpack.c.l.b16 %v464
        %v2810 = vunpack.c.l.b16 %v465
        %v2811 = vunpack.c.h.b16 %v465
        %v2812 = vunpack.c.l.b16 %v466
        %v2813 = vunpack.c.h.b16 %v466
        %v2814 = vunpack.c.l.b16 %v467
        %v2815 = vunpack.c.l.b16 %v468
        %v2816 = vunpack.c.h.b16 %v468
        %v2817 = vunpack.c.l.b16 %v469
        %v2818 = vunpack.c.h.b16 %v469
        %v2819 = vunpack.c.l.b16 %v470
        %v2820 = vunpack.c.l.b16 %v471
        %v2821 = vunpack.c.h.b16 %v471
        %v2822 = vunpack.c.l.b16 %v472
        %v2823 = vunpack.c.h.b16 %v472
        %v2824 = vunpack.c.l.b16 %v473
        %v2825 = vunpack.c.l.b16 %v474
        %v2826 = vunpack.c.h.b16 %v474
        %v2827 = vunpack.c.l.b16 %v475
        %v2828 = vunpack.c.h.b16 %v475
        %v2829 = vunpack.c.l.b16 %v476
        %v2830 = vunpack.c.l.b16 %v477
        %v2831 = vunpack.c.h.b16 %v477
        %v2832 = vunpack.c.l.b16 %v478
        %v2833 = vunpack.c.h.b16 %v478
        %v2834 = vunpack.c.l.b16 %v479
        %v2835 = vunpack.c.l.b16 %v480
        %v2836 = vunpack.c.h.b16 %v480
        %v2837 = vunpack.c.l.b16 %v481
        %v2838 = vunpack.c.h.b16 %v481
        %v2839 = vunpack.c.l.b16 %v482
        %v2840 = vunpack.c.l.b16 %v483
        %v2841 = vunpack.c.h.b16 %v483
        %v2842 = vunpack.c.l.b16 %v484
        %v2843 = vunpack.c.h.b16 %v484
        %v2844 = vunpack.c.l.b16 %v485
        %v2845 = vunpack.c.l.b16 %v486
        %v2846 = vunpack.c.h.b16 %v486
        %v2847 = vunpack.c.l.b16 %v487
        %v2848 = vunpack.c.h.b16 %v487
        %v2849 = vunpack.c.l.b16 %v488
        %v2850 = vunpack.c.l.b16 %v489
        %v2851 = vunpack.c.h.b16 %v489
        %v2852 = vunpack.c.l.b16 %v490
        %v2853 = vunpack.c.h.b16 %v490
        %v2854 = vunpack.c.l.b16 %v491
        %v2855 = vunpack.c.l.b16 %v492
        %v2856 = vunpack.c.h.b16 %v492
        %v2857 = vunpack.c.l.b16 %v493
        %v2858 = vunpack.c.h.b16 %v493
        %v2859 = vunpack.c.l.b16 %v494
        %v2860 = vunpack.c.l.b16 %v495
        %v2861 = vunpack.c.h.b16 %v495
        %v2862 = vunpack.c.l.b16 %v496
        %v2863 = vunpack.c.h.b16 %v496
        %v2864 = vunpack.c.l.b16 %v497
        %v2865 = vunpack.c.l.b16 %v498
        %v2866 = vunpack.c.h.b16 %v498
        %v2867 = vunpack.c.l.b16 %v499
        %v2868 = vunpack.c.h.b16 %v499
        %v2869 = vunpack.c.l.b16 %v500
        %v2870 = vunpack.c.l.b16 %v501
        %v2871 = vunpack.c.h.b16 %v501
        %v2872 = vunpack.c.l.b16 %v502
        %v2873 = vunpack.c.h.b16 %v502
        %v2874 = vunpack.c.l.b16 %v503
        %v2875 = vunpack.c.l.b16 %v504
        %v2876 = vunpack.c.h.b16 %v504
        %v2877 = vunpack.c.l.b16 %v505
        %v2878 = vunpack.c.h.b16 %v505
        %v2879 = vunpack.c.l.b16 %v506
        %v2880 = vunpack.c.l.b16 %v507
        %v2881 = vunpack.c.h.b16 %v507
        %v2882 = vunpack.c.l.b16 %v508
        %v2883 = vunpack.c.h.b16 %v508
        %v2884 = vunpack.c.l.b16 %v509
        %v2885 = vunpack.c.l.b16 %v510
        %v2886 = vunpack.c.h.b16 %v510
        %v2887 = vunpack.c.l.b16 %v511
        %v2888 = vunpack.c.h.b16 %v511
        %v2889 = vunpack.c.l.b16 %v512
        %v2890 = vunpack.c.l.b16 %v513
        %v2891 = vunpack.c.h.b16 %v513
        %v2892 = vunpack.c.l.b16 %v514
        %v2893 = vunpack.c.h.b16 %v514
        %v2894 = vunpack.c.l.b16 %v515
        %v2895 = vunpack.c.l.b16 %v516
        %v2896 = vunpack.c.h.b16 %v516
        %v2897 = vunpack.c.l.b16 %v517
        %v2898 = vunpack.c.h.b16 %v517
        %v2899 = vunpack.c.l.b16 %v518
        %v2900 = vunpack.c.l.b16 %v519
        %v2901 = vunpack.c.h.b16 %v519
        %v2902 = vunpack.c.l.b16 %v520
        %v2903 = vunpack.c.h.b16 %v520
        %v2904 = vunpack.c.l.b16 %v521
        %v2905 = vunpack.c.l.b16 %v522
        %v2906 = vunpack.c.h.b16 %v522
        %v2907 = vunpack.c.l.b16 %v523
        %v2908 = vunpack.c.h.b16 %v523
        %v2909 = vunpack.c.l.b16 %v524
        %v2910 = vunpack.c.l.b16 %v525
        %v2911 = vunpack.c.h.b16 %v525
        %v2912 = vunpack.c.l.b16 %v526
        %v2913 = vunpack.c.h.b16 %v526
        %v2914 = vunpack.c.l.b16 %v527
        %v2915 = vunpack.c.l.b16 %v528
        %v2916 = vunpack.c.h.b16 %v528
        %v2917 = vunpack.c.l.b16 %v529
        %v2918 = vunpack.c.h.b16 %v529
        %v2919 = vunpack.c.l.b16 %v530
        %v2920 = vunpack.c.l.b16 %v531
        %v2921 = vunpack.c.h.b16 %v531
        %v2922 = vunpack.c.l.b16 %v532
        %v2923 = vunpack.c.h.b16 %v532
        %v2924 = vunpack.c.l.b16 %v533
        %v2925 = vunpack.c.l.b16 %v534
        %v2926 = vunpack.c.h.b16 %v534
        %v2927 = vunpack.c.l.b16 %v535
        %v2928 = vunpack.c.h.b16 %v535
        %v2929 = vunpack.c.l.b16 %v536
        %v2930 = vunpack.c.l.b16 %v537
        %v2931 = vunpack.c.h.b16 %v537
        %v2932 = vunpack.c.l.b16 %v538
        %v2933 = vunpack.c.h.b16 %v538
        %v2934 = vunpack.c.l.b16 %v539
        %v2935 = vunpack.c.l.b16 %v540
        %v2936 = vunpack.c.h.b16 %v540
        %v2937 = vunpack.c.l.b16 %v541
        %v2938 = vunpack.c.h.b16 %v541
        %v2939 = vunpack.c.l.b16 %v542
        %v2940 = vunpack.c.l.b16 %v543
        %v2941 = vunpack.c.h.b16 %v543
        %v2942 = vunpack.c.l.b16 %v544
        %v2943 = vunpack.c.h.b16 %v544
        %v2944 = vunpack.c.l.b16 %v545
        %v2945 = vunpack.c.l.b16 %v546
        %v2946 = vunpack.c.h.b16 %v546
        %v2947 = vunpack.c.l.b16 %v547
        %v2948 = vunpack.c.h.b16 %v547
        %v2949 = vunpack.c.l.b16 %v548
        %v2950 = vunpack.c.l.b16 %v549
        %v2951 = vunpack.c.h.b16 %v549
        %v2952 = vunpack.c.l.b16 %v550
        %v2953 = vunpack.c.h.b16 %v550
        %v2954 = vunpack.c.l.b16 %v551
        %v2955 = vunpack.c.l.b16 %v552
        %v2956 = vunpack.c.h.b16 %v552
        %v2957 = vunpack.c.l.b16 %v553
        %v2958 = vunpack.c.h.b16 %v553
        %v2959 = vunpack.c.l.b16 %v554
        %v2960 = vunpack.c.l.b16 %v555
        %v2961 = vunpack.c.h.b16 %v555
        %v2962 = vunpack.c.l.b16 %v556
        %v2963 = vunpack.c.h.b16 %v556
        %v2964 = vunpack.c.l.b16 %v557
        %v2965 = vunpack.c.l.b16 %v558
        %v2966 = vunpack.c.h.b16 %v558
        %v2967 = vunpack.c.l.b16 %v559
        %v2968 = vunpack.c.h.b16 %v559
        %v2969 = vunpack.c.l.b16 %v560
        %v2970 = vunpack.c.l.b16 %v561
        %v2971 = vunpack.c.h.b16 %v561
        %v2972 = vunpack.c.l.b16 %v562
        %v2973 = vunpack.c.h.b16 %v562
        %v2974 = vunpack.c.l.b16 %v563
        %v2975 = vunpack.c.l.b16 %v564
        %v2976 = vunpack.c.h.b16 %v564
        %v2977 = vunpack.c.l.b16 %v565
        %v2978 = vunpack.c.h.b16 %v565
        %v2979 = vunpack.c.l.b16 %v566
        %v2980 = vunpack.c.l.b16 %v567
        %v2981 = vunpack.c.h.b16 %v567
        %v2982 = vunpack.c.l.b16 %v568
        %v2983 = vunpack.c.h.b16 %v568
        %v2984 = vunpack.c.l.b16 %v569
        %v2985 = vunpack.c.l.b16 %v570
        %v2986 = vunpack.c.h.b16 %v570
        %v2987 = vunpack.c.l.b16 %v571
        %v2988 = vunpack.c.h.b16 %v571
        %v2989 = vunpack.c.l.b16 %v572
        %v2990 = vunpack.c.l.b16 %v573
        %v2991 = vunpack.c.h.b16 %v573
        %v2992 = vunpack.c.l.b16 %v574
        %v2993 = vunpack.c.h.b16 %v574
        %v2994 = vunpack.c.l.b16 %v575
        %v2995 = vunpack.c.l.b16 %v576
        %v2996 = vunpack.c.h.b16 %v576
        %v2997 = vunpack.c.l.b16 %v577
        %v2998 = vunpack.c.h.b16 %v577
        %v2999 = vunpack.c.l.b16 %v578
        %v3000 = vunpack.c.l.b16 %v579
        %v3001 = vunpack.c.h.b16 %v579
        %v3002 = vunpack.c.l.b16 %v580
        %v3003 = vunpack.c.h.b16 %v580
        %v3004 = vunpack.c.l.b16 %v581
        %v3005 = vunpack.c.l.b16 %v582
        %v3006 = vunpack.c.h.b16 %v582
        %v3007 = vunpack.c.l.b16 %v583
        %v3008 = vunpack.c.h.b16 %v583
        %v3009 = vunpack.c.l.b16 %v584
        %v3010 = vunpack.c.l.b16 %v585
        %v3011 = vunpack.c.h.b16 %v585
        %v3012 = vunpack.c.l.b16 %v586
        %v3013 = vunpack.c.h.b16 %v586
        %v3014 = vunpack.c.l.b16 %v587
        %v3015 = vunpack.c.l.b16 %v588
        %v3016 = vunpack.c.h.b16 %v588
        %v3017 = vunpack.c.l.b16 %v589
        %v3018 = vunpack.c.h.b16 %v589
        %v3019 = vunpack.c.l.b16 %v590
        %v3020 = vunpack.c.l.b16 %v591
        %v3021 = vunpack.c.h.b16 %v591
        %v3022 = vunpack.c.l.b16 %v592
        %v3023 = vunpack.c.h.b16 %v592
        %v3024 = vunpack.c.l.b16 %v593
        %v3025 = vunpack.c.l.b16 %v594
        %v3026 = vunpack.c.h.b16 %v594
        %v3027 = vunpack.c.l.b16 %v595
        %v3028 = vunpack.c.h.b16 %v595
        %v3029 = vunpack.c.l.b16 %v596
        %v3030 = vunpack.c.l.b16 %v597
        %v3031 = vunpack.c.h.b16 %v597
        %v3032 = vunpack.c.l.b16 %v598
        %v3033 = vunpack.c.h.b16 %v598
        %v3034 = vunpack.c.l.b16 %v599
        %v3035 = vunpack.c.l.b16 %v600
        %v3036 = vunpack.c.h.b16 %v600
        %v3037 = vunpack.c.l.b16 %v601
        %v3038 = vunpack.c.h.b16 %v601
        %v3039 = vunpack.c.l.b16 %v602
        %v3040 = vunpack.c.l.b16 %v603
        %v3041 = vunpack.c.h.b16 %v603
        %v3042 = vunpack.c.l.b16 %v604
        %v3043 = vunpack.c.h.b16 %v604
        %v3044 = vunpack.c.l.b16 %v605
        %v3045 = vunpack.c.l.b16 %v606
        %v3046 = vunpack.c.h.b16 %v606
        %v3047 = vunpack.c.l.b16 %v607
        %v3048 = vunpack.c.h.b16 %v607
        %v3049 = vunpack.c.l.b16 %v608
        %v3050 = vunpack.c.l.b16 %v609
        %v3051 = vunpack.c.h.b16 %v609
        %v3052 = vunpack.c.l.b16 %v610
        %v3053 = vunpack.c.h.b16 %v610
        %v3054 = vunpack.c.l.b16 %v611
        %v3055 = vunpack.c.l.b16 %v612
        %v3056 = vunpack.c.h.b16 %v612
        %v3057 = vunpack.c.l.b16 %v613
        %v3058 = vunpack.c.h.b16 %v613
        %v3059 = vunpack.c.l.b16 %v614
        %v3060 = vunpack.c.l.b16 %v615
        %v3061 = vunpack.c.h.b16 %v615
        %v3062 = vunpack.c.l.b16 %v616
        %v3063 = vunpack.c.h.b16 %v616
        %v3064 = vunpack.c.l.b16 %v617
        %v3065 = vunpack.c.l.b16 %v618
        %v3066 = vunpack.c.h.b16 %v618
        %v3067 = vunpack.c.l.b16 %v619
        %v3068 = vunpack.c.h.b16 %v619
        %v3069 = vunpack.c.l.b16 %v620
        %v3070 = vunpack.c.l.b16 %v621
        %v3071 = vunpack.c.h.b16 %v621
        %v3072 = vunpack.c.l.b16 %v622
        %v3073 = vunpack.c.h.b16 %v622
        %v3074 = vunpack.c.l.b16 %v623
        %v3075 = vunpack.c.l.b16 %v624
        %v3076 = vunpack.c.h.b16 %v624
        %v3077 = vunpack.c.l.b16 %v625
        %v3078 = vunpack.c.h.b16 %v625
        %v3079 = vunpack.c.l.b16 %v626
        %v3080 = vunpack.c.l.b16 %v627
        %v3081 = vunpack.c.h.b16 %v627
        %v3082 = vunpack.c.l.b16 %v628
        %v3083 = vunpack.c.h.b16 %v628
        %v3084 = vunpack.c.l.b16 %v629
        %v3085 = vunpack.c.l.b16 %v630
        %v3086 = vunpack.c.h.b16 %v630
        %v3087 = vunpack.c.l.b16 %v631
        %v3088 = vunpack.c.h.b16 %v631
        %v3089 = vunpack.c.l.b16 %v632
        %v3090 = vunpack.c.l.b16 %v633
        %v3091 = vunpack.c.h.b16 %v633
        %v3092 = vunpack.c.l.b16 %v634
        %v3093 = vunpack.c.h.b16 %v634
        %v3094 = vunpack.c.l.b16 %v635
        %v3095 = vunpack.c.l.b16 %v636
        %v3096 = vunpack.c.h.b16 %v636
        %v3097 = vunpack.c.l.b16 %v637
        %v3098 = vunpack.c.h.b16 %v637
        %v3099 = vunpack.c.l.b16 %v638
        %v3100 = vunpack.c.l.b16 %v639
        %v3101 = vunpack.c.h.b16 %v639
        %v3102 = vunpack.c.l.b16 %v640
        %v3103 = vunpack.c.h.b16 %v640
        %v3104 = vunpack.c.l.b16 %v641
        %v3105 = vunpack.c.l.b16 %v642
        %v3106 = vunpack.c.h.b16 %v642
        %v3107 = vunpack.c.l.b16 %v643
        %v3108 = vunpack.c.h.b16 %v643
        %v3109 = vunpack.c.l.b16 %v644
        %v3110 = vunpack.c.l.b16 %v645
        %v3111 = vunpack.c.h.b16 %v645
        %v3112 = vunpack.c.l.b16 %v646
        %v3113 = vunpack.c.h.b16 %v646
        %v3114 = vunpack.c.l.b16 %v647
        %v3115 = vunpack.c.l.b16 %v648
        %v3116 = vunpack.c.h.b16 %v648
        %v3117 = vunpack.c.l.b16 %v649
        %v3118 = vunpack.c.h.b16 %v649
        %v3119 = vunpack.c.l.b16 %v650
        %v3120 = vunpack.c.l.b16 %v651
        %v3121 = vunpack.c.h.b16 %v651
        %v3122 = vunpack.c.l.b16 %v652
        %v3123 = vunpack.c.h.b16 %v652
        %v3124 = vunpack.c.l.b16 %v653
        %v3125 = vunpack.c.l.b16 %v654
        %v3126 = vunpack.c.h.b16 %v654
        %v3127 = vunpack.c.l.b16 %v655
        %v3128 = vunpack.c.h.b16 %v655
        %v3129 = vunpack.c.l.b16 %v656
        %v3130 = vunpack.c.l.b16 %v657
        %v3131 = vunpack.c.h.b16 %v657
        %v3132 = vunpack.c.l.b16 %v658
        %v3133 = vunpack.c.h.b16 %v658
        %v3134 = vunpack.c.l.b16 %v659
        %v3135 = vunpack.c.l.b16 %v660
        %v3136 = vunpack.c.h.b16 %v660
        %v3137 = vunpack.c.l.b16 %v661
        %v3138 = vunpack.c.h.b16 %v661
        %v3139 = vunpack.c.l.b16 %v662
        %v3140 = vunpack.c.l.b16 %v663
        %v3141 = vunpack.c.h.b16 %v663
        %v3142 = vunpack.c.l.b16 %v664
        %v3143 = vunpack.c.h.b16 %v664
        %v3144 = vunpack.c.l.b16 %v665
        %v3145 = vunpack.c.l.b16 %v666
        %v3146 = vunpack.c.h.b16 %v666
        %v3147 = vunpack.c.l.b16 %v667
        %v3148 = vunpack.c.h.b16 %v667
        %v3149 = vunpack.c.l.b16 %v668
        %v3150 = vunpack.c.l.b16 %v669
        %v3151 = vunpack.c.h.b16 %v669
        %v3152 = vunpack.c.l.b16 %v670
        %v3153 = vunpack.c.h.b16 %v670
        %v3154 = vunpack.c.l.b16 %v671
        %v3155 = vunpack.c.l.b16 %v672
        %v3156 = vunpack.c.h.b16 %v672
        %v3157 = vunpack.c.l.b16 %v673
        %v3158 = vunpack.c.h.b16 %v673
        %v3159 = vunpack.c.l.b16 %v674
        %v3160 = vunpack.c.l.b16 %v675
        %v3161 = vunpack.c.h.b16 %v675
        %v3162 = vunpack.c.l.b16 %v676
        %v3163 = vunpack.c.h.b16 %v676
        %v3164 = vunpack.c.l.b16 %v677
        %v3165 = vunpack.c.l.b16 %v678
        %v3166 = vunpack.c.h.b16 %v678
        %v3167 = vunpack.c.l.b16 %v679
        %v3168 = vunpack.c.h.b16 %v679
        %v3169 = vunpack.c.l.b16 %v680
        %v3170 = vunpack.c.l.b16 %v681
        %v3171 = vunpack.c.h.b16 %v681
        %v3172 = vunpack.c.l.b16 %v682
        %v3173 = vunpack.c.h.b16 %v682
        %v3174 = vunpack.c.l.b16 %v683
        %v3175 = vunpack.c.l.b16 %v684
        %v3176 = vunpack.c.h.b16 %v684
        %v3177 = vunpack.c.l.b16 %v685
        %v3178 = vunpack.c.h.b16 %v685
        %v3179 = vunpack.c.l.b16 %v686
        %v3180 = vunpack.c.l.b16 %v687
        %v3181 = vunpack.c.h.b16 %v687
        %v3182 = vunpack.c.l.b16 %v688
        %v3183 = vunpack.c.h.b16 %v688
        %v3184 = vunpack.c.l.b16 %v689
        %v3185 = vunpack.c.l.b16 %v690
        %v3186 = vunpack.c.h.b16 %v690
        %v3187 = vunpack.c.l.b16 %v691
        %v3188 = vunpack.c.h.b16 %v691
        %v3189 = vunpack.c.l.b16 %v692
        %v3190 = vunpack.c.l.b16 %v693
        %v3191 = vunpack.c.h.b16 %v693
        %v3192 = vunpack.c.l.b16 %v694
        %v3193 = vunpack.c.h.b16 %v694
        %v3194 = vunpack.c.l.b16 %v695
        %v3195 = vunpack.c.l.b16 %v696
        %v3196 = vunpack.c.h.b16 %v696
        %v3197 = vunpack.c.l.b16 %v697
        %v3198 = vunpack.c.h.b16 %v697
        %v3199 = vunpack.c.l.b16 %v698
        %v3200 = vunpack.c.l.b16 %v699
        %v3201 = vunpack.c.h.b16 %v699
        %v3202 = vunpack.c.l.b16 %v700
        %v3203 = vunpack.c.h.b16 %v700
        %v3204 = vunpack.c.l.b16 %v701
        %v3205 = vunpack.c.l.b16 %v702
        %v3206 = vunpack.c.h.b16 %v702
        %v3207 = vunpack.c.l.b16 %v703
        %v3208 = vunpack.c.h.b16 %v703
        %v3209 = vunpack.c.l.b16 %v704
        %v3210 = vunpack.c.l.b16 %v705
        %v3211 = vunpack.c.h.b16 %v705
        %v3212 = vunpack.c.l.b16 %v706
        %v3213 = vunpack.c.h.b16 %v706
        %v3214 = vunpack.c.l.b16 %v707
        %v3215 = vunpack.c.l.b16 %v708
        %v3216 = vunpack.c.h.b16 %v708
        %v3217 = vunpack.c.l.b16 %v709
        %v3218 = vunpack.c.h.b16 %v709
        %v3219 = vunpack.c.l.b16 %v710
        %v3220 = vunpack.c.l.b16 %v711
        %v3221 = vunpack.c.h.b16 %v711
        %v3222 = vunpack.c.l.b16 %v712
        %v3223 = vunpack.c.h.b16 %v712
        %v3224 = vunpack.c.l.b16 %v713
        %v3225 = vunpack.c.l.b16 %v714
        %v3226 = vunpack.c.h.b16 %v714
        %v3227 = vunpack.c.l.b16 %v715
        %v3228 = vunpack.c.h.b16 %v715
        %v3229 = vunpack.c.l.b16 %v716
        %v3230 = vunpack.c.l.b16 %v717
        %v3231 = vunpack.c.h.b16 %v717
        %v3232 = vunpack.c.l.b16 %v718
        %v3233 = vunpack.c.h.b16 %v718
        %v3234 = vunpack.c.l.b16 %v719
        %v3235 = vunpack.c.l.b16 %v720
        %v3236 = vunpack.c.h.b16 %v720
        %v3237 = vunpack.c.l.b16 %v721
        %v3238 = vunpack.c.h.b16 %v721
        %v3239 = vunpack.c.l.b16 %v722
        %v3240 = vunpack.c.l.b16 %v723
        %v3241 = vunpack.c.h.b16 %v723
        %v3242 = vunpack.c.l.b16 %v724
        %v3243 = vunpack.c.h.b16 %v724
        %v3244 = vunpack.c.l.b16 %v725
        %v3245 = vunpack.c.l.b16 %v726
        %v3246 = vunpack.c.h.b16 %v726
        %v3247 = vunpack.c.l.b16 %v727
        %v3248 = vunpack.c.h.b16 %v727
        %v3249 = vunpack.c.l.b16 %v728
        %v3250 = vunpack.c.l.b16 %v729
        %v3251 = vunpack.c.h.b16 %v729
        %v3252 = vunpack.c.l.b16 %v730
        %v3253 = vunpack.c.h.b16 %v730
        %v3254 = vunpack.c.l.b16 %v731
        %v3255 = vunpack.c.l.b16 %v732
        %v3256 = vunpack.c.h.b16 %v732
        %v3257 = vunpack.c.l.b16 %v733
        %v3258 = vunpack.c.h.b16 %v733
        %v3259 = vunpack.c.l.b16 %v734
        %v3260 = vunpack.c.l.b16 %v735
        %v3261 = vunpack.c.h.b16 %v735
        %v3262 = vunpack.c.l.b16 %v736
        %v3263 = vunpack.c.h.b16 %v736
        %v3264 = vunpack.c.l.b16 %v737
        %v3265 = vunpack.c.l.b16 %v738
        %v3266 = vunpack.c.h.b16 %v738
        %v3267 = vunpack.c.l.b16 %v739
        %v3268 = vunpack.c.h.b16 %v739
        %v3269 = vunpack.c.l.b16 %v740
        %v3270 = vunpack.c.l.b16 %v741
        %v3271 = vunpack.c.h.b16 %v741
        %v3272 = vunpack.c.l.b16 %v742
        %v3273 = vunpack.c.h.b16 %v742
        %v3274 = vunpack.c.l.b16 %v743
        %v3275 = vunpack.c.l.b16 %v744
        %v3276 = vunpack.c.h.b16 %v744
        %v3277 = vunpack.c.l.b16 %v745
        %v3278 = vunpack.c.h.b16 %v745
        %v3279 = vunpack.c.l.b16 %v746
        %v3280 = vunpack.c.l.b16 %v747
        %v3281 = vunpack.c.h.b16 %v747
        %v3282 = vunpack.c.l.b16 %v748
        %v3283 = vunpack.c.h.b16 %v748
        %v3284 = vunpack.c.l.b16 %v749
        %v3285 = vunpack.c.l.b16 %v750
        %v3286 = vunpack.c.h.b16 %v750
        %v3287 = vunpack.c.l.b16 %v751
        %v3288 = vunpack.c.h.b16 %v751
        %v3289 = vunpack.c.l.b16 %v752
        %v3290 = vunpack.c.l.b16 %v753
        %v3291 = vunpack.c.h.b16 %v753
        %v3292 = vunpack.c.l.b16 %v754
        %v3293 = vunpack.c.h.b16 %v754
        %v3294 = vunpack.c.l.b16 %v755
        %v3295 = vunpack.c.l.b16 %v756
        %v3296 = vunpack.c.h.b16 %v756
        %v3297 = vunpack.c.l.b16 %v757
        %v3298 = vunpack.c.h.b16 %v757
        %v3299 = vunpack.c.l.b16 %v758
        %v3300 = vunpack.c.l.b16 %v759
        %v3301 = vunpack.c.h.b16 %v759
        %v3302 = vunpack.c.l.b16 %v760
        %v3303 = vunpack.c.h.b16 %v760
        %v3304 = vunpack.c.l.b16 %v761
        %v3305 = vunpack.c.l.b16 %v762
        %v3306 = vunpack.c.h.b16 %v762
        %v3307 = vunpack.c.l.b16 %v763
        %v3308 = vunpack.c.h.b16 %v763
        %v3309 = vunpack.c.l.b16 %v764
        %v3310 = vunpack.c.l.b16 %v765
        %v3311 = vunpack.c.h.b16 %v765
        %v3312 = vunpack.c.l.b16 %v766
        %v3313 = vunpack.c.h.b16 %v766
        %v3314 = vunpack.c.l.b16 %v767
        %v3315 = vunpack.c.l.b16 %v768
        %v3316 = vunpack.c.h.b16 %v768
        %v3317 = vunpack.c.l.b16 %v769
        %v3318 = vunpack.c.h.b16 %v769
        %v3319 = vunpack.c.l.b16 %v770
        %v3320 = vunpack.c.l.b16 %v771
        %v3321 = vunpack.c.h.b16 %v771
        %v3322 = vunpack.c.l.b16 %v772
        %v3323 = vunpack.c.h.b16 %v772
        %v3324 = vunpack.c.l.b16 %v773
        %v3325 = vunpack.c.l.b16 %v774
        %v3326 = vunpack.c.h.b16 %v774
        %v3327 = vunpack.c.l.b16 %v775
        %v3328 = vunpack.c.h.b16 %v775
        %v3329 = vunpack.c.l.b16 %v776
        %v3330 = vunpack.c.l.b16 %v777
        %v3331 = vunpack.c.h.b16 %v777
        %v3332 = vunpack.c.l.b16 %v778
        %v3333 = vunpack.c.h.b16 %v778
        %v3334 = vunpack.c.l.b16 %v779
        %v3335 = vunpack.c.l.b16 %v780
        %v3336 = vunpack.c.h.b16 %v780
        %v3337 = vunpack.c.l.b16 %v781
        %v3338 = vunpack.c.h.b16 %v781
        %v3339 = vunpack.c.l.b16 %v782
        %v3340 = vunpack.c.l.b16 %v783
        %v3341 = vunpack.c.h.b16 %v783
        %v3342 = vunpack.c.l.b16 %v784
        %v3343 = vunpack.c.h.b16 %v784
        %v3344 = vunpack.c.l.b16 %v785
        %v3345 = vunpack.c.l.b16 %v786
        %v3346 = vunpack.c.h.b16 %v786
        %v3347 = vunpack.c.l.b16 %v787
        %v3348 = vunpack.c.h.b16 %v787
        %v3349 = vunpack.c.l.b16 %v788
        %v3350 = vunpack.c.l.b16 %v789
        %v3351 = vunpack.c.h.b16 %v789
        %v3352 = vunpack.c.l.b16 %v790
        %v3353 = vunpack.c.h.b16 %v790
        %v3354 = vunpack.c.l.b16 %v791
        %v3355 = vunpack.c.l.b16 %v792
        %v3356 = vunpack.c.h.b16 %v792
        %v3357 = vunpack.c.l.b16 %v793
        %v3358 = vunpack.c.h.b16 %v793
        %v3359 = vunpack.c.l.b16 %v794
        %v3360 = vunpack.c.l.b16 %v795
        %v3361 = vunpack.c.h.b16 %v795
        %v3362 = vunpack.c.l.b16 %v796
        %v3363 = vunpack.c.h.b16 %v796
        %v3364 = vunpack.c.l.b16 %v797
        %v3365 = vunpack.c.l.b16 %v798
        %v3366 = vunpack.c.h.b16 %v798
        %v3367 = vunpack.c.l.b16 %v799
        %v3368 = vunpack.c.h.b16 %v799
        %v3369 = vunpack.c.l.b16 %v800
        %v3370 = vunpack.c.l.b16 %v801
        %v3371 = vunpack.c.h.b16 %v801
        %v3372 = vunpack.c.l.b16 %v802
        %v3373 = vunpack.c.h.b16 %v802
        %v3374 = vunpack.c.l.b16 %v803
        %v3375 = vunpack.c.l.b16 %v804
        %v3376 = vunpack.c.h.b16 %v804
        %v3377 = vunpack.c.l.b16 %v805
        %v3378 = vunpack.c.h.b16 %v805
        %v3379 = vunpack.c.l.b16 %v806
        %v3380 = vunpack.c.l.b16 %v807
        %v3381 = vunpack.c.h.b16 %v807
        %v3382 = vunpack.c.l.b16 %v808
        %v3383 = vunpack.c.h.b16 %v808
        %v3384 = vunpack.c.l.b16 %v809
        %v3385 = vunpack.c.l.b16 %v810
        %v3386 = vunpack.c.h.b16 %v810
        %v3387 = vunpack.c.l.b16 %v811
        %v3388 = vunpack.c.h.b16 %v811
        %v3389 = vunpack.c.l.b16 %v812
        %v3390 = vunpack.c.l.b16 %v813
        %v3391 = vunpack.c.h.b16 %v813
        %v3392 = vunpack.c.l.b16 %v814
        %v3393 = vunpack.c.h.b16 %v814
        %v3394 = vunpack.c.l.b16 %v815
        %v3395 = vunpack.c.l.b16 %v816
        %v3396 = vunpack.c.h.b16 %v816
        %v3397 = vunpack.c.l.b16 %v817
        %v3398 = vunpack.c.h.b16 %v817
        %v3399 = vunpack.c.l.b16 %v818
        %v3400 = vunpack.c.l.b16 %v819
        %v3401 = vunpack.c.h.b16 %v819
        %v3402 = vunpack.c.l.b16 %v820
        %v3403 = vunpack.c.h.b16 %v820
        %v3404 = vunpack.c.l.b16 %v821
        %v3405 = vunpack.c.l.b16 %v822
        %v3406 = vunpack.c.h.b16 %v822
        %v3407 = vunpack.c.l.b16 %v823
        %v3408 = vunpack.c.h.b16 %v823
        %v3409 = vunpack.c.l.b16 %v824
        %v3410 = vunpack.c.l.b16 %v825
        %v3411 = vunpack.c.h.b16 %v825
        %v3412 = vunpack.c.l.b16 %v826
        %v3413 = vunpack.c.h.b16 %v826
        %v3414 = vunpack.c.l.b16 %v827
        %v3415 = vunpack.c.l.b16 %v828
        %v3416 = vunpack.c.h.b16 %v828
        %v3417 = vunpack.c.l.b16 %v829
        %v3418 = vunpack.c.h.b16 %v829
        %v3419 = vunpack.c.l.b16 %v830
        %v3420 = vunpack.c.l.b16 %v831
        %v3421 = vunpack.c.h.b16 %v831
        %v3422 = vunpack.c.l.b16 %v832
        %v3423 = vunpack.c.h.b16 %v832
        %v3424 = vunpack.c.l.b16 %v833
        %v3425 = vunpack.c.l.b16 %v834
        %v3426 = vunpack.c.h.b16 %v834
        %v3427 = vunpack.c.l.b16 %v835
        %v3428 = vunpack.c.h.b16 %v835
        %v3429 = vunpack.c.l.b16 %v836
        %v3430 = vunpack.c.l.b16 %v837
        %v3431 = vunpack.c.h.b16 %v837
        %v3432 = vunpack.c.l.b16 %v838
        %v3433 = vunpack.c.h.b16 %v838
        %v3434 = vunpack.c.l.b16 %v839
        %v3435 = vunpack.c.l.b16 %v840
        %v3436 = vunpack.c.h.b16 %v840
        %v3437 = vunpack.c.l.b16 %v841
        %v3438 = vunpack.c.h.b16 %v841
        %v3439 = vunpack.c.l.b16 %v842
        %v3440 = vunpack.c.l.b16 %v843
        %v3441 = vunpack.c.h.b16 %v843
        %v3442 = vunpack.c.l.b16 %v844
        %v3443 = vunpack.c.h.b16 %v844
        %v3444 = vunpack.c.l.b16 %v845
        %v3445 = vunpack.c.l.b16 %v846
        %v3446 = vunpack.c.h.b16 %v846
        %v3447 = vunpack.c.l.b16 %v847
        %v3448 = vunpack.c.h.b16 %v847
        %v3449 = vunpack.c.l.b16 %v848
        %v3450 = vunpack.c.l.b16 %v849
        %v3451 = vunpack.c.h.b16 %v849
        %v3452 = vunpack.c.l.b16 %v850
        %v3453 = vunpack.c.h.b16 %v850
        %v3454 = vunpack.c.l.b16 %v851
        %v3455 = vunpack.c.l.b16 %v852
        %v3456 = vunpack.c.h.b16 %v852
        %v3457 = vunpack.c.l.b16 %v853
        %v3458 = vunpack.c.h.b16 %v853
        %v3459 = vunpack.c.l.b16 %v854
        %v3460 = vunpack.c.l.b16 %v855
        %v3461 = vunpack.c.h.b16 %v855
        %v3462 = vunpack.c.l.b16 %v856
        %v3463 = vunpack.c.h.b16 %v856
        %v3464 = vunpack.c.l.b16 %v857
        %v3465 = vunpack.c.l.b16 %v858
        %v3466 = vunpack.c.h.b16 %v858
        %v3467 = vunpack.c.l.b16 %v859
        %v3468 = vunpack.c.h.b16 %v859
        %v3469 = vunpack.c.l.b16 %v860
        %v3470 = vunpack.c.l.b16 %v861
        %v3471 = vunpack.c.h.b16 %v861
        %v3472 = vunpack.c.l.b16 %v862
        %v3473 = vunpack.c.h.b16 %v862
        %v3474 = vunpack.c.l.b16 %v863
        %v3475 = vunpack.c.l.b16 %v864
        %v3476 = vunpack.c.h.b16 %v864
        %v3477 = vunpack.c.l.b16 %v865
        %v3478 = vunpack.c.h.b16 %v865
        %v3479 = vunpack.c.l.b16 %v866
        %v3480 = vunpack.c.l.b16 %v867
        %v3481 = vunpack.c.h.b16 %v867
        %v3482 = vunpack.c.l.b16 %v868
        %v3483 = vunpack.c.h.b16 %v868
        %v3484 = vunpack.c.l.b16 %v869
        %v3485 = vunpack.c.l.b16 %v870
        %v3486 = vunpack.c.h.b16 %v870
        %v3487 = vunpack.c.l.b16 %v871
        %v3488 = vunpack.c.h.b16 %v871
        %v3489 = vunpack.c.l.b16 %v872
        %v3490 = vunpack.c.l.b16 %v873
        %v3491 = vunpack.c.h.b16 %v873
        %v3492 = vunpack.c.l.b16 %v874
        %v3493 = vunpack.c.h.b16 %v874
        %v3494 = vunpack.c.l.b16 %v875
        %v3495 = vunpack.c.l.b16 %v876
        %v3496 = vunpack.c.h.b16 %v876
        %v3497 = vunpack.c.l.b16 %v877
        %v3498 = vunpack.c.h.b16 %v877
        %v3499 = vunpack.c.l.b16 %v878
        %v3500 = vunpack.c.l.b16 %v879
        %v3501 = vunpack.c.h.b16 %v879
        %v3502 = vunpack.c.l.b16 %v880
        %v3503 = vunpack.c.h.b16 %v880
        %v3504 = vunpack.c.l.b16 %v881
        %v3505 = vunpack.c.l.b16 %v882
        %v3506 = vunpack.c.h.b16 %v882
        %v3507 = vunpack.c.l.b16 %v883
        %v3508 = vunpack.c.h.b16 %v883
        %v3509 = vunpack.c.l.b16 %v884
        %v3510 = vunpack.c.l.b16 %v885
        %v3511 = vunpack.c.h.b16 %v885
        %v3512 = vunpack.c.l.b16 %v886
        %v3513 = vunpack.c.h.b16 %v886
        %v3514 = vunpack.c.l.b16 %v887
        %v3515 = vunpack.c.l.b16 %v888
        %v3516 = vunpack.c.h.b16 %v888
        %v3517 = vunpack.c.l.b16 %v889
        %v3518 = vunpack.c.h.b16 %v889
        %v3519 = vunpack.c.l.b16 %v890
        %v3520 = vunpack.c.l.b16 %v891
        %v3521 = vunpack.c.h.b16 %v891
        %v3522 = vunpack.c.l.b16 %v892
        %v3523 = vunpack.c.h.b16 %v892
        %v3524 = vunpack.c.l.b16 %v893
        %v3525 = vunpack.c.l.b16 %v894
        %v3526 = vunpack.c.h.b16 %v894
        %v3527 = vunpack.c.l.b16 %v895
        %v3528 = vunpack.c.h.b16 %v895
        %v3529 = vunpack.c.l.b16 %v896
        %v3530 = vunpack.c.l.b16 %v897
        %v3531 = vunpack.c.h.b16 %v897
        %v3532 = vunpack.c.l.b16 %v898
        %v3533 = vunpack.c.h.b16 %v898
        %v3534 = vunpack.c.l.b16 %v899
        %v3535 = vunpack.c.l.b16 %v900
        %v3536 = vunpack.c.h.b16 %v900
        %v3537 = vunpack.c.l.b16 %v901
        %v3538 = vunpack.c.h.b16 %v901
        %v3539 = vunpack.c.l.b16 %v902
        %v3540 = vunpack.c.l.b16 %v903
        %v3541 = vunpack.c.h.b16 %v903
        %v3542 = vunpack.c.l.b16 %v904
        %v3543 = vunpack.c.h.b16 %v904
        %v3544 = vunpack.c.l.b16 %v905
        %v3545 = vunpack.c.l.b16 %v906
        %v3546 = vunpack.c.h.b16 %v906
        %v3547 = vunpack.c.l.b16 %v907
        %v3548 = vunpack.c.h.b16 %v907
        %v3549 = vunpack.c.l.b16 %v908
        %v3550 = vunpack.c.l.b16 %v909
        %v3551 = vunpack.c.h.b16 %v909
        %v3552 = vunpack.c.l.b16 %v910
        %v3553 = vunpack.c.h.b16 %v910
        %v3554 = vunpack.c.l.b16 %v911
        %v3555 = vunpack.c.l.b16 %v912
        %v3556 = vunpack.c.h.b16 %v912
        %v3557 = vunpack.c.l.b16 %v913
        %v3558 = vunpack.c.h.b16 %v913
        %v3559 = vunpack.c.l.b16 %v914
        %v3560 = vunpack.c.l.b16 %v915
        %v3561 = vunpack.c.h.b16 %v915
        %v3562 = vunpack.c.l.b16 %v916
        %v3563 = vunpack.c.h.b16 %v916
        %v3564 = vunpack.c.l.b16 %v917
        %v3565 = vunpack.c.l.b16 %v918
        %v3566 = vunpack.c.h.b16 %v918
        %v3567 = vunpack.c.l.b16 %v919
        %v3568 = vunpack.c.h.b16 %v919
        %v3569 = vunpack.c.l.b16 %v920
        %v3570 = vunpack.c.l.b16 %v921
        %v3571 = vunpack.c.h.b16 %v921
        %v3572 = vunpack.c.l.b16 %v922
        %v3573 = vunpack.c.h.b16 %v922
        %v3574 = vunpack.c.l.b16 %v923
        %v3575 = vunpack.c.l.b16 %v924
        %v3576 = vunpack.c.h.b16 %v924
        %v3577 = vunpack.c.l.b16 %v925
        %v3578 = vunpack.c.h.b16 %v925
        %v3579 = vunpack.c.l.b16 %v926
        %v3580 = vunpack.c.l.b16 %v927
        %v3581 = vunpack.c.h.b16 %v927
        %v3582 = vunpack.c.l.b16 %v928
        %v3583 = vunpack.c.h.b16 %v928
        %v3584 = vunpack.c.l.b16 %v929
        %v3585 = vunpack.c.l.b16 %v930
        %v3586 = vunpack.c.h.b16 %v930
        %v3587 = vunpack.c.l.b16 %v931
        %v3588 = vunpack.c.h.b16 %v931
        %v3589 = vunpack.c.l.b16 %v932
        %v3590 = vunpack.c.l.b16 %v933
        %v3591 = vunpack.c.h.b16 %v933
        %v3592 = vunpack.c.l.b16 %v934
        %v3593 = vunpack.c.h.b16 %v934
        %v3594 = vunpack.c.l.b16 %v935
        %v3595 = vunpack.c.l.b16 %v936
        %v3596 = vunpack.c.h.b16 %v936
        %v3597 = vunpack.c.l.b16 %v937
        %v3598 = vunpack.c.h.b16 %v937
        %v3599 = vunpack.c.l.b16 %v938
        %v3600 = vunpack.c.l.b16 %v939
        %v3601 = vunpack.c.h.b16 %v939
        %v3602 = vunpack.c.l.b16 %v940
        %v3603 = vunpack.c.h.b16 %v940
        %v3604 = vunpack.c.l.b16 %v941
        %v3605 = vunpack.c.l.b16 %v942
        %v3606 = vunpack.c.h.b16 %v942
        %v3607 = vunpack.c.l.b16 %v943
        %v3608 = vunpack.c.h.b16 %v943
        %v3609 = vunpack.c.l.b16 %v944
        %v3610 = vunpack.c.l.b16 %v945
        %v3611 = vunpack.c.h.b16 %v945
        %v3612 = vunpack.c.l.b16 %v946
        %v3613 = vunpack.c.h.b16 %v946
        %v3614 = vunpack.c.l.b16 %v947
        %v3615 = vunpack.c.l.b16 %v948
        %v3616 = vunpack.c.h.b16 %v948
        %v3617 = vunpack.c.l.b16 %v949
        %v3618 = vunpack.c.h.b16 %v949
        %v3619 = vunpack.c.l.b16 %v950
        %v3620 = vunpack.c.l.b16 %v951
        %v3621 = vunpack.c.h.b16 %v951
        %v3622 = vunpack.c.l.b16 %v952
        %v3623 = vunpack.c.h.b16 %v952
        %v3624 = vunpack.c.l.b16 %v953
        %v3625 = vunpack.c.l.b16 %v954
        %v3626 = vunpack.c.h.b16 %v954
        %v3627 = vunpack.c.l.b16 %v955
        %v3628 = vunpack.c.h.b16 %v955
        %v3629 = vunpack.c.l.b16 %v956
        %v3630 = vunpack.c.l.b16 %v957
        %v3631 = vunpack.c.h.b16 %v957
        %v3632 = vunpack.c.l.b16 %v958
        %v3633 = vunpack.c.h.b16 %v958
        %v3634 = vunpack.c.l.b16 %v959
        %v3635 = vunpack.c.l.b16 %v960
        %v3636 = vunpack.c.h.b16 %v960
        %v3637 = vunpack.c.l.b16 %v961
        %v3638 = vunpack.c.h.b16 %v961
        %v3639 = vunpack.c.l.b16 %v962
        %v3640 = vunpack.c.l.b16 %v963
        %v3641 = vunpack.c.h.b16 %v963
        %v3642 = vunpack.c.l.b16 %v964
        %v3643 = vunpack.c.h.b16 %v964
        %v3644 = vunpack.c.l.b16 %v965
        %v3645 = vunpack.c.l.b16 %v966
        %v3646 = vunpack.c.h.b16 %v966
        %v3647 = vunpack.c.l.b16 %v967
        %v3648 = vunpack.c.h.b16 %v967
        %v3649 = vunpack.c.l.b16 %v968
        %v3650 = vunpack.c.l.b16 %v969
        %v3651 = vunpack.c.h.b16 %v969
        %v3652 = vunpack.c.l.b16 %v970
        %v3653 = vunpack.c.h.b16 %v970
        %v3654 = vunpack.c.l.b16 %v971
        %v3655 = vunpack.c.l.b16 %v972
        %v3656 = vunpack.c.h.b16 %v972
        %v3657 = vunpack.c.l.b16 %v973
        %v3658 = vunpack.c.h.b16 %v973
        %v3659 = vunpack.c.l.b16 %v974
        %v3660 = vunpack.c.l.b16 %v975
        %v3661 = vunpack.c.h.b16 %v975
        %v3662 = vunpack.c.l.b16 %v976
        %v3663 = vunpack.c.h.b16 %v976
        %v3664 = vunpack.c.l.b16 %v977
        %v3665 = vunpack.c.l.b16 %v978
        %v3666 = vunpack.c.h.b16 %v978
        %v3667 = vunpack.c.l.b16 %v979
        %v3668 = vunpack.c.h.b16 %v979
        %v3669 = vunpack.c.l.b16 %v980
        %v3670 = vunpack.c.l.b16 %v981
        %v3671 = vunpack.c.h.b16 %v981
        %v3672 = vunpack.c.l.b16 %v982
        %v3673 = vunpack.c.h.b16 %v982
        %v3674 = vunpack.c.l.b16 %v983
        %v3675 = vunpack.c.l.b16 %v984
        %v3676 = vunpack.c.h.b16 %v984
        %v3677 = vunpack.c.l.b16 %v985
        %v3678 = vunpack.c.h.b16 %v985
        %v3679 = vunpack.c.l.b16 %v986
        %v3680 = vunpack.c.l.b16 %v987
        %v3681 = vunpack.c.h.b16 %v987
        %v3682 = vunpack.c.l.b16 %v988
        %v3683 = vunpack.c.h.b16 %v988
        %v3684 = vunpack.c.l.b16 %v989
        %v3685 = vunpack.c.l.b16 %v990
        %v3686 = vunpack.c.h.b16 %v990
        %v3687 = vunpack.c.l.b16 %v991
        %v3688 = vunpack.c.h.b16 %v991
        %v3689 = vunpack.c.l.b16 %v992
        %v3690 = vunpack.c.l.b16 %v993
        %v3691 = vunpack.c.h.b16 %v993
        %v3692 = vunpack.c.l.b16 %v994
        %v3693 = vunpack.c.h.b16 %v994
        %v3694 = vunpack.c.l.b16 %v995
        %v3695 = vunpack.c.l.b16 %v996
        %v3696 = vunpack.c.h.b16 %v996
        %v3697 = vunpack.c.l.b16 %v997
        %v3698 = vunpack.c.h.b16 %v997
        %v3699 = vunpack.c.l.b16 %v998
        %v3700 = vunpack.c.l.b16 %v999
        %v3701 = vunpack.c.h.b16 %v999
        %v3702 = vunpack.c.l.b16 %v1000
        %v3703 = vunpack.c.h.b16 %v1000
        %v3704 = vunpack.c.l.b16 %v1001
        %v3705 = vunpack.c.l.b16 %v1002
        %v3706 = vunpack.c.h.b16 %v1002
        %v3707 = vunpack.c.l.b16 %v1003
        %v3708 = vunpack.c.h.b16 %v1003
        %v3709 = vunpack.c.l.b16 %v1004
        %v3710 = vunpack.c.l.b16 %v1005
        %v3711 = vunpack.c.h.b16 %v1005
        %v3712 = vunpack.c.l.b16 %v1006
        %v3713 = vunpack.c.h.b16 %v1006
        %v3714 = vunpack.c.l.b16 %v1007
        %v3715 = vunpack.c.l.b16 %v1008
        %v3716 = vunpack.c.h.b16 %v1008
        %v3717 = vunpack.c.l.b16 %v1009
        %v3718 = vunpack.c.h.b16 %v1009
        %v3719 = vunpack.c.l.b16 %v1010
        %v3720 = vunpack.c.l.b16 %v1011
        %v3721 = vunpack.c.h.b16 %v1011
        %v3722 = vunpack.c.l.b16 %v1012
        %v3723 = vunpack.c.h.b16 %v1012
        %v3724 = vunpack.c.l.b16 %v1013
        %v3725 = vunpack.c.l.b16 %v1014
        %v3726 = vunpack.c.h.b16 %v1014
        %v3727 = vunpack.c.l.b16 %v1015
        %v3728 = vunpack.c.h.b16 %v1015
        %v3729 = vunpack.c.l.b16 %v1016
        %v3730 = vunpack.c.l.b16 %v1017
        %v3731 = vunpack.c.h.b16 %v1017
        %v3732 = vunpack.c.l.b16 %v1018
        %v3733 = vunpack.c.h.b16 %v1018
        %v3734 = vunpack.c.l.b16 %v1019
        %v3735 = vunpack.c.l.b16 %v1020
        %v3736 = vunpack.c.h.b16 %v1020
        %v3737 = vunpack.c.l.b16 %v1021
        %v3738 = vunpack.c.h.b16 %v1021
        %v3739 = vunpack.c.l.b16 %v1022
        %v3740 = vunpack.c.l.b16 %v1023
        %v3741 = vunpack.c.h.b16 %v1023
        %v3742 = vunpack.c.l.b16 %v1024
        %v3743 = vunpack.c.h.b16 %v1024
        %v3744 = vunpack.c.l.b16 %v1025
        %v3745 = vunpack.c.l.b16 %v1026
        %v3746 = vunpack.c.h.b16 %v1026
        %v3747 = vunpack.c.l.b16 %v1027
        %v3748 = vunpack.c.h.b16 %v1027
        %v3749 = vunpack.c.l.b16 %v1028
        %v3750 = vunpack.c.l.b16 %v1029
        %v3751 = vunpack.c.h.b16 %v1029
        %v3752 = vunpack.c.l.b16 %v1030
        %v3753 = vunpack.c.h.b16 %v1030
        %v3754 = vunpack.c.l.b16 %v1031
        %v3755 = vunpack.c.l.b16 %v1032
        %v3756 = vunpack.c.h.b16 %v1032
        %v3757 = vunpack.c.l.b16 %v1033
        %v3758 = vunpack.c.h.b16 %v1033
        %v3759 = vunpack.c.l.b16 %v1034
        %v3760 = vunpack.c.l.b16 %v1035
        %v3761 = vunpack.c.h.b16 %v1035
        %v3762 = vunpack.c.l.b16 %v1036
        %v3763 = vunpack.c.h.b16 %v1036
        %v3764 = vunpack.c.l.b16 %v1037
        %v3765 = vunpack.c.l.b16 %v1038
        %v3766 = vunpack.c.h.b16 %v1038
        %v3767 = vunpack.c.l.b16 %v1039
        %v3768 = vunpack.c.h.b16 %v1039
        %v3769 = vunpack.c.l.b16 %v1040
        %v3770 = vunpack.c.l.b16 %v1041
        %v3771 = vunpack.c.h.b16 %v1041
        %v3772 = vunpack.c.l.b16 %v1042
        %v3773 = vunpack.c.h.b16 %v1042
        %v3774 = vunpack.c.l.b16 %v1043
        %v3775 = vunpack.c.l.b16 %v1044
        %v3776 = vunpack.c.h.b16 %v1044
        %v3777 = vunpack.c.l.b16 %v1045
        %v3778 = vunpack.c.h.b16 %v1045
        %v3779 = vunpack.c.l.b16 %v1046
        %v3780 = vunpack.c.l.b16 %v1047
        %v3781 = vunpack.c.h.b16 %v1047
        %v3782 = vunpack.c.l.b16 %v1048
        %v3783 = vunpack.c.h.b16 %v1048
        %v3784 = vunpack.c.l.b16 %v1049
        %v3785 = vunpack.c.l.b16 %v1050
        %v3786 = vunpack.c.h.b16 %v1050
        %v3787 = vunpack.c.l.b16 %v1051
        %v3788 = vunpack.c.h.b16 %v1051
        %v3789 = vunpack.c.l.b16 %v1052
        %v3790 = vunpack.c.l.b16 %v1053
        %v3791 = vunpack.c.h.b16 %v1053
        %v3792 = vunpack.c.l.b16 %v1054
        %v3793 = vunpack.c.h.b16 %v1054
        %v3794 = vunpack.c.l.b16 %v1055
        %v3795 = vunpack.c.l.b16 %v1056
        %v3796 = vunpack.c.h.b16 %v1056
        %v3797 = vunpack.c.l.b16 %v1057
        %v3798 = vunpack.c.h.b16 %v1057
        %v3799 = vunpack.c.l.b16 %v1058
        %v3800 = vunpack.c.l.b16 %v1059
        %v3801 = vunpack.c.h.b16 %v1059
        %v3802 = vunpack.c.l.b16 %v1060
        %v3803 = vunpack.c.h.b16 %v1060
        %v3804 = vunpack.c.l.b16 %v1061
        %v3805 = vunpack.c.l.b16 %v1062
        %v3806 = vunpack.c.h.b16 %v1062
        %v3807 = vunpack.c.l.b16 %v1063
        %v3808 = vunpack.c.h.b16 %v1063
        %v3809 = vunpack.c.l.b16 %v1064
        %v3810 = vunpack.c.l.b16 %v1065
        %v3811 = vunpack.c.h.b16 %v1065
        %v3812 = vunpack.c.l.b16 %v1066
        %v3813 = vunpack.c.h.b16 %v1066
        %v3814 = vunpack.c.l.b16 %v1067
        %v3815 = vpack.c.b16 %v2780, %v2775
        %v3816 = vpack.c.b16 %v2781, %v2776
        %v3817 = vpack.c.b16 %v2782, %v2777
        %v3818 = vpack.c.b16 %v2783, %v2778
        %v3819 = vpack.c.b16 %v2784, %v2779
        %v3820 = vpack.c.b16 %v2790, %v2785
        %v3821 = vpack.c.b16 %v2791, %v2786
        %v3822 = vpack.c.b16 %v2792, %v2787
        %v3823 = vpack.c.b16 %v2793, %v2788
        %v3824 = vpack.c.b16 %v2794, %v2789
        %v3825 = vpack.c.b16 %v2800, %v2795
        %v3826 = vpack.c.b16 %v2801, %v2796
        %v3827 = vpack.c.b16 %v2802, %v2797
        %v3828 = vpack.c.b16 %v2803, %v2798
        %v3829 = vpack.c.b16 %v2804, %v2799
        %v3830 = vpack.c.b16 %v2810, %v2805
        %v3831 = vpack.c.b16 %v2811, %v2806
        %v3832 = vpack.c.b16 %v2812, %v2807
        %v3833 = vpack.c.b16 %v2813, %v2808
        %v3834 = vpack.c.b16 %v2814, %v2809
        %v3835 = vpack.c.b16 %v2820, %v2815
        %v3836 = vpack.c.b16 %v2821, %v2816
        %v3837 = vpack.c.b16 %v2822, %v2817
        %v3838 = vpack.c.b16 %v2823, %v2818
        %v3839 = vpack.c.b16 %v2824, %v2819
        %v3840 = vpack.c.b16 %v2830, %v2825
        %v3841 = vpack.c.b16 %v2831, %v2826
        %v3842 = vpack.c.b16 %v2832, %v2827
        %v3843 = vpack.c.b16 %v2833, %v2828
        %v3844 = vpack.c.b16 %v2834, %v2829
        %v3845 = vpack.c.b16 %v2840, %v2835
        %v3846 = vpack.c.b16 %v2841, %v2836
        %v3847 = vpack.c.b16 %v2842, %v2837
        %v3848 = vpack.c.b16 %v2843, %v2838
        %v3849 = vpack.c.b16 %v2844, %v2839
        %v3850 = vpack.c.b16 %v2850, %v2845
        %v3851 = vpack.c.b16 %v2851, %v2846
        %v3852 = vpack.c.b16 %v2852, %v2847
        %v3853 = vpack.c.b16 %v2853, %v2848
        %v3854 = vpack.c.b16 %v2854, %v2849
        %v3855 = vpack.c.b16 %v2860, %v2855
        %v3856 = vpack.c.b16 %v2861, %v2856
        %v3857 = vpack.c.b16 %v2862, %v2857
        %v3858 = vpack.c.b16 %v2863, %v2858
        %v3859 = vpack.c.b16 %v2864, %v2859
        %v3860 = vpack.c.b16 %v2870, %v2865
        %v3861 = vpack.c.b16 %v2871, %v2866
        %v3862 = vpack.c.b16 %v2872, %v2867
        %v3863 = vpack.c.b16 %v2873, %v2868
        %v3864 = vpack.c.b16 %v2874, %v2869
        %v3865 = vpack.c.b16 %v2880, %v2875
        %v3866 = vpack.c.b16 %v2881, %v2876
        %v3867 = vpack.c.b16 %v2882, %v2877
        %v3868 = vpack.c.b16 %v2883, %v2878
        %v3869 = vpack.c.b16 %v2884, %v2879
        %v3870 = vpack.c.b16 %v2890, %v2885
        %v3871 = vpack.c.b16 %v2891, %v2886
        %v3872 = vpack.c.b16 %v2892, %v2887
        %v3873 = vpack.c.b16 %v2893, %v2888
        %v3874 = vpack.c.b16 %v2894, %v2889
        %v3875 = vpack.c.b16 %v2900, %v2895
        %v3876 = vpack.c.b16 %v2901, %v2896
        %v3877 = vpack.c.b16 %v2902, %v2897
        %v3878 = vpack.c.b16 %v2903, %v2898
        %v3879 = vpack.c.b16 %v2904, %v2899
        %v3880 = vpack.c.b16 %v2910, %v2905
        %v3881 = vpack.c.b16 %v2911, %v2906
        %v3882 = vpack.c.b16 %v2912, %v2907
        %v3883 = vpack.c.b16 %v2913, %v2908
        %v3884 = vpack.c.b16 %v2914, %v2909
        %v3885 = vpack.c.b16 %v2920, %v2915
        %v3886 = vpack.c.b16 %v2921, %v2916
        %v3887 = vpack.c.b16 %v2922, %v2917
        %v3888 = vpack.c.b16 %v2923, %v2918
        %v3889 = vpack.c.b16 %v2924, %v2919
        %v3890 = vpack.c.b16 %v2930, %v2925
        %v3891 = vpack.c.b16 %v2931, %v2926
        %v3892 = vpack.c.b16 %v2932, %v2927
        %v3893 = vpack.c.b16 %v2933, %v2928
        %v3894 = vpack.c.b16 %v2934, %v2929
        %v3895 = vpack.c.b16 %v2940, %v2935
        %v3896 = vpack.c.b16 %v2941, %v2936
        %v3897 = vpack.c.b16 %v2942, %v2937
        %v3898 = vpack.c.b16 %v2943, %v2938
        %v3899 = vpack.c.b16 %v2944, %v2939
        %v3900 = vpack.c.b16 %v2950, %v2945
        %v3901 = vpack.c.b16 %v2951, %v2946
        %v3902 = vpack.c.b16 %v2952, %v2947
        %v3903 = vpack.c.b16 %v2953, %v2948
        %v3904 = vpack.c.b16 %v2954, %v2949
        %v3905 = vpack.c.b16 %v2960, %v2955
        %v3906 = vpack.c.b16 %v2961, %v2956
        %v3907 = vpack.c.b16 %v2962, %v2957
        %v3908 = vpack.c.b16 %v2963, %v2958
        %v3909 = vpack.c.b16 %v2964, %v2959
        %v3910 = vpack.c.b16 %v2970, %v2965
        %v3911 = vpack.c.b16 %v2971, %v2966
        %v3912 = vpack.c.b16 %v2972, %v2967
        %v3913 = vpack.c.b16 %v2973, %v2968
        %v3914 = vpack.c.b16 %v2974, %v2969
        %v3915 = vpack.c.b16 %v2980, %v2975
        %v3916 = vpack.c.b16 %v2981, %v2976
        %v3917 = vpack.c.b16 %v2982, %v2977
        %v3918 = vpack.c.b16 %v2983, %v2978
        %v3919 = vpack.c.b16 %v2984, %v2979
        %v3920 = vpack.c.b16 %v2990, %v2985
        %v3921 = vpack.c.b16 %v2991, %v2986
        %v3922 = vpack.c.b16 %v2992, %v2987
        %v3923 = vpack.c.b16 %v2993, %v2988
        %v3924 = vpack.c.b16 %v2994, %v2989
        %v3925 = vpack.c.b16 %v3000, %v2995
        %v3926 = vpack.c.b16 %v3001, %v2996
        %v3927 = vpack.c.b16 %v3002, %v2997
        %v3928 = vpack.c.b16 %v3003, %v2998
        %v3929 = vpack.c.b16 %v3004, %v2999
        %v3930 = vpack.c.b16 %v3010, %v3005
        %v3931 = vpack.c.b16 %v3011, %v3006
        %v3932 = vpack.c.b16 %v3012, %v3007
        %v3933 = vpack.c.b16 %v3013, %v3008
        %v3934 = vpack.c.b16 %v3014, %v3009
        %v3935 = vpack.c.b16 %v3020, %v3015
        %v3936 = vpack.c.b16 %v3021, %v3016
        %v3937 = vpack.c.b16 %v3022, %v3017
        %v3938 = vpack.c.b16 %v3023, %v3018
        %v3939 = vpack.c.b16 %v3024, %v3019
        %v3940 = vpack.c.b16 %v3030, %v3025
        %v3941 = vpack.c.b16 %v3031, %v3026
        %v3942 = vpack.c.b16 %v3032, %v3027
        %v3943 = vpack.c.b16 %v3033, %v3028
        %v3944 = vpack.c.b16 %v3034, %v3029
        %v3945 = vpack.c.b16 %v3040, %v3035
        %v3946 = vpack.c.b16 %v3041, %v3036
        %v3947 = vpack.c.b16 %v3042, %v3037
        %v3948 = vpack.c.b16 %v3043, %v3038
        %v3949 = vpack.c.b16 %v3044, %v3039
        %v3950 = vpack.c.b16 %v3050, %v3045
        %v3951 = vpack.c.b16 %v3051, %v3046
        %v3952 = vpack.c.b16 %v3052, %v3047
        %v3953 = vpack.c.b16 %v3053, %v3048
        %v3954 = vpack.c.b16 %v3054, %v3049
        %v3955 = vpack.c.b16 %v3060, %v3055
        %v3956 = vpack.c.b16 %v3061, %v3056
        %v3957 = vpack.c.b16 %v3062, %v3057
        %v3958 = vpack.c.b16 %v3063, %v3058
        %v3959 = vpack.c.b16 %v3064, %v3059
        %v3960 = vpack.c.b16 %v3070, %v3065
        %v3961 = vpack.c.b16 %v3071, %v3066
        %v3962 = vpack.c.b16 %v3072, %v3067
        %v3963 = vpack.c.b16 %v3073, %v3068
        %v3964 = vpack.c.b16 %v3074, %v3069
        %v3965 = vpack.c.b16 %v3080, %v3075
        %v3966 = vpack.c.b16 %v3081, %v3076
        %v3967 = vpack.c.b16 %v3082, %v3077
        %v3968 = vpack.c.b16 %v3083, %v3078
        %v3969 = vpack.c.b16 %v3084, %v3079
        %v3970 = vpack.c.b16 %v3090, %v3085
        %v3971 = vpack.c.b16 %v3091, %v3086
        %v3972 = vpack.c.b16 %v3092, %v3087
        %v3973 = vpack.c.b16 %v3093, %v3088
        %v3974 = vpack.c.b16 %v3094, %v3089
        %v3975 = vpack.c.b16 %v3100, %v3095
        %v3976 = vpack.c.b16 %v3101, %v3096
        %v3977 = vpack.c.b16 %v3102, %v3097
        %v3978 = vpack.c.b16 %v3103, %v3098
        %v3979 = vpack.c.b16 %v3104, %v3099
        %v3980 = vpack.c.b16 %v3110, %v3105
        %v3981 = vpack.c.b16 %v3111, %v3106
        %v3982 = vpack.c.b16 %v3112, %v3107
        %v3983 = vpack.c.b16 %v3113, %v3108
        %v3984 = vpack.c.b16 %v3114, %v3109
        %v3985 = vpack.c.b16 %v3120, %v3115
        %v3986 = vpack.c.b16 %v3121, %v3116
        %v3987 = vpack.c.b16 %v3122, %v3117
        %v3988 = vpack.c.b16 %v3123, %v3118
        %v3989 = vpack.c.b16 %v3124, %v3119
        %v3990 = vpack.c.b16 %v3130, %v3125
        %v3991 = vpack.c.b16 %v3131, %v3126
        %v3992 = vpack.c.b16 %v3132, %v3127
        %v3993 = vpack.c.b16 %v3133, %v3128
        %v3994 = vpack.c.b16 %v3134, %v3129
        %v3995 = vpack.c.b16 %v3140, %v3135
        %v3996 = vpack.c.b16 %v3141, %v3136
        %v3997 = vpack.c.b16 %v3142, %v3137
        %v3998 = vpack.c.b16 %v3143, %v3138
        %v3999 = vpack.c.b16 %v3144, %v3139
        %v4000 = vpack.c.b16 %v3150, %v3145
        %v4001 = vpack.c.b16 %v3151, %v3146
        %v4002 = vpack.c.b16 %v3152, %v3147
        %v4003 = vpack.c.b16 %v3153, %v3148
        %v4004 = vpack.c.b16 %v3154, %v3149
        %v4005 = vpack.c.b16 %v3160, %v3155
        %v4006 = vpack.c.b16 %v3161, %v3156
        %v4007 = vpack.c.b16 %v3162, %v3157
        %v4008 = vpack.c.b16 %v3163, %v3158
        %v4009 = vpack.c.b16 %v3164, %v3159
        %v4010 = vpack.c.b16 %v3170, %v3165
        %v4011 = vpack.c.b16 %v3171, %v3166
        %v4012 = vpack.c.b16 %v3172, %v3167
        %v4013 = vpack.c.b16 %v3173, %v3168
        %v4014 = vpack.c.b16 %v3174, %v3169
        %v4015 = vpack.c.b16 %v3180, %v3175
        %v4016 = vpack.c.b16 %v3181, %v3176
        %v4017 = vpack.c.b16 %v3182, %v3177
        %v4018 = vpack.c.b16 %v3183, %v3178
        %v4019 = vpack.c.b16 %v3184, %v3179
        %v4020 = vpack.c.b16 %v3190, %v3185
        %v4021 = vpack.c.b16 %v3191, %v3186
        %v4022 = vpack.c.b16 %v3192, %v3187
        %v4023 = vpack.c.b16 %v3193, %v3188
        %v4024 = vpack.c.b16 %v3194, %v3189
        %v4025 = vpack.c.b16 %v3200, %v3195
        %v4026 = vpack.c.b16 %v3201, %v3196
        %v4027 = vpack.c.b16 %v3202, %v3197
        %v4028 = vpack.c.b16 %v3203, %v3198
        %v4029 = vpack.c.b16 %v3204, %v3199
        %v4030 = vpack.c.b16 %v3210, %v3205
        %v4031 = vpack.c.b16 %v3211, %v3206
        %v4032 = vpack.c.b16 %v3212, %v3207
        %v4033 = vpack.c.b16 %v3213, %v3208
        %v4034 = vpack.c.b16 %v3214, %v3209
        %v4035 = vpack.c.b16 %v3220, %v3215
        %v4036 = vpack.c.b16 %v3221, %v3216
        %v4037 = vpack.c.b16 %v3222, %v3217
        %v4038 = vpack.c.b16 %v3223, %v3218
        %v4039 = vpack.c.b16 %v3224, %v3219
        %v4040 = vpack.c.b16 %v3230, %v3225
        %v4041 = vpack.c.b16 %v3231, %v3226
        %v4042 = vpack.c.b16 %v3232, %v3227
        %v4043 = vpack.c.b16 %v3233, %v3228
        %v4044 = vpack.c.b16 %v3234, %v3229
        %v4045 = vpack.c.b16 %v3240, %v3235
        %v4046 = vpack.c.b16 %v3241, %v3236
        %v4047 = vpack.c.b16 %v3242, %v3237
        %v4048 = vpack.c.b16 %v3243, %v3238
        %v4049 = vpack.c.b16 %v3244, %v3239
        %v4050 = vpack.c.b16 %v3250, %v3245
        %v4051 = vpack.c.b16 %v3251, %v3246
        %v4052 = vpack.c.b16 %v3252, %v3247
        %v4053 = vpack.c.b16 %v3253, %v3248
        %v4054 = vpack.c.b16 %v3254, %v3249
        %v4055 = vpack.c.b16 %v3260, %v3255
        %v4056 = vpack.c.b16 %v3261, %v3256
        %v4057 = vpack.c.b16 %v3262, %v3257
        %v4058 = vpack.c.b16 %v3263, %v3258
        %v4059 = vpack.c.b16 %v3264, %v3259
        %v4060 = vpack.c.b16 %v3270, %v3265
        %v4061 = vpack.c.b16 %v3271, %v3266
        %v4062 = vpack.c.b16 %v3272, %v3267
        %v4063 = vpack.c.b16 %v3273, %v3268
        %v4064 = vpack.c.b16 %v3274, %v3269
        %v4065 = vpack.c.b16 %v3280, %v3275
        %v4066 = vpack.c.b16 %v3281, %v3276
        %v4067 = vpack.c.b16 %v3282, %v3277
        %v4068 = vpack.c.b16 %v3283, %v3278
        %v4069 = vpack.c.b16 %v3284, %v3279
        %v4070 = vpack.c.b16 %v3290, %v3285
        %v4071 = vpack.c.b16 %v3291, %v3286
        %v4072 = vpack.c.b16 %v3292, %v3287
        %v4073 = vpack.c.b16 %v3293, %v3288
        %v4074 = vpack.c.b16 %v3294, %v3289
        %v4075 = vpack.c.b16 %v3300, %v3295
        %v4076 = vpack.c.b16 %v3301, %v3296
        %v4077 = vpack.c.b16 %v3302, %v3297
        %v4078 = vpack.c.b16 %v3303, %v3298
        %v4079 = vpack.c.b16 %v3304, %v3299
        %v4080 = vpack.c.b16 %v3310, %v3305
        %v4081 = vpack.c.b16 %v3311, %v3306
        %v4082 = vpack.c.b16 %v3312, %v3307
        %v4083 = vpack.c.b16 %v3313, %v3308
        %v4084 = vpack.c.b16 %v3314, %v3309
        %v4085 = vpack.c.b16 %v3320, %v3315
        %v4086 = vpack.c.b16 %v3321, %v3316
        %v4087 = vpack.c.b16 %v3322, %v3317
        %v4088 = vpack.c.b16 %v3323, %v3318
        %v4089 = vpack.c.b16 %v3324, %v3319
        %v4090 = vpack.c.b16 %v3330, %v3325
        %v4091 = vpack.c.b16 %v3331, %v3326
        %v4092 = vpack.c.b16 %v3332, %v3327
        %v4093 = vpack.c.b16 %v3333, %v3328
        %v4094 = vpack.c.b16 %v3334, %v3329
        %v4095 = vpack.c.b16 %v3340, %v3335
        %v4096 = vpack.c.b16 %v3341, %v3336
        %v4097 = vpack.c.b16 %v3342, %v3337
        %v4098 = vpack.c.b16 %v3343, %v3338
        %v4099 = vpack.c.b16 %v3344, %v3339
        %v4100 = vpack.c.b16 %v3350, %v3345
        %v4101 = vpack.c.b16 %v3351, %v3346
        %v4102 = vpack.c.b16 %v3352, %v3347
        %v4103 = vpack.c.b16 %v3353, %v3348
        %v4104 = vpack.c.b16 %v3354, %v3349
        %v4105 = vpack.c.b16 %v3360, %v3355
        %v4106 = vpack.c.b16 %v3361, %v3356
        %v4107 = vpack.c.b16 %v3362, %v3357
        %v4108 = vpack.c.b16 %v3363, %v3358
        %v4109 = vpack.c.b16 %v3364, %v3359
        %v4110 = vpack.c.b16 %v3370, %v3365
        %v4111 = vpack.c.b16 %v3371, %v3366
        %v4112 = vpack.c.b16 %v3372, %v3367
        %v4113 = vpack.c.b16 %v3373, %v3368
        %v4114 = vpack.c.b16 %v3374, %v3369
        %v4115 = vpack.c.b16 %v3380, %v3375
        %v4116 = vpack.c.b16 %v3381, %v3376
        %v4117 = vpack.c.b16 %v3382, %v3377
        %v4118 = vpack.c.b16 %v3383, %v3378
        %v4119 = vpack.c.b16 %v3384, %v3379
        %v4120 = vpack.c.b16 %v3390, %v3385
        %v4121 = vpack.c.b16 %v3391, %v3386
        %v4122 = vpack.c.b16 %v3392, %v3387
        %v4123 = vpack.c.b16 %v3393, %v3388
        %v4124 = vpack.c.b16 %v3394, %v3389
        %v4125 = vpack.c.b16 %v3400, %v3395
        %v4126 = vpack.c.b16 %v3401, %v3396
        %v4127 = vpack.c.b16 %v3402, %v3397
        %v4128 = vpack.c.b16 %v3403, %v3398
        %v4129 = vpack.c.b16 %v3404, %v3399
        %v4130 = vpack.c.b16 %v3410, %v3405
        %v4131 = vpack.c.b16 %v3411, %v3406
        %v4132 = vpack.c.b16 %v3412, %v3407
        %v4133 = vpack.c.b16 %v3413, %v3408
        %v4134 = vpack.c.b16 %v3414, %v3409
        %v4135 = vpack.c.b16 %v3420, %v3415
        %v4136 = vpack.c.b16 %v3421, %v3416
        %v4137 = vpack.c.b16 %v3422, %v3417
        %v4138 = vpack.c.b16 %v3423, %v3418
        %v4139 = vpack.c.b16 %v3424, %v3419
        %v4140 = vpack.c.b16 %v3430, %v3425
        %v4141 = vpack.c.b16 %v3431, %v3426
        %v4142 = vpack.c.b16 %v3432, %v3427
        %v4143 = vpack.c.b16 %v3433, %v3428
        %v4144 = vpack.c.b16 %v3434, %v3429
        %v4145 = vpack.c.b16 %v3440, %v3435
        %v4146 = vpack.c.b16 %v3441, %v3436
        %v4147 = vpack.c.b16 %v3442, %v3437
        %v4148 = vpack.c.b16 %v3443, %v3438
        %v4149 = vpack.c.b16 %v3444, %v3439
        %v4150 = vpack.c.b16 %v3450, %v3445
        %v4151 = vpack.c.b16 %v3451, %v3446
        %v4152 = vpack.c.b16 %v3452, %v3447
        %v4153 = vpack.c.b16 %v3453, %v3448
        %v4154 = vpack.c.b16 %v3454, %v3449
        %v4155 = vpack.c.b16 %v3460, %v3455
        %v4156 = vpack.c.b16 %v3461, %v3456
        %v4157 = vpack.c.b16 %v3462, %v3457
        %v4158 = vpack.c.b16 %v3463, %v3458
        %v4159 = vpack.c.b16 %v3464, %v3459
        %v4160 = vpack.c.b16 %v3470, %v3465
        %v4161 = vpack.c.b16 %v3471, %v3466
        %v4162 = vpack.c.b16 %v3472, %v3467
        %v4163 = vpack.c.b16 %v3473, %v3468
        %v4164 = vpack.c.b16 %v3474, %v3469
        %v4165 = vpack.c.b16 %v3480, %v3475
        %v4166 = vpack.c.b16 %v3481, %v3476
        %v4167 = vpack.c.b16 %v3482, %v3477
        %v4168 = vpack.c.b16 %v3483, %v3478
        %v4169 = vpack.c.b16 %v3484, %v3479
        %v4170 = vpack.c.b16 %v3490, %v3485
        %v4171 = vpack.c.b16 %v3491, %v3486
        %v4172 = vpack.c.b16 %v3492, %v3487
        %v4173 = vpack.c.b16 %v3493, %v3488
        %v4174 = vpack.c.b16 %v3494, %v3489
        %v4175 = vpack.c.b16 %v3500, %v3495
        %v4176 = vpack.c.b16 %v3501, %v3496
        %v4177 = vpack.c.b16 %v3502, %v3497
        %v4178 = vpack.c.b16 %v3503, %v3498
        %v4179 = vpack.c.b16 %v3504, %v3499
        %v4180 = vpack.c.b16 %v3510, %v3505
        %v4181 = vpack.c.b16 %v3511, %v3506
        %v4182 = vpack.c.b16 %v3512, %v3507
        %v4183 = vpack.c.b16 %v3513, %v3508
        %v4184 = vpack.c.b16 %v3514, %v3509
        %v4185 = vpack.c.b16 %v3520, %v3515
        %v4186 = vpack.c.b16 %v3521, %v3516
        %v4187 = vpack.c.b16 %v3522, %v3517
        %v4188 = vpack.c.b16 %v3523, %v3518
        %v4189 = vpack.c.b16 %v3524, %v3519
        %v4190 = vpack.c.b16 %v3530, %v3525
        %v4191 = vpack.c.b16 %v3531, %v3526
        %v4192 = vpack.c.b16 %v3532, %v3527
        %v4193 = vpack.c.b16 %v3533, %v3528
        %v4194 = vpack.c.b16 %v3534, %v3529
        %v4195 = vpack.c.b16 %v3540, %v3535
        %v4196 = vpack.c.b16 %v3541, %v3536
        %v4197 = vpack.c.b16 %v3542, %v3537
        %v4198 = vpack.c.b16 %v3543, %v3538
        %v4199 = vpack.c.b16 %v3544, %v3539
        %v4200 = vpack.c.b16 %v3550, %v3545
        %v4201 = vpack.c.b16 %v3551, %v3546
        %v4202 = vpack.c.b16 %v3552, %v3547
        %v4203 = vpack.c.b16 %v3553, %v3548
        %v4204 = vpack.c.b16 %v3554, %v3549
        %v4205 = vpack.c.b16 %v3560, %v3555
        %v4206 = vpack.c.b16 %v3561, %v3556
        %v4207 = vpack.c.b16 %v3562, %v3557
        %v4208 = vpack.c.b16 %v3563, %v3558
        %v4209 = vpack.c.b16 %v3564, %v3559
        %v4210 = vpack.c.b16 %v3570, %v3565
        %v4211 = vpack.c.b16 %v3571, %v3566
        %v4212 = vpack.c.b16 %v3572, %v3567
        %v4213 = vpack.c.b16 %v3573, %v3568
        %v4214 = vpack.c.b16 %v3574, %v3569
        %v4215 = vpack.c.b16 %v3580, %v3575
        %v4216 = vpack.c.b16 %v3581, %v3576
        %v4217 = vpack.c.b16 %v3582, %v3577
        %v4218 = vpack.c.b16 %v3583, %v3578
        %v4219 = vpack.c.b16 %v3584, %v3579
        %v4220 = vpack.c.b16 %v3590, %v3585
        %v4221 = vpack.c.b16 %v3591, %v3586
        %v4222 = vpack.c.b16 %v3592, %v3587
        %v4223 = vpack.c.b16 %v3593, %v3588
        %v4224 = vpack.c.b16 %v3594, %v3589
        %v4225 = vpack.c.b16 %v3600, %v3595
        %v4226 = vpack.c.b16 %v3601, %v3596
        %v4227 = vpack.c.b16 %v3602, %v3597
        %v4228 = vpack.c.b16 %v3603, %v3598
        %v4229 = vpack.c.b16 %v3604, %v3599
        %v4230 = vpack.c.b16 %v3610, %v3605
        %v4231 = vpack.c.b16 %v3611, %v3606
        %v4232 = vpack.c.b16 %v3612, %v3607
        %v4233 = vpack.c.b16 %v3613, %v3608
        %v4234 = vpack.c.b16 %v3614, %v3609
        %v4235 = vpack.c.b16 %v3620, %v3615
        %v4236 = vpack.c.b16 %v3621, %v3616
        %v4237 = vpack.c.b16 %v3622, %v3617
        %v4238 = vpack.c.b16 %v3623, %v3618
        %v4239 = vpack.c.b16 %v3624, %v3619
        %v4240 = vpack.c.b16 %v3630, %v3625
        %v4241 = vpack.c.b16 %v3631, %v3626
        %v4242 = vpack.c.b16 %v3632, %v3627
        %v4243 = vpack.c.b16 %v3633, %v3628
        %v4244 = vpack.c.b16 %v3634, %v3629
        %v4245 = vpack.c.b16 %v3640, %v3635
        %v4246 = vpack.c.b16 %v3641, %v3636
        %v4247 = vpack.c.b16 %v3642, %v3637
        %v4248 = vpack.c.b16 %v3643, %v3638
        %v4249 = vpack.c.b16 %v3644, %v3639
        %v4250 = vpack.c.b16 %v3650, %v3645
        %v4251 = vpack.c.b16 %v3651, %v3646
        %v4252 = vpack.c.b16 %v3652, %v3647
        %v4253 = vpack.c.b16 %v3653, %v3648
        %v4254 = vpack.c.b16 %v3654, %v3649
        %v4255 = vpack.c.b16 %v3660, %v3655
        %v4256 = vpack.c.b16 %v3661, %v3656
        %v4257 = vpack.c.b16 %v3662, %v3657
        %v4258 = vpack.c.b16 %v3663, %v3658
        %v4259 = vpack.c.b16 %v3664, %v3659
        %v4260 = vpack.c.b16 %v3670, %v3665
        %v4261 = vpack.c.b16 %v3671, %v3666
        %v4262 = vpack.c.b16 %v3672, %v3667
        %v4263 = vpack.c.b16 %v3673, %v3668
        %v4264 = vpack.c.b16 %v3674, %v3669
        %v4265 = vpack.c.b16 %v3680, %v3675
        %v4266 = vpack.c.b16 %v3681, %v3676
        %v4267 = vpack.c.b16 %v3682, %v3677
        %v4268 = vpack.c.b16 %v3683, %v3678
        %v4269 = vpack.c.b16 %v3684, %v3679
        %v4270 = vpack.c.b16 %v3690, %v3685
        %v4271 = vpack.c.b16 %v3691, %v3686
        %v4272 = vpack.c.b16 %v3692, %v3687
        %v4273 = vpack.c.b16 %v3693, %v3688
        %v4274 = vpack.c.b16 %v3694, %v3689
        %v4275 = vpack.c.b16 %v3700, %v3695
        %v4276 = vpack.c.b16 %v3701, %v3696
        %v4277 = vpack.c.b16 %v3702, %v3697
        %v4278 = vpack.c.b16 %v3703, %v3698
        %v4279 = vpack.c.b16 %v3704, %v3699
        %v4280 = vpack.c.b16 %v3710, %v3705
        %v4281 = vpack.c.b16 %v3711, %v3706
        %v4282 = vpack.c.b16 %v3712, %v3707
        %v4283 = vpack.c.b16 %v3713, %v3708
        %v4284 = vpack.c.b16 %v3714, %v3709
        %v4285 = vpack.c.b16 %v3720, %v3715
        %v4286 = vpack.c.b16 %v3721, %v3716
        %v4287 = vpack.c.b16 %v3722, %v3717
        %v4288 = vpack.c.b16 %v3723, %v3718
        %v4289 = vpack.c.b16 %v3724, %v3719
        %v4290 = vpack.c.b16 %v3730, %v3725
        %v4291 = vpack.c.b16 %v3731, %v3726
        %v4292 = vpack.c.b16 %v3732, %v3727
        %v4293 = vpack.c.b16 %v3733, %v3728
        %v4294 = vpack.c.b16 %v3734, %v3729
        %v4295 = vpack.c.b16 %v3740, %v3735
        %v4296 = vpack.c.b16 %v3741, %v3736
        %v4297 = vpack.c.b16 %v3742, %v3737
        %v4298 = vpack.c.b16 %v3743, %v3738
        %v4299 = vpack.c.b16 %v3744, %v3739
        %v4300 = vpack.c.b16 %v3750, %v3745
        %v4301 = vpack.c.b16 %v3751, %v3746
        %v4302 = vpack.c.b16 %v3752, %v3747
        %v4303 = vpack.c.b16 %v3753, %v3748
        %v4304 = vpack.c.b16 %v3754, %v3749
        %v4305 = vpack.c.b16 %v3760, %v3755
        %v4306 = vpack.c.b16 %v3761, %v3756
        %v4307 = vpack.c.b16 %v3762, %v3757
        %v4308 = vpack.c.b16 %v3763, %v3758
        %v4309 = vpack.c.b16 %v3764, %v3759
        %v4310 = vpack.c.b16 %v3770, %v3765
        %v4311 = vpack.c.b16 %v3771, %v3766
        %v4312 = vpack.c.b16 %v3772, %v3767
        %v4313 = vpack.c.b16 %v3773, %v3768
        %v4314 = vpack.c.b16 %v3774, %v3769
        %v4315 = vpack.c.b16 %v3780, %v3775
        %v4316 = vpack.c.b16 %v3781, %v3776
        %v4317 = vpack.c.b16 %v3782, %v3777
        %v4318 = vpack.c.b16 %v3783, %v3778
        %v4319 = vpack.c.b16 %v3784, %v3779
        %v4320 = vpack.c.b16 %v3790, %v3785
        %v4321 = vpack.c.b16 %v3791, %v3786
        %v4322 = vpack.c.b16 %v3792, %v3787
        %v4323 = vpack.c.b16 %v3793, %v3788
        %v4324 = vpack.c.b16 %v3794, %v3789
        %v4325 = vpack.c.b16 %v3800, %v3795
        %v4326 = vpack.c.b16 %v3801, %v3796
        %v4327 = vpack.c.b16 %v3802, %v3797
        %v4328 = vpack.c.b16 %v3803, %v3798
        %v4329 = vpack.c.b16 %v3804, %v3799
        %v4330 = vpack.c.b16 %v3810, %v3805
        %v4331 = vpack.c.b16 %v3811, %v3806
        %v4332 = vpack.c.b16 %v3812, %v3807
        %v4333 = vpack.c.b16 %v3813, %v3808
        %v4334 = vpack.c.b16 %v3814, %v3809
        %4855 = vmatprep.subr.bf16.mxu0 %v3816
        %4856 = vmatpush1.bf16.msra.mxu0 %v3815
        %4857 = vmatprep.subr.bf16.mxu0 %v3821
        %4858 = vmatpush1.bf16.msra.mxu0 %v3820
        %4859 = vmatprep.subr.bf16.mxu0 %v3826
        %4860 = vmatpush1.bf16.msra.mxu0 %v3825
        %4861 = vmatprep.subr.bf16.mxu0 %v3831
        %4862 = vmatpush1.bf16.msra.mxu0 %v3830
        %4863 = vmatprep.subr.bf16.mxu0 %v3836
        %4864 = vmatpush1.bf16.msra.mxu0 %v3835
        %4865 = vmatprep.subr.bf16.mxu0 %v3841
        %4866 = vmatpush1.bf16.msra.mxu0 %v3840
        %4867 = vmatprep.subr.bf16.mxu0 %v3846
        %4868 = vmatpush1.bf16.msra.mxu0 %v3845
        %4869 = vmatprep.subr.bf16.mxu0 %v3851
        %4870 = vmatpush1.bf16.msra.mxu0 %v3850
        %4871 = vmatprep.subr.bf16.mxu0 %v3856
        %4872 = vmatpush1.bf16.msra.mxu0 %v3855
        %4873 = vmatprep.subr.bf16.mxu0 %v3861
        %4874 = vmatpush1.bf16.msra.mxu0 %v3860
        %4875 = vmatprep.subr.bf16.mxu0 %v3866
        %4876 = vmatpush1.bf16.msra.mxu0 %v3865
        %4877 = vmatprep.subr.bf16.mxu0 %v3871
        %4878 = vmatpush1.bf16.msra.mxu0 %v3870
        %4879 = vmatprep.subr.bf16.mxu0 %v3876
        %4880 = vmatpush1.bf16.msra.mxu0 %v3875
        %4881 = vmatprep.subr.bf16.mxu0 %v3881
        %4882 = vmatpush1.bf16.msra.mxu0 %v3880
        %4883 = vmatprep.subr.bf16.mxu0 %v3886
        %4884 = vmatpush1.bf16.msra.mxu0 %v3885
        %4885 = vmatprep.subr.bf16.mxu0 %v3891
        %4886 = vmatpush1.bf16.msra.mxu0 %v3890
        %4887 = vmatprep.mubr.bf16.mxu0 %v1736
        %4888 = vmatmul.mubr.bf16.gmra.mrb[0].mxu0 %v1735
        %v4889 = vpop.f32.mrb[0].mxu0
        %v4890 = vadd.f32 %v1073, %v4889
        %v4891 = vpop.f32.mrb[0].mxu0
        %v4892 = vadd.f32 %v1077, %v4891
        %v4893 = vpop.f32.mrb[0].mxu0
        %v4894 = vadd.f32 %v1073, %v4893
        %v4895 = vpop.f32.mrb[0].mxu0
        %v4896 = vadd.f32 %v1077, %v4895
        %4897 = vmatprep.mubr.bf16.mxu0 %v1749
        %4898 = vmatmul.mubr.bf16.gmra.mrb[0].mxu0 %v1748
        %v4899 = vpop.f32.mrb[0].mxu0
        %v4900 = vadd.f32 %v1073, %v4899
        %v4901 = vpop.f32.mrb[0].mxu0
        %v4902 = vadd.f32 %v1077, %v4901
        %v4903 = vpop.f32.mrb[0].mxu0
        %v4904 = vadd.f32 %v1073, %v4903
        %v4905 = vpop.f32.mrb[0].mxu0
        %v4906 = vadd.f32 %v1077, %v4905
        %4907 = vmatprep.mubr.bf16.mxu0 %v1762
        %4908 = vmatmul.mubr.bf16.gmra.mrb[0].mxu0 %v1761
        %v4909 = vpop.f32.mrb[0].mxu0
        %v4910 = vadd.f32 %v1073, %v4909
        %v4911 = vpop.f32.mrb[0].mxu0
        %v4912 = vadd.f32 %v1077, %v4911
        %v4913 = vpop.f32.mrb[0].mxu0
        %v4914 = vadd.f32 %v1073, %v4913
        %v4915 = vpop.f32.mrb[0].mxu0
        %v4916 = vadd.f32 %v1077, %v4915
        %4917 = vmatprep.mubr.bf16.mxu0 %v1775
        %4918 = vmatmul.mubr.bf16.gmra.mrb[0].mxu0 %v1774
        %v4919 = vpop.f32.mrb[0].mxu0
        %v4920 = vadd.f32 %v1073, %v4919
        %v4921 = vpop.f32.mrb[0].mxu0
        %v4922 = vadd.f32 %v1077, %v4921
        %v4923 = vpop.f32.mrb[0].mxu0
        %v4924 = vadd.f32 %v1073, %v4923
        %v4925 = vpop.f32.mrb[0].mxu0
        %v4926 = vadd.f32 %v1077, %v4925
        %4927 = vmatprep.mubr.bf16.mxu0 %v1788
        %4928 = vmatmul.mubr.bf16.gmra.mrb[0].mxu0 %v1787
        %v4929 = vpop.f32.mrb[0].mxu0
        %v4930 = vadd.f32 %v1073, %v4929
        %v4931 = vpop.f32.mrb[0].mxu0
        %v4932 = vadd.f32 %v1077, %v4931
        %v4933 = vpop.f32.mrb[0].mxu0
        %v4934 = vadd.f32 %v1073, %v4933
        %v4935 = vpop.f32.mrb[0].mxu0
        %v4936 = vadd.f32 %v1077, %v4935
        %4937 = vmatprep.mubr.bf16.mxu0 %v1801
        %4938 = vmatmul.mubr.bf16.gmra.mrb[0].mxu0 %v1800
        %v4939 = vpop.f32.mrb[0].mxu0
        %v4940 = vadd.f32 %v1073, %v4939
        %v4941 = vpop.f32.mrb[0].mxu0
        %v4942 = vadd.f32 %v1077, %v4941
        %v4943 = vpop.f32.mrb[0].mxu0
        %v4944 = vadd.f32 %v1073, %v4943
        %v4945 = vpop.f32.mrb[0].mxu0
        %v4946 = vadd.f32 %v1077, %v4945
        %4947 = vmatprep.mubr.bf16.mxu0 %v1814
        %4948 = vmatmul.mubr.bf16.gmra.mrb[0].mxu0 %v1813
        %v4949 = vpop.f32.mrb[0].mxu0
        %v4950 = vadd.f32 %v1073, %v4949
        %v4951 = vpop.f32.mrb[0].mxu0
        %v4952 = vadd.f32 %v1077, %v4951
        %v4953 = vpop.f32.mrb[0].mxu0
        %v4954 = vadd.f32 %v1073, %v4953
        %v4955 = vpop.f32.mrb[0].mxu0
        %v4956 = vadd.f32 %v1077, %v4955
        %4957 = vmatprep.mubr.bf16.mxu0 %v1827
        %4958 = vmatmul.mubr.bf16.gmra.mrb[0].mxu0 %v1826
        %v4959 = vpop.f32.mrb[0].mxu0
        %v4960 = vadd.f32 %v1073, %v4959
        %v4961 = vpop.f32.mrb[0].mxu0
        %v4962 = vadd.f32 %v1077, %v4961
        %v4963 = vpop.f32.mrb[0].mxu0
        %v4964 = vadd.f32 %v1073, %v4963
        %v4965 = vpop.f32.mrb[0].mxu0
        %v4966 = vadd.f32 %v1077, %v4965
        %4967 = vmatprep.mubr.bf16.mxu0 %v1840
        %4968 = vmatmul.mubr.bf16.gmra.mrb[0].mxu0 %v1839
        %v4969 = vpop.f32.mrb[0].mxu0
        %v4970 = vadd.f32 %v1073, %v4969
        %v4971 = vpop.f32.mrb[0].mxu0
        %v4972 = vadd.f32 %v1077, %v4971
        %v4973 = vpop.f32.mrb[0].mxu0
        %v4974 = vadd.f32 %v1073, %v4973
        %v4975 = vpop.f32.mrb[0].mxu0
        %v4976 = vadd.f32 %v1077, %v4975
        %4977 = vmatprep.mubr.bf16.mxu0 %v1853
        %4978 = vmatmul.mubr.bf16.gmra.mrb[0].mxu0 %v1852
        %v4979 = vpop.f32.mrb[0].mxu0
        %v4980 = vadd.f32 %v1073, %v4979
        %v4981 = vpop.f32.mrb[0].mxu0
        %v4982 = vadd.f32 %v1077, %v4981
        %v4983 = vpop.f32.mrb[0].mxu0
        %v4984 = vadd.f32 %v1073, %v4983
        %v4985 = vpop.f32.mrb[0].mxu0
        %v4986 = vadd.f32 %v1077, %v4985
        %4987 = vmatprep.mubr.bf16.mxu0 %v1866
        %4988 = vmatmul.mubr.bf16.gmra.mrb[0].mxu0 %v1865
        %v4989 = vpop.f32.mrb[0].mxu0
        %v4990 = vadd.f32 %v1073, %v4989
        %v4991 = vpop.f32.mrb[0].mxu0
        %v4992 = vadd.f32 %v1077, %v4991
        %v4993 = vpop.f32.mrb[0].mxu0
        %v4994 = vadd.f32 %v1073, %v4993
        %v4995 = vpop.f32.mrb[0].mxu0
        %v4996 = vadd.f32 %v1077, %v4995
        %4997 = vmatprep.mubr.bf16.mxu0 %v1879
        %4998 = vmatmul.mubr.bf16.gmra.mrb[0].mxu0 %v1878
        %v4999 = vpop.f32.mrb[0].mxu0
        %v5000 = vadd.f32 %v1073, %v4999
        %v5001 = vpop.f32.mrb[0].mxu0
        %v5002 = vadd.f32 %v1077, %v5001
        %v5003 = vpop.f32.mrb[0].mxu0
        %v5004 = vadd.f32 %v1073, %v5003
        %v5005 = vpop.f32.mrb[0].mxu0
        %v5006 = vadd.f32 %v1077, %v5005
        %5007 = vmatprep.mubr.bf16.mxu0 %v1892
        %5008 = vmatmul.mubr.bf16.gmra.mrb[0].mxu0 %v1891
        %v5009 = vpop.f32.mrb[0].mxu0
        %v5010 = vadd.f32 %v1073, %v5009
        %v5011 = vpop.f32.mrb[0].mxu0
        %v5012 = vadd.f32 %v1077, %v5011
        %v5013 = vpop.f32.mrb[0].mxu0
        %v5014 = vadd.f32 %v1073, %v5013
        %v5015 = vpop.f32.mrb[0].mxu0
        %v5016 = vadd.f32 %v1077, %v5015
        %5017 = vmatprep.mubr.bf16.mxu0 %v1905
        %5018 = vmatmul.mubr.bf16.gmra.mrb[0].mxu0 %v1904
        %v5019 = vpop.f32.mrb[0].mxu0
        %v5020 = vadd.f32 %v1073, %v5019
        %v5021 = vpop.f32.mrb[0].mxu0
        %v5022 = vadd.f32 %v1077, %v5021
        %v5023 = vpop.f32.mrb[0].mxu0
        %v5024 = vadd.f32 %v1073, %v5023
        %v5025 = vpop.f32.mrb[0].mxu0
        %v5026 = vadd.f32 %v1077, %v5025
        %5027 = vmatprep.mubr.bf16.mxu0 %v1918
        %5028 = vmatmul.mubr.bf16.gmra.mrb[0].mxu0 %v1917
        %v5029 = vpop.f32.mrb[0].mxu0
        %v5030 = vadd.f32 %v1073, %v5029
        %v5031 = vpop.f32.mrb[0].mxu0
        %v5032 = vadd.f32 %v1077, %v5031
        %v5033 = vpop.f32.mrb[0].mxu0
        %v5034 = vadd.f32 %v1073, %v5033
        %v5035 = vpop.f32.mrb[0].mxu0
        %v5036 = vadd.f32 %v1077, %v5035
        %5037 = vmatprep.mubr.bf16.mxu0 %v1931
        %5038 = vmatmul.mubr.bf16.gmra.mrb[0].mxu0 %v1930
        %v5039 = vpop.f32.mrb[0].mxu0
        %v5040 = vadd.f32 %v1073, %v5039
        %v5041 = vpop.f32.mrb[0].mxu0
        %v5042 = vadd.f32 %v1077, %v5041
        %v5043 = vpop.f32.mrb[0].mxu0
        %v5044 = vadd.f32 %v1073, %v5043
        %v5045 = vpop.f32.mrb[0].mxu0
        %v5046 = vadd.f32 %v1077, %v5045
        %5047 = vdwg.mxu0
        %5048 = vmatprep.subr.bf16.mxu0 %v3896
        %5049 = vmatpush1.bf16.msra.mxu0 %v3895
        %5050 = vmatprep.subr.bf16.mxu0 %v3901
        %5051 = vmatpush1.bf16.msra.mxu0 %v3900
        %5052 = vmatprep.subr.bf16.mxu0 %v3906
        %5053 = vmatpush1.bf16.msra.mxu0 %v3905
        %5054 = vmatprep.subr.bf16.mxu0 %v3911
        %5055 = vmatpush1.bf16.msra.mxu0 %v3910
        %5056 = vmatprep.subr.bf16.mxu0 %v3916
        %5057 = vmatpush1.bf16.msra.mxu0 %v3915
        %5058 = vmatprep.subr.bf16.mxu0 %v3921
        %5059 = vmatpush1.bf16.msra.mxu0 %v3920
        %5060 = vmatprep.subr.bf16.mxu0 %v3926
        %5061 = vmatpush1.bf16.msra.mxu0 %v3925
        %5062 = vmatprep.subr.bf16.mxu0 %v3931
        %5063 = vmatpush1.bf16.msra.mxu0 %v3930
        %5064 = vmatprep.subr.bf16.mxu0 %v3936
        %5065 = vmatpush1.bf16.msra.mxu0 %v3935
        %5066 = vmatprep.subr.bf16.mxu0 %v3941
        %5067 = vmatpush1.bf16.msra.mxu0 %v3940
        %5068 = vmatprep.subr.bf16.mxu0 %v3946
        %5069 = vmatpush1.bf16.msra.mxu0 %v3945
        %5070 = vmatprep.subr.bf16.mxu0 %v3951
        %5071 = vmatpush1.bf16.msra.mxu0 %v3950
        %5072 = vmatprep.subr.bf16.mxu0 %v3956
        %5073 = vmatpush1.bf16.msra.mxu0 %v3955
        %5074 = vmatprep.subr.bf16.mxu0 %v3961
        %5075 = vmatpush1.bf16.msra.mxu0 %v3960
        %5076 = vmatprep.subr.bf16.mxu0 %v3966
        %5077 = vmatpush1.bf16.msra.mxu0 %v3965
        %5078 = vmatprep.subr.bf16.mxu0 %v3971
        %5079 = vmatpush1.bf16.msra.mxu0 %v3970
        %5080 = vmatprep.mubr.bf16.mxu0 %v1738
        %5081 = vmatmul.mubr.bf16.gmra.mrb[0].mxu0 %v1737
        %v5082 = vpop.f32.mrb[0].mxu0
        %v5083 = vadd.f32 %v4890, %v5082
        %v5084 = vpop.f32.mrb[0].mxu0
        %v5085 = vadd.f32 %v4892, %v5084
        %v5086 = vpop.f32.mrb[0].mxu0
        %v5087 = vadd.f32 %v4894, %v5086
        %v5088 = vpop.f32.mrb[0].mxu0
        %v5089 = vadd.f32 %v4896, %v5088
        %5090 = vmatprep.mubr.bf16.mxu0 %v1751
        %5091 = vmatmul.mubr.bf16.gmra.mrb[0].mxu0 %v1750
        %v5092 = vpop.f32.mrb[0].mxu0
        %v5093 = vadd.f32 %v4900, %v5092
        %v5094 = vpop.f32.mrb[0].mxu0
        %v5095 = vadd.f32 %v4902, %v5094
        %v5096 = vpop.f32.mrb[0].mxu0
        %v5097 = vadd.f32 %v4904, %v5096
        %v5098 = vpop.f32.mrb[0].mxu0
        %v5099 = vadd.f32 %v4906, %v5098
        %5100 = vmatprep.mubr.bf16.mxu0 %v1764
        %5101 = vmatmul.mubr.bf16.gmra.mrb[0].mxu0 %v1763
        %v5102 = vpop.f32.mrb[0].mxu0
        %v5103 = vadd.f32 %v4910, %v5102
        %v5104 = vpop.f32.mrb[0].mxu0
        %v5105 = vadd.f32 %v4912, %v5104
        %v5106 = vpop.f32.mrb[0].mxu0
        %v5107 = vadd.f32 %v4914, %v5106
        %v5108 = vpop.f32.mrb[0].mxu0
        %v5109 = vadd.f32 %v4916, %v5108
        %5110 = vmatprep.mubr.bf16.mxu0 %v1777
        %5111 = vmatmul.mubr.bf16.gmra.mrb[0].mxu0 %v1776
        %v5112 = vpop.f32.mrb[0].mxu0
        %v5113 = vadd.f32 %v4920, %v5112
        %v5114 = vpop.f32.mrb[0].mxu0
        %v5115 = vadd.f32 %v4922, %v5114
        %v5116 = vpop.f32.mrb[0].mxu0
        %v5117 = vadd.f32 %v4924, %v5116
        %v5118 = vpop.f32.mrb[0].mxu0
        %v5119 = vadd.f32 %v4926, %v5118
        %5120 = vmatprep.mubr.bf16.mxu0 %v1790
        %5121 = vmatmul.mubr.bf16.gmra.mrb[0].mxu0 %v1789
        %v5122 = vpop.f32.mrb[0].mxu0
        %v5123 = vadd.f32 %v4930, %v5122
        %v5124 = vpop.f32.mrb[0].mxu0
        %v5125 = vadd.f32 %v4932, %v5124
        %v5126 = vpop.f32.mrb[0].mxu0
        %v5127 = vadd.f32 %v4934, %v5126
        %v5128 = vpop.f32.mrb[0].mxu0
        %v5129 = vadd.f32 %v4936, %v5128
        %5130 = vmatprep.mubr.bf16.mxu0 %v1803
        %5131 = vmatmul.mubr.bf16.gmra.mrb[0].mxu0 %v1802
        %v5132 = vpop.f32.mrb[0].mxu0
        %v5133 = vadd.f32 %v4940, %v5132
        %v5134 = vpop.f32.mrb[0].mxu0
        %v5135 = vadd.f32 %v4942, %v5134
        %v5136 = vpop.f32.mrb[0].mxu0
        %v5137 = vadd.f32 %v4944, %v5136
        %v5138 = vpop.f32.mrb[0].mxu0
        %v5139 = vadd.f32 %v4946, %v5138
        %5140 = vmatprep.mubr.bf16.mxu0 %v1816
        %5141 = vmatmul.mubr.bf16.gmra.mrb[0].mxu0 %v1815
        %v5142 = vpop.f32.mrb[0].mxu0
        %v5143 = vadd.f32 %v4950, %v5142
        %v5144 = vpop.f32.mrb[0].mxu0
        %v5145 = vadd.f32 %v4952, %v5144
        %v5146 = vpop.f32.mrb[0].mxu0
        %v5147 = vadd.f32 %v4954, %v5146
        %v5148 = vpop.f32.mrb[0].mxu0
        %v5149 = vadd.f32 %v4956, %v5148
        %5150 = vmatprep.mubr.bf16.mxu0 %v1829
        %5151 = vmatmul.mubr.bf16.gmra.mrb[0].mxu0 %v1828
        %v5152 = vpop.f32.mrb[0].mxu0
        %v5153 = vadd.f32 %v4960, %v5152
        %v5154 = vpop.f32.mrb[0].mxu0
        %v5155 = vadd.f32 %v4962, %v5154
        %v5156 = vpop.f32.mrb[0].mxu0
        %v5157 = vadd.f32 %v4964, %v5156
        %v5158 = vpop.f32.mrb[0].mxu0
        %v5159 = vadd.f32 %v4966, %v5158
        %5160 = vmatprep.mubr.bf16.mxu0 %v1842
        %5161 = vmatmul.mubr.bf16.gmra.mrb[0].mxu0 %v1841
        %v5162 = vpop.f32.mrb[0].mxu0
        %v5163 = vadd.f32 %v4970, %v5162
        %v5164 = vpop.f32.mrb[0].mxu0
        %v5165 = vadd.f32 %v4972, %v5164
        %v5166 = vpop.f32.mrb[0].mxu0
        %v5167 = vadd.f32 %v4974, %v5166
        %v5168 = vpop.f32.mrb[0].mxu0
        %v5169 = vadd.f32 %v4976, %v5168
        %5170 = vmatprep.mubr.bf16.mxu0 %v1855
        %5171 = vmatmul.mubr.bf16.gmra.mrb[0].mxu0 %v1854
        %v5172 = vpop.f32.mrb[0].mxu0
        %v5173 = vadd.f32 %v4980, %v5172
        %v5174 = vpop.f32.mrb[0].mxu0
        %v5175 = vadd.f32 %v4982, %v5174
        %v5176 = vpop.f32.mrb[0].mxu0
        %v5177 = vadd.f32 %v4984, %v5176
        %v5178 = vpop.f32.mrb[0].mxu0
        %v5179 = vadd.f32 %v4986, %v5178
        %5180 = vmatprep.mubr.bf16.mxu0 %v1868
        %5181 = vmatmul.mubr.bf16.gmra.mrb[0].mxu0 %v1867
        %v5182 = vpop.f32.mrb[0].mxu0
        %v5183 = vadd.f32 %v4990, %v5182
        %v5184 = vpop.f32.mrb[0].mxu0
        %v5185 = vadd.f32 %v4992, %v5184
        %v5186 = vpop.f32.mrb[0].mxu0
        %v5187 = vadd.f32 %v4994, %v5186
        %v5188 = vpop.f32.mrb[0].mxu0
        %v5189 = vadd.f32 %v4996, %v5188
        %5190 = vmatprep.mubr.bf16.mxu0 %v1881
        %5191 = vmatmul.mubr.bf16.gmra.mrb[0].mxu0 %v1880
        %v5192 = vpop.f32.mrb[0].mxu0
        %v5193 = vadd.f32 %v5000, %v5192
        %v5194 = vpop.f32.mrb[0].mxu0
        %v5195 = vadd.f32 %v5002, %v5194
        %v5196 = vpop.f32.mrb[0].mxu0
        %v5197 = vadd.f32 %v5004, %v5196
        %v5198 = vpop.f32.mrb[0].mxu0
        %v5199 = vadd.f32 %v5006, %v5198
        %5200 = vmatprep.mubr.bf16.mxu0 %v1894
        %5201 = vmatmul.mubr.bf16.gmra.mrb[0].mxu0 %v1893
        %v5202 = vpop.f32.mrb[0].mxu0
        %v5203 = vadd.f32 %v5010, %v5202
        %v5204 = vpop.f32.mrb[0].mxu0
        %v5205 = vadd.f32 %v5012, %v5204
        %v5206 = vpop.f32.mrb[0].mxu0
        %v5207 = vadd.f32 %v5014, %v5206
        %v5208 = vpop.f32.mrb[0].mxu0
        %v5209 = vadd.f32 %v5016, %v5208
        %5210 = vmatprep.mubr.bf16.mxu0 %v1907
        %5211 = vmatmul.mubr.bf16.gmra.mrb[0].mxu0 %v1906
        %v5212 = vpop.f32.mrb[0].mxu0
        %v5213 = vadd.f32 %v5020, %v5212
        %v5214 = vpop.f32.mrb[0].mxu0
        %v5215 = vadd.f32 %v5022, %v5214
        %v5216 = vpop.f32.mrb[0].mxu0
        %v5217 = vadd.f32 %v5024, %v5216
        %v5218 = vpop.f32.mrb[0].mxu0
        %v5219 = vadd.f32 %v5026, %v5218
        %5220 = vmatprep.mubr.bf16.mxu0 %v1920
        %5221 = vmatmul.mubr.bf16.gmra.mrb[0].mxu0 %v1919
        %v5222 = vpop.f32.mrb[0].mxu0
        %v5223 = vadd.f32 %v5030, %v5222
        %v5224 = vpop.f32.mrb[0].mxu0
        %v5225 = vadd.f32 %v5032, %v5224
        %v5226 = vpop.f32.mrb[0].mxu0
        %v5227 = vadd.f32 %v5034, %v5226
        %v5228 = vpop.f32.mrb[0].mxu0
        %v5229 = vadd.f32 %v5036, %v5228
        %5230 = vmatprep.mubr.bf16.mxu0 %v1933
        %5231 = vmatmul.mubr.bf16.gmra.mrb[0].mxu0 %v1932
        %v5232 = vpop.f32.mrb[0].mxu0
        %v5233 = vadd.f32 %v5040, %v5232
        %v5234 = vpop.f32.mrb[0].mxu0
        %v5235 = vadd.f32 %v5042, %v5234
        %v5236 = vpop.f32.mrb[0].mxu0
        %v5237 = vadd.f32 %v5044, %v5236
        %v5238 = vpop.f32.mrb[0].mxu0
        %v5239 = vadd.f32 %v5046, %v5238
        %5240 = vdwg.mxu0
        %5241 = vmatprep.subr.bf16.mxu0 %v3976
        %5242 = vmatpush1.bf16.msra.mxu0 %v3975
        %5243 = vmatprep.subr.bf16.mxu0 %v3981
        %5244 = vmatpush1.bf16.msra.mxu0 %v3980
        %5245 = vmatprep.subr.bf16.mxu0 %v3986
        %5246 = vmatpush1.bf16.msra.mxu0 %v3985
        %5247 = vmatprep.subr.bf16.mxu0 %v3991
        %5248 = vmatpush1.bf16.msra.mxu0 %v3990
        %5249 = vmatprep.subr.bf16.mxu0 %v3996
        %5250 = vmatpush1.bf16.msra.mxu0 %v3995
        %5251 = vmatprep.subr.bf16.mxu0 %v4001
        %5252 = vmatpush1.bf16.msra.mxu0 %v4000
        %5253 = vmatprep.subr.bf16.mxu0 %v4006
        %5254 = vmatpush1.bf16.msra.mxu0 %v4005
        %5255 = vmatprep.subr.bf16.mxu0 %v4011
        %5256 = vmatpush1.bf16.msra.mxu0 %v4010
        %5257 = vmatprep.subr.bf16.mxu0 %v4016
        %5258 = vmatpush1.bf16.msra.mxu0 %v4015
        %5259 = vmatprep.subr.bf16.mxu0 %v4021
        %5260 = vmatpush1.bf16.msra.mxu0 %v4020
        %5261 = vmatprep.subr.bf16.mxu0 %v4026
        %5262 = vmatpush1.bf16.msra.mxu0 %v4025
        %5263 = vmatprep.subr.bf16.mxu0 %v4031
        %5264 = vmatpush1.bf16.msra.mxu0 %v4030
        %5265 = vmatprep.subr.bf16.mxu0 %v4036
        %5266 = vmatpush1.bf16.msra.mxu0 %v4035
        %5267 = vmatprep.subr.bf16.mxu0 %v4041
        %5268 = vmatpush1.bf16.msra.mxu0 %v4040
        %5269 = vmatprep.subr.bf16.mxu0 %v4046
        %5270 = vmatpush1.bf16.msra.mxu0 %v4045
        %5271 = vmatprep.subr.bf16.mxu0 %v4051
        %5272 = vmatpush1.bf16.msra.mxu0 %v4050
        %5273 = vmatprep.mubr.bf16.mxu0 %v1740
        %5274 = vmatmul.mubr.bf16.gmra.mrb[0].mxu0 %v1739
        %v5275 = vpop.f32.mrb[0].mxu0
        %v5276 = vadd.f32 %v5083, %v5275
        %v5277 = vpop.f32.mrb[0].mxu0
        %v5278 = vadd.f32 %v5085, %v5277
        %v5279 = vpop.f32.mrb[0].mxu0
        %v5280 = vadd.f32 %v5087, %v5279
        %v5281 = vpop.f32.mrb[0].mxu0
        %v5282 = vadd.f32 %v5089, %v5281
        %5283 = vmatprep.mubr.bf16.mxu0 %v1753
        %5284 = vmatmul.mubr.bf16.gmra.mrb[0].mxu0 %v1752
        %v5285 = vpop.f32.mrb[0].mxu0
        %v5286 = vadd.f32 %v5093, %v5285
        %v5287 = vpop.f32.mrb[0].mxu0
        %v5288 = vadd.f32 %v5095, %v5287
        %v5289 = vpop.f32.mrb[0].mxu0
        %v5290 = vadd.f32 %v5097, %v5289
        %v5291 = vpop.f32.mrb[0].mxu0
        %v5292 = vadd.f32 %v5099, %v5291
        %5293 = vmatprep.mubr.bf16.mxu0 %v1766
        %5294 = vmatmul.mubr.bf16.gmra.mrb[0].mxu0 %v1765
        %v5295 = vpop.f32.mrb[0].mxu0
        %v5296 = vadd.f32 %v5103, %v5295
        %v5297 = vpop.f32.mrb[0].mxu0
        %v5298 = vadd.f32 %v5105, %v5297
        %v5299 = vpop.f32.mrb[0].mxu0
        %v5300 = vadd.f32 %v5107, %v5299
        %v5301 = vpop.f32.mrb[0].mxu0
        %v5302 = vadd.f32 %v5109, %v5301
        %5303 = vmatprep.mubr.bf16.mxu0 %v1779
        %5304 = vmatmul.mubr.bf16.gmra.mrb[0].mxu0 %v1778
        %v5305 = vpop.f32.mrb[0].mxu0
        %v5306 = vadd.f32 %v5113, %v5305
        %v5307 = vpop.f32.mrb[0].mxu0
        %v5308 = vadd.f32 %v5115, %v5307
        %v5309 = vpop.f32.mrb[0].mxu0
        %v5310 = vadd.f32 %v5117, %v5309
        %v5311 = vpop.f32.mrb[0].mxu0
        %v5312 = vadd.f32 %v5119, %v5311
        %5313 = vmatprep.mubr.bf16.mxu0 %v1792
        %5314 = vmatmul.mubr.bf16.gmra.mrb[0].mxu0 %v1791
        %v5315 = vpop.f32.mrb[0].mxu0
        %v5316 = vadd.f32 %v5123, %v5315
        %v5317 = vpop.f32.mrb[0].mxu0
        %v5318 = vadd.f32 %v5125, %v5317
        %v5319 = vpop.f32.mrb[0].mxu0
        %v5320 = vadd.f32 %v5127, %v5319
        %v5321 = vpop.f32.mrb[0].mxu0
        %v5322 = vadd.f32 %v5129, %v5321
        %5323 = vmatprep.mubr.bf16.mxu0 %v1805
        %5324 = vmatmul.mubr.bf16.gmra.mrb[0].mxu0 %v1804
        %v5325 = vpop.f32.mrb[0].mxu0
        %v5326 = vadd.f32 %v5133, %v5325
        %v5327 = vpop.f32.mrb[0].mxu0
        %v5328 = vadd.f32 %v5135, %v5327
        %v5329 = vpop.f32.mrb[0].mxu0
        %v5330 = vadd.f32 %v5137, %v5329
        %v5331 = vpop.f32.mrb[0].mxu0
        %v5332 = vadd.f32 %v5139, %v5331
        %5333 = vmatprep.mubr.bf16.mxu0 %v1818
        %5334 = vmatmul.mubr.bf16.gmra.mrb[0].mxu0 %v1817
        %v5335 = vpop.f32.mrb[0].mxu0
        %v5336 = vadd.f32 %v5143, %v5335
        %v5337 = vpop.f32.mrb[0].mxu0
        %v5338 = vadd.f32 %v5145, %v5337
        %v5339 = vpop.f32.mrb[0].mxu0
        %v5340 = vadd.f32 %v5147, %v5339
        %v5341 = vpop.f32.mrb[0].mxu0
        %v5342 = vadd.f32 %v5149, %v5341
        %5343 = vmatprep.mubr.bf16.mxu0 %v1831
        %5344 = vmatmul.mubr.bf16.gmra.mrb[0].mxu0 %v1830
        %v5345 = vpop.f32.mrb[0].mxu0
        %v5346 = vadd.f32 %v5153, %v5345
        %v5347 = vpop.f32.mrb[0].mxu0
        %v5348 = vadd.f32 %v5155, %v5347
        %v5349 = vpop.f32.mrb[0].mxu0
        %v5350 = vadd.f32 %v5157, %v5349
        %v5351 = vpop.f32.mrb[0].mxu0
        %v5352 = vadd.f32 %v5159, %v5351
        %5353 = vmatprep.mubr.bf16.mxu0 %v1844
        %5354 = vmatmul.mubr.bf16.gmra.mrb[0].mxu0 %v1843
        %v5355 = vpop.f32.mrb[0].mxu0
        %v5356 = vadd.f32 %v5163, %v5355
        %v5357 = vpop.f32.mrb[0].mxu0
        %v5358 = vadd.f32 %v5165, %v5357
        %v5359 = vpop.f32.mrb[0].mxu0
        %v5360 = vadd.f32 %v5167, %v5359
        %v5361 = vpop.f32.mrb[0].mxu0
        %v5362 = vadd.f32 %v5169, %v5361
        %5363 = vmatprep.mubr.bf16.mxu0 %v1857
        %5364 = vmatmul.mubr.bf16.gmra.mrb[0].mxu0 %v1856
        %v5365 = vpop.f32.mrb[0].mxu0
        %v5366 = vadd.f32 %v5173, %v5365
        %v5367 = vpop.f32.mrb[0].mxu0
        %v5368 = vadd.f32 %v5175, %v5367
        %v5369 = vpop.f32.mrb[0].mxu0
        %v5370 = vadd.f32 %v5177, %v5369
        %v5371 = vpop.f32.mrb[0].mxu0
        %v5372 = vadd.f32 %v5179, %v5371
        %5373 = vmatprep.mubr.bf16.mxu0 %v1870
        %5374 = vmatmul.mubr.bf16.gmra.mrb[0].mxu0 %v1869
        %v5375 = vpop.f32.mrb[0].mxu0
        %v5376 = vadd.f32 %v5183, %v5375
        %v5377 = vpop.f32.mrb[0].mxu0
        %v5378 = vadd.f32 %v5185, %v5377
        %v5379 = vpop.f32.mrb[0].mxu0
        %v5380 = vadd.f32 %v5187, %v5379
        %v5381 = vpop.f32.mrb[0].mxu0
        %v5382 = vadd.f32 %v5189, %v5381
        %5383 = vmatprep.mubr.bf16.mxu0 %v1883
        %5384 = vmatmul.mubr.bf16.gmra.mrb[0].mxu0 %v1882
        %v5385 = vpop.f32.mrb[0].mxu0
        %v5386 = vadd.f32 %v5193, %v5385
        %v5387 = vpop.f32.mrb[0].mxu0
        %v5388 = vadd.f32 %v5195, %v5387
        %v5389 = vpop.f32.mrb[0].mxu0
        %v5390 = vadd.f32 %v5197, %v5389
        %v5391 = vpop.f32.mrb[0].mxu0
        %v5392 = vadd.f32 %v5199, %v5391
        %5393 = vmatprep.mubr.bf16.mxu0 %v1896
        %5394 = vmatmul.mubr.bf16.gmra.mrb[0].mxu0 %v1895
        %v5395 = vpop.f32.mrb[0].mxu0
        %v5396 = vadd.f32 %v5203, %v5395
        %v5397 = vpop.f32.mrb[0].mxu0
        %v5398 = vadd.f32 %v5205, %v5397
        %v5399 = vpop.f32.mrb[0].mxu0
        %v5400 = vadd.f32 %v5207, %v5399
        %v5401 = vpop.f32.mrb[0].mxu0
        %v5402 = vadd.f32 %v5209, %v5401
        %5403 = vmatprep.mubr.bf16.mxu0 %v1909
        %5404 = vmatmul.mubr.bf16.gmra.mrb[0].mxu0 %v1908
        %v5405 = vpop.f32.mrb[0].mxu0
        %v5406 = vadd.f32 %v5213, %v5405
        %v5407 = vpop.f32.mrb[0].mxu0
        %v5408 = vadd.f32 %v5215, %v5407
        %v5409 = vpop.f32.mrb[0].mxu0
        %v5410 = vadd.f32 %v5217, %v5409
        %v5411 = vpop.f32.mrb[0].mxu0
        %v5412 = vadd.f32 %v5219, %v5411
        %5413 = vmatprep.mubr.bf16.mxu0 %v1922
        %5414 = vmatmul.mubr.bf16.gmra.mrb[0].mxu0 %v1921
        %v5415 = vpop.f32.mrb[0].mxu0
        %v5416 = vadd.f32 %v5223, %v5415
        %v5417 = vpop.f32.mrb[0].mxu0
        %v5418 = vadd.f32 %v5225, %v5417
        %v5419 = vpop.f32.mrb[0].mxu0
        %v5420 = vadd.f32 %v5227, %v5419
        %v5421 = vpop.f32.mrb[0].mxu0
        %v5422 = vadd.f32 %v5229, %v5421
        %5423 = vmatprep.mubr.bf16.mxu0 %v1935
        %5424 = vmatmul.mubr.bf16.gmra.mrb[0].mxu0 %v1934
        %v5425 = vpop.f32.mrb[0].mxu0
        %v5426 = vadd.f32 %v5233, %v5425
        %v5427 = vpop.f32.mrb[0].mxu0
        %v5428 = vadd.f32 %v5235, %v5427
        %v5429 = vpop.f32.mrb[0].mxu0
        %v5430 = vadd.f32 %v5237, %v5429
        %v5431 = vpop.f32.mrb[0].mxu0
        %v5432 = vadd.f32 %v5239, %v5431
        %5433 = vdwg.mxu0
        %5434 = vmatprep.subr.bf16.mxu0 %v4056
        %5435 = vmatpush1.bf16.msra.mxu0 %v4055
        %5436 = vmatprep.subr.bf16.mxu0 %v4061
        %5437 = vmatpush1.bf16.msra.mxu0 %v4060
        %5438 = vmatprep.subr.bf16.mxu0 %v4066
        %5439 = vmatpush1.bf16.msra.mxu0 %v4065
        %5440 = vmatprep.subr.bf16.mxu0 %v4071
        %5441 = vmatpush1.bf16.msra.mxu0 %v4070
        %5442 = vmatprep.subr.bf16.mxu0 %v4076
        %5443 = vmatpush1.bf16.msra.mxu0 %v4075
        %5444 = vmatprep.subr.bf16.mxu0 %v4081
        %5445 = vmatpush1.bf16.msra.mxu0 %v4080
        %5446 = vmatprep.subr.bf16.mxu0 %v4086
        %5447 = vmatpush1.bf16.msra.mxu0 %v4085
        %5448 = vmatprep.subr.bf16.mxu0 %v4091
        %5449 = vmatpush1.bf16.msra.mxu0 %v4090
        %5450 = vmatprep.subr.bf16.mxu0 %v4096
        %5451 = vmatpush1.bf16.msra.mxu0 %v4095
        %5452 = vmatprep.subr.bf16.mxu0 %v4101
        %5453 = vmatpush1.bf16.msra.mxu0 %v4100
        %5454 = vmatprep.subr.bf16.mxu0 %v4106
        %5455 = vmatpush1.bf16.msra.mxu0 %v4105
        %5456 = vmatprep.subr.bf16.mxu0 %v4111
        %5457 = vmatpush1.bf16.msra.mxu0 %v4110
        %5458 = vmatprep.subr.bf16.mxu0 %v4116
        %5459 = vmatpush1.bf16.msra.mxu0 %v4115
        %5460 = vmatprep.subr.bf16.mxu0 %v4121
        %5461 = vmatpush1.bf16.msra.mxu0 %v4120
        %5462 = vmatprep.subr.bf16.mxu0 %v4126
        %5463 = vmatpush1.bf16.msra.mxu0 %v4125
        %5464 = vmatprep.subr.bf16.mxu0 %v4131
        %5465 = vmatpush1.bf16.msra.mxu0 %v4130
        %5466 = vmatprep.mubr.bf16.mxu0 %v1742
        %5467 = vmatmul.mubr.bf16.gmra.mrb[0].mxu0 %v1741
        %v5468 = vpop.f32.mrb[0].mxu0
        %v5469 = vadd.f32 %v5276, %v5468
        %v5470 = vpop.f32.mrb[0].mxu0
        %v5471 = vadd.f32 %v5278, %v5470
        %v5472 = vpop.f32.mrb[0].mxu0
        %v5473 = vadd.f32 %v5280, %v5472
        %v5474 = vpop.f32.mrb[0].mxu0
        %v5475 = vadd.f32 %v5282, %v5474
        %5476 = vmatprep.mubr.bf16.mxu0 %v1755
        %5477 = vmatmul.mubr.bf16.gmra.mrb[0].mxu0 %v1754
        %v5478 = vpop.f32.mrb[0].mxu0
        %v5479 = vadd.f32 %v5286, %v5478
        %v5480 = vpop.f32.mrb[0].mxu0
        %v5481 = vadd.f32 %v5288, %v5480
        %v5482 = vpop.f32.mrb[0].mxu0
        %v5483 = vadd.f32 %v5290, %v5482
        %v5484 = vpop.f32.mrb[0].mxu0
        %v5485 = vadd.f32 %v5292, %v5484
        %5486 = vmatprep.mubr.bf16.mxu0 %v1768
        %5487 = vmatmul.mubr.bf16.gmra.mrb[0].mxu0 %v1767
        %v5488 = vpop.f32.mrb[0].mxu0
        %v5489 = vadd.f32 %v5296, %v5488
        %v5490 = vpop.f32.mrb[0].mxu0
        %v5491 = vadd.f32 %v5298, %v5490
        %v5492 = vpop.f32.mrb[0].mxu0
        %v5493 = vadd.f32 %v5300, %v5492
        %v5494 = vpop.f32.mrb[0].mxu0
        %v5495 = vadd.f32 %v5302, %v5494
        %5496 = vmatprep.mubr.bf16.mxu0 %v1781
        %5497 = vmatmul.mubr.bf16.gmra.mrb[0].mxu0 %v1780
        %v5498 = vpop.f32.mrb[0].mxu0
        %v5499 = vadd.f32 %v5306, %v5498
        %v5500 = vpop.f32.mrb[0].mxu0
        %v5501 = vadd.f32 %v5308, %v5500
        %v5502 = vpop.f32.mrb[0].mxu0
        %v5503 = vadd.f32 %v5310, %v5502
        %v5504 = vpop.f32.mrb[0].mxu0
        %v5505 = vadd.f32 %v5312, %v5504
        %5506 = vmatprep.mubr.bf16.mxu0 %v1794
        %5507 = vmatmul.mubr.bf16.gmra.mrb[0].mxu0 %v1793
        %v5508 = vpop.f32.mrb[0].mxu0
        %v5509 = vadd.f32 %v5316, %v5508
        %v5510 = vpop.f32.mrb[0].mxu0
        %v5511 = vadd.f32 %v5318, %v5510
        %v5512 = vpop.f32.mrb[0].mxu0
        %v5513 = vadd.f32 %v5320, %v5512
        %v5514 = vpop.f32.mrb[0].mxu0
        %v5515 = vadd.f32 %v5322, %v5514
        %5516 = vmatprep.mubr.bf16.mxu0 %v1807
        %5517 = vmatmul.mubr.bf16.gmra.mrb[0].mxu0 %v1806
        %v5518 = vpop.f32.mrb[0].mxu0
        %v5519 = vadd.f32 %v5326, %v5518
        %v5520 = vpop.f32.mrb[0].mxu0
        %v5521 = vadd.f32 %v5328, %v5520
        %v5522 = vpop.f32.mrb[0].mxu0
        %v5523 = vadd.f32 %v5330, %v5522
        %v5524 = vpop.f32.mrb[0].mxu0
        %v5525 = vadd.f32 %v5332, %v5524
        %5526 = vmatprep.mubr.bf16.mxu0 %v1820
        %5527 = vmatmul.mubr.bf16.gmra.mrb[0].mxu0 %v1819
        %v5528 = vpop.f32.mrb[0].mxu0
        %v5529 = vadd.f32 %v5336, %v5528
        %v5530 = vpop.f32.mrb[0].mxu0
        %v5531 = vadd.f32 %v5338, %v5530
        %v5532 = vpop.f32.mrb[0].mxu0
        %v5533 = vadd.f32 %v5340, %v5532
        %v5534 = vpop.f32.mrb[0].mxu0
        %v5535 = vadd.f32 %v5342, %v5534
        %5536 = vmatprep.mubr.bf16.mxu0 %v1833
        %5537 = vmatmul.mubr.bf16.gmra.mrb[0].mxu0 %v1832
        %v5538 = vpop.f32.mrb[0].mxu0
        %v5539 = vadd.f32 %v5346, %v5538
        %v5540 = vpop.f32.mrb[0].mxu0
        %v5541 = vadd.f32 %v5348, %v5540
        %v5542 = vpop.f32.mrb[0].mxu0
        %v5543 = vadd.f32 %v5350, %v5542
        %v5544 = vpop.f32.mrb[0].mxu0
        %v5545 = vadd.f32 %v5352, %v5544
        %5546 = vmatprep.mubr.bf16.mxu0 %v1846
        %5547 = vmatmul.mubr.bf16.gmra.mrb[0].mxu0 %v1845
        %v5548 = vpop.f32.mrb[0].mxu0
        %v5549 = vadd.f32 %v5356, %v5548
        %v5550 = vpop.f32.mrb[0].mxu0
        %v5551 = vadd.f32 %v5358, %v5550
        %v5552 = vpop.f32.mrb[0].mxu0
        %v5553 = vadd.f32 %v5360, %v5552
        %v5554 = vpop.f32.mrb[0].mxu0
        %v5555 = vadd.f32 %v5362, %v5554
        %5556 = vmatprep.mubr.bf16.mxu0 %v1859
        %5557 = vmatmul.mubr.bf16.gmra.mrb[0].mxu0 %v1858
        %v5558 = vpop.f32.mrb[0].mxu0
        %v5559 = vadd.f32 %v5366, %v5558
        %v5560 = vpop.f32.mrb[0].mxu0
        %v5561 = vadd.f32 %v5368, %v5560
        %v5562 = vpop.f32.mrb[0].mxu0
        %v5563 = vadd.f32 %v5370, %v5562
        %v5564 = vpop.f32.mrb[0].mxu0
        %v5565 = vadd.f32 %v5372, %v5564
        %5566 = vmatprep.mubr.bf16.mxu0 %v1872
        %5567 = vmatmul.mubr.bf16.gmra.mrb[0].mxu0 %v1871
        %v5568 = vpop.f32.mrb[0].mxu0
        %v5569 = vadd.f32 %v5376, %v5568
        %v5570 = vpop.f32.mrb[0].mxu0
        %v5571 = vadd.f32 %v5378, %v5570
        %v5572 = vpop.f32.mrb[0].mxu0
        %v5573 = vadd.f32 %v5380, %v5572
        %v5574 = vpop.f32.mrb[0].mxu0
        %v5575 = vadd.f32 %v5382, %v5574
        %5576 = vmatprep.mubr.bf16.mxu0 %v1885
        %5577 = vmatmul.mubr.bf16.gmra.mrb[0].mxu0 %v1884
        %v5578 = vpop.f32.mrb[0].mxu0
        %v5579 = vadd.f32 %v5386, %v5578
        %v5580 = vpop.f32.mrb[0].mxu0
        %v5581 = vadd.f32 %v5388, %v5580
        %v5582 = vpop.f32.mrb[0].mxu0
        %v5583 = vadd.f32 %v5390, %v5582
        %v5584 = vpop.f32.mrb[0].mxu0
        %v5585 = vadd.f32 %v5392, %v5584
        %5586 = vmatprep.mubr.bf16.mxu0 %v1898
        %5587 = vmatmul.mubr.bf16.gmra.mrb[0].mxu0 %v1897
        %v5588 = vpop.f32.mrb[0].mxu0
        %v5589 = vadd.f32 %v5396, %v5588
        %v5590 = vpop.f32.mrb[0].mxu0
        %v5591 = vadd.f32 %v5398, %v5590
        %v5592 = vpop.f32.mrb[0].mxu0
        %v5593 = vadd.f32 %v5400, %v5592
        %v5594 = vpop.f32.mrb[0].mxu0
        %v5595 = vadd.f32 %v5402, %v5594
        %5596 = vmatprep.mubr.bf16.mxu0 %v1911
        %5597 = vmatmul.mubr.bf16.gmra.mrb[0].mxu0 %v1910
        %v5598 = vpop.f32.mrb[0].mxu0
        %v5599 = vadd.f32 %v5406, %v5598
        %v5600 = vpop.f32.mrb[0].mxu0
        %v5601 = vadd.f32 %v5408, %v5600
        %v5602 = vpop.f32.mrb[0].mxu0
        %v5603 = vadd.f32 %v5410, %v5602
        %v5604 = vpop.f32.mrb[0].mxu0
        %v5605 = vadd.f32 %v5412, %v5604
        %5606 = vmatprep.mubr.bf16.mxu0 %v1924
        %5607 = vmatmul.mubr.bf16.gmra.mrb[0].mxu0 %v1923
        %v5608 = vpop.f32.mrb[0].mxu0
        %v5609 = vadd.f32 %v5416, %v5608
        %v5610 = vpop.f32.mrb[0].mxu0
        %v5611 = vadd.f32 %v5418, %v5610
        %v5612 = vpop.f32.mrb[0].mxu0
        %v5613 = vadd.f32 %v5420, %v5612
        %v5614 = vpop.f32.mrb[0].mxu0
        %v5615 = vadd.f32 %v5422, %v5614
        %5616 = vmatprep.mubr.bf16.mxu0 %v1937
        %5617 = vmatmul.mubr.bf16.gmra.mrb[0].mxu0 %v1936
        %v5618 = vpop.f32.mrb[0].mxu0
        %v5619 = vadd.f32 %v5426, %v5618
        %v5620 = vpop.f32.mrb[0].mxu0
        %v5621 = vadd.f32 %v5428, %v5620
        %v5622 = vpop.f32.mrb[0].mxu0
        %v5623 = vadd.f32 %v5430, %v5622
        %v5624 = vpop.f32.mrb[0].mxu0
        %v5625 = vadd.f32 %v5432, %v5624
        %5626 = vdwg.mxu0
        %5627 = vmatprep.subr.bf16.mxu0 %v4136
        %5628 = vmatpush1.bf16.msra.mxu0 %v4135
        %5629 = vmatprep.subr.bf16.mxu0 %v4141
        %5630 = vmatpush1.bf16.msra.mxu0 %v4140
        %5631 = vmatprep.subr.bf16.mxu0 %v4146
        %5632 = vmatpush1.bf16.msra.mxu0 %v4145
        %5633 = vmatprep.subr.bf16.mxu0 %v4151
        %5634 = vmatpush1.bf16.msra.mxu0 %v4150
        %5635 = vmatprep.subr.bf16.mxu0 %v4156
        %5636 = vmatpush1.bf16.msra.mxu0 %v4155
        %5637 = vmatprep.subr.bf16.mxu0 %v4161
        %5638 = vmatpush1.bf16.msra.mxu0 %v4160
        %5639 = vmatprep.subr.bf16.mxu0 %v4166
        %5640 = vmatpush1.bf16.msra.mxu0 %v4165
        %5641 = vmatprep.subr.bf16.mxu0 %v4171
        %5642 = vmatpush1.bf16.msra.mxu0 %v4170
        %5643 = vmatprep.subr.bf16.mxu0 %v4176
        %5644 = vmatpush1.bf16.msra.mxu0 %v4175
        %5645 = vmatprep.subr.bf16.mxu0 %v4181
        %5646 = vmatpush1.bf16.msra.mxu0 %v4180
        %5647 = vmatprep.subr.bf16.mxu0 %v4186
        %5648 = vmatpush1.bf16.msra.mxu0 %v4185
        %5649 = vmatprep.subr.bf16.mxu0 %v4191
        %5650 = vmatpush1.bf16.msra.mxu0 %v4190
        %5651 = vmatprep.subr.bf16.mxu0 %v4196
        %5652 = vmatpush1.bf16.msra.mxu0 %v4195
        %5653 = vmatprep.subr.bf16.mxu0 %v4201
        %5654 = vmatpush1.bf16.msra.mxu0 %v4200
        %5655 = vmatprep.subr.bf16.mxu0 %v4206
        %5656 = vmatpush1.bf16.msra.mxu0 %v4205
        %5657 = vmatprep.subr.bf16.mxu0 %v4211
        %5658 = vmatpush1.bf16.msra.mxu0 %v4210
        %5659 = vmatprep.mubr.bf16.mxu0 %v1744
        %5660 = vmatmul.mubr.bf16.gmra.mrb[0].mxu0 %v1743
        %v5661 = vpop.f32.mrb[0].mxu0
        %v5662 = vadd.f32 %v5469, %v5661
        %v5663 = vpop.f32.mrb[0].mxu0
        %v5664 = vadd.f32 %v5471, %v5663
        %v5665 = vpop.f32.mrb[0].mxu0
        %v5666 = vadd.f32 %v5473, %v5665
        %v5667 = vpop.f32.mrb[0].mxu0
        %v5668 = vadd.f32 %v5475, %v5667
        %5669 = vmatprep.mubr.bf16.mxu0 %v1757
        %5670 = vmatmul.mubr.bf16.gmra.mrb[0].mxu0 %v1756
        %v5671 = vpop.f32.mrb[0].mxu0
        %v5672 = vadd.f32 %v5479, %v5671
        %v5673 = vpop.f32.mrb[0].mxu0
        %v5674 = vadd.f32 %v5481, %v5673
        %v5675 = vpop.f32.mrb[0].mxu0
        %v5676 = vadd.f32 %v5483, %v5675
        %v5677 = vpop.f32.mrb[0].mxu0
        %v5678 = vadd.f32 %v5485, %v5677
        %5679 = vmatprep.mubr.bf16.mxu0 %v1770
        %5680 = vmatmul.mubr.bf16.gmra.mrb[0].mxu0 %v1769
        %v5681 = vpop.f32.mrb[0].mxu0
        %v5682 = vadd.f32 %v5489, %v5681
        %v5683 = vpop.f32.mrb[0].mxu0
        %v5684 = vadd.f32 %v5491, %v5683
        %v5685 = vpop.f32.mrb[0].mxu0
        %v5686 = vadd.f32 %v5493, %v5685
        %v5687 = vpop.f32.mrb[0].mxu0
        %v5688 = vadd.f32 %v5495, %v5687
        %5689 = vmatprep.mubr.bf16.mxu0 %v1783
        %5690 = vmatmul.mubr.bf16.gmra.mrb[0].mxu0 %v1782
        %v5691 = vpop.f32.mrb[0].mxu0
        %v5692 = vadd.f32 %v5499, %v5691
        %v5693 = vpop.f32.mrb[0].mxu0
        %v5694 = vadd.f32 %v5501, %v5693
        %v5695 = vpop.f32.mrb[0].mxu0
        %v5696 = vadd.f32 %v5503, %v5695
        %v5697 = vpop.f32.mrb[0].mxu0
        %v5698 = vadd.f32 %v5505, %v5697
        %5699 = vmatprep.mubr.bf16.mxu0 %v1796
        %5700 = vmatmul.mubr.bf16.gmra.mrb[0].mxu0 %v1795
        %v5701 = vpop.f32.mrb[0].mxu0
        %v5702 = vadd.f32 %v5509, %v5701
        %v5703 = vpop.f32.mrb[0].mxu0
        %v5704 = vadd.f32 %v5511, %v5703
        %v5705 = vpop.f32.mrb[0].mxu0
        %v5706 = vadd.f32 %v5513, %v5705
        %v5707 = vpop.f32.mrb[0].mxu0
        %v5708 = vadd.f32 %v5515, %v5707
        %5709 = vmatprep.mubr.bf16.mxu0 %v1809
        %5710 = vmatmul.mubr.bf16.gmra.mrb[0].mxu0 %v1808
        %v5711 = vpop.f32.mrb[0].mxu0
        %v5712 = vadd.f32 %v5519, %v5711
        %v5713 = vpop.f32.mrb[0].mxu0
        %v5714 = vadd.f32 %v5521, %v5713
        %v5715 = vpop.f32.mrb[0].mxu0
        %v5716 = vadd.f32 %v5523, %v5715
        %v5717 = vpop.f32.mrb[0].mxu0
        %v5718 = vadd.f32 %v5525, %v5717
        %5719 = vmatprep.mubr.bf16.mxu0 %v1822
        %5720 = vmatmul.mubr.bf16.gmra.mrb[0].mxu0 %v1821
        %v5721 = vpop.f32.mrb[0].mxu0
        %v5722 = vadd.f32 %v5529, %v5721
        %v5723 = vpop.f32.mrb[0].mxu0
        %v5724 = vadd.f32 %v5531, %v5723
        %v5725 = vpop.f32.mrb[0].mxu0
        %v5726 = vadd.f32 %v5533, %v5725
        %v5727 = vpop.f32.mrb[0].mxu0
        %v5728 = vadd.f32 %v5535, %v5727
        %5729 = vmatprep.mubr.bf16.mxu0 %v1835
        %5730 = vmatmul.mubr.bf16.gmra.mrb[0].mxu0 %v1834
        %v5731 = vpop.f32.mrb[0].mxu0
        %v5732 = vadd.f32 %v5539, %v5731
        %v5733 = vpop.f32.mrb[0].mxu0
        %v5734 = vadd.f32 %v5541, %v5733
        %v5735 = vpop.f32.mrb[0].mxu0
        %v5736 = vadd.f32 %v5543, %v5735
        %v5737 = vpop.f32.mrb[0].mxu0
        %v5738 = vadd.f32 %v5545, %v5737
        %5739 = vmatprep.mubr.bf16.mxu0 %v1848
        %5740 = vmatmul.mubr.bf16.gmra.mrb[0].mxu0 %v1847
        %v5741 = vpop.f32.mrb[0].mxu0
        %v5742 = vadd.f32 %v5549, %v5741
        %v5743 = vpop.f32.mrb[0].mxu0
        %v5744 = vadd.f32 %v5551, %v5743
        %v5745 = vpop.f32.mrb[0].mxu0
        %v5746 = vadd.f32 %v5553, %v5745
        %v5747 = vpop.f32.mrb[0].mxu0
        %v5748 = vadd.f32 %v5555, %v5747
        %5749 = vmatprep.mubr.bf16.mxu0 %v1861
        %5750 = vmatmul.mubr.bf16.gmra.mrb[0].mxu0 %v1860
        %v5751 = vpop.f32.mrb[0].mxu0
        %v5752 = vadd.f32 %v5559, %v5751
        %v5753 = vpop.f32.mrb[0].mxu0
        %v5754 = vadd.f32 %v5561, %v5753
        %v5755 = vpop.f32.mrb[0].mxu0
        %v5756 = vadd.f32 %v5563, %v5755
        %v5757 = vpop.f32.mrb[0].mxu0
        %v5758 = vadd.f32 %v5565, %v5757
        %5759 = vmatprep.mubr.bf16.mxu0 %v1874
        %5760 = vmatmul.mubr.bf16.gmra.mrb[0].mxu0 %v1873
        %v5761 = vpop.f32.mrb[0].mxu0
        %v5762 = vadd.f32 %v5569, %v5761
        %v5763 = vpop.f32.mrb[0].mxu0
        %v5764 = vadd.f32 %v5571, %v5763
        %v5765 = vpop.f32.mrb[0].mxu0
        %v5766 = vadd.f32 %v5573, %v5765
        %v5767 = vpop.f32.mrb[0].mxu0
        %v5768 = vadd.f32 %v5575, %v5767
        %5769 = vmatprep.mubr.bf16.mxu0 %v1887
        %5770 = vmatmul.mubr.bf16.gmra.mrb[0].mxu0 %v1886
        %v5771 = vpop.f32.mrb[0].mxu0
        %v5772 = vadd.f32 %v5579, %v5771
        %v5773 = vpop.f32.mrb[0].mxu0
        %v5774 = vadd.f32 %v5581, %v5773
        %v5775 = vpop.f32.mrb[0].mxu0
        %v5776 = vadd.f32 %v5583, %v5775
        %v5777 = vpop.f32.mrb[0].mxu0
        %v5778 = vadd.f32 %v5585, %v5777
        %5779 = vmatprep.mubr.bf16.mxu0 %v1900
        %5780 = vmatmul.mubr.bf16.gmra.mrb[0].mxu0 %v1899
        %v5781 = vpop.f32.mrb[0].mxu0
        %v5782 = vadd.f32 %v5589, %v5781
        %v5783 = vpop.f32.mrb[0].mxu0
        %v5784 = vadd.f32 %v5591, %v5783
        %v5785 = vpop.f32.mrb[0].mxu0
        %v5786 = vadd.f32 %v5593, %v5785
        %v5787 = vpop.f32.mrb[0].mxu0
        %v5788 = vadd.f32 %v5595, %v5787
        %5789 = vmatprep.mubr.bf16.mxu0 %v1913
        %5790 = vmatmul.mubr.bf16.gmra.mrb[0].mxu0 %v1912
        %v5791 = vpop.f32.mrb[0].mxu0
        %v5792 = vadd.f32 %v5599, %v5791
        %v5793 = vpop.f32.mrb[0].mxu0
        %v5794 = vadd.f32 %v5601, %v5793
        %v5795 = vpop.f32.mrb[0].mxu0
        %v5796 = vadd.f32 %v5603, %v5795
        %v5797 = vpop.f32.mrb[0].mxu0
        %v5798 = vadd.f32 %v5605, %v5797
        %5799 = vmatprep.mubr.bf16.mxu0 %v1926
        %5800 = vmatmul.mubr.bf16.gmra.mrb[0].mxu0 %v1925
        %v5801 = vpop.f32.mrb[0].mxu0
        %v5802 = vadd.f32 %v5609, %v5801
        %v5803 = vpop.f32.mrb[0].mxu0
        %v5804 = vadd.f32 %v5611, %v5803
        %v5805 = vpop.f32.mrb[0].mxu0
        %v5806 = vadd.f32 %v5613, %v5805
        %v5807 = vpop.f32.mrb[0].mxu0
        %v5808 = vadd.f32 %v5615, %v5807
        %5809 = vmatprep.mubr.bf16.mxu0 %v1939
        %5810 = vmatmul.mubr.bf16.gmra.mrb[0].mxu0 %v1938
        %v5811 = vpop.f32.mrb[0].mxu0
        %v5812 = vadd.f32 %v5619, %v5811
        %v5813 = vpop.f32.mrb[0].mxu0
        %v5814 = vadd.f32 %v5621, %v5813
        %v5815 = vpop.f32.mrb[0].mxu0
        %v5816 = vadd.f32 %v5623, %v5815
        %v5817 = vpop.f32.mrb[0].mxu0
        %v5818 = vadd.f32 %v5625, %v5817
        %5819 = vdwg.mxu0
        %5820 = vmatprep.subr.bf16.mxu0 %v4216
        %5821 = vmatpush1.bf16.msra.mxu0 %v4215
        %5822 = vmatprep.subr.bf16.mxu0 %v4221
        %5823 = vmatpush1.bf16.msra.mxu0 %v4220
        %5824 = vmatprep.subr.bf16.mxu0 %v4226
        %5825 = vmatpush1.bf16.msra.mxu0 %v4225
        %5826 = vmatprep.subr.bf16.mxu0 %v4231
        %5827 = vmatpush1.bf16.msra.mxu0 %v4230
        %5828 = vmatprep.subr.bf16.mxu0 %v4236
        %5829 = vmatpush1.bf16.msra.mxu0 %v4235
        %5830 = vmatprep.subr.bf16.mxu0 %v4241
        %5831 = vmatpush1.bf16.msra.mxu0 %v4240
        %5832 = vmatprep.subr.bf16.mxu0 %v4246
        %5833 = vmatpush1.bf16.msra.mxu0 %v4245
        %5834 = vmatprep.subr.bf16.mxu0 %v4251
        %5835 = vmatpush1.bf16.msra.mxu0 %v4250
        %5836 = vmatprep.subr.bf16.mxu0 %v4256
        %5837 = vmatpush1.bf16.msra.mxu0 %v4255
        %5838 = vmatprep.subr.bf16.mxu0 %v4261
        %5839 = vmatpush1.bf16.msra.mxu0 %v4260
        %5840 = vmatprep.subr.bf16.mxu0 %v4266
        %5841 = vmatpush1.bf16.msra.mxu0 %v4265
        %5842 = vmatprep.subr.bf16.mxu0 %v4271
        %5843 = vmatpush1.bf16.msra.mxu0 %v4270
        %5844 = vmatprep.subr.bf16.mxu0 %v4276
        %5845 = vmatpush1.bf16.msra.mxu0 %v4275
        %5846 = vmatprep.subr.bf16.mxu0 %v4281
        %5847 = vmatpush1.bf16.msra.mxu0 %v4280
        %5848 = vmatprep.subr.bf16.mxu0 %v4286
        %5849 = vmatpush1.bf16.msra.mxu0 %v4285
        %5850 = vmatprep.subr.bf16.mxu0 %v4291
        %5851 = vmatpush1.bf16.msra.mxu0 %v4290
        %5852 = vmatprep.mubr.bf16.mxu0 %v1746
        %5853 = vmatmul.mubr.bf16.gmra.mrb[0].mxu0 %v1745
        %v5854 = vpop.f32.mrb[0].mxu0
        %v5855 = vadd.f32 %v5662, %v5854
        %v5856 = vpop.f32.mrb[0].mxu0
        %v5857 = vadd.f32 %v5664, %v5856
        %v5858 = vpop.f32.mrb[0].mxu0
        %v5859 = vadd.f32 %v5666, %v5858
        %v5860 = vpop.f32.mrb[0].mxu0
        %v5861 = vadd.f32 %v5668, %v5860
        %5862 = vmatprep.mubr.bf16.mxu0 %v1759
        %5863 = vmatmul.mubr.bf16.gmra.mrb[0].mxu0 %v1758
        %v5864 = vpop.f32.mrb[0].mxu0
        %v5865 = vadd.f32 %v5672, %v5864
        %v5866 = vpop.f32.mrb[0].mxu0
        %v5867 = vadd.f32 %v5674, %v5866
        %v5868 = vpop.f32.mrb[0].mxu0
        %v5869 = vadd.f32 %v5676, %v5868
        %v5870 = vpop.f32.mrb[0].mxu0
        %v5871 = vadd.f32 %v5678, %v5870
        %5872 = vmatprep.mubr.bf16.mxu0 %v1772
        %5873 = vmatmul.mubr.bf16.gmra.mrb[0].mxu0 %v1771
        %v5874 = vpop.f32.mrb[0].mxu0
        %v5875 = vadd.f32 %v5682, %v5874
        %v5876 = vpop.f32.mrb[0].mxu0
        %v5877 = vadd.f32 %v5684, %v5876
        %v5878 = vpop.f32.mrb[0].mxu0
        %v5879 = vadd.f32 %v5686, %v5878
        %v5880 = vpop.f32.mrb[0].mxu0
        %v5881 = vadd.f32 %v5688, %v5880
        %5882 = vmatprep.mubr.bf16.mxu0 %v1785
        %5883 = vmatmul.mubr.bf16.gmra.mrb[0].mxu0 %v1784
        %v5884 = vpop.f32.mrb[0].mxu0
        %v5885 = vadd.f32 %v5692, %v5884
        %v5886 = vpop.f32.mrb[0].mxu0
        %v5887 = vadd.f32 %v5694, %v5886
        %v5888 = vpop.f32.mrb[0].mxu0
        %v5889 = vadd.f32 %v5696, %v5888
        %v5890 = vpop.f32.mrb[0].mxu0
        %v5891 = vadd.f32 %v5698, %v5890
        %5892 = vmatprep.mubr.bf16.mxu0 %v1798
        %5893 = vmatmul.mubr.bf16.gmra.mrb[0].mxu0 %v1797
        %v5894 = vpop.f32.mrb[0].mxu0
        %v5895 = vadd.f32 %v5702, %v5894
        %v5896 = vpop.f32.mrb[0].mxu0
        %v5897 = vadd.f32 %v5704, %v5896
        %v5898 = vpop.f32.mrb[0].mxu0
        %v5899 = vadd.f32 %v5706, %v5898
        %v5900 = vpop.f32.mrb[0].mxu0
        %v5901 = vadd.f32 %v5708, %v5900
        %5902 = vmatprep.mubr.bf16.mxu0 %v1811
        %5903 = vmatmul.mubr.bf16.gmra.mrb[0].mxu0 %v1810
        %v5904 = vpop.f32.mrb[0].mxu0
        %v5905 = vadd.f32 %v5712, %v5904
        %v5906 = vpop.f32.mrb[0].mxu0
        %v5907 = vadd.f32 %v5714, %v5906
        %v5908 = vpop.f32.mrb[0].mxu0
        %v5909 = vadd.f32 %v5716, %v5908
        %v5910 = vpop.f32.mrb[0].mxu0
        %v5911 = vadd.f32 %v5718, %v5910
        %5912 = vmatprep.mubr.bf16.mxu0 %v1824
        %5913 = vmatmul.mubr.bf16.gmra.mrb[0].mxu0 %v1823
        %v5914 = vpop.f32.mrb[0].mxu0
        %v5915 = vadd.f32 %v5722, %v5914
        %v5916 = vpop.f32.mrb[0].mxu0
        %v5917 = vadd.f32 %v5724, %v5916
        %v5918 = vpop.f32.mrb[0].mxu0
        %v5919 = vadd.f32 %v5726, %v5918
        %v5920 = vpop.f32.mrb[0].mxu0
        %v5921 = vadd.f32 %v5728, %v5920
        %5922 = vmatprep.mubr.bf16.mxu0 %v1837
        %5923 = vmatmul.mubr.bf16.gmra.mrb[0].mxu0 %v1836
        %v5924 = vpop.f32.mrb[0].mxu0
        %v5925 = vadd.f32 %v5732, %v5924
        %v5926 = vpop.f32.mrb[0].mxu0
        %v5927 = vadd.f32 %v5734, %v5926
        %v5928 = vpop.f32.mrb[0].mxu0
        %v5929 = vadd.f32 %v5736, %v5928
        %v5930 = vpop.f32.mrb[0].mxu0
        %v5931 = vadd.f32 %v5738, %v5930
        %5932 = vmatprep.mubr.bf16.mxu0 %v1850
        %5933 = vmatmul.mubr.bf16.gmra.mrb[0].mxu0 %v1849
        %v5934 = vpop.f32.mrb[0].mxu0
        %v5935 = vadd.f32 %v5742, %v5934
        %v5936 = vpop.f32.mrb[0].mxu0
        %v5937 = vadd.f32 %v5744, %v5936
        %v5938 = vpop.f32.mrb[0].mxu0
        %v5939 = vadd.f32 %v5746, %v5938
        %v5940 = vpop.f32.mrb[0].mxu0
        %v5941 = vadd.f32 %v5748, %v5940
        %5942 = vmatprep.mubr.bf16.mxu0 %v1863
        %5943 = vmatmul.mubr.bf16.gmra.mrb[0].mxu0 %v1862
        %v5944 = vpop.f32.mrb[0].mxu0
        %v5945 = vadd.f32 %v5752, %v5944
        %v5946 = vpop.f32.mrb[0].mxu0
        %v5947 = vadd.f32 %v5754, %v5946
        %v5948 = vpop.f32.mrb[0].mxu0
        %v5949 = vadd.f32 %v5756, %v5948
        %v5950 = vpop.f32.mrb[0].mxu0
        %v5951 = vadd.f32 %v5758, %v5950
        %5952 = vmatprep.mubr.bf16.mxu0 %v1876
        %5953 = vmatmul.mubr.bf16.gmra.mrb[0].mxu0 %v1875
        %v5954 = vpop.f32.mrb[0].mxu0
        %v5955 = vadd.f32 %v5762, %v5954
        %v5956 = vpop.f32.mrb[0].mxu0
        %v5957 = vadd.f32 %v5764, %v5956
        %v5958 = vpop.f32.mrb[0].mxu0
        %v5959 = vadd.f32 %v5766, %v5958
        %v5960 = vpop.f32.mrb[0].mxu0
        %v5961 = vadd.f32 %v5768, %v5960
        %5962 = vmatprep.mubr.bf16.mxu0 %v1889
        %5963 = vmatmul.mubr.bf16.gmra.mrb[0].mxu0 %v1888
        %v5964 = vpop.f32.mrb[0].mxu0
        %v5965 = vadd.f32 %v5772, %v5964
        %v5966 = vpop.f32.mrb[0].mxu0
        %v5967 = vadd.f32 %v5774, %v5966
        %v5968 = vpop.f32.mrb[0].mxu0
        %v5969 = vadd.f32 %v5776, %v5968
        %v5970 = vpop.f32.mrb[0].mxu0
        %v5971 = vadd.f32 %v5778, %v5970
        %5972 = vmatprep.mubr.bf16.mxu0 %v1902
        %5973 = vmatmul.mubr.bf16.gmra.mrb[0].mxu0 %v1901
        %v5974 = vpop.f32.mrb[0].mxu0
        %v5975 = vadd.f32 %v5782, %v5974
        %v5976 = vpop.f32.mrb[0].mxu0
        %v5977 = vadd.f32 %v5784, %v5976
        %v5978 = vpop.f32.mrb[0].mxu0
        %v5979 = vadd.f32 %v5786, %v5978
        %v5980 = vpop.f32.mrb[0].mxu0
        %v5981 = vadd.f32 %v5788, %v5980
        %5982 = vmatprep.mubr.bf16.mxu0 %v1915
        %5983 = vmatmul.mubr.bf16.gmra.mrb[0].mxu0 %v1914
        %v5984 = vpop.f32.mrb[0].mxu0
        %v5985 = vadd.f32 %v5792, %v5984
        %v5986 = vpop.f32.mrb[0].mxu0
        %v5987 = vadd.f32 %v5794, %v5986
        %v5988 = vpop.f32.mrb[0].mxu0
        %v5989 = vadd.f32 %v5796, %v5988
        %v5990 = vpop.f32.mrb[0].mxu0
        %v5991 = vadd.f32 %v5798, %v5990
        %5992 = vmatprep.mubr.bf16.mxu0 %v1928
        %5993 = vmatmul.mubr.bf16.gmra.mrb[0].mxu0 %v1927
        %v5994 = vpop.f32.mrb[0].mxu0
        %v5995 = vadd.f32 %v5802, %v5994
        %v5996 = vpop.f32.mrb[0].mxu0
        %v5997 = vadd.f32 %v5804, %v5996
        %v5998 = vpop.f32.mrb[0].mxu0
        %v5999 = vadd.f32 %v5806, %v5998
        %v6000 = vpop.f32.mrb[0].mxu0
        %v6001 = vadd.f32 %v5808, %v6000
        %6002 = vmatprep.mubr.bf16.mxu0 %v1941
        %6003 = vmatmul.mubr.bf16.gmra.mrb[0].mxu0 %v1940
        %v6004 = vpop.f32.mrb[0].mxu0
        %v6005 = vadd.f32 %v5812, %v6004
        %v6006 = vpop.f32.mrb[0].mxu0
        %v6007 = vadd.f32 %v5814, %v6006
        %v6008 = vpop.f32.mrb[0].mxu0
        %v6009 = vadd.f32 %v5816, %v6008
        %v6010 = vpop.f32.mrb[0].mxu0
        %v6011 = vadd.f32 %v5818, %v6010
        %6012 = vdwg.mxu0
        %6013 = vmatprep.subr.bf16.mxu0 %v4296
        %6014 = vmatpush1.bf16.msra.mxu0 %v4295
        %6015 = vmatprep.subr.bf16.mxu0 %v4301
        %6016 = vmatpush1.bf16.msra.mxu0 %v4300
        %6017 = vmatprep.subr.bf16.mxu0 %v4306
        %6018 = vmatpush1.bf16.msra.mxu0 %v4305
        %6019 = vmatprep.subr.bf16.mxu0 %v4311
        %6020 = vmatpush1.bf16.msra.mxu0 %v4310
        %6021 = vmatprep.subr.bf16.mxu0 %v4316
        %6022 = vmatpush1.bf16.msra.mxu0 %v4315
        %6023 = vmatprep.subr.bf16.mxu0 %v4321
        %6024 = vmatpush1.bf16.msra.mxu0 %v4320
        %6025 = vmatprep.subr.bf16.mxu0 %v4326
        %6026 = vmatpush1.bf16.msra.mxu0 %v4325
        %6027 = vmatprep.subr.bf16.mxu0 %v4331
        %6028 = vmatpush1.bf16.msra.mxu0 %v4330
        %6029 = vmatprep.subr.bf16.mxu0 0
        %6030 = vmatpush1.bf16.msra.mxu0 0
        %6031 = vmatprep.subr.bf16.mxu0 0
        %6032 = vmatpush1.bf16.msra.mxu0 0
        %6033 = vmatprep.subr.bf16.mxu0 0
        %6034 = vmatpush1.bf16.msra.mxu0 0
        %6035 = vmatprep.subr.bf16.mxu0 0
        %6036 = vmatpush1.bf16.msra.mxu0 0
        %6037 = vmatprep.subr.bf16.mxu0 0
        %6038 = vmatpush1.bf16.msra.mxu0 0
        %6039 = vmatprep.subr.bf16.mxu0 0
        %6040 = vmatpush1.bf16.msra.mxu0 0
        %6041 = vmatprep.subr.bf16.mxu0 0
        %6042 = vmatpush1.bf16.msra.mxu0 0
        %6043 = vmatprep.subr.bf16.mxu0 0
        %6044 = vmatpush1.bf16.msra.mxu0 0
        %6045 = vmatprep.mubr.bf16.mxu0 0
        %6046 = vmatmul.mubr.bf16.gmra.mrb[0].mxu0 %v1747
        %v6047 = vpop.f32.mrb[0].mxu0
        %v6048 = vadd.f32 %v5855, %v6047
        %v6049 = vpop.f32.mrb[0].mxu0
        %v6050 = vadd.f32 %v5857, %v6049
        %v6051 = vpop.f32.mrb[0].mxu0
        %v6052 = vadd.f32 %v5859, %v6051
        %v6053 = vpop.f32.mrb[0].mxu0
        %v6054 = vadd.f32 %v5861, %v6053
        %6055 = vmatprep.mubr.bf16.mxu0 0
        %6056 = vmatmul.mubr.bf16.gmra.mrb[0].mxu0 %v1760
        %v6057 = vpop.f32.mrb[0].mxu0
        %v6058 = vadd.f32 %v5865, %v6057
        %v6059 = vpop.f32.mrb[0].mxu0
        %v6060 = vadd.f32 %v5867, %v6059
        %v6061 = vpop.f32.mrb[0].mxu0
        %v6062 = vadd.f32 %v5869, %v6061
        %v6063 = vpop.f32.mrb[0].mxu0
        %v6064 = vadd.f32 %v5871, %v6063
        %6065 = vmatprep.mubr.bf16.mxu0 0
        %6066 = vmatmul.mubr.bf16.gmra.mrb[0].mxu0 %v1773
        %v6067 = vpop.f32.mrb[0].mxu0
        %v6068 = vadd.f32 %v5875, %v6067
        %v6069 = vpop.f32.mrb[0].mxu0
        %v6070 = vadd.f32 %v5877, %v6069
        %v6071 = vpop.f32.mrb[0].mxu0
        %v6072 = vadd.f32 %v5879, %v6071
        %v6073 = vpop.f32.mrb[0].mxu0
        %v6074 = vadd.f32 %v5881, %v6073
        %6075 = vmatprep.mubr.bf16.mxu0 0
        %6076 = vmatmul.mubr.bf16.gmra.mrb[0].mxu0 %v1786
        %v6077 = vpop.f32.mrb[0].mxu0
        %v6078 = vadd.f32 %v5885, %v6077
        %v6079 = vpop.f32.mrb[0].mxu0
        %v6080 = vadd.f32 %v5887, %v6079
        %v6081 = vpop.f32.mrb[0].mxu0
        %v6082 = vadd.f32 %v5889, %v6081
        %v6083 = vpop.f32.mrb[0].mxu0
        %v6084 = vadd.f32 %v5891, %v6083
        %6085 = vmatprep.mubr.bf16.mxu0 0
        %6086 = vmatmul.mubr.bf16.gmra.mrb[0].mxu0 %v1799
        %v6087 = vpop.f32.mrb[0].mxu0
        %v6088 = vadd.f32 %v5895, %v6087
        %v6089 = vpop.f32.mrb[0].mxu0
        %v6090 = vadd.f32 %v5897, %v6089
        %v6091 = vpop.f32.mrb[0].mxu0
        %v6092 = vadd.f32 %v5899, %v6091
        %v6093 = vpop.f32.mrb[0].mxu0
        %v6094 = vadd.f32 %v5901, %v6093
        %6095 = vmatprep.mubr.bf16.mxu0 0
        %6096 = vmatmul.mubr.bf16.gmra.mrb[0].mxu0 %v1812
        %v6097 = vpop.f32.mrb[0].mxu0
        %v6098 = vadd.f32 %v5905, %v6097
        %v6099 = vpop.f32.mrb[0].mxu0
        %v6100 = vadd.f32 %v5907, %v6099
        %v6101 = vpop.f32.mrb[0].mxu0
        %v6102 = vadd.f32 %v5909, %v6101
        %v6103 = vpop.f32.mrb[0].mxu0
        %v6104 = vadd.f32 %v5911, %v6103
        %6105 = vmatprep.mubr.bf16.mxu0 0
        %6106 = vmatmul.mubr.bf16.gmra.mrb[0].mxu0 %v1825
        %v6107 = vpop.f32.mrb[0].mxu0
        %v6108 = vadd.f32 %v5915, %v6107
        %v6109 = vpop.f32.mrb[0].mxu0
        %v6110 = vadd.f32 %v5917, %v6109
        %v6111 = vpop.f32.mrb[0].mxu0
        %v6112 = vadd.f32 %v5919, %v6111
        %v6113 = vpop.f32.mrb[0].mxu0
        %v6114 = vadd.f32 %v5921, %v6113
        %6115 = vmatprep.mubr.bf16.mxu0 0
        %6116 = vmatmul.mubr.bf16.gmra.mrb[0].mxu0 %v1838
        %v6117 = vpop.f32.mrb[0].mxu0
        %v6118 = vadd.f32 %v5925, %v6117
        %v6119 = vpop.f32.mrb[0].mxu0
        %v6120 = vadd.f32 %v5927, %v6119
        %v6121 = vpop.f32.mrb[0].mxu0
        %v6122 = vadd.f32 %v5929, %v6121
        %v6123 = vpop.f32.mrb[0].mxu0
        %v6124 = vadd.f32 %v5931, %v6123
        %6125 = vmatprep.mubr.bf16.mxu0 0
        %6126 = vmatmul.mubr.bf16.gmra.mrb[0].mxu0 %v1851
        %v6127 = vpop.f32.mrb[0].mxu0
        %v6128 = vadd.f32 %v5935, %v6127
        %v6129 = vpop.f32.mrb[0].mxu0
        %v6130 = vadd.f32 %v5937, %v6129
        %v6131 = vpop.f32.mrb[0].mxu0
        %v6132 = vadd.f32 %v5939, %v6131
        %v6133 = vpop.f32.mrb[0].mxu0
        %v6134 = vadd.f32 %v5941, %v6133
        %6135 = vmatprep.mubr.bf16.mxu0 0
        %6136 = vmatmul.mubr.bf16.gmra.mrb[0].mxu0 %v1864
        %v6137 = vpop.f32.mrb[0].mxu0
        %v6138 = vadd.f32 %v5945, %v6137
        %v6139 = vpop.f32.mrb[0].mxu0
        %v6140 = vadd.f32 %v5947, %v6139
        %v6141 = vpop.f32.mrb[0].mxu0
        %v6142 = vadd.f32 %v5949, %v6141
        %v6143 = vpop.f32.mrb[0].mxu0
        %v6144 = vadd.f32 %v5951, %v6143
        %6145 = vmatprep.mubr.bf16.mxu0 0
        %6146 = vmatmul.mubr.bf16.gmra.mrb[0].mxu0 %v1877
        %v6147 = vpop.f32.mrb[0].mxu0
        %v6148 = vadd.f32 %v5955, %v6147
        %v6149 = vpop.f32.mrb[0].mxu0
        %v6150 = vadd.f32 %v5957, %v6149
        %v6151 = vpop.f32.mrb[0].mxu0
        %v6152 = vadd.f32 %v5959, %v6151
        %v6153 = vpop.f32.mrb[0].mxu0
        %v6154 = vadd.f32 %v5961, %v6153
        %6155 = vmatprep.mubr.bf16.mxu0 0
        %6156 = vmatmul.mubr.bf16.gmra.mrb[0].mxu0 %v1890
        %v6157 = vpop.f32.mrb[0].mxu0
        %v6158 = vadd.f32 %v5965, %v6157
        %v6159 = vpop.f32.mrb[0].mxu0
        %v6160 = vadd.f32 %v5967, %v6159
        %v6161 = vpop.f32.mrb[0].mxu0
        %v6162 = vadd.f32 %v5969, %v6161
        %v6163 = vpop.f32.mrb[0].mxu0
        %v6164 = vadd.f32 %v5971, %v6163
        %6165 = vmatprep.mubr.bf16.mxu0 0
        %6166 = vmatmul.mubr.bf16.gmra.mrb[0].mxu0 %v1903
        %v6167 = vpop.f32.mrb[0].mxu0
        %v6168 = vadd.f32 %v5975, %v6167
        %v6169 = vpop.f32.mrb[0].mxu0
        %v6170 = vadd.f32 %v5977, %v6169
        %v6171 = vpop.f32.mrb[0].mxu0
        %v6172 = vadd.f32 %v5979, %v6171
        %v6173 = vpop.f32.mrb[0].mxu0
        %v6174 = vadd.f32 %v5981, %v6173
        %6175 = vmatprep.mubr.bf16.mxu0 0
        %6176 = vmatmul.mubr.bf16.gmra.mrb[0].mxu0 %v1916
        %v6177 = vpop.f32.mrb[0].mxu0
        %v6178 = vadd.f32 %v5985, %v6177
        %v6179 = vpop.f32.mrb[0].mxu0
        %v6180 = vadd.f32 %v5987, %v6179
        %v6181 = vpop.f32.mrb[0].mxu0
        %v6182 = vadd.f32 %v5989, %v6181
        %v6183 = vpop.f32.mrb[0].mxu0
        %v6184 = vadd.f32 %v5991, %v6183
        %6185 = vmatprep.mubr.bf16.mxu0 0
        %6186 = vmatmul.mubr.bf16.gmra.mrb[0].mxu0 %v1929
        %v6187 = vpop.f32.mrb[0].mxu0
        %v6188 = vadd.f32 %v5995, %v6187
        %v6189 = vpop.f32.mrb[0].mxu0
        %v6190 = vadd.f32 %v5997, %v6189
        %v6191 = vpop.f32.mrb[0].mxu0
        %v6192 = vadd.f32 %v5999, %v6191
        %v6193 = vpop.f32.mrb[0].mxu0
        %v6194 = vadd.f32 %v6001, %v6193
        %6195 = vmatprep.mubr.bf16.mxu0 0
        %6196 = vmatmul.mubr.bf16.gmra.mrb[0].mxu0 %v1942
        %v6197 = vpop.f32.mrb[0].mxu0
        %v6198 = vadd.f32 %v6005, %v6197
        %v6199 = vpop.f32.mrb[0].mxu0
        %v6200 = vadd.f32 %v6007, %v6199
        %v6201 = vpop.f32.mrb[0].mxu0
        %v6202 = vadd.f32 %v6009, %v6201
        %v6203 = vpop.f32.mrb[0].mxu0
        %v6204 = vadd.f32 %v6011, %v6203
        %6205 = vdwg.mxu0
        %6206 = vmatprep.subr.bf16.mxu0 %v3818
        %6207 = vmatpush1.bf16.msra.mxu0 %v3817
        %6208 = vmatprep.subr.bf16.mxu0 %v3823
        %6209 = vmatpush1.bf16.msra.mxu0 %v3822
        %6210 = vmatprep.subr.bf16.mxu0 %v3828
        %6211 = vmatpush1.bf16.msra.mxu0 %v3827
        %6212 = vmatprep.subr.bf16.mxu0 %v3833
        %6213 = vmatpush1.bf16.msra.mxu0 %v3832
        %6214 = vmatprep.subr.bf16.mxu0 %v3838
        %6215 = vmatpush1.bf16.msra.mxu0 %v3837
        %6216 = vmatprep.subr.bf16.mxu0 %v3843
        %6217 = vmatpush1.bf16.msra.mxu0 %v3842
        %6218 = vmatprep.subr.bf16.mxu0 %v3848
        %6219 = vmatpush1.bf16.msra.mxu0 %v3847
        %6220 = vmatprep.subr.bf16.mxu0 %v3853
        %6221 = vmatpush1.bf16.msra.mxu0 %v3852
        %6222 = vmatprep.subr.bf16.mxu0 %v3858
        %6223 = vmatpush1.bf16.msra.mxu0 %v3857
        %6224 = vmatprep.subr.bf16.mxu0 %v3863
        %6225 = vmatpush1.bf16.msra.mxu0 %v3862
        %6226 = vmatprep.subr.bf16.mxu0 %v3868
        %6227 = vmatpush1.bf16.msra.mxu0 %v3867
        %6228 = vmatprep.subr.bf16.mxu0 %v3873
        %6229 = vmatpush1.bf16.msra.mxu0 %v3872
        %6230 = vmatprep.subr.bf16.mxu0 %v3878
        %6231 = vmatpush1.bf16.msra.mxu0 %v3877
        %6232 = vmatprep.subr.bf16.mxu0 %v3883
        %6233 = vmatpush1.bf16.msra.mxu0 %v3882
        %6234 = vmatprep.subr.bf16.mxu0 %v3888
        %6235 = vmatpush1.bf16.msra.mxu0 %v3887
        %6236 = vmatprep.subr.bf16.mxu0 %v3893
        %6237 = vmatpush1.bf16.msra.mxu0 %v3892
        %6238 = vmatprep.mubr.bf16.mxu0 %v1736
        %6239 = vmatmul.mubr.bf16.gmra.mrb[0].mxu0 %v1735
        %v6240 = vpop.f32.mrb[0].mxu0
        %v6241 = vadd.f32 %v1081, %v6240
        %v6242 = vpop.f32.mrb[0].mxu0
        %v6243 = vadd.f32 %v1085, %v6242
        %v6244 = vpop.f32.mrb[0].mxu0
        %v6245 = vadd.f32 %v1081, %v6244
        %v6246 = vpop.f32.mrb[0].mxu0
        %v6247 = vadd.f32 %v1085, %v6246
        %6248 = vmatprep.mubr.bf16.mxu0 %v1749
        %6249 = vmatmul.mubr.bf16.gmra.mrb[0].mxu0 %v1748
        %v6250 = vpop.f32.mrb[0].mxu0
        %v6251 = vadd.f32 %v1081, %v6250
        %v6252 = vpop.f32.mrb[0].mxu0
        %v6253 = vadd.f32 %v1085, %v6252
        %v6254 = vpop.f32.mrb[0].mxu0
        %v6255 = vadd.f32 %v1081, %v6254
        %v6256 = vpop.f32.mrb[0].mxu0
        %v6257 = vadd.f32 %v1085, %v6256
        %6258 = vmatprep.mubr.bf16.mxu0 %v1762
        %6259 = vmatmul.mubr.bf16.gmra.mrb[0].mxu0 %v1761
        %v6260 = vpop.f32.mrb[0].mxu0
        %v6261 = vadd.f32 %v1081, %v6260
        %v6262 = vpop.f32.mrb[0].mxu0
        %v6263 = vadd.f32 %v1085, %v6262
        %v6264 = vpop.f32.mrb[0].mxu0
        %v6265 = vadd.f32 %v1081, %v6264
        %v6266 = vpop.f32.mrb[0].mxu0
        %v6267 = vadd.f32 %v1085, %v6266
        %6268 = vmatprep.mubr.bf16.mxu0 %v1775
        %6269 = vmatmul.mubr.bf16.gmra.mrb[0].mxu0 %v1774
        %v6270 = vpop.f32.mrb[0].mxu0
        %v6271 = vadd.f32 %v1081, %v6270
        %v6272 = vpop.f32.mrb[0].mxu0
        %v6273 = vadd.f32 %v1085, %v6272
        %v6274 = vpop.f32.mrb[0].mxu0
        %v6275 = vadd.f32 %v1081, %v6274
        %v6276 = vpop.f32.mrb[0].mxu0
        %v6277 = vadd.f32 %v1085, %v6276
        %6278 = vmatprep.mubr.bf16.mxu0 %v1788
        %6279 = vmatmul.mubr.bf16.gmra.mrb[0].mxu0 %v1787
        %v6280 = vpop.f32.mrb[0].mxu0
        %v6281 = vadd.f32 %v1081, %v6280
        %v6282 = vpop.f32.mrb[0].mxu0
        %v6283 = vadd.f32 %v1085, %v6282
        %v6284 = vpop.f32.mrb[0].mxu0
        %v6285 = vadd.f32 %v1081, %v6284
        %v6286 = vpop.f32.mrb[0].mxu0
        %v6287 = vadd.f32 %v1085, %v6286
        %6288 = vmatprep.mubr.bf16.mxu0 %v1801
        %6289 = vmatmul.mubr.bf16.gmra.mrb[0].mxu0 %v1800
        %v6290 = vpop.f32.mrb[0].mxu0
        %v6291 = vadd.f32 %v1081, %v6290
        %v6292 = vpop.f32.mrb[0].mxu0
        %v6293 = vadd.f32 %v1085, %v6292
        %v6294 = vpop.f32.mrb[0].mxu0
        %v6295 = vadd.f32 %v1081, %v6294
        %v6296 = vpop.f32.mrb[0].mxu0
        %v6297 = vadd.f32 %v1085, %v6296
        %6298 = vmatprep.mubr.bf16.mxu0 %v1814
        %6299 = vmatmul.mubr.bf16.gmra.mrb[0].mxu0 %v1813
        %v6300 = vpop.f32.mrb[0].mxu0
        %v6301 = vadd.f32 %v1081, %v6300
        %v6302 = vpop.f32.mrb[0].mxu0
        %v6303 = vadd.f32 %v1085, %v6302
        %v6304 = vpop.f32.mrb[0].mxu0
        %v6305 = vadd.f32 %v1081, %v6304
        %v6306 = vpop.f32.mrb[0].mxu0
        %v6307 = vadd.f32 %v1085, %v6306
        %6308 = vmatprep.mubr.bf16.mxu0 %v1827
        %6309 = vmatmul.mubr.bf16.gmra.mrb[0].mxu0 %v1826
        %v6310 = vpop.f32.mrb[0].mxu0
        %v6311 = vadd.f32 %v1081, %v6310
        %v6312 = vpop.f32.mrb[0].mxu0
        %v6313 = vadd.f32 %v1085, %v6312
        %v6314 = vpop.f32.mrb[0].mxu0
        %v6315 = vadd.f32 %v1081, %v6314
        %v6316 = vpop.f32.mrb[0].mxu0
        %v6317 = vadd.f32 %v1085, %v6316
        %6318 = vmatprep.mubr.bf16.mxu0 %v1840
        %6319 = vmatmul.mubr.bf16.gmra.mrb[0].mxu0 %v1839
        %v6320 = vpop.f32.mrb[0].mxu0
        %v6321 = vadd.f32 %v1081, %v6320
        %v6322 = vpop.f32.mrb[0].mxu0
        %v6323 = vadd.f32 %v1085, %v6322
        %v6324 = vpop.f32.mrb[0].mxu0
        %v6325 = vadd.f32 %v1081, %v6324
        %v6326 = vpop.f32.mrb[0].mxu0
        %v6327 = vadd.f32 %v1085, %v6326
        %6328 = vmatprep.mubr.bf16.mxu0 %v1853
        %6329 = vmatmul.mubr.bf16.gmra.mrb[0].mxu0 %v1852
        %v6330 = vpop.f32.mrb[0].mxu0
        %v6331 = vadd.f32 %v1081, %v6330
        %v6332 = vpop.f32.mrb[0].mxu0
        %v6333 = vadd.f32 %v1085, %v6332
        %v6334 = vpop.f32.mrb[0].mxu0
        %v6335 = vadd.f32 %v1081, %v6334
        %v6336 = vpop.f32.mrb[0].mxu0
        %v6337 = vadd.f32 %v1085, %v6336
        %6338 = vmatprep.mubr.bf16.mxu0 %v1866
        %6339 = vmatmul.mubr.bf16.gmra.mrb[0].mxu0 %v1865
        %v6340 = vpop.f32.mrb[0].mxu0
        %v6341 = vadd.f32 %v1081, %v6340
        %v6342 = vpop.f32.mrb[0].mxu0
        %v6343 = vadd.f32 %v1085, %v6342
        %v6344 = vpop.f32.mrb[0].mxu0
        %v6345 = vadd.f32 %v1081, %v6344
        %v6346 = vpop.f32.mrb[0].mxu0
        %v6347 = vadd.f32 %v1085, %v6346
        %6348 = vmatprep.mubr.bf16.mxu0 %v1879
        %6349 = vmatmul.mubr.bf16.gmra.mrb[0].mxu0 %v1878
        %v6350 = vpop.f32.mrb[0].mxu0
        %v6351 = vadd.f32 %v1081, %v6350
        %v6352 = vpop.f32.mrb[0].mxu0
        %v6353 = vadd.f32 %v1085, %v6352
        %v6354 = vpop.f32.mrb[0].mxu0
        %v6355 = vadd.f32 %v1081, %v6354
        %v6356 = vpop.f32.mrb[0].mxu0
        %v6357 = vadd.f32 %v1085, %v6356
        %6358 = vmatprep.mubr.bf16.mxu0 %v1892
        %6359 = vmatmul.mubr.bf16.gmra.mrb[0].mxu0 %v1891
        %v6360 = vpop.f32.mrb[0].mxu0
        %v6361 = vadd.f32 %v1081, %v6360
        %v6362 = vpop.f32.mrb[0].mxu0
        %v6363 = vadd.f32 %v1085, %v6362
        %v6364 = vpop.f32.mrb[0].mxu0
        %v6365 = vadd.f32 %v1081, %v6364
        %v6366 = vpop.f32.mrb[0].mxu0
        %v6367 = vadd.f32 %v1085, %v6366
        %6368 = vmatprep.mubr.bf16.mxu0 %v1905
        %6369 = vmatmul.mubr.bf16.gmra.mrb[0].mxu0 %v1904
        %v6370 = vpop.f32.mrb[0].mxu0
        %v6371 = vadd.f32 %v1081, %v6370
        %v6372 = vpop.f32.mrb[0].mxu0
        %v6373 = vadd.f32 %v1085, %v6372
        %v6374 = vpop.f32.mrb[0].mxu0
        %v6375 = vadd.f32 %v1081, %v6374
        %v6376 = vpop.f32.mrb[0].mxu0
        %v6377 = vadd.f32 %v1085, %v6376
        %6378 = vmatprep.mubr.bf16.mxu0 %v1918
        %6379 = vmatmul.mubr.bf16.gmra.mrb[0].mxu0 %v1917
        %v6380 = vpop.f32.mrb[0].mxu0
        %v6381 = vadd.f32 %v1081, %v6380
        %v6382 = vpop.f32.mrb[0].mxu0
        %v6383 = vadd.f32 %v1085, %v6382
        %v6384 = vpop.f32.mrb[0].mxu0
        %v6385 = vadd.f32 %v1081, %v6384
        %v6386 = vpop.f32.mrb[0].mxu0
        %v6387 = vadd.f32 %v1085, %v6386
        %6388 = vmatprep.mubr.bf16.mxu0 %v1931
        %6389 = vmatmul.mubr.bf16.gmra.mrb[0].mxu0 %v1930
        %v6390 = vpop.f32.mrb[0].mxu0
        %v6391 = vadd.f32 %v1081, %v6390
        %v6392 = vpop.f32.mrb[0].mxu0
        %v6393 = vadd.f32 %v1085, %v6392
        %v6394 = vpop.f32.mrb[0].mxu0
        %v6395 = vadd.f32 %v1081, %v6394
        %v6396 = vpop.f32.mrb[0].mxu0
        %v6397 = vadd.f32 %v1085, %v6396
        %6398 = vdwg.mxu0
        %6399 = vmatprep.subr.bf16.mxu0 %v3898
        %6400 = vmatpush1.bf16.msra.mxu0 %v3897
        %6401 = vmatprep.subr.bf16.mxu0 %v3903
        %6402 = vmatpush1.bf16.msra.mxu0 %v3902
        %6403 = vmatprep.subr.bf16.mxu0 %v3908
        %6404 = vmatpush1.bf16.msra.mxu0 %v3907
        %6405 = vmatprep.subr.bf16.mxu0 %v3913
        %6406 = vmatpush1.bf16.msra.mxu0 %v3912
        %6407 = vmatprep.subr.bf16.mxu0 %v3918
        %6408 = vmatpush1.bf16.msra.mxu0 %v3917
        %6409 = vmatprep.subr.bf16.mxu0 %v3923
        %6410 = vmatpush1.bf16.msra.mxu0 %v3922
        %6411 = vmatprep.subr.bf16.mxu0 %v3928
        %6412 = vmatpush1.bf16.msra.mxu0 %v3927
        %6413 = vmatprep.subr.bf16.mxu0 %v3933
        %6414 = vmatpush1.bf16.msra.mxu0 %v3932
        %6415 = vmatprep.subr.bf16.mxu0 %v3938
        %6416 = vmatpush1.bf16.msra.mxu0 %v3937
        %6417 = vmatprep.subr.bf16.mxu0 %v3943
        %6418 = vmatpush1.bf16.msra.mxu0 %v3942
        %6419 = vmatprep.subr.bf16.mxu0 %v3948
        %6420 = vmatpush1.bf16.msra.mxu0 %v3947
        %6421 = vmatprep.subr.bf16.mxu0 %v3953
        %6422 = vmatpush1.bf16.msra.mxu0 %v3952
        %6423 = vmatprep.subr.bf16.mxu0 %v3958
        %6424 = vmatpush1.bf16.msra.mxu0 %v3957
        %6425 = vmatprep.subr.bf16.mxu0 %v3963
        %6426 = vmatpush1.bf16.msra.mxu0 %v3962
        %6427 = vmatprep.subr.bf16.mxu0 %v3968
        %6428 = vmatpush1.bf16.msra.mxu0 %v3967
        %6429 = vmatprep.subr.bf16.mxu0 %v3973
        %6430 = vmatpush1.bf16.msra.mxu0 %v3972
        %6431 = vmatprep.mubr.bf16.mxu0 %v1738
        %6432 = vmatmul.mubr.bf16.gmra.mrb[0].mxu0 %v1737
        %v6433 = vpop.f32.mrb[0].mxu0
        %v6434 = vadd.f32 %v6241, %v6433
        %v6435 = vpop.f32.mrb[0].mxu0
        %v6436 = vadd.f32 %v6243, %v6435
        %v6437 = vpop.f32.mrb[0].mxu0
        %v6438 = vadd.f32 %v6245, %v6437
        %v6439 = vpop.f32.mrb[0].mxu0
        %v6440 = vadd.f32 %v6247, %v6439
        %6441 = vmatprep.mubr.bf16.mxu0 %v1751
        %6442 = vmatmul.mubr.bf16.gmra.mrb[0].mxu0 %v1750
        %v6443 = vpop.f32.mrb[0].mxu0
        %v6444 = vadd.f32 %v6251, %v6443
        %v6445 = vpop.f32.mrb[0].mxu0
        %v6446 = vadd.f32 %v6253, %v6445
        %v6447 = vpop.f32.mrb[0].mxu0
        %v6448 = vadd.f32 %v6255, %v6447
        %v6449 = vpop.f32.mrb[0].mxu0
        %v6450 = vadd.f32 %v6257, %v6449
        %6451 = vmatprep.mubr.bf16.mxu0 %v1764
        %6452 = vmatmul.mubr.bf16.gmra.mrb[0].mxu0 %v1763
        %v6453 = vpop.f32.mrb[0].mxu0
        %v6454 = vadd.f32 %v6261, %v6453
        %v6455 = vpop.f32.mrb[0].mxu0
        %v6456 = vadd.f32 %v6263, %v6455
        %v6457 = vpop.f32.mrb[0].mxu0
        %v6458 = vadd.f32 %v6265, %v6457
        %v6459 = vpop.f32.mrb[0].mxu0
        %v6460 = vadd.f32 %v6267, %v6459
        %6461 = vmatprep.mubr.bf16.mxu0 %v1777
        %6462 = vmatmul.mubr.bf16.gmra.mrb[0].mxu0 %v1776
        %v6463 = vpop.f32.mrb[0].mxu0
        %v6464 = vadd.f32 %v6271, %v6463
        %v6465 = vpop.f32.mrb[0].mxu0
        %v6466 = vadd.f32 %v6273, %v6465
        %v6467 = vpop.f32.mrb[0].mxu0
        %v6468 = vadd.f32 %v6275, %v6467
        %v6469 = vpop.f32.mrb[0].mxu0
        %v6470 = vadd.f32 %v6277, %v6469
        %6471 = vmatprep.mubr.bf16.mxu0 %v1790
        %6472 = vmatmul.mubr.bf16.gmra.mrb[0].mxu0 %v1789
        %v6473 = vpop.f32.mrb[0].mxu0
        %v6474 = vadd.f32 %v6281, %v6473
        %v6475 = vpop.f32.mrb[0].mxu0
        %v6476 = vadd.f32 %v6283, %v6475
        %v6477 = vpop.f32.mrb[0].mxu0
        %v6478 = vadd.f32 %v6285, %v6477
        %v6479 = vpop.f32.mrb[0].mxu0
        %v6480 = vadd.f32 %v6287, %v6479
        %6481 = vmatprep.mubr.bf16.mxu0 %v1803
        %6482 = vmatmul.mubr.bf16.gmra.mrb[0].mxu0 %v1802
        %v6483 = vpop.f32.mrb[0].mxu0
        %v6484 = vadd.f32 %v6291, %v6483
        %v6485 = vpop.f32.mrb[0].mxu0
        %v6486 = vadd.f32 %v6293, %v6485
        %v6487 = vpop.f32.mrb[0].mxu0
        %v6488 = vadd.f32 %v6295, %v6487
        %v6489 = vpop.f32.mrb[0].mxu0
        %v6490 = vadd.f32 %v6297, %v6489
        %6491 = vmatprep.mubr.bf16.mxu0 %v1816
        %6492 = vmatmul.mubr.bf16.gmra.mrb[0].mxu0 %v1815
        %v6493 = vpop.f32.mrb[0].mxu0
        %v6494 = vadd.f32 %v6301, %v6493
        %v6495 = vpop.f32.mrb[0].mxu0
        %v6496 = vadd.f32 %v6303, %v6495
        %v6497 = vpop.f32.mrb[0].mxu0
        %v6498 = vadd.f32 %v6305, %v6497
        %v6499 = vpop.f32.mrb[0].mxu0
        %v6500 = vadd.f32 %v6307, %v6499
        %6501 = vmatprep.mubr.bf16.mxu0 %v1829
        %6502 = vmatmul.mubr.bf16.gmra.mrb[0].mxu0 %v1828
        %v6503 = vpop.f32.mrb[0].mxu0
        %v6504 = vadd.f32 %v6311, %v6503
        %v6505 = vpop.f32.mrb[0].mxu0
        %v6506 = vadd.f32 %v6313, %v6505
        %v6507 = vpop.f32.mrb[0].mxu0
        %v6508 = vadd.f32 %v6315, %v6507
        %v6509 = vpop.f32.mrb[0].mxu0
        %v6510 = vadd.f32 %v6317, %v6509
        %6511 = vmatprep.mubr.bf16.mxu0 %v1842
        %6512 = vmatmul.mubr.bf16.gmra.mrb[0].mxu0 %v1841
        %v6513 = vpop.f32.mrb[0].mxu0
        %v6514 = vadd.f32 %v6321, %v6513
        %v6515 = vpop.f32.mrb[0].mxu0
        %v6516 = vadd.f32 %v6323, %v6515
        %v6517 = vpop.f32.mrb[0].mxu0
        %v6518 = vadd.f32 %v6325, %v6517
        %v6519 = vpop.f32.mrb[0].mxu0
        %v6520 = vadd.f32 %v6327, %v6519
        %6521 = vmatprep.mubr.bf16.mxu0 %v1855
        %6522 = vmatmul.mubr.bf16.gmra.mrb[0].mxu0 %v1854
        %v6523 = vpop.f32.mrb[0].mxu0
        %v6524 = vadd.f32 %v6331, %v6523
        %v6525 = vpop.f32.mrb[0].mxu0
        %v6526 = vadd.f32 %v6333, %v6525
        %v6527 = vpop.f32.mrb[0].mxu0
        %v6528 = vadd.f32 %v6335, %v6527
        %v6529 = vpop.f32.mrb[0].mxu0
        %v6530 = vadd.f32 %v6337, %v6529
        %6531 = vmatprep.mubr.bf16.mxu0 %v1868
        %6532 = vmatmul.mubr.bf16.gmra.mrb[0].mxu0 %v1867
        %v6533 = vpop.f32.mrb[0].mxu0
        %v6534 = vadd.f32 %v6341, %v6533
        %v6535 = vpop.f32.mrb[0].mxu0
        %v6536 = vadd.f32 %v6343, %v6535
        %v6537 = vpop.f32.mrb[0].mxu0
        %v6538 = vadd.f32 %v6345, %v6537
        %v6539 = vpop.f32.mrb[0].mxu0
        %v6540 = vadd.f32 %v6347, %v6539
        %6541 = vmatprep.mubr.bf16.mxu0 %v1881
        %6542 = vmatmul.mubr.bf16.gmra.mrb[0].mxu0 %v1880
        %v6543 = vpop.f32.mrb[0].mxu0
        %v6544 = vadd.f32 %v6351, %v6543
        %v6545 = vpop.f32.mrb[0].mxu0
        %v6546 = vadd.f32 %v6353, %v6545
        %v6547 = vpop.f32.mrb[0].mxu0
        %v6548 = vadd.f32 %v6355, %v6547
        %v6549 = vpop.f32.mrb[0].mxu0
        %v6550 = vadd.f32 %v6357, %v6549
        %6551 = vmatprep.mubr.bf16.mxu0 %v1894
        %6552 = vmatmul.mubr.bf16.gmra.mrb[0].mxu0 %v1893
        %v6553 = vpop.f32.mrb[0].mxu0
        %v6554 = vadd.f32 %v6361, %v6553
        %v6555 = vpop.f32.mrb[0].mxu0
        %v6556 = vadd.f32 %v6363, %v6555
        %v6557 = vpop.f32.mrb[0].mxu0
        %v6558 = vadd.f32 %v6365, %v6557
        %v6559 = vpop.f32.mrb[0].mxu0
        %v6560 = vadd.f32 %v6367, %v6559
        %6561 = vmatprep.mubr.bf16.mxu0 %v1907
        %6562 = vmatmul.mubr.bf16.gmra.mrb[0].mxu0 %v1906
        %v6563 = vpop.f32.mrb[0].mxu0
        %v6564 = vadd.f32 %v6371, %v6563
        %v6565 = vpop.f32.mrb[0].mxu0
        %v6566 = vadd.f32 %v6373, %v6565
        %v6567 = vpop.f32.mrb[0].mxu0
        %v6568 = vadd.f32 %v6375, %v6567
        %v6569 = vpop.f32.mrb[0].mxu0
        %v6570 = vadd.f32 %v6377, %v6569
        %6571 = vmatprep.mubr.bf16.mxu0 %v1920
        %6572 = vmatmul.mubr.bf16.gmra.mrb[0].mxu0 %v1919
        %v6573 = vpop.f32.mrb[0].mxu0
        %v6574 = vadd.f32 %v6381, %v6573
        %v6575 = vpop.f32.mrb[0].mxu0
        %v6576 = vadd.f32 %v6383, %v6575
        %v6577 = vpop.f32.mrb[0].mxu0
        %v6578 = vadd.f32 %v6385, %v6577
        %v6579 = vpop.f32.mrb[0].mxu0
        %v6580 = vadd.f32 %v6387, %v6579
        %6581 = vmatprep.mubr.bf16.mxu0 %v1933
        %6582 = vmatmul.mubr.bf16.gmra.mrb[0].mxu0 %v1932
        %v6583 = vpop.f32.mrb[0].mxu0
        %v6584 = vadd.f32 %v6391, %v6583
        %v6585 = vpop.f32.mrb[0].mxu0
        %v6586 = vadd.f32 %v6393, %v6585
        %v6587 = vpop.f32.mrb[0].mxu0
        %v6588 = vadd.f32 %v6395, %v6587
        %v6589 = vpop.f32.mrb[0].mxu0
        %v6590 = vadd.f32 %v6397, %v6589
        %6591 = vdwg.mxu0
        %6592 = vmatprep.subr.bf16.mxu0 %v3978
        %6593 = vmatpush1.bf16.msra.mxu0 %v3977
        %6594 = vmatprep.subr.bf16.mxu0 %v3983
        %6595 = vmatpush1.bf16.msra.mxu0 %v3982
        %6596 = vmatprep.subr.bf16.mxu0 %v3988
        %6597 = vmatpush1.bf16.msra.mxu0 %v3987
        %6598 = vmatprep.subr.bf16.mxu0 %v3993
        %6599 = vmatpush1.bf16.msra.mxu0 %v3992
        %6600 = vmatprep.subr.bf16.mxu0 %v3998
        %6601 = vmatpush1.bf16.msra.mxu0 %v3997
        %6602 = vmatprep.subr.bf16.mxu0 %v4003
        %6603 = vmatpush1.bf16.msra.mxu0 %v4002
        %6604 = vmatprep.subr.bf16.mxu0 %v4008
        %6605 = vmatpush1.bf16.msra.mxu0 %v4007
        %6606 = vmatprep.subr.bf16.mxu0 %v4013
        %6607 = vmatpush1.bf16.msra.mxu0 %v4012
        %6608 = vmatprep.subr.bf16.mxu0 %v4018
        %6609 = vmatpush1.bf16.msra.mxu0 %v4017
        %6610 = vmatprep.subr.bf16.mxu0 %v4023
        %6611 = vmatpush1.bf16.msra.mxu0 %v4022
        %6612 = vmatprep.subr.bf16.mxu0 %v4028
        %6613 = vmatpush1.bf16.msra.mxu0 %v4027
        %6614 = vmatprep.subr.bf16.mxu0 %v4033
        %6615 = vmatpush1.bf16.msra.mxu0 %v4032
        %6616 = vmatprep.subr.bf16.mxu0 %v4038
        %6617 = vmatpush1.bf16.msra.mxu0 %v4037
        %6618 = vmatprep.subr.bf16.mxu0 %v4043
        %6619 = vmatpush1.bf16.msra.mxu0 %v4042
        %6620 = vmatprep.subr.bf16.mxu0 %v4048
        %6621 = vmatpush1.bf16.msra.mxu0 %v4047
        %6622 = vmatprep.subr.bf16.mxu0 %v4053
        %6623 = vmatpush1.bf16.msra.mxu0 %v4052
        %6624 = vmatprep.mubr.bf16.mxu0 %v1740
        %6625 = vmatmul.mubr.bf16.gmra.mrb[0].mxu0 %v1739
        %v6626 = vpop.f32.mrb[0].mxu0
        %v6627 = vadd.f32 %v6434, %v6626
        %v6628 = vpop.f32.mrb[0].mxu0
        %v6629 = vadd.f32 %v6436, %v6628
        %v6630 = vpop.f32.mrb[0].mxu0
        %v6631 = vadd.f32 %v6438, %v6630
        %v6632 = vpop.f32.mrb[0].mxu0
        %v6633 = vadd.f32 %v6440, %v6632
        %6634 = vmatprep.mubr.bf16.mxu0 %v1753
        %6635 = vmatmul.mubr.bf16.gmra.mrb[0].mxu0 %v1752
        %v6636 = vpop.f32.mrb[0].mxu0
        %v6637 = vadd.f32 %v6444, %v6636
        %v6638 = vpop.f32.mrb[0].mxu0
        %v6639 = vadd.f32 %v6446, %v6638
        %v6640 = vpop.f32.mrb[0].mxu0
        %v6641 = vadd.f32 %v6448, %v6640
        %v6642 = vpop.f32.mrb[0].mxu0
        %v6643 = vadd.f32 %v6450, %v6642
        %6644 = vmatprep.mubr.bf16.mxu0 %v1766
        %6645 = vmatmul.mubr.bf16.gmra.mrb[0].mxu0 %v1765
        %v6646 = vpop.f32.mrb[0].mxu0
        %v6647 = vadd.f32 %v6454, %v6646
        %v6648 = vpop.f32.mrb[0].mxu0
        %v6649 = vadd.f32 %v6456, %v6648
        %v6650 = vpop.f32.mrb[0].mxu0
        %v6651 = vadd.f32 %v6458, %v6650
        %v6652 = vpop.f32.mrb[0].mxu0
        %v6653 = vadd.f32 %v6460, %v6652
        %6654 = vmatprep.mubr.bf16.mxu0 %v1779
        %6655 = vmatmul.mubr.bf16.gmra.mrb[0].mxu0 %v1778
        %v6656 = vpop.f32.mrb[0].mxu0
        %v6657 = vadd.f32 %v6464, %v6656
        %v6658 = vpop.f32.mrb[0].mxu0
        %v6659 = vadd.f32 %v6466, %v6658
        %v6660 = vpop.f32.mrb[0].mxu0
        %v6661 = vadd.f32 %v6468, %v6660
        %v6662 = vpop.f32.mrb[0].mxu0
        %v6663 = vadd.f32 %v6470, %v6662
        %6664 = vmatprep.mubr.bf16.mxu0 %v1792
        %6665 = vmatmul.mubr.bf16.gmra.mrb[0].mxu0 %v1791
        %v6666 = vpop.f32.mrb[0].mxu0
        %v6667 = vadd.f32 %v6474, %v6666
        %v6668 = vpop.f32.mrb[0].mxu0
        %v6669 = vadd.f32 %v6476, %v6668
        %v6670 = vpop.f32.mrb[0].mxu0
        %v6671 = vadd.f32 %v6478, %v6670
        %v6672 = vpop.f32.mrb[0].mxu0
        %v6673 = vadd.f32 %v6480, %v6672
        %6674 = vmatprep.mubr.bf16.mxu0 %v1805
        %6675 = vmatmul.mubr.bf16.gmra.mrb[0].mxu0 %v1804
        %v6676 = vpop.f32.mrb[0].mxu0
        %v6677 = vadd.f32 %v6484, %v6676
        %v6678 = vpop.f32.mrb[0].mxu0
        %v6679 = vadd.f32 %v6486, %v6678
        %v6680 = vpop.f32.mrb[0].mxu0
        %v6681 = vadd.f32 %v6488, %v6680
        %v6682 = vpop.f32.mrb[0].mxu0
        %v6683 = vadd.f32 %v6490, %v6682
        %6684 = vmatprep.mubr.bf16.mxu0 %v1818
        %6685 = vmatmul.mubr.bf16.gmra.mrb[0].mxu0 %v1817
        %v6686 = vpop.f32.mrb[0].mxu0
        %v6687 = vadd.f32 %v6494, %v6686
        %v6688 = vpop.f32.mrb[0].mxu0
        %v6689 = vadd.f32 %v6496, %v6688
        %v6690 = vpop.f32.mrb[0].mxu0
        %v6691 = vadd.f32 %v6498, %v6690
        %v6692 = vpop.f32.mrb[0].mxu0
        %v6693 = vadd.f32 %v6500, %v6692
        %6694 = vmatprep.mubr.bf16.mxu0 %v1831
        %6695 = vmatmul.mubr.bf16.gmra.mrb[0].mxu0 %v1830
        %v6696 = vpop.f32.mrb[0].mxu0
        %v6697 = vadd.f32 %v6504, %v6696
        %v6698 = vpop.f32.mrb[0].mxu0
        %v6699 = vadd.f32 %v6506, %v6698
        %v6700 = vpop.f32.mrb[0].mxu0
        %v6701 = vadd.f32 %v6508, %v6700
        %v6702 = vpop.f32.mrb[0].mxu0
        %v6703 = vadd.f32 %v6510, %v6702
        %6704 = vmatprep.mubr.bf16.mxu0 %v1844
        %6705 = vmatmul.mubr.bf16.gmra.mrb[0].mxu0 %v1843
        %v6706 = vpop.f32.mrb[0].mxu0
        %v6707 = vadd.f32 %v6514, %v6706
        %v6708 = vpop.f32.mrb[0].mxu0
        %v6709 = vadd.f32 %v6516, %v6708
        %v6710 = vpop.f32.mrb[0].mxu0
        %v6711 = vadd.f32 %v6518, %v6710
        %v6712 = vpop.f32.mrb[0].mxu0
        %v6713 = vadd.f32 %v6520, %v6712
        %6714 = vmatprep.mubr.bf16.mxu0 %v1857
        %6715 = vmatmul.mubr.bf16.gmra.mrb[0].mxu0 %v1856
        %v6716 = vpop.f32.mrb[0].mxu0
        %v6717 = vadd.f32 %v6524, %v6716
        %v6718 = vpop.f32.mrb[0].mxu0
        %v6719 = vadd.f32 %v6526, %v6718
        %v6720 = vpop.f32.mrb[0].mxu0
        %v6721 = vadd.f32 %v6528, %v6720
        %v6722 = vpop.f32.mrb[0].mxu0
        %v6723 = vadd.f32 %v6530, %v6722
        %6724 = vmatprep.mubr.bf16.mxu0 %v1870
        %6725 = vmatmul.mubr.bf16.gmra.mrb[0].mxu0 %v1869
        %v6726 = vpop.f32.mrb[0].mxu0
        %v6727 = vadd.f32 %v6534, %v6726
        %v6728 = vpop.f32.mrb[0].mxu0
        %v6729 = vadd.f32 %v6536, %v6728
        %v6730 = vpop.f32.mrb[0].mxu0
        %v6731 = vadd.f32 %v6538, %v6730
        %v6732 = vpop.f32.mrb[0].mxu0
        %v6733 = vadd.f32 %v6540, %v6732
        %6734 = vmatprep.mubr.bf16.mxu0 %v1883
        %6735 = vmatmul.mubr.bf16.gmra.mrb[0].mxu0 %v1882
        %v6736 = vpop.f32.mrb[0].mxu0
        %v6737 = vadd.f32 %v6544, %v6736
        %v6738 = vpop.f32.mrb[0].mxu0
        %v6739 = vadd.f32 %v6546, %v6738
        %v6740 = vpop.f32.mrb[0].mxu0
        %v6741 = vadd.f32 %v6548, %v6740
        %v6742 = vpop.f32.mrb[0].mxu0
        %v6743 = vadd.f32 %v6550, %v6742
        %6744 = vmatprep.mubr.bf16.mxu0 %v1896
        %6745 = vmatmul.mubr.bf16.gmra.mrb[0].mxu0 %v1895
        %v6746 = vpop.f32.mrb[0].mxu0
        %v6747 = vadd.f32 %v6554, %v6746
        %v6748 = vpop.f32.mrb[0].mxu0
        %v6749 = vadd.f32 %v6556, %v6748
        %v6750 = vpop.f32.mrb[0].mxu0
        %v6751 = vadd.f32 %v6558, %v6750
        %v6752 = vpop.f32.mrb[0].mxu0
        %v6753 = vadd.f32 %v6560, %v6752
        %6754 = vmatprep.mubr.bf16.mxu0 %v1909
        %6755 = vmatmul.mubr.bf16.gmra.mrb[0].mxu0 %v1908
        %v6756 = vpop.f32.mrb[0].mxu0
        %v6757 = vadd.f32 %v6564, %v6756
        %v6758 = vpop.f32.mrb[0].mxu0
        %v6759 = vadd.f32 %v6566, %v6758
        %v6760 = vpop.f32.mrb[0].mxu0
        %v6761 = vadd.f32 %v6568, %v6760
        %v6762 = vpop.f32.mrb[0].mxu0
        %v6763 = vadd.f32 %v6570, %v6762
        %6764 = vmatprep.mubr.bf16.mxu0 %v1922
        %6765 = vmatmul.mubr.bf16.gmra.mrb[0].mxu0 %v1921
        %v6766 = vpop.f32.mrb[0].mxu0
        %v6767 = vadd.f32 %v6574, %v6766
        %v6768 = vpop.f32.mrb[0].mxu0
        %v6769 = vadd.f32 %v6576, %v6768
        %v6770 = vpop.f32.mrb[0].mxu0
        %v6771 = vadd.f32 %v6578, %v6770
        %v6772 = vpop.f32.mrb[0].mxu0
        %v6773 = vadd.f32 %v6580, %v6772
        %6774 = vmatprep.mubr.bf16.mxu0 %v1935
        %6775 = vmatmul.mubr.bf16.gmra.mrb[0].mxu0 %v1934
        %v6776 = vpop.f32.mrb[0].mxu0
        %v6777 = vadd.f32 %v6584, %v6776
        %v6778 = vpop.f32.mrb[0].mxu0
        %v6779 = vadd.f32 %v6586, %v6778
        %v6780 = vpop.f32.mrb[0].mxu0
        %v6781 = vadd.f32 %v6588, %v6780
        %v6782 = vpop.f32.mrb[0].mxu0
        %v6783 = vadd.f32 %v6590, %v6782
        %6784 = vdwg.mxu0
        %6785 = vmatprep.subr.bf16.mxu0 %v4058
        %6786 = vmatpush1.bf16.msra.mxu0 %v4057
        %6787 = vmatprep.subr.bf16.mxu0 %v4063
        %6788 = vmatpush1.bf16.msra.mxu0 %v4062
        %6789 = vmatprep.subr.bf16.mxu0 %v4068
        %6790 = vmatpush1.bf16.msra.mxu0 %v4067
        %6791 = vmatprep.subr.bf16.mxu0 %v4073
        %6792 = vmatpush1.bf16.msra.mxu0 %v4072
        %6793 = vmatprep.subr.bf16.mxu0 %v4078
        %6794 = vmatpush1.bf16.msra.mxu0 %v4077
        %6795 = vmatprep.subr.bf16.mxu0 %v4083
        %6796 = vmatpush1.bf16.msra.mxu0 %v4082
        %6797 = vmatprep.subr.bf16.mxu0 %v4088
        %6798 = vmatpush1.bf16.msra.mxu0 %v4087
        %6799 = vmatprep.subr.bf16.mxu0 %v4093
        %6800 = vmatpush1.bf16.msra.mxu0 %v4092
        %6801 = vmatprep.subr.bf16.mxu0 %v4098
        %6802 = vmatpush1.bf16.msra.mxu0 %v4097
        %6803 = vmatprep.subr.bf16.mxu0 %v4103
        %6804 = vmatpush1.bf16.msra.mxu0 %v4102
        %6805 = vmatprep.subr.bf16.mxu0 %v4108
        %6806 = vmatpush1.bf16.msra.mxu0 %v4107
        %6807 = vmatprep.subr.bf16.mxu0 %v4113
        %6808 = vmatpush1.bf16.msra.mxu0 %v4112
        %6809 = vmatprep.subr.bf16.mxu0 %v4118
        %6810 = vmatpush1.bf16.msra.mxu0 %v4117
        %6811 = vmatprep.subr.bf16.mxu0 %v4123
        %6812 = vmatpush1.bf16.msra.mxu0 %v4122
        %6813 = vmatprep.subr.bf16.mxu0 %v4128
        %6814 = vmatpush1.bf16.msra.mxu0 %v4127
        %6815 = vmatprep.subr.bf16.mxu0 %v4133
        %6816 = vmatpush1.bf16.msra.mxu0 %v4132
        %6817 = vmatprep.mubr.bf16.mxu0 %v1742
        %6818 = vmatmul.mubr.bf16.gmra.mrb[0].mxu0 %v1741
        %v6819 = vpop.f32.mrb[0].mxu0
        %v6820 = vadd.f32 %v6627, %v6819
        %v6821 = vpop.f32.mrb[0].mxu0
        %v6822 = vadd.f32 %v6629, %v6821
        %v6823 = vpop.f32.mrb[0].mxu0
        %v6824 = vadd.f32 %v6631, %v6823
        %v6825 = vpop.f32.mrb[0].mxu0
        %v6826 = vadd.f32 %v6633, %v6825
        %6827 = vmatprep.mubr.bf16.mxu0 %v1755
        %6828 = vmatmul.mubr.bf16.gmra.mrb[0].mxu0 %v1754
        %v6829 = vpop.f32.mrb[0].mxu0
        %v6830 = vadd.f32 %v6637, %v6829
        %v6831 = vpop.f32.mrb[0].mxu0
        %v6832 = vadd.f32 %v6639, %v6831
        %v6833 = vpop.f32.mrb[0].mxu0
        %v6834 = vadd.f32 %v6641, %v6833
        %v6835 = vpop.f32.mrb[0].mxu0
        %v6836 = vadd.f32 %v6643, %v6835
        %6837 = vmatprep.mubr.bf16.mxu0 %v1768
        %6838 = vmatmul.mubr.bf16.gmra.mrb[0].mxu0 %v1767
        %v6839 = vpop.f32.mrb[0].mxu0
        %v6840 = vadd.f32 %v6647, %v6839
        %v6841 = vpop.f32.mrb[0].mxu0
        %v6842 = vadd.f32 %v6649, %v6841
        %v6843 = vpop.f32.mrb[0].mxu0
        %v6844 = vadd.f32 %v6651, %v6843
        %v6845 = vpop.f32.mrb[0].mxu0
        %v6846 = vadd.f32 %v6653, %v6845
        %6847 = vmatprep.mubr.bf16.mxu0 %v1781
        %6848 = vmatmul.mubr.bf16.gmra.mrb[0].mxu0 %v1780
        %v6849 = vpop.f32.mrb[0].mxu0
        %v6850 = vadd.f32 %v6657, %v6849
        %v6851 = vpop.f32.mrb[0].mxu0
        %v6852 = vadd.f32 %v6659, %v6851
        %v6853 = vpop.f32.mrb[0].mxu0
        %v6854 = vadd.f32 %v6661, %v6853
        %v6855 = vpop.f32.mrb[0].mxu0
        %v6856 = vadd.f32 %v6663, %v6855
        %6857 = vmatprep.mubr.bf16.mxu0 %v1794
        %6858 = vmatmul.mubr.bf16.gmra.mrb[0].mxu0 %v1793
        %v6859 = vpop.f32.mrb[0].mxu0
        %v6860 = vadd.f32 %v6667, %v6859
        %v6861 = vpop.f32.mrb[0].mxu0
        %v6862 = vadd.f32 %v6669, %v6861
        %v6863 = vpop.f32.mrb[0].mxu0
        %v6864 = vadd.f32 %v6671, %v6863
        %v6865 = vpop.f32.mrb[0].mxu0
        %v6866 = vadd.f32 %v6673, %v6865
        %6867 = vmatprep.mubr.bf16.mxu0 %v1807
        %6868 = vmatmul.mubr.bf16.gmra.mrb[0].mxu0 %v1806
        %v6869 = vpop.f32.mrb[0].mxu0
        %v6870 = vadd.f32 %v6677, %v6869
        %v6871 = vpop.f32.mrb[0].mxu0
        %v6872 = vadd.f32 %v6679, %v6871
        %v6873 = vpop.f32.mrb[0].mxu0
        %v6874 = vadd.f32 %v6681, %v6873
        %v6875 = vpop.f32.mrb[0].mxu0
        %v6876 = vadd.f32 %v6683, %v6875
        %6877 = vmatprep.mubr.bf16.mxu0 %v1820
        %6878 = vmatmul.mubr.bf16.gmra.mrb[0].mxu0 %v1819
        %v6879 = vpop.f32.mrb[0].mxu0
        %v6880 = vadd.f32 %v6687, %v6879
        %v6881 = vpop.f32.mrb[0].mxu0
        %v6882 = vadd.f32 %v6689, %v6881
        %v6883 = vpop.f32.mrb[0].mxu0
        %v6884 = vadd.f32 %v6691, %v6883
        %v6885 = vpop.f32.mrb[0].mxu0
        %v6886 = vadd.f32 %v6693, %v6885
        %6887 = vmatprep.mubr.bf16.mxu0 %v1833
        %6888 = vmatmul.mubr.bf16.gmra.mrb[0].mxu0 %v1832
        %v6889 = vpop.f32.mrb[0].mxu0
        %v6890 = vadd.f32 %v6697, %v6889
        %v6891 = vpop.f32.mrb[0].mxu0
        %v6892 = vadd.f32 %v6699, %v6891
        %v6893 = vpop.f32.mrb[0].mxu0
        %v6894 = vadd.f32 %v6701, %v6893
        %v6895 = vpop.f32.mrb[0].mxu0
        %v6896 = vadd.f32 %v6703, %v6895
        %6897 = vmatprep.mubr.bf16.mxu0 %v1846
        %6898 = vmatmul.mubr.bf16.gmra.mrb[0].mxu0 %v1845
        %v6899 = vpop.f32.mrb[0].mxu0
        %v6900 = vadd.f32 %v6707, %v6899
        %v6901 = vpop.f32.mrb[0].mxu0
        %v6902 = vadd.f32 %v6709, %v6901
        %v6903 = vpop.f32.mrb[0].mxu0
        %v6904 = vadd.f32 %v6711, %v6903
        %v6905 = vpop.f32.mrb[0].mxu0
        %v6906 = vadd.f32 %v6713, %v6905
        %6907 = vmatprep.mubr.bf16.mxu0 %v1859
        %6908 = vmatmul.mubr.bf16.gmra.mrb[0].mxu0 %v1858
        %v6909 = vpop.f32.mrb[0].mxu0
        %v6910 = vadd.f32 %v6717, %v6909
        %v6911 = vpop.f32.mrb[0].mxu0
        %v6912 = vadd.f32 %v6719, %v6911
        %v6913 = vpop.f32.mrb[0].mxu0
        %v6914 = vadd.f32 %v6721, %v6913
        %v6915 = vpop.f32.mrb[0].mxu0
        %v6916 = vadd.f32 %v6723, %v6915
        %6917 = vmatprep.mubr.bf16.mxu0 %v1872
        %6918 = vmatmul.mubr.bf16.gmra.mrb[0].mxu0 %v1871
        %v6919 = vpop.f32.mrb[0].mxu0
        %v6920 = vadd.f32 %v6727, %v6919
        %v6921 = vpop.f32.mrb[0].mxu0
        %v6922 = vadd.f32 %v6729, %v6921
        %v6923 = vpop.f32.mrb[0].mxu0
        %v6924 = vadd.f32 %v6731, %v6923
        %v6925 = vpop.f32.mrb[0].mxu0
        %v6926 = vadd.f32 %v6733, %v6925
        %6927 = vmatprep.mubr.bf16.mxu0 %v1885
        %6928 = vmatmul.mubr.bf16.gmra.mrb[0].mxu0 %v1884
        %v6929 = vpop.f32.mrb[0].mxu0
        %v6930 = vadd.f32 %v6737, %v6929
        %v6931 = vpop.f32.mrb[0].mxu0
        %v6932 = vadd.f32 %v6739, %v6931
        %v6933 = vpop.f32.mrb[0].mxu0
        %v6934 = vadd.f32 %v6741, %v6933
        %v6935 = vpop.f32.mrb[0].mxu0
        %v6936 = vadd.f32 %v6743, %v6935
        %6937 = vmatprep.mubr.bf16.mxu0 %v1898
        %6938 = vmatmul.mubr.bf16.gmra.mrb[0].mxu0 %v1897
        %v6939 = vpop.f32.mrb[0].mxu0
        %v6940 = vadd.f32 %v6747, %v6939
        %v6941 = vpop.f32.mrb[0].mxu0
        %v6942 = vadd.f32 %v6749, %v6941
        %v6943 = vpop.f32.mrb[0].mxu0
        %v6944 = vadd.f32 %v6751, %v6943
        %v6945 = vpop.f32.mrb[0].mxu0
        %v6946 = vadd.f32 %v6753, %v6945
        %6947 = vmatprep.mubr.bf16.mxu0 %v1911
        %6948 = vmatmul.mubr.bf16.gmra.mrb[0].mxu0 %v1910
        %v6949 = vpop.f32.mrb[0].mxu0
        %v6950 = vadd.f32 %v6757, %v6949
        %v6951 = vpop.f32.mrb[0].mxu0
        %v6952 = vadd.f32 %v6759, %v6951
        %v6953 = vpop.f32.mrb[0].mxu0
        %v6954 = vadd.f32 %v6761, %v6953
        %v6955 = vpop.f32.mrb[0].mxu0
        %v6956 = vadd.f32 %v6763, %v6955
        %6957 = vmatprep.mubr.bf16.mxu0 %v1924
        %6958 = vmatmul.mubr.bf16.gmra.mrb[0].mxu0 %v1923
        %v6959 = vpop.f32.mrb[0].mxu0
        %v6960 = vadd.f32 %v6767, %v6959
        %v6961 = vpop.f32.mrb[0].mxu0
        %v6962 = vadd.f32 %v6769, %v6961
        %v6963 = vpop.f32.mrb[0].mxu0
        %v6964 = vadd.f32 %v6771, %v6963
        %v6965 = vpop.f32.mrb[0].mxu0
        %v6966 = vadd.f32 %v6773, %v6965
        %6967 = vmatprep.mubr.bf16.mxu0 %v1937
        %6968 = vmatmul.mubr.bf16.gmra.mrb[0].mxu0 %v1936
        %v6969 = vpop.f32.mrb[0].mxu0
        %v6970 = vadd.f32 %v6777, %v6969
        %v6971 = vpop.f32.mrb[0].mxu0
        %v6972 = vadd.f32 %v6779, %v6971
        %v6973 = vpop.f32.mrb[0].mxu0
        %v6974 = vadd.f32 %v6781, %v6973
        %v6975 = vpop.f32.mrb[0].mxu0
        %v6976 = vadd.f32 %v6783, %v6975
        %6977 = vdwg.mxu0
        %6978 = vmatprep.subr.bf16.mxu0 %v4138
        %6979 = vmatpush1.bf16.msra.mxu0 %v4137
        %6980 = vmatprep.subr.bf16.mxu0 %v4143
        %6981 = vmatpush1.bf16.msra.mxu0 %v4142
        %6982 = vmatprep.subr.bf16.mxu0 %v4148
        %6983 = vmatpush1.bf16.msra.mxu0 %v4147
        %6984 = vmatprep.subr.bf16.mxu0 %v4153
        %6985 = vmatpush1.bf16.msra.mxu0 %v4152
        %6986 = vmatprep.subr.bf16.mxu0 %v4158
        %6987 = vmatpush1.bf16.msra.mxu0 %v4157
        %6988 = vmatprep.subr.bf16.mxu0 %v4163
        %6989 = vmatpush1.bf16.msra.mxu0 %v4162
        %6990 = vmatprep.subr.bf16.mxu0 %v4168
        %6991 = vmatpush1.bf16.msra.mxu0 %v4167
        %6992 = vmatprep.subr.bf16.mxu0 %v4173
        %6993 = vmatpush1.bf16.msra.mxu0 %v4172
        %6994 = vmatprep.subr.bf16.mxu0 %v4178
        %6995 = vmatpush1.bf16.msra.mxu0 %v4177
        %6996 = vmatprep.subr.bf16.mxu0 %v4183
        %6997 = vmatpush1.bf16.msra.mxu0 %v4182
        %6998 = vmatprep.subr.bf16.mxu0 %v4188
        %6999 = vmatpush1.bf16.msra.mxu0 %v4187
        %7000 = vmatprep.subr.bf16.mxu0 %v4193
        %7001 = vmatpush1.bf16.msra.mxu0 %v4192
        %7002 = vmatprep.subr.bf16.mxu0 %v4198
        %7003 = vmatpush1.bf16.msra.mxu0 %v4197
        %7004 = vmatprep.subr.bf16.mxu0 %v4203
        %7005 = vmatpush1.bf16.msra.mxu0 %v4202
        %7006 = vmatprep.subr.bf16.mxu0 %v4208
        %7007 = vmatpush1.bf16.msra.mxu0 %v4207
        %7008 = vmatprep.subr.bf16.mxu0 %v4213
        %7009 = vmatpush1.bf16.msra.mxu0 %v4212
        %7010 = vmatprep.mubr.bf16.mxu0 %v1744
        %7011 = vmatmul.mubr.bf16.gmra.mrb[0].mxu0 %v1743
        %v7012 = vpop.f32.mrb[0].mxu0
        %v7013 = vadd.f32 %v6820, %v7012
        %v7014 = vpop.f32.mrb[0].mxu0
        %v7015 = vadd.f32 %v6822, %v7014
        %v7016 = vpop.f32.mrb[0].mxu0
        %v7017 = vadd.f32 %v6824, %v7016
        %v7018 = vpop.f32.mrb[0].mxu0
        %v7019 = vadd.f32 %v6826, %v7018
        %7020 = vmatprep.mubr.bf16.mxu0 %v1757
        %7021 = vmatmul.mubr.bf16.gmra.mrb[0].mxu0 %v1756
        %v7022 = vpop.f32.mrb[0].mxu0
        %v7023 = vadd.f32 %v6830, %v7022
        %v7024 = vpop.f32.mrb[0].mxu0
        %v7025 = vadd.f32 %v6832, %v7024
        %v7026 = vpop.f32.mrb[0].mxu0
        %v7027 = vadd.f32 %v6834, %v7026
        %v7028 = vpop.f32.mrb[0].mxu0
        %v7029 = vadd.f32 %v6836, %v7028
        %7030 = vmatprep.mubr.bf16.mxu0 %v1770
        %7031 = vmatmul.mubr.bf16.gmra.mrb[0].mxu0 %v1769
        %v7032 = vpop.f32.mrb[0].mxu0
        %v7033 = vadd.f32 %v6840, %v7032
        %v7034 = vpop.f32.mrb[0].mxu0
        %v7035 = vadd.f32 %v6842, %v7034
        %v7036 = vpop.f32.mrb[0].mxu0
        %v7037 = vadd.f32 %v6844, %v7036
        %v7038 = vpop.f32.mrb[0].mxu0
        %v7039 = vadd.f32 %v6846, %v7038
        %7040 = vmatprep.mubr.bf16.mxu0 %v1783
        %7041 = vmatmul.mubr.bf16.gmra.mrb[0].mxu0 %v1782
        %v7042 = vpop.f32.mrb[0].mxu0
        %v7043 = vadd.f32 %v6850, %v7042
        %v7044 = vpop.f32.mrb[0].mxu0
        %v7045 = vadd.f32 %v6852, %v7044
        %v7046 = vpop.f32.mrb[0].mxu0
        %v7047 = vadd.f32 %v6854, %v7046
        %v7048 = vpop.f32.mrb[0].mxu0
        %v7049 = vadd.f32 %v6856, %v7048
        %7050 = vmatprep.mubr.bf16.mxu0 %v1796
        %7051 = vmatmul.mubr.bf16.gmra.mrb[0].mxu0 %v1795
        %v7052 = vpop.f32.mrb[0].mxu0
        %v7053 = vadd.f32 %v6860, %v7052
        %v7054 = vpop.f32.mrb[0].mxu0
        %v7055 = vadd.f32 %v6862, %v7054
        %v7056 = vpop.f32.mrb[0].mxu0
        %v7057 = vadd.f32 %v6864, %v7056
        %v7058 = vpop.f32.mrb[0].mxu0
        %v7059 = vadd.f32 %v6866, %v7058
        %7060 = vmatprep.mubr.bf16.mxu0 %v1809
        %7061 = vmatmul.mubr.bf16.gmra.mrb[0].mxu0 %v1808
        %v7062 = vpop.f32.mrb[0].mxu0
        %v7063 = vadd.f32 %v6870, %v7062
        %v7064 = vpop.f32.mrb[0].mxu0
        %v7065 = vadd.f32 %v6872, %v7064
        %v7066 = vpop.f32.mrb[0].mxu0
        %v7067 = vadd.f32 %v6874, %v7066
        %v7068 = vpop.f32.mrb[0].mxu0
        %v7069 = vadd.f32 %v6876, %v7068
        %7070 = vmatprep.mubr.bf16.mxu0 %v1822
        %7071 = vmatmul.mubr.bf16.gmra.mrb[0].mxu0 %v1821
        %v7072 = vpop.f32.mrb[0].mxu0
        %v7073 = vadd.f32 %v6880, %v7072
        %v7074 = vpop.f32.mrb[0].mxu0
        %v7075 = vadd.f32 %v6882, %v7074
        %v7076 = vpop.f32.mrb[0].mxu0
        %v7077 = vadd.f32 %v6884, %v7076
        %v7078 = vpop.f32.mrb[0].mxu0
        %v7079 = vadd.f32 %v6886, %v7078
        %7080 = vmatprep.mubr.bf16.mxu0 %v1835
        %7081 = vmatmul.mubr.bf16.gmra.mrb[0].mxu0 %v1834
        %v7082 = vpop.f32.mrb[0].mxu0
        %v7083 = vadd.f32 %v6890, %v7082
        %v7084 = vpop.f32.mrb[0].mxu0
        %v7085 = vadd.f32 %v6892, %v7084
        %v7086 = vpop.f32.mrb[0].mxu0
        %v7087 = vadd.f32 %v6894, %v7086
        %v7088 = vpop.f32.mrb[0].mxu0
        %v7089 = vadd.f32 %v6896, %v7088
        %7090 = vmatprep.mubr.bf16.mxu0 %v1848
        %7091 = vmatmul.mubr.bf16.gmra.mrb[0].mxu0 %v1847
        %v7092 = vpop.f32.mrb[0].mxu0
        %v7093 = vadd.f32 %v6900, %v7092
        %v7094 = vpop.f32.mrb[0].mxu0
        %v7095 = vadd.f32 %v6902, %v7094
        %v7096 = vpop.f32.mrb[0].mxu0
        %v7097 = vadd.f32 %v6904, %v7096
        %v7098 = vpop.f32.mrb[0].mxu0
        %v7099 = vadd.f32 %v6906, %v7098
        %7100 = vmatprep.mubr.bf16.mxu0 %v1861
        %7101 = vmatmul.mubr.bf16.gmra.mrb[0].mxu0 %v1860
        %v7102 = vpop.f32.mrb[0].mxu0
        %v7103 = vadd.f32 %v6910, %v7102
        %v7104 = vpop.f32.mrb[0].mxu0
        %v7105 = vadd.f32 %v6912, %v7104
        %v7106 = vpop.f32.mrb[0].mxu0
        %v7107 = vadd.f32 %v6914, %v7106
        %v7108 = vpop.f32.mrb[0].mxu0
        %v7109 = vadd.f32 %v6916, %v7108
        %7110 = vmatprep.mubr.bf16.mxu0 %v1874
        %7111 = vmatmul.mubr.bf16.gmra.mrb[0].mxu0 %v1873
        %v7112 = vpop.f32.mrb[0].mxu0
        %v7113 = vadd.f32 %v6920, %v7112
        %v7114 = vpop.f32.mrb[0].mxu0
        %v7115 = vadd.f32 %v6922, %v7114
        %v7116 = vpop.f32.mrb[0].mxu0
        %v7117 = vadd.f32 %v6924, %v7116
        %v7118 = vpop.f32.mrb[0].mxu0
        %v7119 = vadd.f32 %v6926, %v7118
        %7120 = vmatprep.mubr.bf16.mxu0 %v1887
        %7121 = vmatmul.mubr.bf16.gmra.mrb[0].mxu0 %v1886
        %v7122 = vpop.f32.mrb[0].mxu0
        %v7123 = vadd.f32 %v6930, %v7122
        %v7124 = vpop.f32.mrb[0].mxu0
        %v7125 = vadd.f32 %v6932, %v7124
        %v7126 = vpop.f32.mrb[0].mxu0
        %v7127 = vadd.f32 %v6934, %v7126
        %v7128 = vpop.f32.mrb[0].mxu0
        %v7129 = vadd.f32 %v6936, %v7128
        %7130 = vmatprep.mubr.bf16.mxu0 %v1900
        %7131 = vmatmul.mubr.bf16.gmra.mrb[0].mxu0 %v1899
        %v7132 = vpop.f32.mrb[0].mxu0
        %v7133 = vadd.f32 %v6940, %v7132
        %v7134 = vpop.f32.mrb[0].mxu0
        %v7135 = vadd.f32 %v6942, %v7134
        %v7136 = vpop.f32.mrb[0].mxu0
        %v7137 = vadd.f32 %v6944, %v7136
        %v7138 = vpop.f32.mrb[0].mxu0
        %v7139 = vadd.f32 %v6946, %v7138
        %7140 = vmatprep.mubr.bf16.mxu0 %v1913
        %7141 = vmatmul.mubr.bf16.gmra.mrb[0].mxu0 %v1912
        %v7142 = vpop.f32.mrb[0].mxu0
        %v7143 = vadd.f32 %v6950, %v7142
        %v7144 = vpop.f32.mrb[0].mxu0
        %v7145 = vadd.f32 %v6952, %v7144
        %v7146 = vpop.f32.mrb[0].mxu0
        %v7147 = vadd.f32 %v6954, %v7146
        %v7148 = vpop.f32.mrb[0].mxu0
        %v7149 = vadd.f32 %v6956, %v7148
        %7150 = vmatprep.mubr.bf16.mxu0 %v1926
        %7151 = vmatmul.mubr.bf16.gmra.mrb[0].mxu0 %v1925
        %v7152 = vpop.f32.mrb[0].mxu0
        %v7153 = vadd.f32 %v6960, %v7152
        %v7154 = vpop.f32.mrb[0].mxu0
        %v7155 = vadd.f32 %v6962, %v7154
        %v7156 = vpop.f32.mrb[0].mxu0
        %v7157 = vadd.f32 %v6964, %v7156
        %v7158 = vpop.f32.mrb[0].mxu0
        %v7159 = vadd.f32 %v6966, %v7158
        %7160 = vmatprep.mubr.bf16.mxu0 %v1939
        %7161 = vmatmul.mubr.bf16.gmra.mrb[0].mxu0 %v1938
        %v7162 = vpop.f32.mrb[0].mxu0
        %v7163 = vadd.f32 %v6970, %v7162
        %v7164 = vpop.f32.mrb[0].mxu0
        %v7165 = vadd.f32 %v6972, %v7164
        %v7166 = vpop.f32.mrb[0].mxu0
        %v7167 = vadd.f32 %v6974, %v7166
        %v7168 = vpop.f32.mrb[0].mxu0
        %v7169 = vadd.f32 %v6976, %v7168
        %7170 = vdwg.mxu0
        %7171 = vmatprep.subr.bf16.mxu0 %v4218
        %7172 = vmatpush1.bf16.msra.mxu0 %v4217
        %7173 = vmatprep.subr.bf16.mxu0 %v4223
        %7174 = vmatpush1.bf16.msra.mxu0 %v4222
        %7175 = vmatprep.subr.bf16.mxu0 %v4228
        %7176 = vmatpush1.bf16.msra.mxu0 %v4227
        %7177 = vmatprep.subr.bf16.mxu0 %v4233
        %7178 = vmatpush1.bf16.msra.mxu0 %v4232
        %7179 = vmatprep.subr.bf16.mxu0 %v4238
        %7180 = vmatpush1.bf16.msra.mxu0 %v4237
        %7181 = vmatprep.subr.bf16.mxu0 %v4243
        %7182 = vmatpush1.bf16.msra.mxu0 %v4242
        %7183 = vmatprep.subr.bf16.mxu0 %v4248
        %7184 = vmatpush1.bf16.msra.mxu0 %v4247
        %7185 = vmatprep.subr.bf16.mxu0 %v4253
        %7186 = vmatpush1.bf16.msra.mxu0 %v4252
        %7187 = vmatprep.subr.bf16.mxu0 %v4258
        %7188 = vmatpush1.bf16.msra.mxu0 %v4257
        %7189 = vmatprep.subr.bf16.mxu0 %v4263
        %7190 = vmatpush1.bf16.msra.mxu0 %v4262
        %7191 = vmatprep.subr.bf16.mxu0 %v4268
        %7192 = vmatpush1.bf16.msra.mxu0 %v4267
        %7193 = vmatprep.subr.bf16.mxu0 %v4273
        %7194 = vmatpush1.bf16.msra.mxu0 %v4272
        %7195 = vmatprep.subr.bf16.mxu0 %v4278
        %7196 = vmatpush1.bf16.msra.mxu0 %v4277
        %7197 = vmatprep.subr.bf16.mxu0 %v4283
        %7198 = vmatpush1.bf16.msra.mxu0 %v4282
        %7199 = vmatprep.subr.bf16.mxu0 %v4288
        %7200 = vmatpush1.bf16.msra.mxu0 %v4287
        %7201 = vmatprep.subr.bf16.mxu0 %v4293
        %7202 = vmatpush1.bf16.msra.mxu0 %v4292
        %7203 = vmatprep.mubr.bf16.mxu0 %v1746
        %7204 = vmatmul.mubr.bf16.gmra.mrb[0].mxu0 %v1745
        %v7205 = vpop.f32.mrb[0].mxu0
        %v7206 = vadd.f32 %v7013, %v7205
        %v7207 = vpop.f32.mrb[0].mxu0
        %v7208 = vadd.f32 %v7015, %v7207
        %v7209 = vpop.f32.mrb[0].mxu0
        %v7210 = vadd.f32 %v7017, %v7209
        %v7211 = vpop.f32.mrb[0].mxu0
        %v7212 = vadd.f32 %v7019, %v7211
        %7213 = vmatprep.mubr.bf16.mxu0 %v1759
        %7214 = vmatmul.mubr.bf16.gmra.mrb[0].mxu0 %v1758
        %v7215 = vpop.f32.mrb[0].mxu0
        %v7216 = vadd.f32 %v7023, %v7215
        %v7217 = vpop.f32.mrb[0].mxu0
        %v7218 = vadd.f32 %v7025, %v7217
        %v7219 = vpop.f32.mrb[0].mxu0
        %v7220 = vadd.f32 %v7027, %v7219
        %v7221 = vpop.f32.mrb[0].mxu0
        %v7222 = vadd.f32 %v7029, %v7221
        %7223 = vmatprep.mubr.bf16.mxu0 %v1772
        %7224 = vmatmul.mubr.bf16.gmra.mrb[0].mxu0 %v1771
        %v7225 = vpop.f32.mrb[0].mxu0
        %v7226 = vadd.f32 %v7033, %v7225
        %v7227 = vpop.f32.mrb[0].mxu0
        %v7228 = vadd.f32 %v7035, %v7227
        %v7229 = vpop.f32.mrb[0].mxu0
        %v7230 = vadd.f32 %v7037, %v7229
        %v7231 = vpop.f32.mrb[0].mxu0
        %v7232 = vadd.f32 %v7039, %v7231
        %7233 = vmatprep.mubr.bf16.mxu0 %v1785
        %7234 = vmatmul.mubr.bf16.gmra.mrb[0].mxu0 %v1784
        %v7235 = vpop.f32.mrb[0].mxu0
        %v7236 = vadd.f32 %v7043, %v7235
        %v7237 = vpop.f32.mrb[0].mxu0
        %v7238 = vadd.f32 %v7045, %v7237
        %v7239 = vpop.f32.mrb[0].mxu0
        %v7240 = vadd.f32 %v7047, %v7239
        %v7241 = vpop.f32.mrb[0].mxu0
        %v7242 = vadd.f32 %v7049, %v7241
        %7243 = vmatprep.mubr.bf16.mxu0 %v1798
        %7244 = vmatmul.mubr.bf16.gmra.mrb[0].mxu0 %v1797
        %v7245 = vpop.f32.mrb[0].mxu0
        %v7246 = vadd.f32 %v7053, %v7245
        %v7247 = vpop.f32.mrb[0].mxu0
        %v7248 = vadd.f32 %v7055, %v7247
        %v7249 = vpop.f32.mrb[0].mxu0
        %v7250 = vadd.f32 %v7057, %v7249
        %v7251 = vpop.f32.mrb[0].mxu0
        %v7252 = vadd.f32 %v7059, %v7251
        %7253 = vmatprep.mubr.bf16.mxu0 %v1811
        %7254 = vmatmul.mubr.bf16.gmra.mrb[0].mxu0 %v1810
        %v7255 = vpop.f32.mrb[0].mxu0
        %v7256 = vadd.f32 %v7063, %v7255
        %v7257 = vpop.f32.mrb[0].mxu0
        %v7258 = vadd.f32 %v7065, %v7257
        %v7259 = vpop.f32.mrb[0].mxu0
        %v7260 = vadd.f32 %v7067, %v7259
        %v7261 = vpop.f32.mrb[0].mxu0
        %v7262 = vadd.f32 %v7069, %v7261
        %7263 = vmatprep.mubr.bf16.mxu0 %v1824
        %7264 = vmatmul.mubr.bf16.gmra.mrb[0].mxu0 %v1823
        %v7265 = vpop.f32.mrb[0].mxu0
        %v7266 = vadd.f32 %v7073, %v7265
        %v7267 = vpop.f32.mrb[0].mxu0
        %v7268 = vadd.f32 %v7075, %v7267
        %v7269 = vpop.f32.mrb[0].mxu0
        %v7270 = vadd.f32 %v7077, %v7269
        %v7271 = vpop.f32.mrb[0].mxu0
        %v7272 = vadd.f32 %v7079, %v7271
        %7273 = vmatprep.mubr.bf16.mxu0 %v1837
        %7274 = vmatmul.mubr.bf16.gmra.mrb[0].mxu0 %v1836
        %v7275 = vpop.f32.mrb[0].mxu0
        %v7276 = vadd.f32 %v7083, %v7275
        %v7277 = vpop.f32.mrb[0].mxu0
        %v7278 = vadd.f32 %v7085, %v7277
        %v7279 = vpop.f32.mrb[0].mxu0
        %v7280 = vadd.f32 %v7087, %v7279
        %v7281 = vpop.f32.mrb[0].mxu0
        %v7282 = vadd.f32 %v7089, %v7281
        %7283 = vmatprep.mubr.bf16.mxu0 %v1850
        %7284 = vmatmul.mubr.bf16.gmra.mrb[0].mxu0 %v1849
        %v7285 = vpop.f32.mrb[0].mxu0
        %v7286 = vadd.f32 %v7093, %v7285
        %v7287 = vpop.f32.mrb[0].mxu0
        %v7288 = vadd.f32 %v7095, %v7287
        %v7289 = vpop.f32.mrb[0].mxu0
        %v7290 = vadd.f32 %v7097, %v7289
        %v7291 = vpop.f32.mrb[0].mxu0
        %v7292 = vadd.f32 %v7099, %v7291
        %7293 = vmatprep.mubr.bf16.mxu0 %v1863
        %7294 = vmatmul.mubr.bf16.gmra.mrb[0].mxu0 %v1862
        %v7295 = vpop.f32.mrb[0].mxu0
        %v7296 = vadd.f32 %v7103, %v7295
        %v7297 = vpop.f32.mrb[0].mxu0
        %v7298 = vadd.f32 %v7105, %v7297
        %v7299 = vpop.f32.mrb[0].mxu0
        %v7300 = vadd.f32 %v7107, %v7299
        %v7301 = vpop.f32.mrb[0].mxu0
        %v7302 = vadd.f32 %v7109, %v7301
        %7303 = vmatprep.mubr.bf16.mxu0 %v1876
        %7304 = vmatmul.mubr.bf16.gmra.mrb[0].mxu0 %v1875
        %v7305 = vpop.f32.mrb[0].mxu0
        %v7306 = vadd.f32 %v7113, %v7305
        %v7307 = vpop.f32.mrb[0].mxu0
        %v7308 = vadd.f32 %v7115, %v7307
        %v7309 = vpop.f32.mrb[0].mxu0
        %v7310 = vadd.f32 %v7117, %v7309
        %v7311 = vpop.f32.mrb[0].mxu0
        %v7312 = vadd.f32 %v7119, %v7311
        %7313 = vmatprep.mubr.bf16.mxu0 %v1889
        %7314 = vmatmul.mubr.bf16.gmra.mrb[0].mxu0 %v1888
        %v7315 = vpop.f32.mrb[0].mxu0
        %v7316 = vadd.f32 %v7123, %v7315
        %v7317 = vpop.f32.mrb[0].mxu0
        %v7318 = vadd.f32 %v7125, %v7317
        %v7319 = vpop.f32.mrb[0].mxu0
        %v7320 = vadd.f32 %v7127, %v7319
        %v7321 = vpop.f32.mrb[0].mxu0
        %v7322 = vadd.f32 %v7129, %v7321
        %7323 = vmatprep.mubr.bf16.mxu0 %v1902
        %7324 = vmatmul.mubr.bf16.gmra.mrb[0].mxu0 %v1901
        %v7325 = vpop.f32.mrb[0].mxu0
        %v7326 = vadd.f32 %v7133, %v7325
        %v7327 = vpop.f32.mrb[0].mxu0
        %v7328 = vadd.f32 %v7135, %v7327
        %v7329 = vpop.f32.mrb[0].mxu0
        %v7330 = vadd.f32 %v7137, %v7329
        %v7331 = vpop.f32.mrb[0].mxu0
        %v7332 = vadd.f32 %v7139, %v7331
        %7333 = vmatprep.mubr.bf16.mxu0 %v1915
        %7334 = vmatmul.mubr.bf16.gmra.mrb[0].mxu0 %v1914
        %v7335 = vpop.f32.mrb[0].mxu0
        %v7336 = vadd.f32 %v7143, %v7335
        %v7337 = vpop.f32.mrb[0].mxu0
        %v7338 = vadd.f32 %v7145, %v7337
        %v7339 = vpop.f32.mrb[0].mxu0
        %v7340 = vadd.f32 %v7147, %v7339
        %v7341 = vpop.f32.mrb[0].mxu0
        %v7342 = vadd.f32 %v7149, %v7341
        %7343 = vmatprep.mubr.bf16.mxu0 %v1928
        %7344 = vmatmul.mubr.bf16.gmra.mrb[0].mxu0 %v1927
        %v7345 = vpop.f32.mrb[0].mxu0
        %v7346 = vadd.f32 %v7153, %v7345
        %v7347 = vpop.f32.mrb[0].mxu0
        %v7348 = vadd.f32 %v7155, %v7347
        %v7349 = vpop.f32.mrb[0].mxu0
        %v7350 = vadd.f32 %v7157, %v7349
        %v7351 = vpop.f32.mrb[0].mxu0
        %v7352 = vadd.f32 %v7159, %v7351
        %7353 = vmatprep.mubr.bf16.mxu0 %v1941
        %7354 = vmatmul.mubr.bf16.gmra.mrb[0].mxu0 %v1940
        %v7355 = vpop.f32.mrb[0].mxu0
        %v7356 = vadd.f32 %v7163, %v7355
        %v7357 = vpop.f32.mrb[0].mxu0
        %v7358 = vadd.f32 %v7165, %v7357
        %v7359 = vpop.f32.mrb[0].mxu0
        %v7360 = vadd.f32 %v7167, %v7359
        %v7361 = vpop.f32.mrb[0].mxu0
        %v7362 = vadd.f32 %v7169, %v7361
        %7363 = vdwg.mxu0
        %7364 = vmatprep.subr.bf16.mxu0 %v4298
        %7365 = vmatpush1.bf16.msra.mxu0 %v4297
        %7366 = vmatprep.subr.bf16.mxu0 %v4303
        %7367 = vmatpush1.bf16.msra.mxu0 %v4302
        %7368 = vmatprep.subr.bf16.mxu0 %v4308
        %7369 = vmatpush1.bf16.msra.mxu0 %v4307
        %7370 = vmatprep.subr.bf16.mxu0 %v4313
        %7371 = vmatpush1.bf16.msra.mxu0 %v4312
        %7372 = vmatprep.subr.bf16.mxu0 %v4318
        %7373 = vmatpush1.bf16.msra.mxu0 %v4317
        %7374 = vmatprep.subr.bf16.mxu0 %v4323
        %7375 = vmatpush1.bf16.msra.mxu0 %v4322
        %7376 = vmatprep.subr.bf16.mxu0 %v4328
        %7377 = vmatpush1.bf16.msra.mxu0 %v4327
        %7378 = vmatprep.subr.bf16.mxu0 %v4333
        %7379 = vmatpush1.bf16.msra.mxu0 %v4332
        %7380 = vmatprep.subr.bf16.mxu0 0
        %7381 = vmatpush1.bf16.msra.mxu0 0
        %7382 = vmatprep.subr.bf16.mxu0 0
        %7383 = vmatpush1.bf16.msra.mxu0 0
        %7384 = vmatprep.subr.bf16.mxu0 0
        %7385 = vmatpush1.bf16.msra.mxu0 0
        %7386 = vmatprep.subr.bf16.mxu0 0
        %7387 = vmatpush1.bf16.msra.mxu0 0
        %7388 = vmatprep.subr.bf16.mxu0 0
        %7389 = vmatpush1.bf16.msra.mxu0 0
        %7390 = vmatprep.subr.bf16.mxu0 0
        %7391 = vmatpush1.bf16.msra.mxu0 0
        %7392 = vmatprep.subr.bf16.mxu0 0
        %7393 = vmatpush1.bf16.msra.mxu0 0
        %7394 = vmatprep.subr.bf16.mxu0 0
        %7395 = vmatpush1.bf16.msra.mxu0 0
        %7396 = vmatprep.mubr.bf16.mxu0 0
        %7397 = vmatmul.mubr.bf16.gmra.mrb[0].mxu0 %v1747
        %v7398 = vpop.f32.mrb[0].mxu0
        %v7399 = vadd.f32 %v7206, %v7398
        %v7400 = vpop.f32.mrb[0].mxu0
        %v7401 = vadd.f32 %v7208, %v7400
        %v7402 = vpop.f32.mrb[0].mxu0
        %v7403 = vadd.f32 %v7210, %v7402
        %v7404 = vpop.f32.mrb[0].mxu0
        %v7405 = vadd.f32 %v7212, %v7404
        %7406 = vmatprep.mubr.bf16.mxu0 0
        %7407 = vmatmul.mubr.bf16.gmra.mrb[0].mxu0 %v1760
        %v7408 = vpop.f32.mrb[0].mxu0
        %v7409 = vadd.f32 %v7216, %v7408
        %v7410 = vpop.f32.mrb[0].mxu0
        %v7411 = vadd.f32 %v7218, %v7410
        %v7412 = vpop.f32.mrb[0].mxu0
        %v7413 = vadd.f32 %v7220, %v7412
        %v7414 = vpop.f32.mrb[0].mxu0
        %v7415 = vadd.f32 %v7222, %v7414
        %7416 = vmatprep.mubr.bf16.mxu0 0
        %7417 = vmatmul.mubr.bf16.gmra.mrb[0].mxu0 %v1773
        %v7418 = vpop.f32.mrb[0].mxu0
        %v7419 = vadd.f32 %v7226, %v7418
        %v7420 = vpop.f32.mrb[0].mxu0
        %v7421 = vadd.f32 %v7228, %v7420
        %v7422 = vpop.f32.mrb[0].mxu0
        %v7423 = vadd.f32 %v7230, %v7422
        %v7424 = vpop.f32.mrb[0].mxu0
        %v7425 = vadd.f32 %v7232, %v7424
        %7426 = vmatprep.mubr.bf16.mxu0 0
        %7427 = vmatmul.mubr.bf16.gmra.mrb[0].mxu0 %v1786
        %v7428 = vpop.f32.mrb[0].mxu0
        %v7429 = vadd.f32 %v7236, %v7428
        %v7430 = vpop.f32.mrb[0].mxu0
        %v7431 = vadd.f32 %v7238, %v7430
        %v7432 = vpop.f32.mrb[0].mxu0
        %v7433 = vadd.f32 %v7240, %v7432
        %v7434 = vpop.f32.mrb[0].mxu0
        %v7435 = vadd.f32 %v7242, %v7434
        %7436 = vmatprep.mubr.bf16.mxu0 0
        %7437 = vmatmul.mubr.bf16.gmra.mrb[0].mxu0 %v1799
        %v7438 = vpop.f32.mrb[0].mxu0
        %v7439 = vadd.f32 %v7246, %v7438
        %v7440 = vpop.f32.mrb[0].mxu0
        %v7441 = vadd.f32 %v7248, %v7440
        %v7442 = vpop.f32.mrb[0].mxu0
        %v7443 = vadd.f32 %v7250, %v7442
        %v7444 = vpop.f32.mrb[0].mxu0
        %v7445 = vadd.f32 %v7252, %v7444
        %7446 = vmatprep.mubr.bf16.mxu0 0
        %7447 = vmatmul.mubr.bf16.gmra.mrb[0].mxu0 %v1812
        %v7448 = vpop.f32.mrb[0].mxu0
        %v7449 = vadd.f32 %v7256, %v7448
        %v7450 = vpop.f32.mrb[0].mxu0
        %v7451 = vadd.f32 %v7258, %v7450
        %v7452 = vpop.f32.mrb[0].mxu0
        %v7453 = vadd.f32 %v7260, %v7452
        %v7454 = vpop.f32.mrb[0].mxu0
        %v7455 = vadd.f32 %v7262, %v7454
        %7456 = vmatprep.mubr.bf16.mxu0 0
        %7457 = vmatmul.mubr.bf16.gmra.mrb[0].mxu0 %v1825
        %v7458 = vpop.f32.mrb[0].mxu0
        %v7459 = vadd.f32 %v7266, %v7458
        %v7460 = vpop.f32.mrb[0].mxu0
        %v7461 = vadd.f32 %v7268, %v7460
        %v7462 = vpop.f32.mrb[0].mxu0
        %v7463 = vadd.f32 %v7270, %v7462
        %v7464 = vpop.f32.mrb[0].mxu0
        %v7465 = vadd.f32 %v7272, %v7464
        %7466 = vmatprep.mubr.bf16.mxu0 0
        %7467 = vmatmul.mubr.bf16.gmra.mrb[0].mxu0 %v1838
        %v7468 = vpop.f32.mrb[0].mxu0
        %v7469 = vadd.f32 %v7276, %v7468
        %v7470 = vpop.f32.mrb[0].mxu0
        %v7471 = vadd.f32 %v7278, %v7470
        %v7472 = vpop.f32.mrb[0].mxu0
        %v7473 = vadd.f32 %v7280, %v7472
        %v7474 = vpop.f32.mrb[0].mxu0
        %v7475 = vadd.f32 %v7282, %v7474
        %7476 = vmatprep.mubr.bf16.mxu0 0
        %7477 = vmatmul.mubr.bf16.gmra.mrb[0].mxu0 %v1851
        %v7478 = vpop.f32.mrb[0].mxu0
        %v7479 = vadd.f32 %v7286, %v7478
        %v7480 = vpop.f32.mrb[0].mxu0
        %v7481 = vadd.f32 %v7288, %v7480
        %v7482 = vpop.f32.mrb[0].mxu0
        %v7483 = vadd.f32 %v7290, %v7482
        %v7484 = vpop.f32.mrb[0].mxu0
        %v7485 = vadd.f32 %v7292, %v7484
        %7486 = vmatprep.mubr.bf16.mxu0 0
        %7487 = vmatmul.mubr.bf16.gmra.mrb[0].mxu0 %v1864
        %v7488 = vpop.f32.mrb[0].mxu0
        %v7489 = vadd.f32 %v7296, %v7488
        %v7490 = vpop.f32.mrb[0].mxu0
        %v7491 = vadd.f32 %v7298, %v7490
        %v7492 = vpop.f32.mrb[0].mxu0
        %v7493 = vadd.f32 %v7300, %v7492
        %v7494 = vpop.f32.mrb[0].mxu0
        %v7495 = vadd.f32 %v7302, %v7494
        %7496 = vmatprep.mubr.bf16.mxu0 0
        %7497 = vmatmul.mubr.bf16.gmra.mrb[0].mxu0 %v1877
        %v7498 = vpop.f32.mrb[0].mxu0
        %v7499 = vadd.f32 %v7306, %v7498
        %v7500 = vpop.f32.mrb[0].mxu0
        %v7501 = vadd.f32 %v7308, %v7500
        %v7502 = vpop.f32.mrb[0].mxu0
        %v7503 = vadd.f32 %v7310, %v7502
        %v7504 = vpop.f32.mrb[0].mxu0
        %v7505 = vadd.f32 %v7312, %v7504
        %7506 = vmatprep.mubr.bf16.mxu0 0
        %7507 = vmatmul.mubr.bf16.gmra.mrb[0].mxu0 %v1890
        %v7508 = vpop.f32.mrb[0].mxu0
        %v7509 = vadd.f32 %v7316, %v7508
        %v7510 = vpop.f32.mrb[0].mxu0
        %v7511 = vadd.f32 %v7318, %v7510
        %v7512 = vpop.f32.mrb[0].mxu0
        %v7513 = vadd.f32 %v7320, %v7512
        %v7514 = vpop.f32.mrb[0].mxu0
        %v7515 = vadd.f32 %v7322, %v7514
        %7516 = vmatprep.mubr.bf16.mxu0 0
        %7517 = vmatmul.mubr.bf16.gmra.mrb[0].mxu0 %v1903
        %v7518 = vpop.f32.mrb[0].mxu0
        %v7519 = vadd.f32 %v7326, %v7518
        %v7520 = vpop.f32.mrb[0].mxu0
        %v7521 = vadd.f32 %v7328, %v7520
        %v7522 = vpop.f32.mrb[0].mxu0
        %v7523 = vadd.f32 %v7330, %v7522
        %v7524 = vpop.f32.mrb[0].mxu0
        %v7525 = vadd.f32 %v7332, %v7524
        %7526 = vmatprep.mubr.bf16.mxu0 0
        %7527 = vmatmul.mubr.bf16.gmra.mrb[0].mxu0 %v1916
        %v7528 = vpop.f32.mrb[0].mxu0
        %v7529 = vadd.f32 %v7336, %v7528
        %v7530 = vpop.f32.mrb[0].mxu0
        %v7531 = vadd.f32 %v7338, %v7530
        %v7532 = vpop.f32.mrb[0].mxu0
        %v7533 = vadd.f32 %v7340, %v7532
        %v7534 = vpop.f32.mrb[0].mxu0
        %v7535 = vadd.f32 %v7342, %v7534
        %7536 = vmatprep.mubr.bf16.mxu0 0
        %7537 = vmatmul.mubr.bf16.gmra.mrb[0].mxu0 %v1929
        %v7538 = vpop.f32.mrb[0].mxu0
        %v7539 = vadd.f32 %v7346, %v7538
        %v7540 = vpop.f32.mrb[0].mxu0
        %v7541 = vadd.f32 %v7348, %v7540
        %v7542 = vpop.f32.mrb[0].mxu0
        %v7543 = vadd.f32 %v7350, %v7542
        %v7544 = vpop.f32.mrb[0].mxu0
        %v7545 = vadd.f32 %v7352, %v7544
        %7546 = vmatprep.mubr.bf16.mxu0 0
        %7547 = vmatmul.mubr.bf16.gmra.mrb[0].mxu0 %v1942
        %v7548 = vpop.f32.mrb[0].mxu0
        %v7549 = vadd.f32 %v7356, %v7548
        %v7550 = vpop.f32.mrb[0].mxu0
        %v7551 = vadd.f32 %v7358, %v7550
        %v7552 = vpop.f32.mrb[0].mxu0
        %v7553 = vadd.f32 %v7360, %v7552
        %v7554 = vpop.f32.mrb[0].mxu0
        %v7555 = vadd.f32 %v7362, %v7554
        %7556 = vdwg.mxu0
        %7557 = vmatprep.subr.bf16.mxu0 0
        %7558 = vmatpush1.bf16.msra.mxu0 %v3819
        %7559 = vmatprep.subr.bf16.mxu0 0
        %7560 = vmatpush1.bf16.msra.mxu0 %v3824
        %7561 = vmatprep.subr.bf16.mxu0 0
        %7562 = vmatpush1.bf16.msra.mxu0 %v3829
        %7563 = vmatprep.subr.bf16.mxu0 0
        %7564 = vmatpush1.bf16.msra.mxu0 %v3834
        %7565 = vmatprep.subr.bf16.mxu0 0
        %7566 = vmatpush1.bf16.msra.mxu0 %v3839
        %7567 = vmatprep.subr.bf16.mxu0 0
        %7568 = vmatpush1.bf16.msra.mxu0 %v3844
        %7569 = vmatprep.subr.bf16.mxu0 0
        %7570 = vmatpush1.bf16.msra.mxu0 %v3849
        %7571 = vmatprep.subr.bf16.mxu0 0
        %7572 = vmatpush1.bf16.msra.mxu0 %v3854
        %7573 = vmatprep.subr.bf16.mxu0 0
        %7574 = vmatpush1.bf16.msra.mxu0 %v3859
        %7575 = vmatprep.subr.bf16.mxu0 0
        %7576 = vmatpush1.bf16.msra.mxu0 %v3864
        %7577 = vmatprep.subr.bf16.mxu0 0
        %7578 = vmatpush1.bf16.msra.mxu0 %v3869
        %7579 = vmatprep.subr.bf16.mxu0 0
        %7580 = vmatpush1.bf16.msra.mxu0 %v3874
        %7581 = vmatprep.subr.bf16.mxu0 0
        %7582 = vmatpush1.bf16.msra.mxu0 %v3879
        %7583 = vmatprep.subr.bf16.mxu0 0
        %7584 = vmatpush1.bf16.msra.mxu0 %v3884
        %7585 = vmatprep.subr.bf16.mxu0 0
        %7586 = vmatpush1.bf16.msra.mxu0 %v3889
        %7587 = vmatprep.subr.bf16.mxu0 0
        %7588 = vmatpush1.bf16.msra.mxu0 %v3894
        %7589 = vmatprep.mubr.bf16.mxu0 %v1736
        %7590 = vmatmul.mubr.bf16.gmra.mrb[0].mxu0 %v1735
        %v7591 = vpop.f32.mrb[0].mxu0
        %v7592 = vadd.f32 %v1089, %v7591
        %v7593 = vpop.f32.mrb[0].mxu0
        %v7594 = vpop.f32.mrb[0].mxu0
        %v7595 = vadd.f32 %v1089, %v7594
        %v7596 = vpop.f32.mrb[0].mxu0
        %7597 = vmatprep.mubr.bf16.mxu0 %v1749
        %7598 = vmatmul.mubr.bf16.gmra.mrb[0].mxu0 %v1748
        %v7599 = vpop.f32.mrb[0].mxu0
        %v7600 = vadd.f32 %v1089, %v7599
        %v7601 = vpop.f32.mrb[0].mxu0
        %v7602 = vpop.f32.mrb[0].mxu0
        %v7603 = vadd.f32 %v1089, %v7602
        %v7604 = vpop.f32.mrb[0].mxu0
        %7605 = vmatprep.mubr.bf16.mxu0 %v1762
        %7606 = vmatmul.mubr.bf16.gmra.mrb[0].mxu0 %v1761
        %v7607 = vpop.f32.mrb[0].mxu0
        %v7608 = vadd.f32 %v1089, %v7607
        %v7609 = vpop.f32.mrb[0].mxu0
        %v7610 = vpop.f32.mrb[0].mxu0
        %v7611 = vadd.f32 %v1089, %v7610
        %v7612 = vpop.f32.mrb[0].mxu0
        %7613 = vmatprep.mubr.bf16.mxu0 %v1775
        %7614 = vmatmul.mubr.bf16.gmra.mrb[0].mxu0 %v1774
        %v7615 = vpop.f32.mrb[0].mxu0
        %v7616 = vadd.f32 %v1089, %v7615
        %v7617 = vpop.f32.mrb[0].mxu0
        %v7618 = vpop.f32.mrb[0].mxu0
        %v7619 = vadd.f32 %v1089, %v7618
        %v7620 = vpop.f32.mrb[0].mxu0
        %7621 = vmatprep.mubr.bf16.mxu0 %v1788
        %7622 = vmatmul.mubr.bf16.gmra.mrb[0].mxu0 %v1787
        %v7623 = vpop.f32.mrb[0].mxu0
        %v7624 = vadd.f32 %v1089, %v7623
        %v7625 = vpop.f32.mrb[0].mxu0
        %v7626 = vpop.f32.mrb[0].mxu0
        %v7627 = vadd.f32 %v1089, %v7626
        %v7628 = vpop.f32.mrb[0].mxu0
        %7629 = vmatprep.mubr.bf16.mxu0 %v1801
        %7630 = vmatmul.mubr.bf16.gmra.mrb[0].mxu0 %v1800
        %v7631 = vpop.f32.mrb[0].mxu0
        %v7632 = vadd.f32 %v1089, %v7631
        %v7633 = vpop.f32.mrb[0].mxu0
        %v7634 = vpop.f32.mrb[0].mxu0
        %v7635 = vadd.f32 %v1089, %v7634
        %v7636 = vpop.f32.mrb[0].mxu0
        %7637 = vmatprep.mubr.bf16.mxu0 %v1814
        %7638 = vmatmul.mubr.bf16.gmra.mrb[0].mxu0 %v1813
        %v7639 = vpop.f32.mrb[0].mxu0
        %v7640 = vadd.f32 %v1089, %v7639
        %v7641 = vpop.f32.mrb[0].mxu0
        %v7642 = vpop.f32.mrb[0].mxu0
        %v7643 = vadd.f32 %v1089, %v7642
        %v7644 = vpop.f32.mrb[0].mxu0
        %7645 = vmatprep.mubr.bf16.mxu0 %v1827
        %7646 = vmatmul.mubr.bf16.gmra.mrb[0].mxu0 %v1826
        %v7647 = vpop.f32.mrb[0].mxu0
        %v7648 = vadd.f32 %v1089, %v7647
        %v7649 = vpop.f32.mrb[0].mxu0
        %v7650 = vpop.f32.mrb[0].mxu0
        %v7651 = vadd.f32 %v1089, %v7650
        %v7652 = vpop.f32.mrb[0].mxu0
        %7653 = vmatprep.mubr.bf16.mxu0 %v1840
        %7654 = vmatmul.mubr.bf16.gmra.mrb[0].mxu0 %v1839
        %v7655 = vpop.f32.mrb[0].mxu0
        %v7656 = vadd.f32 %v1089, %v7655
        %v7657 = vpop.f32.mrb[0].mxu0
        %v7658 = vpop.f32.mrb[0].mxu0
        %v7659 = vadd.f32 %v1089, %v7658
        %v7660 = vpop.f32.mrb[0].mxu0
        %7661 = vmatprep.mubr.bf16.mxu0 %v1853
        %7662 = vmatmul.mubr.bf16.gmra.mrb[0].mxu0 %v1852
        %v7663 = vpop.f32.mrb[0].mxu0
        %v7664 = vadd.f32 %v1089, %v7663
        %v7665 = vpop.f32.mrb[0].mxu0
        %v7666 = vpop.f32.mrb[0].mxu0
        %v7667 = vadd.f32 %v1089, %v7666
        %v7668 = vpop.f32.mrb[0].mxu0
        %7669 = vmatprep.mubr.bf16.mxu0 %v1866
        %7670 = vmatmul.mubr.bf16.gmra.mrb[0].mxu0 %v1865
        %v7671 = vpop.f32.mrb[0].mxu0
        %v7672 = vadd.f32 %v1089, %v7671
        %v7673 = vpop.f32.mrb[0].mxu0
        %v7674 = vpop.f32.mrb[0].mxu0
        %v7675 = vadd.f32 %v1089, %v7674
        %v7676 = vpop.f32.mrb[0].mxu0
        %7677 = vmatprep.mubr.bf16.mxu0 %v1879
        %7678 = vmatmul.mubr.bf16.gmra.mrb[0].mxu0 %v1878
        %v7679 = vpop.f32.mrb[0].mxu0
        %v7680 = vadd.f32 %v1089, %v7679
        %v7681 = vpop.f32.mrb[0].mxu0
        %v7682 = vpop.f32.mrb[0].mxu0
        %v7683 = vadd.f32 %v1089, %v7682
        %v7684 = vpop.f32.mrb[0].mxu0
        %7685 = vmatprep.mubr.bf16.mxu0 %v1892
        %7686 = vmatmul.mubr.bf16.gmra.mrb[0].mxu0 %v1891
        %v7687 = vpop.f32.mrb[0].mxu0
        %v7688 = vadd.f32 %v1089, %v7687
        %v7689 = vpop.f32.mrb[0].mxu0
        %v7690 = vpop.f32.mrb[0].mxu0
        %v7691 = vadd.f32 %v1089, %v7690
        %v7692 = vpop.f32.mrb[0].mxu0
        %7693 = vmatprep.mubr.bf16.mxu0 %v1905
        %7694 = vmatmul.mubr.bf16.gmra.mrb[0].mxu0 %v1904
        %v7695 = vpop.f32.mrb[0].mxu0
        %v7696 = vadd.f32 %v1089, %v7695
        %v7697 = vpop.f32.mrb[0].mxu0
        %v7698 = vpop.f32.mrb[0].mxu0
        %v7699 = vadd.f32 %v1089, %v7698
        %v7700 = vpop.f32.mrb[0].mxu0
        %7701 = vmatprep.mubr.bf16.mxu0 %v1918
        %7702 = vmatmul.mubr.bf16.gmra.mrb[0].mxu0 %v1917
        %v7703 = vpop.f32.mrb[0].mxu0
        %v7704 = vadd.f32 %v1089, %v7703
        %v7705 = vpop.f32.mrb[0].mxu0
        %v7706 = vpop.f32.mrb[0].mxu0
        %v7707 = vadd.f32 %v1089, %v7706
        %v7708 = vpop.f32.mrb[0].mxu0
        %7709 = vmatprep.mubr.bf16.mxu0 %v1931
        %7710 = vmatmul.mubr.bf16.gmra.mrb[0].mxu0 %v1930
        %v7711 = vpop.f32.mrb[0].mxu0
        %v7712 = vadd.f32 %v1089, %v7711
        %v7713 = vpop.f32.mrb[0].mxu0
        %v7714 = vpop.f32.mrb[0].mxu0
        %v7715 = vadd.f32 %v1089, %v7714
        %v7716 = vpop.f32.mrb[0].mxu0
        %7717 = vdwg.mxu0
        %7718 = vmatprep.subr.bf16.mxu0 0
        %7719 = vmatpush1.bf16.msra.mxu0 %v3899
        %7720 = vmatprep.subr.bf16.mxu0 0
        %7721 = vmatpush1.bf16.msra.mxu0 %v3904
        %7722 = vmatprep.subr.bf16.mxu0 0
        %7723 = vmatpush1.bf16.msra.mxu0 %v3909
        %7724 = vmatprep.subr.bf16.mxu0 0
        %7725 = vmatpush1.bf16.msra.mxu0 %v3914
        %7726 = vmatprep.subr.bf16.mxu0 0
        %7727 = vmatpush1.bf16.msra.mxu0 %v3919
        %7728 = vmatprep.subr.bf16.mxu0 0
        %7729 = vmatpush1.bf16.msra.mxu0 %v3924
        %7730 = vmatprep.subr.bf16.mxu0 0
        %7731 = vmatpush1.bf16.msra.mxu0 %v3929
        %7732 = vmatprep.subr.bf16.mxu0 0
        %7733 = vmatpush1.bf16.msra.mxu0 %v3934
        %7734 = vmatprep.subr.bf16.mxu0 0
        %7735 = vmatpush1.bf16.msra.mxu0 %v3939
        %7736 = vmatprep.subr.bf16.mxu0 0
        %7737 = vmatpush1.bf16.msra.mxu0 %v3944
        %7738 = vmatprep.subr.bf16.mxu0 0
        %7739 = vmatpush1.bf16.msra.mxu0 %v3949
        %7740 = vmatprep.subr.bf16.mxu0 0
        %7741 = vmatpush1.bf16.msra.mxu0 %v3954
        %7742 = vmatprep.subr.bf16.mxu0 0
        %7743 = vmatpush1.bf16.msra.mxu0 %v3959
        %7744 = vmatprep.subr.bf16.mxu0 0
        %7745 = vmatpush1.bf16.msra.mxu0 %v3964
        %7746 = vmatprep.subr.bf16.mxu0 0
        %7747 = vmatpush1.bf16.msra.mxu0 %v3969
        %7748 = vmatprep.subr.bf16.mxu0 0
        %7749 = vmatpush1.bf16.msra.mxu0 %v3974
        %7750 = vmatprep.mubr.bf16.mxu0 %v1738
        %7751 = vmatmul.mubr.bf16.gmra.mrb[0].mxu0 %v1737
        %v7752 = vpop.f32.mrb[0].mxu0
        %v7753 = vadd.f32 %v7592, %v7752
        %v7754 = vpop.f32.mrb[0].mxu0
        %v7755 = vpop.f32.mrb[0].mxu0
        %v7756 = vadd.f32 %v7595, %v7755
        %v7757 = vpop.f32.mrb[0].mxu0
        %7758 = vmatprep.mubr.bf16.mxu0 %v1751
        %7759 = vmatmul.mubr.bf16.gmra.mrb[0].mxu0 %v1750
        %v7760 = vpop.f32.mrb[0].mxu0
        %v7761 = vadd.f32 %v7600, %v7760
        %v7762 = vpop.f32.mrb[0].mxu0
        %v7763 = vpop.f32.mrb[0].mxu0
        %v7764 = vadd.f32 %v7603, %v7763
        %v7765 = vpop.f32.mrb[0].mxu0
        %7766 = vmatprep.mubr.bf16.mxu0 %v1764
        %7767 = vmatmul.mubr.bf16.gmra.mrb[0].mxu0 %v1763
        %v7768 = vpop.f32.mrb[0].mxu0
        %v7769 = vadd.f32 %v7608, %v7768
        %v7770 = vpop.f32.mrb[0].mxu0
        %v7771 = vpop.f32.mrb[0].mxu0
        %v7772 = vadd.f32 %v7611, %v7771
        %v7773 = vpop.f32.mrb[0].mxu0
        %7774 = vmatprep.mubr.bf16.mxu0 %v1777
        %7775 = vmatmul.mubr.bf16.gmra.mrb[0].mxu0 %v1776
        %v7776 = vpop.f32.mrb[0].mxu0
        %v7777 = vadd.f32 %v7616, %v7776
        %v7778 = vpop.f32.mrb[0].mxu0
        %v7779 = vpop.f32.mrb[0].mxu0
        %v7780 = vadd.f32 %v7619, %v7779
        %v7781 = vpop.f32.mrb[0].mxu0
        %7782 = vmatprep.mubr.bf16.mxu0 %v1790
        %7783 = vmatmul.mubr.bf16.gmra.mrb[0].mxu0 %v1789
        %v7784 = vpop.f32.mrb[0].mxu0
        %v7785 = vadd.f32 %v7624, %v7784
        %v7786 = vpop.f32.mrb[0].mxu0
        %v7787 = vpop.f32.mrb[0].mxu0
        %v7788 = vadd.f32 %v7627, %v7787
        %v7789 = vpop.f32.mrb[0].mxu0
        %7790 = vmatprep.mubr.bf16.mxu0 %v1803
        %7791 = vmatmul.mubr.bf16.gmra.mrb[0].mxu0 %v1802
        %v7792 = vpop.f32.mrb[0].mxu0
        %v7793 = vadd.f32 %v7632, %v7792
        %v7794 = vpop.f32.mrb[0].mxu0
        %v7795 = vpop.f32.mrb[0].mxu0
        %v7796 = vadd.f32 %v7635, %v7795
        %v7797 = vpop.f32.mrb[0].mxu0
        %7798 = vmatprep.mubr.bf16.mxu0 %v1816
        %7799 = vmatmul.mubr.bf16.gmra.mrb[0].mxu0 %v1815
        %v7800 = vpop.f32.mrb[0].mxu0
        %v7801 = vadd.f32 %v7640, %v7800
        %v7802 = vpop.f32.mrb[0].mxu0
        %v7803 = vpop.f32.mrb[0].mxu0
        %v7804 = vadd.f32 %v7643, %v7803
        %v7805 = vpop.f32.mrb[0].mxu0
        %7806 = vmatprep.mubr.bf16.mxu0 %v1829
        %7807 = vmatmul.mubr.bf16.gmra.mrb[0].mxu0 %v1828
        %v7808 = vpop.f32.mrb[0].mxu0
        %v7809 = vadd.f32 %v7648, %v7808
        %v7810 = vpop.f32.mrb[0].mxu0
        %v7811 = vpop.f32.mrb[0].mxu0
        %v7812 = vadd.f32 %v7651, %v7811
        %v7813 = vpop.f32.mrb[0].mxu0
        %7814 = vmatprep.mubr.bf16.mxu0 %v1842
        %7815 = vmatmul.mubr.bf16.gmra.mrb[0].mxu0 %v1841
        %v7816 = vpop.f32.mrb[0].mxu0
        %v7817 = vadd.f32 %v7656, %v7816
        %v7818 = vpop.f32.mrb[0].mxu0
        %v7819 = vpop.f32.mrb[0].mxu0
        %v7820 = vadd.f32 %v7659, %v7819
        %v7821 = vpop.f32.mrb[0].mxu0
        %7822 = vmatprep.mubr.bf16.mxu0 %v1855
        %7823 = vmatmul.mubr.bf16.gmra.mrb[0].mxu0 %v1854
        %v7824 = vpop.f32.mrb[0].mxu0
        %v7825 = vadd.f32 %v7664, %v7824
        %v7826 = vpop.f32.mrb[0].mxu0
        %v7827 = vpop.f32.mrb[0].mxu0
        %v7828 = vadd.f32 %v7667, %v7827
        %v7829 = vpop.f32.mrb[0].mxu0
        %7830 = vmatprep.mubr.bf16.mxu0 %v1868
        %7831 = vmatmul.mubr.bf16.gmra.mrb[0].mxu0 %v1867
        %v7832 = vpop.f32.mrb[0].mxu0
        %v7833 = vadd.f32 %v7672, %v7832
        %v7834 = vpop.f32.mrb[0].mxu0
        %v7835 = vpop.f32.mrb[0].mxu0
        %v7836 = vadd.f32 %v7675, %v7835
        %v7837 = vpop.f32.mrb[0].mxu0
        %7838 = vmatprep.mubr.bf16.mxu0 %v1881
        %7839 = vmatmul.mubr.bf16.gmra.mrb[0].mxu0 %v1880
        %v7840 = vpop.f32.mrb[0].mxu0
        %v7841 = vadd.f32 %v7680, %v7840
        %v7842 = vpop.f32.mrb[0].mxu0
        %v7843 = vpop.f32.mrb[0].mxu0
        %v7844 = vadd.f32 %v7683, %v7843
        %v7845 = vpop.f32.mrb[0].mxu0
        %7846 = vmatprep.mubr.bf16.mxu0 %v1894
        %7847 = vmatmul.mubr.bf16.gmra.mrb[0].mxu0 %v1893
        %v7848 = vpop.f32.mrb[0].mxu0
        %v7849 = vadd.f32 %v7688, %v7848
        %v7850 = vpop.f32.mrb[0].mxu0
        %v7851 = vpop.f32.mrb[0].mxu0
        %v7852 = vadd.f32 %v7691, %v7851
        %v7853 = vpop.f32.mrb[0].mxu0
        %7854 = vmatprep.mubr.bf16.mxu0 %v1907
        %7855 = vmatmul.mubr.bf16.gmra.mrb[0].mxu0 %v1906
        %v7856 = vpop.f32.mrb[0].mxu0
        %v7857 = vadd.f32 %v7696, %v7856
        %v7858 = vpop.f32.mrb[0].mxu0
        %v7859 = vpop.f32.mrb[0].mxu0
        %v7860 = vadd.f32 %v7699, %v7859
        %v7861 = vpop.f32.mrb[0].mxu0
        %7862 = vmatprep.mubr.bf16.mxu0 %v1920
        %7863 = vmatmul.mubr.bf16.gmra.mrb[0].mxu0 %v1919
        %v7864 = vpop.f32.mrb[0].mxu0
        %v7865 = vadd.f32 %v7704, %v7864
        %v7866 = vpop.f32.mrb[0].mxu0
        %v7867 = vpop.f32.mrb[0].mxu0
        %v7868 = vadd.f32 %v7707, %v7867
        %v7869 = vpop.f32.mrb[0].mxu0
        %7870 = vmatprep.mubr.bf16.mxu0 %v1933
        %7871 = vmatmul.mubr.bf16.gmra.mrb[0].mxu0 %v1932
        %v7872 = vpop.f32.mrb[0].mxu0
        %v7873 = vadd.f32 %v7712, %v7872
        %v7874 = vpop.f32.mrb[0].mxu0
        %v7875 = vpop.f32.mrb[0].mxu0
        %v7876 = vadd.f32 %v7715, %v7875
        %v7877 = vpop.f32.mrb[0].mxu0
        %7878 = vdwg.mxu0
        %7879 = vmatprep.subr.bf16.mxu0 0
        %7880 = vmatpush1.bf16.msra.mxu0 %v3979
        %7881 = vmatprep.subr.bf16.mxu0 0
        %7882 = vmatpush1.bf16.msra.mxu0 %v3984
        %7883 = vmatprep.subr.bf16.mxu0 0
        %7884 = vmatpush1.bf16.msra.mxu0 %v3989
        %7885 = vmatprep.subr.bf16.mxu0 0
        %7886 = vmatpush1.bf16.msra.mxu0 %v3994
        %7887 = vmatprep.subr.bf16.mxu0 0
        %7888 = vmatpush1.bf16.msra.mxu0 %v3999
        %7889 = vmatprep.subr.bf16.mxu0 0
        %7890 = vmatpush1.bf16.msra.mxu0 %v4004
        %7891 = vmatprep.subr.bf16.mxu0 0
        %7892 = vmatpush1.bf16.msra.mxu0 %v4009
        %7893 = vmatprep.subr.bf16.mxu0 0
        %7894 = vmatpush1.bf16.msra.mxu0 %v4014
        %7895 = vmatprep.subr.bf16.mxu0 0
        %7896 = vmatpush1.bf16.msra.mxu0 %v4019
        %7897 = vmatprep.subr.bf16.mxu0 0
        %7898 = vmatpush1.bf16.msra.mxu0 %v4024
        %7899 = vmatprep.subr.bf16.mxu0 0
        %7900 = vmatpush1.bf16.msra.mxu0 %v4029
        %7901 = vmatprep.subr.bf16.mxu0 0
        %7902 = vmatpush1.bf16.msra.mxu0 %v4034
        %7903 = vmatprep.subr.bf16.mxu0 0
        %7904 = vmatpush1.bf16.msra.mxu0 %v4039
        %7905 = vmatprep.subr.bf16.mxu0 0
        %7906 = vmatpush1.bf16.msra.mxu0 %v4044
        %7907 = vmatprep.subr.bf16.mxu0 0
        %7908 = vmatpush1.bf16.msra.mxu0 %v4049
        %7909 = vmatprep.subr.bf16.mxu0 0
        %7910 = vmatpush1.bf16.msra.mxu0 %v4054
        %7911 = vmatprep.mubr.bf16.mxu0 %v1740
        %7912 = vmatmul.mubr.bf16.gmra.mrb[0].mxu0 %v1739
        %v7913 = vpop.f32.mrb[0].mxu0
        %v7914 = vadd.f32 %v7753, %v7913
        %v7915 = vpop.f32.mrb[0].mxu0
        %v7916 = vpop.f32.mrb[0].mxu0
        %v7917 = vadd.f32 %v7756, %v7916
        %v7918 = vpop.f32.mrb[0].mxu0
        %7919 = vmatprep.mubr.bf16.mxu0 %v1753
        %7920 = vmatmul.mubr.bf16.gmra.mrb[0].mxu0 %v1752
        %v7921 = vpop.f32.mrb[0].mxu0
        %v7922 = vadd.f32 %v7761, %v7921
        %v7923 = vpop.f32.mrb[0].mxu0
        %v7924 = vpop.f32.mrb[0].mxu0
        %v7925 = vadd.f32 %v7764, %v7924
        %v7926 = vpop.f32.mrb[0].mxu0
        %7927 = vmatprep.mubr.bf16.mxu0 %v1766
        %7928 = vmatmul.mubr.bf16.gmra.mrb[0].mxu0 %v1765
        %v7929 = vpop.f32.mrb[0].mxu0
        %v7930 = vadd.f32 %v7769, %v7929
        %v7931 = vpop.f32.mrb[0].mxu0
        %v7932 = vpop.f32.mrb[0].mxu0
        %v7933 = vadd.f32 %v7772, %v7932
        %v7934 = vpop.f32.mrb[0].mxu0
        %7935 = vmatprep.mubr.bf16.mxu0 %v1779
        %7936 = vmatmul.mubr.bf16.gmra.mrb[0].mxu0 %v1778
        %v7937 = vpop.f32.mrb[0].mxu0
        %v7938 = vadd.f32 %v7777, %v7937
        %v7939 = vpop.f32.mrb[0].mxu0
        %v7940 = vpop.f32.mrb[0].mxu0
        %v7941 = vadd.f32 %v7780, %v7940
        %v7942 = vpop.f32.mrb[0].mxu0
        %7943 = vmatprep.mubr.bf16.mxu0 %v1792
        %7944 = vmatmul.mubr.bf16.gmra.mrb[0].mxu0 %v1791
        %v7945 = vpop.f32.mrb[0].mxu0
        %v7946 = vadd.f32 %v7785, %v7945
        %v7947 = vpop.f32.mrb[0].mxu0
        %v7948 = vpop.f32.mrb[0].mxu0
        %v7949 = vadd.f32 %v7788, %v7948
        %v7950 = vpop.f32.mrb[0].mxu0
        %7951 = vmatprep.mubr.bf16.mxu0 %v1805
        %7952 = vmatmul.mubr.bf16.gmra.mrb[0].mxu0 %v1804
        %v7953 = vpop.f32.mrb[0].mxu0
        %v7954 = vadd.f32 %v7793, %v7953
        %v7955 = vpop.f32.mrb[0].mxu0
        %v7956 = vpop.f32.mrb[0].mxu0
        %v7957 = vadd.f32 %v7796, %v7956
        %v7958 = vpop.f32.mrb[0].mxu0
        %7959 = vmatprep.mubr.bf16.mxu0 %v1818
        %7960 = vmatmul.mubr.bf16.gmra.mrb[0].mxu0 %v1817
        %v7961 = vpop.f32.mrb[0].mxu0
        %v7962 = vadd.f32 %v7801, %v7961
        %v7963 = vpop.f32.mrb[0].mxu0
        %v7964 = vpop.f32.mrb[0].mxu0
        %v7965 = vadd.f32 %v7804, %v7964
        %v7966 = vpop.f32.mrb[0].mxu0
        %7967 = vmatprep.mubr.bf16.mxu0 %v1831
        %7968 = vmatmul.mubr.bf16.gmra.mrb[0].mxu0 %v1830
        %v7969 = vpop.f32.mrb[0].mxu0
        %v7970 = vadd.f32 %v7809, %v7969
        %v7971 = vpop.f32.mrb[0].mxu0
        %v7972 = vpop.f32.mrb[0].mxu0
        %v7973 = vadd.f32 %v7812, %v7972
        %v7974 = vpop.f32.mrb[0].mxu0
        %7975 = vmatprep.mubr.bf16.mxu0 %v1844
        %7976 = vmatmul.mubr.bf16.gmra.mrb[0].mxu0 %v1843
        %v7977 = vpop.f32.mrb[0].mxu0
        %v7978 = vadd.f32 %v7817, %v7977
        %v7979 = vpop.f32.mrb[0].mxu0
        %v7980 = vpop.f32.mrb[0].mxu0
        %v7981 = vadd.f32 %v7820, %v7980
        %v7982 = vpop.f32.mrb[0].mxu0
        %7983 = vmatprep.mubr.bf16.mxu0 %v1857
        %7984 = vmatmul.mubr.bf16.gmra.mrb[0].mxu0 %v1856
        %v7985 = vpop.f32.mrb[0].mxu0
        %v7986 = vadd.f32 %v7825, %v7985
        %v7987 = vpop.f32.mrb[0].mxu0
        %v7988 = vpop.f32.mrb[0].mxu0
        %v7989 = vadd.f32 %v7828, %v7988
        %v7990 = vpop.f32.mrb[0].mxu0
        %7991 = vmatprep.mubr.bf16.mxu0 %v1870
        %7992 = vmatmul.mubr.bf16.gmra.mrb[0].mxu0 %v1869
        %v7993 = vpop.f32.mrb[0].mxu0
        %v7994 = vadd.f32 %v7833, %v7993
        %v7995 = vpop.f32.mrb[0].mxu0
        %v7996 = vpop.f32.mrb[0].mxu0
        %v7997 = vadd.f32 %v7836, %v7996
        %v7998 = vpop.f32.mrb[0].mxu0
        %7999 = vmatprep.mubr.bf16.mxu0 %v1883
        %8000 = vmatmul.mubr.bf16.gmra.mrb[0].mxu0 %v1882
        %v8001 = vpop.f32.mrb[0].mxu0
        %v8002 = vadd.f32 %v7841, %v8001
        %v8003 = vpop.f32.mrb[0].mxu0
        %v8004 = vpop.f32.mrb[0].mxu0
        %v8005 = vadd.f32 %v7844, %v8004
        %v8006 = vpop.f32.mrb[0].mxu0
        %8007 = vmatprep.mubr.bf16.mxu0 %v1896
        %8008 = vmatmul.mubr.bf16.gmra.mrb[0].mxu0 %v1895
        %v8009 = vpop.f32.mrb[0].mxu0
        %v8010 = vadd.f32 %v7849, %v8009
        %v8011 = vpop.f32.mrb[0].mxu0
        %v8012 = vpop.f32.mrb[0].mxu0
        %v8013 = vadd.f32 %v7852, %v8012
        %v8014 = vpop.f32.mrb[0].mxu0
        %8015 = vmatprep.mubr.bf16.mxu0 %v1909
        %8016 = vmatmul.mubr.bf16.gmra.mrb[0].mxu0 %v1908
        %v8017 = vpop.f32.mrb[0].mxu0
        %v8018 = vadd.f32 %v7857, %v8017
        %v8019 = vpop.f32.mrb[0].mxu0
        %v8020 = vpop.f32.mrb[0].mxu0
        %v8021 = vadd.f32 %v7860, %v8020
        %v8022 = vpop.f32.mrb[0].mxu0
        %8023 = vmatprep.mubr.bf16.mxu0 %v1922
        %8024 = vmatmul.mubr.bf16.gmra.mrb[0].mxu0 %v1921
        %v8025 = vpop.f32.mrb[0].mxu0
        %v8026 = vadd.f32 %v7865, %v8025
        %v8027 = vpop.f32.mrb[0].mxu0
        %v8028 = vpop.f32.mrb[0].mxu0
        %v8029 = vadd.f32 %v7868, %v8028
        %v8030 = vpop.f32.mrb[0].mxu0
        %8031 = vmatprep.mubr.bf16.mxu0 %v1935
        %8032 = vmatmul.mubr.bf16.gmra.mrb[0].mxu0 %v1934
        %v8033 = vpop.f32.mrb[0].mxu0
        %v8034 = vadd.f32 %v7873, %v8033
        %v8035 = vpop.f32.mrb[0].mxu0
        %v8036 = vpop.f32.mrb[0].mxu0
        %v8037 = vadd.f32 %v7876, %v8036
        %v8038 = vpop.f32.mrb[0].mxu0
        %8039 = vdwg.mxu0
        %8040 = vmatprep.subr.bf16.mxu0 0
        %8041 = vmatpush1.bf16.msra.mxu0 %v4059
        %8042 = vmatprep.subr.bf16.mxu0 0
        %8043 = vmatpush1.bf16.msra.mxu0 %v4064
        %8044 = vmatprep.subr.bf16.mxu0 0
        %8045 = vmatpush1.bf16.msra.mxu0 %v4069
        %8046 = vmatprep.subr.bf16.mxu0 0
        %8047 = vmatpush1.bf16.msra.mxu0 %v4074
        %8048 = vmatprep.subr.bf16.mxu0 0
        %8049 = vmatpush1.bf16.msra.mxu0 %v4079
        %8050 = vmatprep.subr.bf16.mxu0 0
        %8051 = vmatpush1.bf16.msra.mxu0 %v4084
        %8052 = vmatprep.subr.bf16.mxu0 0
        %8053 = vmatpush1.bf16.msra.mxu0 %v4089
        %8054 = vmatprep.subr.bf16.mxu0 0
        %8055 = vmatpush1.bf16.msra.mxu0 %v4094
        %8056 = vmatprep.subr.bf16.mxu0 0
        %8057 = vmatpush1.bf16.msra.mxu0 %v4099
        %8058 = vmatprep.subr.bf16.mxu0 0
        %8059 = vmatpush1.bf16.msra.mxu0 %v4104
        %8060 = vmatprep.subr.bf16.mxu0 0
        %8061 = vmatpush1.bf16.msra.mxu0 %v4109
        %8062 = vmatprep.subr.bf16.mxu0 0
        %8063 = vmatpush1.bf16.msra.mxu0 %v4114
        %8064 = vmatprep.subr.bf16.mxu0 0
        %8065 = vmatpush1.bf16.msra.mxu0 %v4119
        %8066 = vmatprep.subr.bf16.mxu0 0
        %8067 = vmatpush1.bf16.msra.mxu0 %v4124
        %8068 = vmatprep.subr.bf16.mxu0 0
        %8069 = vmatpush1.bf16.msra.mxu0 %v4129
        %8070 = vmatprep.subr.bf16.mxu0 0
        %8071 = vmatpush1.bf16.msra.mxu0 %v4134
        %8072 = vmatprep.mubr.bf16.mxu0 %v1742
        %8073 = vmatmul.mubr.bf16.gmra.mrb[0].mxu0 %v1741
        %v8074 = vpop.f32.mrb[0].mxu0
        %v8075 = vadd.f32 %v7914, %v8074
        %v8076 = vpop.f32.mrb[0].mxu0
        %v8077 = vpop.f32.mrb[0].mxu0
        %v8078 = vadd.f32 %v7917, %v8077
        %v8079 = vpop.f32.mrb[0].mxu0
        %8080 = vmatprep.mubr.bf16.mxu0 %v1755
        %8081 = vmatmul.mubr.bf16.gmra.mrb[0].mxu0 %v1754
        %v8082 = vpop.f32.mrb[0].mxu0
        %v8083 = vadd.f32 %v7922, %v8082
        %v8084 = vpop.f32.mrb[0].mxu0
        %v8085 = vpop.f32.mrb[0].mxu0
        %v8086 = vadd.f32 %v7925, %v8085
        %v8087 = vpop.f32.mrb[0].mxu0
        %8088 = vmatprep.mubr.bf16.mxu0 %v1768
        %8089 = vmatmul.mubr.bf16.gmra.mrb[0].mxu0 %v1767
        %v8090 = vpop.f32.mrb[0].mxu0
        %v8091 = vadd.f32 %v7930, %v8090
        %v8092 = vpop.f32.mrb[0].mxu0
        %v8093 = vpop.f32.mrb[0].mxu0
        %v8094 = vadd.f32 %v7933, %v8093
        %v8095 = vpop.f32.mrb[0].mxu0
        %8096 = vmatprep.mubr.bf16.mxu0 %v1781
        %8097 = vmatmul.mubr.bf16.gmra.mrb[0].mxu0 %v1780
        %v8098 = vpop.f32.mrb[0].mxu0
        %v8099 = vadd.f32 %v7938, %v8098
        %v8100 = vpop.f32.mrb[0].mxu0
        %v8101 = vpop.f32.mrb[0].mxu0
        %v8102 = vadd.f32 %v7941, %v8101
        %v8103 = vpop.f32.mrb[0].mxu0
        %8104 = vmatprep.mubr.bf16.mxu0 %v1794
        %8105 = vmatmul.mubr.bf16.gmra.mrb[0].mxu0 %v1793
        %v8106 = vpop.f32.mrb[0].mxu0
        %v8107 = vadd.f32 %v7946, %v8106
        %v8108 = vpop.f32.mrb[0].mxu0
        %v8109 = vpop.f32.mrb[0].mxu0
        %v8110 = vadd.f32 %v7949, %v8109
        %v8111 = vpop.f32.mrb[0].mxu0
        %8112 = vmatprep.mubr.bf16.mxu0 %v1807
        %8113 = vmatmul.mubr.bf16.gmra.mrb[0].mxu0 %v1806
        %v8114 = vpop.f32.mrb[0].mxu0
        %v8115 = vadd.f32 %v7954, %v8114
        %v8116 = vpop.f32.mrb[0].mxu0
        %v8117 = vpop.f32.mrb[0].mxu0
        %v8118 = vadd.f32 %v7957, %v8117
        %v8119 = vpop.f32.mrb[0].mxu0
        %8120 = vmatprep.mubr.bf16.mxu0 %v1820
        %8121 = vmatmul.mubr.bf16.gmra.mrb[0].mxu0 %v1819
        %v8122 = vpop.f32.mrb[0].mxu0
        %v8123 = vadd.f32 %v7962, %v8122
        %v8124 = vpop.f32.mrb[0].mxu0
        %v8125 = vpop.f32.mrb[0].mxu0
        %v8126 = vadd.f32 %v7965, %v8125
        %v8127 = vpop.f32.mrb[0].mxu0
        %8128 = vmatprep.mubr.bf16.mxu0 %v1833
        %8129 = vmatmul.mubr.bf16.gmra.mrb[0].mxu0 %v1832
        %v8130 = vpop.f32.mrb[0].mxu0
        %v8131 = vadd.f32 %v7970, %v8130
        %v8132 = vpop.f32.mrb[0].mxu0
        %v8133 = vpop.f32.mrb[0].mxu0
        %v8134 = vadd.f32 %v7973, %v8133
        %v8135 = vpop.f32.mrb[0].mxu0
        %8136 = vmatprep.mubr.bf16.mxu0 %v1846
        %8137 = vmatmul.mubr.bf16.gmra.mrb[0].mxu0 %v1845
        %v8138 = vpop.f32.mrb[0].mxu0
        %v8139 = vadd.f32 %v7978, %v8138
        %v8140 = vpop.f32.mrb[0].mxu0
        %v8141 = vpop.f32.mrb[0].mxu0
        %v8142 = vadd.f32 %v7981, %v8141
        %v8143 = vpop.f32.mrb[0].mxu0
        %8144 = vmatprep.mubr.bf16.mxu0 %v1859
        %8145 = vmatmul.mubr.bf16.gmra.mrb[0].mxu0 %v1858
        %v8146 = vpop.f32.mrb[0].mxu0
        %v8147 = vadd.f32 %v7986, %v8146
        %v8148 = vpop.f32.mrb[0].mxu0
        %v8149 = vpop.f32.mrb[0].mxu0
        %v8150 = vadd.f32 %v7989, %v8149
        %v8151 = vpop.f32.mrb[0].mxu0
        %8152 = vmatprep.mubr.bf16.mxu0 %v1872
        %8153 = vmatmul.mubr.bf16.gmra.mrb[0].mxu0 %v1871
        %v8154 = vpop.f32.mrb[0].mxu0
        %v8155 = vadd.f32 %v7994, %v8154
        %v8156 = vpop.f32.mrb[0].mxu0
        %v8157 = vpop.f32.mrb[0].mxu0
        %v8158 = vadd.f32 %v7997, %v8157
        %v8159 = vpop.f32.mrb[0].mxu0
        %8160 = vmatprep.mubr.bf16.mxu0 %v1885
        %8161 = vmatmul.mubr.bf16.gmra.mrb[0].mxu0 %v1884
        %v8162 = vpop.f32.mrb[0].mxu0
        %v8163 = vadd.f32 %v8002, %v8162
        %v8164 = vpop.f32.mrb[0].mxu0
        %v8165 = vpop.f32.mrb[0].mxu0
        %v8166 = vadd.f32 %v8005, %v8165
        %v8167 = vpop.f32.mrb[0].mxu0
        %8168 = vmatprep.mubr.bf16.mxu0 %v1898
        %8169 = vmatmul.mubr.bf16.gmra.mrb[0].mxu0 %v1897
        %v8170 = vpop.f32.mrb[0].mxu0
        %v8171 = vadd.f32 %v8010, %v8170
        %v8172 = vpop.f32.mrb[0].mxu0
        %v8173 = vpop.f32.mrb[0].mxu0
        %v8174 = vadd.f32 %v8013, %v8173
        %v8175 = vpop.f32.mrb[0].mxu0
        %8176 = vmatprep.mubr.bf16.mxu0 %v1911
        %8177 = vmatmul.mubr.bf16.gmra.mrb[0].mxu0 %v1910
        %v8178 = vpop.f32.mrb[0].mxu0
        %v8179 = vadd.f32 %v8018, %v8178
        %v8180 = vpop.f32.mrb[0].mxu0
        %v8181 = vpop.f32.mrb[0].mxu0
        %v8182 = vadd.f32 %v8021, %v8181
        %v8183 = vpop.f32.mrb[0].mxu0
        %8184 = vmatprep.mubr.bf16.mxu0 %v1924
        %8185 = vmatmul.mubr.bf16.gmra.mrb[0].mxu0 %v1923
        %v8186 = vpop.f32.mrb[0].mxu0
        %v8187 = vadd.f32 %v8026, %v8186
        %v8188 = vpop.f32.mrb[0].mxu0
        %v8189 = vpop.f32.mrb[0].mxu0
        %v8190 = vadd.f32 %v8029, %v8189
        %v8191 = vpop.f32.mrb[0].mxu0
        %8192 = vmatprep.mubr.bf16.mxu0 %v1937
        %8193 = vmatmul.mubr.bf16.gmra.mrb[0].mxu0 %v1936
        %v8194 = vpop.f32.mrb[0].mxu0
        %v8195 = vadd.f32 %v8034, %v8194
        %v8196 = vpop.f32.mrb[0].mxu0
        %v8197 = vpop.f32.mrb[0].mxu0
        %v8198 = vadd.f32 %v8037, %v8197
        %v8199 = vpop.f32.mrb[0].mxu0
        %8200 = vdwg.mxu0
        %8201 = vmatprep.subr.bf16.mxu0 0
        %8202 = vmatpush1.bf16.msra.mxu0 %v4139
        %8203 = vmatprep.subr.bf16.mxu0 0
        %8204 = vmatpush1.bf16.msra.mxu0 %v4144
        %8205 = vmatprep.subr.bf16.mxu0 0
        %8206 = vmatpush1.bf16.msra.mxu0 %v4149
        %8207 = vmatprep.subr.bf16.mxu0 0
        %8208 = vmatpush1.bf16.msra.mxu0 %v4154
        %8209 = vmatprep.subr.bf16.mxu0 0
        %8210 = vmatpush1.bf16.msra.mxu0 %v4159
        %8211 = vmatprep.subr.bf16.mxu0 0
        %8212 = vmatpush1.bf16.msra.mxu0 %v4164
        %8213 = vmatprep.subr.bf16.mxu0 0
        %8214 = vmatpush1.bf16.msra.mxu0 %v4169
        %8215 = vmatprep.subr.bf16.mxu0 0
        %8216 = vmatpush1.bf16.msra.mxu0 %v4174
        %8217 = vmatprep.subr.bf16.mxu0 0
        %8218 = vmatpush1.bf16.msra.mxu0 %v4179
        %8219 = vmatprep.subr.bf16.mxu0 0
        %8220 = vmatpush1.bf16.msra.mxu0 %v4184
        %8221 = vmatprep.subr.bf16.mxu0 0
        %8222 = vmatpush1.bf16.msra.mxu0 %v4189
        %8223 = vmatprep.subr.bf16.mxu0 0
        %8224 = vmatpush1.bf16.msra.mxu0 %v4194
        %8225 = vmatprep.subr.bf16.mxu0 0
        %8226 = vmatpush1.bf16.msra.mxu0 %v4199
        %8227 = vmatprep.subr.bf16.mxu0 0
        %8228 = vmatpush1.bf16.msra.mxu0 %v4204
        %8229 = vmatprep.subr.bf16.mxu0 0
        %8230 = vmatpush1.bf16.msra.mxu0 %v4209
        %8231 = vmatprep.subr.bf16.mxu0 0
        %8232 = vmatpush1.bf16.msra.mxu0 %v4214
        %8233 = vmatprep.mubr.bf16.mxu0 %v1744
        %8234 = vmatmul.mubr.bf16.gmra.mrb[0].mxu0 %v1743
        %v8235 = vpop.f32.mrb[0].mxu0
        %v8236 = vadd.f32 %v8075, %v8235
        %v8237 = vpop.f32.mrb[0].mxu0
        %v8238 = vpop.f32.mrb[0].mxu0
        %v8239 = vadd.f32 %v8078, %v8238
        %v8240 = vpop.f32.mrb[0].mxu0
        %8241 = vmatprep.mubr.bf16.mxu0 %v1757
        %8242 = vmatmul.mubr.bf16.gmra.mrb[0].mxu0 %v1756
        %v8243 = vpop.f32.mrb[0].mxu0
        %v8244 = vadd.f32 %v8083, %v8243
        %v8245 = vpop.f32.mrb[0].mxu0
        %v8246 = vpop.f32.mrb[0].mxu0
        %v8247 = vadd.f32 %v8086, %v8246
        %v8248 = vpop.f32.mrb[0].mxu0
        %8249 = vmatprep.mubr.bf16.mxu0 %v1770
        %8250 = vmatmul.mubr.bf16.gmra.mrb[0].mxu0 %v1769
        %v8251 = vpop.f32.mrb[0].mxu0
        %v8252 = vadd.f32 %v8091, %v8251
        %v8253 = vpop.f32.mrb[0].mxu0
        %v8254 = vpop.f32.mrb[0].mxu0
        %v8255 = vadd.f32 %v8094, %v8254
        %v8256 = vpop.f32.mrb[0].mxu0
        %8257 = vmatprep.mubr.bf16.mxu0 %v1783
        %8258 = vmatmul.mubr.bf16.gmra.mrb[0].mxu0 %v1782
        %v8259 = vpop.f32.mrb[0].mxu0
        %v8260 = vadd.f32 %v8099, %v8259
        %v8261 = vpop.f32.mrb[0].mxu0
        %v8262 = vpop.f32.mrb[0].mxu0
        %v8263 = vadd.f32 %v8102, %v8262
        %v8264 = vpop.f32.mrb[0].mxu0
        %8265 = vmatprep.mubr.bf16.mxu0 %v1796
        %8266 = vmatmul.mubr.bf16.gmra.mrb[0].mxu0 %v1795
        %v8267 = vpop.f32.mrb[0].mxu0
        %v8268 = vadd.f32 %v8107, %v8267
        %v8269 = vpop.f32.mrb[0].mxu0
        %v8270 = vpop.f32.mrb[0].mxu0
        %v8271 = vadd.f32 %v8110, %v8270
        %v8272 = vpop.f32.mrb[0].mxu0
        %8273 = vmatprep.mubr.bf16.mxu0 %v1809
        %8274 = vmatmul.mubr.bf16.gmra.mrb[0].mxu0 %v1808
        %v8275 = vpop.f32.mrb[0].mxu0
        %v8276 = vadd.f32 %v8115, %v8275
        %v8277 = vpop.f32.mrb[0].mxu0
        %v8278 = vpop.f32.mrb[0].mxu0
        %v8279 = vadd.f32 %v8118, %v8278
        %v8280 = vpop.f32.mrb[0].mxu0
        %8281 = vmatprep.mubr.bf16.mxu0 %v1822
        %8282 = vmatmul.mubr.bf16.gmra.mrb[0].mxu0 %v1821
        %v8283 = vpop.f32.mrb[0].mxu0
        %v8284 = vadd.f32 %v8123, %v8283
        %v8285 = vpop.f32.mrb[0].mxu0
        %v8286 = vpop.f32.mrb[0].mxu0
        %v8287 = vadd.f32 %v8126, %v8286
        %v8288 = vpop.f32.mrb[0].mxu0
        %8289 = vmatprep.mubr.bf16.mxu0 %v1835
        %8290 = vmatmul.mubr.bf16.gmra.mrb[0].mxu0 %v1834
        %v8291 = vpop.f32.mrb[0].mxu0
        %v8292 = vadd.f32 %v8131, %v8291
        %v8293 = vpop.f32.mrb[0].mxu0
        %v8294 = vpop.f32.mrb[0].mxu0
        %v8295 = vadd.f32 %v8134, %v8294
        %v8296 = vpop.f32.mrb[0].mxu0
        %8297 = vmatprep.mubr.bf16.mxu0 %v1848
        %8298 = vmatmul.mubr.bf16.gmra.mrb[0].mxu0 %v1847
        %v8299 = vpop.f32.mrb[0].mxu0
        %v8300 = vadd.f32 %v8139, %v8299
        %v8301 = vpop.f32.mrb[0].mxu0
        %v8302 = vpop.f32.mrb[0].mxu0
        %v8303 = vadd.f32 %v8142, %v8302
        %v8304 = vpop.f32.mrb[0].mxu0
        %8305 = vmatprep.mubr.bf16.mxu0 %v1861
        %8306 = vmatmul.mubr.bf16.gmra.mrb[0].mxu0 %v1860
        %v8307 = vpop.f32.mrb[0].mxu0
        %v8308 = vadd.f32 %v8147, %v8307
        %v8309 = vpop.f32.mrb[0].mxu0
        %v8310 = vpop.f32.mrb[0].mxu0
        %v8311 = vadd.f32 %v8150, %v8310
        %v8312 = vpop.f32.mrb[0].mxu0
        %8313 = vmatprep.mubr.bf16.mxu0 %v1874
        %8314 = vmatmul.mubr.bf16.gmra.mrb[0].mxu0 %v1873
        %v8315 = vpop.f32.mrb[0].mxu0
        %v8316 = vadd.f32 %v8155, %v8315
        %v8317 = vpop.f32.mrb[0].mxu0
        %v8318 = vpop.f32.mrb[0].mxu0
        %v8319 = vadd.f32 %v8158, %v8318
        %v8320 = vpop.f32.mrb[0].mxu0
        %8321 = vmatprep.mubr.bf16.mxu0 %v1887
        %8322 = vmatmul.mubr.bf16.gmra.mrb[0].mxu0 %v1886
        %v8323 = vpop.f32.mrb[0].mxu0
        %v8324 = vadd.f32 %v8163, %v8323
        %v8325 = vpop.f32.mrb[0].mxu0
        %v8326 = vpop.f32.mrb[0].mxu0
        %v8327 = vadd.f32 %v8166, %v8326
        %v8328 = vpop.f32.mrb[0].mxu0
        %8329 = vmatprep.mubr.bf16.mxu0 %v1900
        %8330 = vmatmul.mubr.bf16.gmra.mrb[0].mxu0 %v1899
        %v8331 = vpop.f32.mrb[0].mxu0
        %v8332 = vadd.f32 %v8171, %v8331
        %v8333 = vpop.f32.mrb[0].mxu0
        %v8334 = vpop.f32.mrb[0].mxu0
        %v8335 = vadd.f32 %v8174, %v8334
        %v8336 = vpop.f32.mrb[0].mxu0
        %8337 = vmatprep.mubr.bf16.mxu0 %v1913
        %8338 = vmatmul.mubr.bf16.gmra.mrb[0].mxu0 %v1912
        %v8339 = vpop.f32.mrb[0].mxu0
        %v8340 = vadd.f32 %v8179, %v8339
        %v8341 = vpop.f32.mrb[0].mxu0
        %v8342 = vpop.f32.mrb[0].mxu0
        %v8343 = vadd.f32 %v8182, %v8342
        %v8344 = vpop.f32.mrb[0].mxu0
        %8345 = vmatprep.mubr.bf16.mxu0 %v1926
        %8346 = vmatmul.mubr.bf16.gmra.mrb[0].mxu0 %v1925
        %v8347 = vpop.f32.mrb[0].mxu0
        %v8348 = vadd.f32 %v8187, %v8347
        %v8349 = vpop.f32.mrb[0].mxu0
        %v8350 = vpop.f32.mrb[0].mxu0
        %v8351 = vadd.f32 %v8190, %v8350
        %v8352 = vpop.f32.mrb[0].mxu0
        %8353 = vmatprep.mubr.bf16.mxu0 %v1939
        %8354 = vmatmul.mubr.bf16.gmra.mrb[0].mxu0 %v1938
        %v8355 = vpop.f32.mrb[0].mxu0
        %v8356 = vadd.f32 %v8195, %v8355
        %v8357 = vpop.f32.mrb[0].mxu0
        %v8358 = vpop.f32.mrb[0].mxu0
        %v8359 = vadd.f32 %v8198, %v8358
        %v8360 = vpop.f32.mrb[0].mxu0
        %8361 = vdwg.mxu0
        %8362 = vmatprep.subr.bf16.mxu0 0
        %8363 = vmatpush1.bf16.msra.mxu0 %v4219
        %8364 = vmatprep.subr.bf16.mxu0 0
        %8365 = vmatpush1.bf16.msra.mxu0 %v4224
        %8366 = vmatprep.subr.bf16.mxu0 0
        %8367 = vmatpush1.bf16.msra.mxu0 %v4229
        %8368 = vmatprep.subr.bf16.mxu0 0
        %8369 = vmatpush1.bf16.msra.mxu0 %v4234
        %8370 = vmatprep.subr.bf16.mxu0 0
        %8371 = vmatpush1.bf16.msra.mxu0 %v4239
        %8372 = vmatprep.subr.bf16.mxu0 0
        %8373 = vmatpush1.bf16.msra.mxu0 %v4244
        %8374 = vmatprep.subr.bf16.mxu0 0
        %8375 = vmatpush1.bf16.msra.mxu0 %v4249
        %8376 = vmatprep.subr.bf16.mxu0 0
        %8377 = vmatpush1.bf16.msra.mxu0 %v4254
        %8378 = vmatprep.subr.bf16.mxu0 0
        %8379 = vmatpush1.bf16.msra.mxu0 %v4259
        %8380 = vmatprep.subr.bf16.mxu0 0
        %8381 = vmatpush1.bf16.msra.mxu0 %v4264
        %8382 = vmatprep.subr.bf16.mxu0 0
        %8383 = vmatpush1.bf16.msra.mxu0 %v4269
        %8384 = vmatprep.subr.bf16.mxu0 0
        %8385 = vmatpush1.bf16.msra.mxu0 %v4274
        %8386 = vmatprep.subr.bf16.mxu0 0
        %8387 = vmatpush1.bf16.msra.mxu0 %v4279
        %8388 = vmatprep.subr.bf16.mxu0 0
        %8389 = vmatpush1.bf16.msra.mxu0 %v4284
        %8390 = vmatprep.subr.bf16.mxu0 0
        %8391 = vmatpush1.bf16.msra.mxu0 %v4289
        %8392 = vmatprep.subr.bf16.mxu0 0
        %8393 = vmatpush1.bf16.msra.mxu0 %v4294
        %8394 = vmatprep.mubr.bf16.mxu0 %v1746
        %8395 = vmatmul.mubr.bf16.gmra.mrb[0].mxu0 %v1745
        %v8396 = vpop.f32.mrb[0].mxu0
        %v8397 = vadd.f32 %v8236, %v8396
        %v8398 = vpop.f32.mrb[0].mxu0
        %v8399 = vpop.f32.mrb[0].mxu0
        %v8400 = vadd.f32 %v8239, %v8399
        %v8401 = vpop.f32.mrb[0].mxu0
        %8402 = vmatprep.mubr.bf16.mxu0 %v1759
        %8403 = vmatmul.mubr.bf16.gmra.mrb[0].mxu0 %v1758
        %v8404 = vpop.f32.mrb[0].mxu0
        %v8405 = vadd.f32 %v8244, %v8404
        %v8406 = vpop.f32.mrb[0].mxu0
        %v8407 = vpop.f32.mrb[0].mxu0
        %v8408 = vadd.f32 %v8247, %v8407
        %v8409 = vpop.f32.mrb[0].mxu0
        %8410 = vmatprep.mubr.bf16.mxu0 %v1772
        %8411 = vmatmul.mubr.bf16.gmra.mrb[0].mxu0 %v1771
        %v8412 = vpop.f32.mrb[0].mxu0
        %v8413 = vadd.f32 %v8252, %v8412
        %v8414 = vpop.f32.mrb[0].mxu0
        %v8415 = vpop.f32.mrb[0].mxu0
        %v8416 = vadd.f32 %v8255, %v8415
        %v8417 = vpop.f32.mrb[0].mxu0
        %8418 = vmatprep.mubr.bf16.mxu0 %v1785
        %8419 = vmatmul.mubr.bf16.gmra.mrb[0].mxu0 %v1784
        %v8420 = vpop.f32.mrb[0].mxu0
        %v8421 = vadd.f32 %v8260, %v8420
        %v8422 = vpop.f32.mrb[0].mxu0
        %v8423 = vpop.f32.mrb[0].mxu0
        %v8424 = vadd.f32 %v8263, %v8423
        %v8425 = vpop.f32.mrb[0].mxu0
        %8426 = vmatprep.mubr.bf16.mxu0 %v1798
        %8427 = vmatmul.mubr.bf16.gmra.mrb[0].mxu0 %v1797
        %v8428 = vpop.f32.mrb[0].mxu0
        %v8429 = vadd.f32 %v8268, %v8428
        %v8430 = vpop.f32.mrb[0].mxu0
        %v8431 = vpop.f32.mrb[0].mxu0
        %v8432 = vadd.f32 %v8271, %v8431
        %v8433 = vpop.f32.mrb[0].mxu0
        %8434 = vmatprep.mubr.bf16.mxu0 %v1811
        %8435 = vmatmul.mubr.bf16.gmra.mrb[0].mxu0 %v1810
        %v8436 = vpop.f32.mrb[0].mxu0
        %v8437 = vadd.f32 %v8276, %v8436
        %v8438 = vpop.f32.mrb[0].mxu0
        %v8439 = vpop.f32.mrb[0].mxu0
        %v8440 = vadd.f32 %v8279, %v8439
        %v8441 = vpop.f32.mrb[0].mxu0
        %8442 = vmatprep.mubr.bf16.mxu0 %v1824
        %8443 = vmatmul.mubr.bf16.gmra.mrb[0].mxu0 %v1823
        %v8444 = vpop.f32.mrb[0].mxu0
        %v8445 = vadd.f32 %v8284, %v8444
        %v8446 = vpop.f32.mrb[0].mxu0
        %v8447 = vpop.f32.mrb[0].mxu0
        %v8448 = vadd.f32 %v8287, %v8447
        %v8449 = vpop.f32.mrb[0].mxu0
        %8450 = vmatprep.mubr.bf16.mxu0 %v1837
        %8451 = vmatmul.mubr.bf16.gmra.mrb[0].mxu0 %v1836
        %v8452 = vpop.f32.mrb[0].mxu0
        %v8453 = vadd.f32 %v8292, %v8452
        %v8454 = vpop.f32.mrb[0].mxu0
        %v8455 = vpop.f32.mrb[0].mxu0
        %v8456 = vadd.f32 %v8295, %v8455
        %v8457 = vpop.f32.mrb[0].mxu0
        %8458 = vmatprep.mubr.bf16.mxu0 %v1850
        %8459 = vmatmul.mubr.bf16.gmra.mrb[0].mxu0 %v1849
        %v8460 = vpop.f32.mrb[0].mxu0
        %v8461 = vadd.f32 %v8300, %v8460
        %v8462 = vpop.f32.mrb[0].mxu0
        %v8463 = vpop.f32.mrb[0].mxu0
        %v8464 = vadd.f32 %v8303, %v8463
        %v8465 = vpop.f32.mrb[0].mxu0
        %8466 = vmatprep.mubr.bf16.mxu0 %v1863
        %8467 = vmatmul.mubr.bf16.gmra.mrb[0].mxu0 %v1862
        %v8468 = vpop.f32.mrb[0].mxu0
        %v8469 = vadd.f32 %v8308, %v8468
        %v8470 = vpop.f32.mrb[0].mxu0
        %v8471 = vpop.f32.mrb[0].mxu0
        %v8472 = vadd.f32 %v8311, %v8471
        %v8473 = vpop.f32.mrb[0].mxu0
        %8474 = vmatprep.mubr.bf16.mxu0 %v1876
        %8475 = vmatmul.mubr.bf16.gmra.mrb[0].mxu0 %v1875
        %v8476 = vpop.f32.mrb[0].mxu0
        %v8477 = vadd.f32 %v8316, %v8476
        %v8478 = vpop.f32.mrb[0].mxu0
        %v8479 = vpop.f32.mrb[0].mxu0
        %v8480 = vadd.f32 %v8319, %v8479
        %v8481 = vpop.f32.mrb[0].mxu0
        %8482 = vmatprep.mubr.bf16.mxu0 %v1889
        %8483 = vmatmul.mubr.bf16.gmra.mrb[0].mxu0 %v1888
        %v8484 = vpop.f32.mrb[0].mxu0
        %v8485 = vadd.f32 %v8324, %v8484
        %v8486 = vpop.f32.mrb[0].mxu0
        %v8487 = vpop.f32.mrb[0].mxu0
        %v8488 = vadd.f32 %v8327, %v8487
        %v8489 = vpop.f32.mrb[0].mxu0
        %8490 = vmatprep.mubr.bf16.mxu0 %v1902
        %8491 = vmatmul.mubr.bf16.gmra.mrb[0].mxu0 %v1901
        %v8492 = vpop.f32.mrb[0].mxu0
        %v8493 = vadd.f32 %v8332, %v8492
        %v8494 = vpop.f32.mrb[0].mxu0
        %v8495 = vpop.f32.mrb[0].mxu0
        %v8496 = vadd.f32 %v8335, %v8495
        %v8497 = vpop.f32.mrb[0].mxu0
        %8498 = vmatprep.mubr.bf16.mxu0 %v1915
        %8499 = vmatmul.mubr.bf16.gmra.mrb[0].mxu0 %v1914
        %v8500 = vpop.f32.mrb[0].mxu0
        %v8501 = vadd.f32 %v8340, %v8500
        %v8502 = vpop.f32.mrb[0].mxu0
        %v8503 = vpop.f32.mrb[0].mxu0
        %v8504 = vadd.f32 %v8343, %v8503
        %v8505 = vpop.f32.mrb[0].mxu0
        %8506 = vmatprep.mubr.bf16.mxu0 %v1928
        %8507 = vmatmul.mubr.bf16.gmra.mrb[0].mxu0 %v1927
        %v8508 = vpop.f32.mrb[0].mxu0
        %v8509 = vadd.f32 %v8348, %v8508
        %v8510 = vpop.f32.mrb[0].mxu0
        %v8511 = vpop.f32.mrb[0].mxu0
        %v8512 = vadd.f32 %v8351, %v8511
        %v8513 = vpop.f32.mrb[0].mxu0
        %8514 = vmatprep.mubr.bf16.mxu0 %v1941
        %8515 = vmatmul.mubr.bf16.gmra.mrb[0].mxu0 %v1940
        %v8516 = vpop.f32.mrb[0].mxu0
        %v8517 = vadd.f32 %v8356, %v8516
        %v8518 = vpop.f32.mrb[0].mxu0
        %v8519 = vpop.f32.mrb[0].mxu0
        %v8520 = vadd.f32 %v8359, %v8519
        %v8521 = vpop.f32.mrb[0].mxu0
        %8522 = vdwg.mxu0
        %8523 = vmatprep.subr.bf16.mxu0 0
        %8524 = vmatpush1.bf16.msra.mxu0 %v4299
        %8525 = vmatprep.subr.bf16.mxu0 0
        %8526 = vmatpush1.bf16.msra.mxu0 %v4304
        %8527 = vmatprep.subr.bf16.mxu0 0
        %8528 = vmatpush1.bf16.msra.mxu0 %v4309
        %8529 = vmatprep.subr.bf16.mxu0 0
        %8530 = vmatpush1.bf16.msra.mxu0 %v4314
        %8531 = vmatprep.subr.bf16.mxu0 0
        %8532 = vmatpush1.bf16.msra.mxu0 %v4319
        %8533 = vmatprep.subr.bf16.mxu0 0
        %8534 = vmatpush1.bf16.msra.mxu0 %v4324
        %8535 = vmatprep.subr.bf16.mxu0 0
        %8536 = vmatpush1.bf16.msra.mxu0 %v4329
        %8537 = vmatprep.subr.bf16.mxu0 0
        %8538 = vmatpush1.bf16.msra.mxu0 %v4334
        %8539 = vmatprep.subr.bf16.mxu0 0
        %8540 = vmatpush1.bf16.msra.mxu0 0
        %8541 = vmatprep.subr.bf16.mxu0 0
        %8542 = vmatpush1.bf16.msra.mxu0 0
        %8543 = vmatprep.subr.bf16.mxu0 0
        %8544 = vmatpush1.bf16.msra.mxu0 0
        %8545 = vmatprep.subr.bf16.mxu0 0
        %8546 = vmatpush1.bf16.msra.mxu0 0
        %8547 = vmatprep.subr.bf16.mxu0 0
        %8548 = vmatpush1.bf16.msra.mxu0 0
        %8549 = vmatprep.subr.bf16.mxu0 0
        %8550 = vmatpush1.bf16.msra.mxu0 0
        %8551 = vmatprep.subr.bf16.mxu0 0
        %8552 = vmatpush1.bf16.msra.mxu0 0
        %8553 = vmatprep.subr.bf16.mxu0 0
        %8554 = vmatpush1.bf16.msra.mxu0 0
        %8555 = vmatprep.mubr.bf16.mxu0 0
        %8556 = vmatmul.mubr.bf16.gmra.mrb[0].mxu0 %v1747
        %v8557 = vpop.f32.mrb[0].mxu0
        %v8558 = vadd.f32 %v8397, %v8557
        %v8559 = vpop.f32.mrb[0].mxu0
        %v8560 = vpop.f32.mrb[0].mxu0
        %v8561 = vadd.f32 %v8400, %v8560
        %v8562 = vpop.f32.mrb[0].mxu0
        %8563 = vmatprep.mubr.bf16.mxu0 0
        %8564 = vmatmul.mubr.bf16.gmra.mrb[0].mxu0 %v1760
        %v8565 = vpop.f32.mrb[0].mxu0
        %v8566 = vadd.f32 %v8405, %v8565
        %v8567 = vpop.f32.mrb[0].mxu0
        %v8568 = vpop.f32.mrb[0].mxu0
        %v8569 = vadd.f32 %v8408, %v8568
        %v8570 = vpop.f32.mrb[0].mxu0
        %8571 = vmatprep.mubr.bf16.mxu0 0
        %8572 = vmatmul.mubr.bf16.gmra.mrb[0].mxu0 %v1773
        %v8573 = vpop.f32.mrb[0].mxu0
        %v8574 = vadd.f32 %v8413, %v8573
        %v8575 = vpop.f32.mrb[0].mxu0
        %v8576 = vpop.f32.mrb[0].mxu0
        %v8577 = vadd.f32 %v8416, %v8576
        %v8578 = vpop.f32.mrb[0].mxu0
        %8579 = vmatprep.mubr.bf16.mxu0 0
        %8580 = vmatmul.mubr.bf16.gmra.mrb[0].mxu0 %v1786
        %v8581 = vpop.f32.mrb[0].mxu0
        %v8582 = vadd.f32 %v8421, %v8581
        %v8583 = vpop.f32.mrb[0].mxu0
        %v8584 = vpop.f32.mrb[0].mxu0
        %v8585 = vadd.f32 %v8424, %v8584
        %v8586 = vpop.f32.mrb[0].mxu0
        %8587 = vmatprep.mubr.bf16.mxu0 0
        %8588 = vmatmul.mubr.bf16.gmra.mrb[0].mxu0 %v1799
        %v8589 = vpop.f32.mrb[0].mxu0
        %v8590 = vadd.f32 %v8429, %v8589
        %v8591 = vpop.f32.mrb[0].mxu0
        %v8592 = vpop.f32.mrb[0].mxu0
        %v8593 = vadd.f32 %v8432, %v8592
        %v8594 = vpop.f32.mrb[0].mxu0
        %8595 = vmatprep.mubr.bf16.mxu0 0
        %8596 = vmatmul.mubr.bf16.gmra.mrb[0].mxu0 %v1812
        %v8597 = vpop.f32.mrb[0].mxu0
        %v8598 = vadd.f32 %v8437, %v8597
        %v8599 = vpop.f32.mrb[0].mxu0
        %v8600 = vpop.f32.mrb[0].mxu0
        %v8601 = vadd.f32 %v8440, %v8600
        %v8602 = vpop.f32.mrb[0].mxu0
        %8603 = vmatprep.mubr.bf16.mxu0 0
        %8604 = vmatmul.mubr.bf16.gmra.mrb[0].mxu0 %v1825
        %v8605 = vpop.f32.mrb[0].mxu0
        %v8606 = vadd.f32 %v8445, %v8605
        %v8607 = vpop.f32.mrb[0].mxu0
        %v8608 = vpop.f32.mrb[0].mxu0
        %v8609 = vadd.f32 %v8448, %v8608
        %v8610 = vpop.f32.mrb[0].mxu0
        %8611 = vmatprep.mubr.bf16.mxu0 0
        %8612 = vmatmul.mubr.bf16.gmra.mrb[0].mxu0 %v1838
        %v8613 = vpop.f32.mrb[0].mxu0
        %v8614 = vadd.f32 %v8453, %v8613
        %v8615 = vpop.f32.mrb[0].mxu0
        %v8616 = vpop.f32.mrb[0].mxu0
        %v8617 = vadd.f32 %v8456, %v8616
        %v8618 = vpop.f32.mrb[0].mxu0
        %8619 = vmatprep.mubr.bf16.mxu0 0
        %8620 = vmatmul.mubr.bf16.gmra.mrb[0].mxu0 %v1851
        %v8621 = vpop.f32.mrb[0].mxu0
        %v8622 = vadd.f32 %v8461, %v8621
        %v8623 = vpop.f32.mrb[0].mxu0
        %v8624 = vpop.f32.mrb[0].mxu0
        %v8625 = vadd.f32 %v8464, %v8624
        %v8626 = vpop.f32.mrb[0].mxu0
        %8627 = vmatprep.mubr.bf16.mxu0 0
        %8628 = vmatmul.mubr.bf16.gmra.mrb[0].mxu0 %v1864
        %v8629 = vpop.f32.mrb[0].mxu0
        %v8630 = vadd.f32 %v8469, %v8629
        %v8631 = vpop.f32.mrb[0].mxu0
        %v8632 = vpop.f32.mrb[0].mxu0
        %v8633 = vadd.f32 %v8472, %v8632
        %v8634 = vpop.f32.mrb[0].mxu0
        %8635 = vmatprep.mubr.bf16.mxu0 0
        %8636 = vmatmul.mubr.bf16.gmra.mrb[0].mxu0 %v1877
        %v8637 = vpop.f32.mrb[0].mxu0
        %v8638 = vadd.f32 %v8477, %v8637
        %v8639 = vpop.f32.mrb[0].mxu0
        %v8640 = vpop.f32.mrb[0].mxu0
        %v8641 = vadd.f32 %v8480, %v8640
        %v8642 = vpop.f32.mrb[0].mxu0
        %8643 = vmatprep.mubr.bf16.mxu0 0
        %8644 = vmatmul.mubr.bf16.gmra.mrb[0].mxu0 %v1890
        %v8645 = vpop.f32.mrb[0].mxu0
        %v8646 = vadd.f32 %v8485, %v8645
        %v8647 = vpop.f32.mrb[0].mxu0
        %v8648 = vpop.f32.mrb[0].mxu0
        %v8649 = vadd.f32 %v8488, %v8648
        %v8650 = vpop.f32.mrb[0].mxu0
        %8651 = vmatprep.mubr.bf16.mxu0 0
        %8652 = vmatmul.mubr.bf16.gmra.mrb[0].mxu0 %v1903
        %v8653 = vpop.f32.mrb[0].mxu0
        %v8654 = vadd.f32 %v8493, %v8653
        %v8655 = vpop.f32.mrb[0].mxu0
        %v8656 = vpop.f32.mrb[0].mxu0
        %v8657 = vadd.f32 %v8496, %v8656
        %v8658 = vpop.f32.mrb[0].mxu0
        %8659 = vmatprep.mubr.bf16.mxu0 0
        %8660 = vmatmul.mubr.bf16.gmra.mrb[0].mxu0 %v1916
        %v8661 = vpop.f32.mrb[0].mxu0
        %v8662 = vadd.f32 %v8501, %v8661
        %v8663 = vpop.f32.mrb[0].mxu0
        %v8664 = vpop.f32.mrb[0].mxu0
        %v8665 = vadd.f32 %v8504, %v8664
        %v8666 = vpop.f32.mrb[0].mxu0
        %8667 = vmatprep.mubr.bf16.mxu0 0
        %8668 = vmatmul.mubr.bf16.gmra.mrb[0].mxu0 %v1929
        %v8669 = vpop.f32.mrb[0].mxu0
        %v8670 = vadd.f32 %v8509, %v8669
        %v8671 = vpop.f32.mrb[0].mxu0
        %v8672 = vpop.f32.mrb[0].mxu0
        %v8673 = vadd.f32 %v8512, %v8672
        %v8674 = vpop.f32.mrb[0].mxu0
        %8675 = vmatprep.mubr.bf16.mxu0 0
        %8676 = vmatmul.mubr.bf16.gmra.mrb[0].mxu0 %v1942
        %v8677 = vpop.f32.mrb[0].mxu0
        %v8678 = vadd.f32 %v8517, %v8677
        %v8679 = vpop.f32.mrb[0].mxu0
        %v8680 = vpop.f32.mrb[0].mxu0
        %v8681 = vadd.f32 %v8520, %v8680
        %v8682 = vpop.f32.mrb[0].mxu0
        %8683 = vdwg.mxu0
        %v8684 = vmax.f32 %v6048, 0.0
        %v8685 = vmax.f32 %v6050, 0.0
        %v8686 = vmax.f32 %v7399, 0.0
        %v8687 = vmax.f32 %v7401, 0.0
        %v8688 = vmax.f32 %v8558, 0.0
        %v8689 = vmax.f32 %v6052, 0.0
        %v8690 = vmax.f32 %v6054, 0.0
        %v8691 = vmax.f32 %v7403, 0.0
        %v8692 = vmax.f32 %v7405, 0.0
        %v8693 = vmax.f32 %v8561, 0.0
        %v8694 = vmax.f32 %v6058, 0.0
        %v8695 = vmax.f32 %v6060, 0.0
        %v8696 = vmax.f32 %v7409, 0.0
        %v8697 = vmax.f32 %v7411, 0.0
        %v8698 = vmax.f32 %v8566, 0.0
        %v8699 = vmax.f32 %v6062, 0.0
        %v8700 = vmax.f32 %v6064, 0.0
        %v8701 = vmax.f32 %v7413, 0.0
        %v8702 = vmax.f32 %v7415, 0.0
        %v8703 = vmax.f32 %v8569, 0.0
        %v8704 = vmax.f32 %v6068, 0.0
        %v8705 = vmax.f32 %v6070, 0.0
        %v8706 = vmax.f32 %v7419, 0.0
        %v8707 = vmax.f32 %v7421, 0.0
        %v8708 = vmax.f32 %v8574, 0.0
        %v8709 = vmax.f32 %v6072, 0.0
        %v8710 = vmax.f32 %v6074, 0.0
        %v8711 = vmax.f32 %v7423, 0.0
        %v8712 = vmax.f32 %v7425, 0.0
        %v8713 = vmax.f32 %v8577, 0.0
        %v8714 = vmax.f32 %v6078, 0.0
        %v8715 = vmax.f32 %v6080, 0.0
        %v8716 = vmax.f32 %v7429, 0.0
        %v8717 = vmax.f32 %v7431, 0.0
        %v8718 = vmax.f32 %v8582, 0.0
        %v8719 = vmax.f32 %v6082, 0.0
        %v8720 = vmax.f32 %v6084, 0.0
        %v8721 = vmax.f32 %v7433, 0.0
        %v8722 = vmax.f32 %v7435, 0.0
        %v8723 = vmax.f32 %v8585, 0.0
        %v8724 = vmax.f32 %v6088, 0.0
        %v8725 = vmax.f32 %v6090, 0.0
        %v8726 = vmax.f32 %v7439, 0.0
        %v8727 = vmax.f32 %v7441, 0.0
        %v8728 = vmax.f32 %v8590, 0.0
        %v8729 = vmax.f32 %v6092, 0.0
        %v8730 = vmax.f32 %v6094, 0.0
        %v8731 = vmax.f32 %v7443, 0.0
        %v8732 = vmax.f32 %v7445, 0.0
        %v8733 = vmax.f32 %v8593, 0.0
        %v8734 = vmax.f32 %v6098, 0.0
        %v8735 = vmax.f32 %v6100, 0.0
        %v8736 = vmax.f32 %v7449, 0.0
        %v8737 = vmax.f32 %v7451, 0.0
        %v8738 = vmax.f32 %v8598, 0.0
        %v8739 = vmax.f32 %v6102, 0.0
        %v8740 = vmax.f32 %v6104, 0.0
        %v8741 = vmax.f32 %v7453, 0.0
        %v8742 = vmax.f32 %v7455, 0.0
        %v8743 = vmax.f32 %v8601, 0.0
        %v8744 = vmax.f32 %v6108, 0.0
        %v8745 = vmax.f32 %v6110, 0.0
        %v8746 = vmax.f32 %v7459, 0.0
        %v8747 = vmax.f32 %v7461, 0.0
        %v8748 = vmax.f32 %v8606, 0.0
        %v8749 = vmax.f32 %v6112, 0.0
        %v8750 = vmax.f32 %v6114, 0.0
        %v8751 = vmax.f32 %v7463, 0.0
        %v8752 = vmax.f32 %v7465, 0.0
        %v8753 = vmax.f32 %v8609, 0.0
        %v8754 = vmax.f32 %v6118, 0.0
        %v8755 = vmax.f32 %v6120, 0.0
        %v8756 = vmax.f32 %v7469, 0.0
        %v8757 = vmax.f32 %v7471, 0.0
        %v8758 = vmax.f32 %v8614, 0.0
        %v8759 = vmax.f32 %v6122, 0.0
        %v8760 = vmax.f32 %v6124, 0.0
        %v8761 = vmax.f32 %v7473, 0.0
        %v8762 = vmax.f32 %v7475, 0.0
        %v8763 = vmax.f32 %v8617, 0.0
        %v8764 = vmax.f32 %v6128, 0.0
        %v8765 = vmax.f32 %v6130, 0.0
        %v8766 = vmax.f32 %v7479, 0.0
        %v8767 = vmax.f32 %v7481, 0.0
        %v8768 = vmax.f32 %v8622, 0.0
        %v8769 = vmax.f32 %v6132, 0.0
        %v8770 = vmax.f32 %v6134, 0.0
        %v8771 = vmax.f32 %v7483, 0.0
        %v8772 = vmax.f32 %v7485, 0.0
        %v8773 = vmax.f32 %v8625, 0.0
        %v8774 = vmax.f32 %v6138, 0.0
        %v8775 = vmax.f32 %v6140, 0.0
        %v8776 = vmax.f32 %v7489, 0.0
        %v8777 = vmax.f32 %v7491, 0.0
        %v8778 = vmax.f32 %v8630, 0.0
        %v8779 = vmax.f32 %v6142, 0.0
        %v8780 = vmax.f32 %v6144, 0.0
        %v8781 = vmax.f32 %v7493, 0.0
        %v8782 = vmax.f32 %v7495, 0.0
        %v8783 = vmax.f32 %v8633, 0.0
        %v8784 = vmax.f32 %v6148, 0.0
        %v8785 = vmax.f32 %v6150, 0.0
        %v8786 = vmax.f32 %v7499, 0.0
        %v8787 = vmax.f32 %v7501, 0.0
        %v8788 = vmax.f32 %v8638, 0.0
        %v8789 = vmax.f32 %v6152, 0.0
        %v8790 = vmax.f32 %v6154, 0.0
        %v8791 = vmax.f32 %v7503, 0.0
        %v8792 = vmax.f32 %v7505, 0.0
        %v8793 = vmax.f32 %v8641, 0.0
        %v8794 = vmax.f32 %v6158, 0.0
        %v8795 = vmax.f32 %v6160, 0.0
        %v8796 = vmax.f32 %v7509, 0.0
        %v8797 = vmax.f32 %v7511, 0.0
        %v8798 = vmax.f32 %v8646, 0.0
        %v8799 = vmax.f32 %v6162, 0.0
        %v8800 = vmax.f32 %v6164, 0.0
        %v8801 = vmax.f32 %v7513, 0.0
        %v8802 = vmax.f32 %v7515, 0.0
        %v8803 = vmax.f32 %v8649, 0.0
        %v8804 = vmax.f32 %v6168, 0.0
        %v8805 = vmax.f32 %v6170, 0.0
        %v8806 = vmax.f32 %v7519, 0.0
        %v8807 = vmax.f32 %v7521, 0.0
        %v8808 = vmax.f32 %v8654, 0.0
        %v8809 = vmax.f32 %v6172, 0.0
        %v8810 = vmax.f32 %v6174, 0.0
        %v8811 = vmax.f32 %v7523, 0.0
        %v8812 = vmax.f32 %v7525, 0.0
        %v8813 = vmax.f32 %v8657, 0.0
        %v8814 = vmax.f32 %v6178, 0.0
        %v8815 = vmax.f32 %v6180, 0.0
        %v8816 = vmax.f32 %v7529, 0.0
        %v8817 = vmax.f32 %v7531, 0.0
        %v8818 = vmax.f32 %v8662, 0.0
        %v8819 = vmax.f32 %v6182, 0.0
        %v8820 = vmax.f32 %v6184, 0.0
        %v8821 = vmax.f32 %v7533, 0.0
        %v8822 = vmax.f32 %v7535, 0.0
        %v8823 = vmax.f32 %v8665, 0.0
        %v8824 = vmax.f32 %v6188, 0.0
        %v8825 = vmax.f32 %v6190, 0.0
        %v8826 = vmax.f32 %v7539, 0.0
        %v8827 = vmax.f32 %v7541, 0.0
        %v8828 = vmax.f32 %v8670, 0.0
        %v8829 = vmax.f32 %v6192, 0.0
        %v8830 = vmax.f32 %v6194, 0.0
        %v8831 = vmax.f32 %v7543, 0.0
        %v8832 = vmax.f32 %v7545, 0.0
        %v8833 = vmax.f32 %v8673, 0.0
        %v8834 = vmax.f32 %v6198, 0.0
        %v8835 = vmax.f32 %v6200, 0.0
        %v8836 = vmax.f32 %v7549, 0.0
        %v8837 = vmax.f32 %v7551, 0.0
        %v8838 = vmax.f32 %v8678, 0.0
        %v8839 = vmax.f32 %v6202, 0.0
        %v8840 = vmax.f32 %v6204, 0.0
        %v8841 = vmax.f32 %v7553, 0.0
        %v8842 = vmax.f32 %v7555, 0.0
        %v8843 = vmax.f32 %v8681, 0.0
        %8844 = vst [vmem:[%s216] sm:$0xff] %v8684
        %8845 = vst [vmem:[%s216 + $0x8] sm:$0xff] %v8685
        %8846 = vst [vmem:[%s216 + $0x10] sm:$0xff] %v8686
        %8847 = vst [vmem:[%s216 + $0x18] sm:$0xff] %v8687
        %8848 = vst [vmem:[%s216 + $0x20] sm:$0xff] %v8688
        %8849 = vst [vmem:[%s216 + $0x28] sm:$0xff] %v8689
        %8850 = vst [vmem:[%s216 + $0x30] sm:$0xff] %v8690
        %8851 = vst [vmem:[%s216 + $0x38] sm:$0xff] %v8691
        %8852 = vst [vmem:[%s216 + $0x40] sm:$0xff] %v8692
        %8853 = vst [vmem:[%s216 + $0x48] sm:$0xff] %v8693
        %8854 = vst [vmem:[%s216 + $0x50] sm:$0xff] %v8694
        %8855 = vst [vmem:[%s216 + $0x58] sm:$0xff] %v8695
        %8856 = vst [vmem:[%s216 + $0x60] sm:$0xff] %v8696
        %8857 = vst [vmem:[%s216 + $0x68] sm:$0xff] %v8697
        %8858 = vst [vmem:[%s216 + $0x70] sm:$0xff] %v8698
        %8859 = vst [vmem:[%s216 + $0x78] sm:$0xff] %v8699
        %8860 = vst [vmem:[%s216 + $0x80] sm:$0xff] %v8700
        %8861 = vst [vmem:[%s216 + $0x88] sm:$0xff] %v8701
        %8862 = vst [vmem:[%s216 + $0x90] sm:$0xff] %v8702
        %8863 = vst [vmem:[%s216 + $0x98] sm:$0xff] %v8703
        %8864 = vst [vmem:[%s216 + $0xa0] sm:$0xff] %v8704
        %8865 = vst [vmem:[%s216 + $0xa8] sm:$0xff] %v8705
        %8866 = vst [vmem:[%s216 + $0xb0] sm:$0xff] %v8706
        %8867 = vst [vmem:[%s216 + $0xb8] sm:$0xff] %v8707
        %8868 = vst [vmem:[%s216 + $0xc0] sm:$0xff] %v8708
        %8869 = vst [vmem:[%s216 + $0xc8] sm:$0xff] %v8709
        %8870 = vst [vmem:[%s216 + $0xd0] sm:$0xff] %v8710
        %8871 = vst [vmem:[%s216 + $0xd8] sm:$0xff] %v8711
        %8872 = vst [vmem:[%s216 + $0xe0] sm:$0xff] %v8712
        %8873 = vst [vmem:[%s216 + $0xe8] sm:$0xff] %v8713
        %8874 = vst [vmem:[%s216 + $0xf0] sm:$0xff] %v8714
        %8875 = vst [vmem:[%s216 + $0xf8] sm:$0xff] %v8715
        %8876 = vst [vmem:[%s216 + $0x100] sm:$0xff] %v8716
        %8877 = vst [vmem:[%s216 + $0x108] sm:$0xff] %v8717
        %8878 = vst [vmem:[%s216 + $0x110] sm:$0xff] %v8718
        %8879 = vst [vmem:[%s216 + $0x118] sm:$0xff] %v8719
        %8880 = vst [vmem:[%s216 + $0x120] sm:$0xff] %v8720
        %8881 = vst [vmem:[%s216 + $0x128] sm:$0xff] %v8721
        %8882 = vst [vmem:[%s216 + $0x130] sm:$0xff] %v8722
        %8883 = vst [vmem:[%s216 + $0x138] sm:$0xff] %v8723
        %8884 = vst [vmem:[%s216 + $0x140] sm:$0xff] %v8724
        %8885 = vst [vmem:[%s216 + $0x148] sm:$0xff] %v8725
        %8886 = vst [vmem:[%s216 + $0x150] sm:$0xff] %v8726
        %8887 = vst [vmem:[%s216 + $0x158] sm:$0xff] %v8727
        %8888 = vst [vmem:[%s216 + $0x160] sm:$0xff] %v8728
        %8889 = vst [vmem:[%s216 + $0x168] sm:$0xff] %v8729
        %8890 = vst [vmem:[%s216 + $0x170] sm:$0xff] %v8730
        %8891 = vst [vmem:[%s216 + $0x178] sm:$0xff] %v8731
        %8892 = vst [vmem:[%s216 + $0x180] sm:$0xff] %v8732
        %8893 = vst [vmem:[%s216 + $0x188] sm:$0xff] %v8733
        %8894 = vst [vmem:[%s216 + $0x190] sm:$0xff] %v8734
        %8895 = vst [vmem:[%s216 + $0x198] sm:$0xff] %v8735
        %8896 = vst [vmem:[%s216 + $0x1a0] sm:$0xff] %v8736
        %8897 = vst [vmem:[%s216 + $0x1a8] sm:$0xff] %v8737
        %8898 = vst [vmem:[%s216 + $0x1b0] sm:$0xff] %v8738
        %8899 = vst [vmem:[%s216 + $0x1b8] sm:$0xff] %v8739
        %8900 = vst [vmem:[%s216 + $0x1c0] sm:$0xff] %v8740
        %8901 = vst [vmem:[%s216 + $0x1c8] sm:$0xff] %v8741
        %8902 = vst [vmem:[%s216 + $0x1d0] sm:$0xff] %v8742
        %8903 = vst [vmem:[%s216 + $0x1d8] sm:$0xff] %v8743
        %8904 = vst [vmem:[%s216 + $0x1e0] sm:$0xff] %v8744
        %8905 = vst [vmem:[%s216 + $0x1e8] sm:$0xff] %v8745
        %8906 = vst [vmem:[%s216 + $0x1f0] sm:$0xff] %v8746
        %8907 = vst [vmem:[%s216 + $0x1f8] sm:$0xff] %v8747
        %8908 = vst [vmem:[%s216 + $0x200] sm:$0xff] %v8748
        %8909 = vst [vmem:[%s216 + $0x208] sm:$0xff] %v8749
        %8910 = vst [vmem:[%s216 + $0x210] sm:$0xff] %v8750
        %8911 = vst [vmem:[%s216 + $0x218] sm:$0xff] %v8751
        %8912 = vst [vmem:[%s216 + $0x220] sm:$0xff] %v8752
        %8913 = vst [vmem:[%s216 + $0x228] sm:$0xff] %v8753
        %8914 = vst [vmem:[%s216 + $0x230] sm:$0xff] %v8754
        %8915 = vst [vmem:[%s216 + $0x238] sm:$0xff] %v8755
        %8916 = vst [vmem:[%s216 + $0x240] sm:$0xff] %v8756
        %8917 = vst [vmem:[%s216 + $0x248] sm:$0xff] %v8757
        %8918 = vst [vmem:[%s216 + $0x250] sm:$0xff] %v8758
        %8919 = vst [vmem:[%s216 + $0x258] sm:$0xff] %v8759
        %8920 = vst [vmem:[%s216 + $0x260] sm:$0xff] %v8760
        %8921 = vst [vmem:[%s216 + $0x268] sm:$0xff] %v8761
        %8922 = vst [vmem:[%s216 + $0x270] sm:$0xff] %v8762
        %8923 = vst [vmem:[%s216 + $0x278] sm:$0xff] %v8763
        %8924 = vst [vmem:[%s216 + $0x280] sm:$0xff] %v8764
        %8925 = vst [vmem:[%s216 + $0x288] sm:$0xff] %v8765
        %8926 = vst [vmem:[%s216 + $0x290] sm:$0xff] %v8766
        %8927 = vst [vmem:[%s216 + $0x298] sm:$0xff] %v8767
        %8928 = vst [vmem:[%s216 + $0x2a0] sm:$0xff] %v8768
        %8929 = vst [vmem:[%s216 + $0x2a8] sm:$0xff] %v8769
        %8930 = vst [vmem:[%s216 + $0x2b0] sm:$0xff] %v8770
        %8931 = vst [vmem:[%s216 + $0x2b8] sm:$0xff] %v8771
        %8932 = vst [vmem:[%s216 + $0x2c0] sm:$0xff] %v8772
        %8933 = vst [vmem:[%s216 + $0x2c8] sm:$0xff] %v8773
        %8934 = vst [vmem:[%s216 + $0x2d0] sm:$0xff] %v8774
        %8935 = vst [vmem:[%s216 + $0x2d8] sm:$0xff] %v8775
        %8936 = vst [vmem:[%s216 + $0x2e0] sm:$0xff] %v8776
        %8937 = vst [vmem:[%s216 + $0x2e8] sm:$0xff] %v8777
        %8938 = vst [vmem:[%s216 + $0x2f0] sm:$0xff] %v8778
        %8939 = vst [vmem:[%s216 + $0x2f8] sm:$0xff] %v8779
        %8940 = vst [vmem:[%s216 + $0x300] sm:$0xff] %v8780
        %8941 = vst [vmem:[%s216 + $0x308] sm:$0xff] %v8781
        %8942 = vst [vmem:[%s216 + $0x310] sm:$0xff] %v8782
        %8943 = vst [vmem:[%s216 + $0x318] sm:$0xff] %v8783
        %8944 = vst [vmem:[%s216 + $0x320] sm:$0xff] %v8784
        %8945 = vst [vmem:[%s216 + $0x328] sm:$0xff] %v8785
        %8946 = vst [vmem:[%s216 + $0x330] sm:$0xff] %v8786
        %8947 = vst [vmem:[%s216 + $0x338] sm:$0xff] %v8787
        %8948 = vst [vmem:[%s216 + $0x340] sm:$0xff] %v8788
        %8949 = vst [vmem:[%s216 + $0x348] sm:$0xff] %v8789
        %8950 = vst [vmem:[%s216 + $0x350] sm:$0xff] %v8790
        %8951 = vst [vmem:[%s216 + $0x358] sm:$0xff] %v8791
        %8952 = vst [vmem:[%s216 + $0x360] sm:$0xff] %v8792
        %8953 = vst [vmem:[%s216 + $0x368] sm:$0xff] %v8793
        %8954 = vst [vmem:[%s216 + $0x370] sm:$0xff] %v8794
        %8955 = vst [vmem:[%s216 + $0x378] sm:$0xff] %v8795
        %8956 = vst [vmem:[%s216 + $0x380] sm:$0xff] %v8796
        %8957 = vst [vmem:[%s216 + $0x388] sm:$0xff] %v8797
        %8958 = vst [vmem:[%s216 + $0x390] sm:$0xff] %v8798
        %8959 = vst [vmem:[%s216 + $0x398] sm:$0xff] %v8799
        %8960 = vst [vmem:[%s216 + $0x3a0] sm:$0xff] %v8800
        %8961 = vst [vmem:[%s216 + $0x3a8] sm:$0xff] %v8801
        %8962 = vst [vmem:[%s216 + $0x3b0] sm:$0xff] %v8802
        %8963 = vst [vmem:[%s216 + $0x3b8] sm:$0xff] %v8803
        %8964 = vst [vmem:[%s216 + $0x3c0] sm:$0xff] %v8804
        %8965 = vst [vmem:[%s216 + $0x3c8] sm:$0xff] %v8805
        %8966 = vst [vmem:[%s216 + $0x3d0] sm:$0xff] %v8806
        %8967 = vst [vmem:[%s216 + $0x3d8] sm:$0xff] %v8807
        %8968 = vst [vmem:[%s216 + $0x3e0] sm:$0xff] %v8808
        %8969 = vst [vmem:[%s216 + $0x3e8] sm:$0xff] %v8809
        %8970 = vst [vmem:[%s216 + $0x3f0] sm:$0xff] %v8810
        %8971 = vst [vmem:[%s216 + $0x3f8] sm:$0xff] %v8811
        %8972 = vst [vmem:[%s216 + $0x400] sm:$0xff] %v8812
        %8973 = vst [vmem:[%s216 + $0x408] sm:$0xff] %v8813
        %8974 = vst [vmem:[%s216 + $0x410] sm:$0xff] %v8814
        %8975 = vst [vmem:[%s216 + $0x418] sm:$0xff] %v8815
        %8976 = vst [vmem:[%s216 + $0x420] sm:$0xff] %v8816
        %8977 = vst [vmem:[%s216 + $0x428] sm:$0xff] %v8817
        %8978 = vst [vmem:[%s216 + $0x430] sm:$0xff] %v8818
        %8979 = vst [vmem:[%s216 + $0x438] sm:$0xff] %v8819
        %8980 = vst [vmem:[%s216 + $0x440] sm:$0xff] %v8820
        %8981 = vst [vmem:[%s216 + $0x448] sm:$0xff] %v8821
        %8982 = vst [vmem:[%s216 + $0x450] sm:$0xff] %v8822
        %8983 = vst [vmem:[%s216 + $0x458] sm:$0xff] %v8823
        %8984 = vst [vmem:[%s216 + $0x460] sm:$0xff] %v8824
        %8985 = vst [vmem:[%s216 + $0x468] sm:$0xff] %v8825
        %8986 = vst [vmem:[%s216 + $0x470] sm:$0xff] %v8826
        %8987 = vst [vmem:[%s216 + $0x478] sm:$0xff] %v8827
        %8988 = vst [vmem:[%s216 + $0x480] sm:$0xff] %v8828
        %8989 = vst [vmem:[%s216 + $0x488] sm:$0xff] %v8829
        %8990 = vst [vmem:[%s216 + $0x490] sm:$0xff] %v8830
        %8991 = vst [vmem:[%s216 + $0x498] sm:$0xff] %v8831
        %8992 = vst [vmem:[%s216 + $0x4a0] sm:$0xff] %v8832
        %8993 = vst [vmem:[%s216 + $0x4a8] sm:$0xff] %v8833
        %8994 = vst [vmem:[%s216 + $0x4b0] sm:$0xff] %v8834
        %8995 = vst [vmem:[%s216 + $0x4b8] sm:$0xff] %v8835
        %8996 = vst [vmem:[%s216 + $0x4c0] sm:$0xff] %v8836
        %8997 = vst [vmem:[%s216 + $0x4c8] sm:$0xff] %v8837
        %8998 = vst [vmem:[%s216 + $0x4d0] sm:$0xff] %v8838
        %8999 = vst [vmem:[%s216 + $0x4d8] sm:$0xff] %v8839
        %9000 = vst [vmem:[%s216 + $0x4e0] sm:$0xff] %v8840
        %9001 = vst [vmem:[%s216 + $0x4e8] sm:$0xff] %v8841
        %9002 = vst [vmem:[%s216 + $0x4f0] sm:$0xff] %v8842
        %9003 = vst [vmem:[%s216 + $0x4f8] sm:$0xff] %v8843
        %s9004 = sand.u32 %s97, 1
        %s9005 = scalar_lea.sflag [#allocation4], %s9004
        %s9006 = sand.u32 %s97, 1
        %s9007 = smul.addr %s9006, 1280
        %s9008 = scalar_lea.vmem [#allocation8], %s9007
        // Predicated region
        $region45: #{tpu_custom_call.1} parent=31 // pred_check
          %p9009 = pneg %p107
        $region46: #{tpu_custom_call.1} parent=31 // pred_check_branch
          %9011 = sbr.rel (%p9009) target = $region48
        $region47: #{tpu_custom_call.1} parent=31 // pred_region
          %s9012 = smul.u32 32, %s21
          %s9014 = ssub.s32 20480, 20480
          %9015 = vsyncadd %s9005, %s9014
          %s9016 = smul.addr %s9012, 5
          %s9017 = smul.addr %s9016, 128
          %s9018 = scalar_lea.hbm %s3, %s9017
          %s9019 = sshll.u32 %s9008, 4
          %s9020 = int_to_ptr.vmem [resolvable:$true] %s9019
          %9025 = dma.vmem_to_hbm [thread:$0]  %s9020, 20480, %s9018, %s9005, 640, 640, 40
        $region48: #{tpu_custom_call.1} parent=31 // pred_fallthru
          _
      $region32: #{tpu_custom_call.1} parent=5 // pred_fallthru
        _
      %p9026 = scmp.le.s32.totalorder 2, %s16
      // Predicated region
      $region49: #{tpu_custom_call.1} parent=5 // pred_check
        %p9027 = pneg %p9026
      $region50: #{tpu_custom_call.1} parent=5 // pred_check_branch
        %9029 = sbr.rel (%p9027) target = $region52
      $region51: #{tpu_custom_call.1} parent=5 // pred_region
        %s9030 = ssub.s32 %s16, 2
        // Predicated region
        $region53: #{tpu_custom_call.1} parent=51 // pred_check
          %p9031 = pneg %p113
        $region54: #{tpu_custom_call.1} parent=51 // pred_check_branch
          %9033 = sbr.rel (%p9031) target = $region56
        $region55: #{tpu_custom_call.1} parent=51 // pred_region
          %s9034 = sand.u32 %s98, 1
          %s9035 = scalar_lea.sflag [#allocation4], %s9034
          %s9036 = sand.u32 %s98, 1
          %s9037 = smul.addr %s9036, 1280
          %s9038 = scalar_lea.vmem [#allocation8], %s9037
          %9039 = dma.done %s9035, 20480
        $region56: #{tpu_custom_call.1} parent=51 // pred_fallthru
          _
      $region52: #{tpu_custom_call.1} parent=5 // pred_fallthru
        _
    $region6: #{tpu_custom_call.1} parent=1 // loop_footer
      %s20 = sadd.s32 1, %s16
    $region7: #{tpu_custom_call.1} parent=1 // loop_footer_branch
      %15 = sbr.rel target = $region3
    $region8: #{tpu_custom_call.1} parent=1 // loop_exit
      _
    %9040 = vsyncpa [#allocation3], 1
    %s9041 = scalar_lea.sflag [#allocation3], 1
    %9042 = vsyncpa %s9041, 1
    %9043 = vsyncpa [#allocation6], 1
    %9044 = vsyncpa [#allocation4], 1
    %s9045 = scalar_lea.sflag [#allocation4], 1
    %9046 = vsyncpa %s9045, 1

</llo_original>
